<compile_context>
chip_gen: v7x
topology: tpu7x:2x2x1
jax: 0.10.0
libtpu: 0.0.40
codegen_flags: <defaults>
</compile_context>

<pallas_src>
import jax
import jax.numpy as jnp
from jax.experimental import pallas as pl
from jax.experimental.pallas import tpu as pltpu

F32 = jnp.float32
BF16 = jnp.bfloat16
LN_EPS = 1e-5
NEG_INF = -1e30


def _layernorm(x, g, b):
    m = jnp.mean(x, axis=-1, keepdims=True)
    v = jnp.mean((x - m) ** 2, axis=-1, keepdims=True)
    return (x - m) * jax.lax.rsqrt(v + LN_EPS) * g + b


# --------------------------- fused forward kernel ---------------------------

def _make_glrp_kernel(*, hidden, nhead, K, n_agents, fin):
    H = hidden
    hd = H // nhead

    def kernel(x_ref, ahat_ref, adjn_ref, eps_ref, kq_ref, kk_ref, tar_ref,
               p1w_ref, p1b_ref, p2w_ref, p2b_ref,
               g1w_ref, g1g_ref, g1b_ref, n1g_ref, n1b_ref,
               g2w_ref, g2g_ref, g2b_ref, n2g_ref, n2b_ref,
               p3w_ref, p3b_ref, p4w_ref, p4b_ref, p5w_ref, p5b_ref,
               n3g_ref, n3b_ref,
               wqkv_ref, bqkv_ref, wo_ref, bo_ref, t1g_ref, t1b_ref,
               f1w_ref, f1b_ref, f2w_ref, f2b_ref, t2g_ref, t2b_ref,
               p6w_ref, p6b_ref,
               out6_ref, loss_ref):
        MK = eps_ref.shape[0]            # M * K rows (row order (m, k))
        M = MK // K
        NK = n_agents * K

        # ---------------- input projections (pro1 -> relu -> pro2) ----------
        h1 = jnp.dot(x_ref[...], p1w_ref[...], preferred_element_type=F32) + p1b_ref[...]
        h1 = jnp.maximum(h1, 0.0)
        enc = jnp.dot(h1, p2w_ref[...], preferred_element_type=F32) + p2b_ref[...]

        # ---------------- two GCN layers with residual + LayerNorm ----------
        ahat = ahat_ref[...]             # D^-1/2 (A+I) D^-1/2, precomputed

        vw = jnp.dot(enc, g1w_ref[...], preferred_element_type=F32)
        g1 = jnp.dot(ahat, vw, preferred_element_type=F32)
        g1 = _layernorm(jnp.maximum(g1, 0.0), g1g_ref[...], g1b_ref[...])
        z = _layernorm(g1 + enc, n1g_ref[...], n1b_ref[...])

        vw = jnp.dot(z, g2w_ref[...], preferred_element_type=F32)
        g2 = jnp.dot(ahat, vw, preferred_element_type=F32)
        g2 = _layernorm(jnp.maximum(g2, 0.0), g2g_ref[...], g2b_ref[...])
        z = _layernorm(g2 + z, n2g_ref[...], n2b_ref[...])            # (M, H)

        # ---------------- repeat K times + VAE reparameterisation -----------
        # expansion matrix generated in-kernel via iota range checks (no DMA):
        # expand[r, m] = 1  iff  m*K <= r < (m+1)*K   (rows ordered (m, k))
        er = jax.lax.broadcasted_iota(jnp.int32, (MK, M), 0)
        ec = jax.lax.broadcasted_iota(jnp.int32, (MK, M), 1)
        ed = er - ec * K
        expand = jnp.where((ed >= 0) & (ed < K), 1.0, 0.0).astype(F32)
        zK = jnp.dot(expand, z, preferred_element_type=F32)           # (MK, H)

        mu = jnp.dot(zK, p3w_ref[...], preferred_element_type=F32) + p3b_ref[...]
        lv = jnp.dot(zK, p4w_ref[...], preferred_element_type=F32) + p4b_ref[...]
        Z = mu + eps_ref[...] * jnp.exp(0.5 * lv)

        h5 = jnp.dot(Z, p5w_ref[...], preferred_element_type=F32) + p5b_ref[...]
        src0 = _layernorm(jnp.maximum(h5, 0.0) + zK, n3g_ref[...], n3b_ref[...])

        # ---------------- transformer encoder layer (post-norm) -------------
        # fused QKV projection (1/sqrt(hd) already folded into the Q columns)
        qkv = jnp.dot(src0, wqkv_ref[...], preferred_element_type=F32) + bqkv_ref[...]
        q = qkv[:, 0:H]
        k = qkv[:, H:2 * H].astype(BF16)
        v = qkv[:, 2 * H:3 * H].astype(BF16)

        # "attend only within the same K sample" mask from two tiny vectors
        mask_same_k = kq_ref[...] == kk_ref[...]                       # (MK, MK)
        col = jax.lax.broadcasted_iota(jnp.int32, (1, H), 1)

        att = None
        for h in range(nhead):                       # statically unrolled
            sel = (col >= h * hd) & (col < (h + 1) * hd)               # (1, H)
            q_h = jnp.where(sel, q, 0.0).astype(BF16)                  # head channels only
            s_h = jax.lax.dot_general(q_h, k, (((1,), (1,)), ((), ())),
                                      preferred_element_type=F32)      # (MK, MK)
            s_h = jnp.where(mask_same_k, s_h, NEG_INF)
            m_h = jnp.max(s_h, axis=-1, keepdims=True)
            e_h = jnp.exp(s_h - m_h)
            inv_h = pl.reciprocal(jnp.sum(e_h, axis=-1, keepdims=True), approx=True)
            o_h = jnp.dot(e_h.astype(BF16), v, preferred_element_type=F32) * inv_h
            o_h = jnp.where(sel, o_h, 0.0)           # keep head-h channels
            att = o_h if att is None else att + o_h                    # concat-of-heads
        att = jnp.dot(att.astype(BF16), wo_ref[...],
                      preferred_element_type=F32) + bo_ref[...]
        # TODO(synk): nn.Dropout (p=0.1, train mode) inside the encoder layer
        # is omitted; eval-mode semantics are used.
        src = _layernorm(src0 + att, t1g_ref[...], t1b_ref[...])

        # relu FFN: bf16 MXU operands, f32 accumulation and elementwise
        ff = jnp.dot(src.astype(BF16), f1w_ref[...],
                     preferred_element_type=F32) + f1b_ref[...]
        ff = jnp.maximum(ff, 0.0)
        ff = jnp.dot(ff.astype(BF16), f2w_ref[...],
                     preferred_element_type=F32) + f2b_ref[...]
        src = _layernorm(src + ff, t2g_ref[...], t2b_ref[...])

        # ---------------- pro6 + trajectory output --------------------------
        out6 = jnp.dot(src, p6w_ref[...], preferred_element_type=F32) + p6b_ref[...]
        out6_ref[...] = out6                                           # (MK, pred)

        # ---------------- fused losses --------------------------------------
        # trajectory RMSE: rows ordered (f, n, k); sum squared error over f
        d = out6 - tar_ref[...]
        sq = d * d
        acc = sq[0:NK, :]
        for f in range(1, fin):
            acc = acc + sq[f * NK:(f + 1) * NK, :]
        rmse = jnp.sqrt(acc)                                           # (NK, pred)
        traj_loss = jnp.sum(jnp.sum(rmse, axis=-1, keepdims=True),
                            axis=0, keepdims=True) / float(NK)

        # KL term: -0.5 * mean_{m,k} sum_h (1 + lv - mu^2 - exp(lv))
        kl_row = jnp.sum(1.0 + lv - mu * mu - jnp.exp(lv), axis=-1, keepdims=True)
        kl_loss = -0.5 * jnp.sum(kl_row, axis=0, keepdims=True) / float(MK)

        # graph BCE-with-logits on (Zmean @ Zmean^T, ADJ), mean reduction.
        # pool[m, r] = 1/K  iff  m*K <= r < (m+1)*K  (generated in-kernel)
        pr = jax.lax.broadcasted_iota(jnp.int32, (M, MK), 0)
        pc = jax.lax.broadcasted_iota(jnp.int32, (M, MK), 1)
        pd = pc - pr * K
        pool = jnp.where((pd >= 0) & (pd < K), 1.0 / K, 0.0).astype(F32)
        zmean = jnp.dot(pool, Z, preferred_element_type=F32)           # (M, H)
        logits = jax.lax.dot_general(zmean, zmean, (((1,), (1,)), ((), ())),
                                     preferred_element_type=F32)       # (M, M)
        y = adjn_ref[...]
        bce = (jnp.maximum(logits, 0.0) - logits * y
               + jnp.log(1.0 + jnp.exp(-jnp.abs(logits))))
        g_loss = jnp.sum(jnp.sum(bce, axis=-1, keepdims=True),
                         axis=0, keepdims=True) / float(M * M)

        loss_ref[...] = traj_loss + kl_loss + g_loss

    return kernel


# --------------------------- model wrapper ----------------------------------

class Args:
    obs_length = 8
    pred_length = 8
    feats_in = 2
    feats_out = 2
    feats_hidden = 32
    K = 10                  # Traj_loss hard-codes a repeat of 10 on the K axis
    nhead = 8
    dim_feedforward = 2048  # nn.TransformerEncoderLayer default


def init_params(key, args):
    H = args.feats_hidden
    ks = iter(jax.random.split(key, 32))

    def dense(i, o):
        w = jax.random.normal(next(ks), (i, o), F32) * (1.0 / (i ** 0.5))
        return w, jnp.zeros((1, o), F32)

    p = {}
    p["pro1"] = dense(args.obs_length, H)
    p["pro2"] = dense(H, H)
    p["pro3"] = dense(H, H)
    p["pro4"] = dense(H, H)
    p["pro5"] = dense(H, H)
    p["pro6"] = dense(H, args.pred_length)
    # GcnLayer: weight = torch.randn(in, out), LayerNorm(out)
    p["gcn1_w"] = jax.random.normal(next(ks), (H, H), F32)
    p["gcn2_w"] = jax.random.normal(next(ks), (H, H), F32)
    for n in ("gcn1", "gcn2", "norm1", "norm2", "norm3", "tln1", "tln2"):
        p[n + "_g"] = jnp.ones((1, H), F32)
        p[n + "_b"] = jnp.zeros((1, H), F32)
    # TransformerEncoderLayer (1 layer, post-norm, relu FFN)
    p["attn_wq"], p["attn_bq"] = dense(H, H)
    p["attn_wk"], p["attn_bk"] = dense(H, H)
    p["attn_wv"], p["attn_bv"] = dense(H, H)
    p["attn_wo"], p["attn_bo"] = dense(H, H)
    p["ffn1"] = dense(H, args.dim_feedforward)
    p["ffn2"] = dense(args.dim_feedforward, H)
    return p


def glrp_forward(params, args, x_seq, adj_seq, key):
    obs, pred = args.obs_length, args.pred_length
    fin, fout = args.feats_in, args.feats_out
    assert fin == fout, "trajectory loss slicing assumes feats_in == feats_out"
    H, K, nhead = args.feats_hidden, args.K, args.nhead
    hd = H // nhead
    n_agents = x_seq.shape[1]
    M = fin * n_agents
    MK = M * K

    batch_in = x_seq[:obs, :, :fin]                     # (obs, N, fin)
    tar_y = x_seq[obs:, :, :fout]                       # (pred, N, fout)

    # block-diagonal adjacency, min-max normalised (matches the reference)
    adj_last = adj_seq[-1].astype(F32)
    adj_blk = jnp.kron(jnp.eye(fin, dtype=F32), adj_last)              # (M, M)
    ADJ = (adj_blk - adj_blk.min()) / (adj_blk.max() - adj_blk.min())

    # symmetric GCN normalisation, shared by both GCN layers (precomputed once)
    a_self = ADJ + jnp.eye(M, dtype=F32)
    dinv = jax.lax.rsqrt(jnp.sum(a_self, axis=1))
    a_hat = dinv[:, None] * a_self * dinv[None, :]

    # (obs, N, fin) -> (fin, N, obs) -> (M, obs); rows ordered (f, n)
    x2d = jnp.transpose(batch_in, (2, 1, 0)).reshape(M, obs)

    # torch.randn_like analogue for the reparameterisation trick
    eps = jax.random.normal(key, (MK, H), F32)

    # tiny same-K index vectors (< 1 KiB total); rows ordered (m, k) => k = r%K.
    # Everything else (expand/pool/head masks) is generated inside the kernel.
    kid = (jnp.arange(MK, dtype=jnp.int32) % K).astype(F32)
    kq = kid.reshape(MK, 1)
    kk = kid.reshape(1, MK)

    # target slab with the same (f, n, k) row ordering as the pro6 output
    tar_slab = jnp.broadcast_to(
        jnp.transpose(tar_y, (2, 1, 0))[:, :, None, :],
        (fout, n_agents, K, pred)).reshape(fout * n_agents * K, pred)

    # fused QKV projection with 1/sqrt(head_dim) folded into the Q columns;
    # attention output projection and FFN weights as bf16 MXU operands
    scale = 1.0 / float(hd) ** 0.5
    wqkv = jnp.concatenate([params["attn_wq"] * scale, params["attn_wk"],
                            params["attn_wv"]], axis=1)
    bqkv = jnp.concatenate([params["attn_bq"] * scale, params["attn_bk"],
                            params["attn_bv"]], axis=1)
    wo = params["attn_wo"].astype(BF16)
    f1w = params["ffn1"][0].astype(BF16)
    f2w = params["ffn2"][0].astype(BF16)

    inputs = (
        x2d, a_hat, ADJ, eps, kq, kk, tar_slab,
        params["pro1"][0], params["pro1"][1], params["pro2"][0], params["pro2"][1],
        params["gcn1_w"], params["gcn1_g"], params["gcn1_b"],
        params["norm1_g"], params["norm1_b"],
        params["gcn2_w"], params["gcn2_g"], params["gcn2_b"],
        params["norm2_g"], params["norm2_b"],
        params["pro3"][0], params["pro3"][1],
        params["pro4"][0], params["pro4"][1],
        params["pro5"][0], params["pro5"][1],
        params["norm3_g"], params["norm3_b"],
        wqkv, bqkv, wo, params["attn_bo"],
        params["tln1_g"], params["tln1_b"],
        f1w, params["ffn1"][1], f2w, params["ffn2"][1],
        params["tln2_g"], params["tln2_b"],
        params["pro6"][0], params["pro6"][1],
    )

    kernel = _make_glrp_kernel(hidden=H, nhead=nhead, K=K,
                               n_agents=n_agents, fin=fin)
    out6, loss = pl.pallas_call(
        kernel,
        out_shape=(jax.ShapeDtypeStruct((MK, pred), F32),
                   jax.ShapeDtypeStruct((1, 1), F32)),
        compiler_params=pltpu.CompilerParams(vmem_limit_bytes=32 * 1024 * 1024),
    )(*inputs)

    # final reshape/permute of the tiny (MK, pred) slab is plain XLA
    traj = jnp.transpose(out6.reshape(fin, n_agents, K, pred), (3, 1, 2, 0))
    return traj, loss[0, 0]


if __name__ == "__main__":
    args = Args()
    key = jax.random.PRNGKey(0)
    kp, kx, ka, kz = jax.random.split(key, 4)

    params = init_params(kp, args)

    n_agents = 4
    T = args.obs_length + args.pred_length
    x_seq = jax.random.normal(kx, (T, n_agents, args.feats_in), F32)   # inputs[0]
    adj_seq = jax.random.uniform(ka, (3, n_agents, n_agents), F32)     # inputs[2]

    fwd = jax.jit(lambda p, x, a, k: glrp_forward(p, args, x, a, k))
    traj, loss = fwd(params, x_seq, adj_seq, kz)
    traj = jax.block_until_ready(traj)
    loss = jax.block_until_ready(loss)

    assert traj.shape == (args.pred_length, n_agents, args.K, args.feats_in)
    assert bool(jnp.isfinite(loss))
    print("KERNEL_OK")
</pallas_src>

<mosaic_0001>
module attributes {stable_mosaic.version = 11 : i64} {
  func.func @kernel(%arg0: memref<8x8xf32, #tpu.memory_space<vmem>>, %arg1: memref<8x8xf32, #tpu.memory_space<vmem>>, %arg2: memref<8x8xf32, #tpu.memory_space<vmem>>, %arg3: memref<80x32xf32, #tpu.memory_space<vmem>>, %arg4: memref<80x1xf32, #tpu.memory_space<vmem>>, %arg5: memref<1x80xf32, #tpu.memory_space<vmem>>, %arg6: memref<80x8xf32, #tpu.memory_space<vmem>>, %arg7: memref<8x32xf32, #tpu.memory_space<vmem>>, %arg8: memref<1x32xf32, #tpu.memory_space<vmem>>, %arg9: memref<32x32xf32, #tpu.memory_space<vmem>>, %arg10: memref<1x32xf32, #tpu.memory_space<vmem>>, %arg11: memref<32x32xf32, #tpu.memory_space<vmem>>, %arg12: memref<1x32xf32, #tpu.memory_space<vmem>>, %arg13: memref<1x32xf32, #tpu.memory_space<vmem>>, %arg14: memref<1x32xf32, #tpu.memory_space<vmem>>, %arg15: memref<1x32xf32, #tpu.memory_space<vmem>>, %arg16: memref<32x32xf32, #tpu.memory_space<vmem>>, %arg17: memref<1x32xf32, #tpu.memory_space<vmem>>, %arg18: memref<1x32xf32, #tpu.memory_space<vmem>>, %arg19: memref<1x32xf32, #tpu.memory_space<vmem>>, %arg20: memref<1x32xf32, #tpu.memory_space<vmem>>, %arg21: memref<32x32xf32, #tpu.memory_space<vmem>>, %arg22: memref<1x32xf32, #tpu.memory_space<vmem>>, %arg23: memref<32x32xf32, #tpu.memory_space<vmem>>, %arg24: memref<1x32xf32, #tpu.memory_space<vmem>>, %arg25: memref<32x32xf32, #tpu.memory_space<vmem>>, %arg26: memref<1x32xf32, #tpu.memory_space<vmem>>, %arg27: memref<1x32xf32, #tpu.memory_space<vmem>>, %arg28: memref<1x32xf32, #tpu.memory_space<vmem>>, %arg29: memref<32x96xf32, #tpu.memory_space<vmem>>, %arg30: memref<1x96xf32, #tpu.memory_space<vmem>>, %arg31: memref<32x32xbf16, #tpu.memory_space<vmem>>, %arg32: memref<1x32xf32, #tpu.memory_space<vmem>>, %arg33: memref<1x32xf32, #tpu.memory_space<vmem>>, %arg34: memref<1x32xf32, #tpu.memory_space<vmem>>, %arg35: memref<32x2048xbf16, #tpu.memory_space<vmem>>, %arg36: memref<1x2048xf32, #tpu.memory_space<vmem>>, %arg37: memref<2048x32xbf16, #tpu.memory_space<vmem>>, %arg38: memref<1x32xf32, #tpu.memory_space<vmem>>, %arg39: memref<1x32xf32, #tpu.memory_space<vmem>>, %arg40: memref<1x32xf32, #tpu.memory_space<vmem>>, %arg41: memref<32x8xf32, #tpu.memory_space<vmem>>, %arg42: memref<1x8xf32, #tpu.memory_space<vmem>>, %arg43: memref<80x8xf32, #tpu.memory_space<vmem>>, %arg44: memref<1x1xf32, #tpu.memory_space<vmem>>) attributes {dimension_semantics = [], scalar_prefetch = 0 : i64, scratch_operands = 0 : i64, tpu.core_type = #tpu.core_type<tc>} {
    %c0 = arith.constant 0 : index
    %c0_0 = arith.constant 0 : index
    %0 = vector.load %arg0[%c0, %c0_0] : memref<8x8xf32, #tpu.memory_space<vmem>>, vector<8x8xf32>
    %c0_1 = arith.constant 0 : index
    %c0_2 = arith.constant 0 : index
    %1 = vector.load %arg7[%c0_1, %c0_2] : memref<8x32xf32, #tpu.memory_space<vmem>>, vector<8x32xf32>
    %cst = arith.constant dense<0.000000e+00> : vector<8x32xf32>
    %2 = tpu.matmul %0, %1, %cst {dimension_numbers = #tpu.dot_dimension_numbers<[1], [0], [0], [1], [0, 0, 1, 1], [], []>} : vector<8x8xf32>, vector<8x32xf32>, vector<8x32xf32> -> vector<8x32xf32>
    %c0_3 = arith.constant 0 : index
    %c0_4 = arith.constant 0 : index
    %3 = vector.load %arg8[%c0_3, %c0_4] : memref<1x32xf32, #tpu.memory_space<vmem>>, vector<1x32xf32>
    %4 = vector.broadcast %3 : vector<1x32xf32> to vector<8x32xf32>
    %5 = arith.addf %2, %4 : vector<8x32xf32>
    %cst_5 = arith.constant 0.000000e+00 : f32
    %6 = vector.broadcast %cst_5 : f32 to vector<8x32xf32>
    %7 = arith.maximumf %5, %6 : vector<8x32xf32>
    %c0_6 = arith.constant 0 : index
    %c0_7 = arith.constant 0 : index
    %8 = vector.load %arg9[%c0_6, %c0_7] : memref<32x32xf32, #tpu.memory_space<vmem>>, vector<32x32xf32>
    %cst_8 = arith.constant dense<0.000000e+00> : vector<8x32xf32>
    %9 = tpu.matmul %7, %8, %cst_8 {dimension_numbers = #tpu.dot_dimension_numbers<[1], [0], [0], [1], [0, 0, 1, 1], [], []>} : vector<8x32xf32>, vector<32x32xf32>, vector<8x32xf32> -> vector<8x32xf32>
    %c0_9 = arith.constant 0 : index
    %c0_10 = arith.constant 0 : index
    %10 = vector.load %arg10[%c0_9, %c0_10] : memref<1x32xf32, #tpu.memory_space<vmem>>, vector<1x32xf32>
    %11 = vector.broadcast %10 : vector<1x32xf32> to vector<8x32xf32>
    %12 = arith.addf %9, %11 : vector<8x32xf32>
    %c0_11 = arith.constant 0 : index
    %c0_12 = arith.constant 0 : index
    %13 = vector.load %arg1[%c0_11, %c0_12] : memref<8x8xf32, #tpu.memory_space<vmem>>, vector<8x8xf32>
    %c0_13 = arith.constant 0 : index
    %c0_14 = arith.constant 0 : index
    %14 = vector.load %arg11[%c0_13, %c0_14] : memref<32x32xf32, #tpu.memory_space<vmem>>, vector<32x32xf32>
    %cst_15 = arith.constant dense<0.000000e+00> : vector<8x32xf32>
    %15 = tpu.matmul %12, %14, %cst_15 {dimension_numbers = #tpu.dot_dimension_numbers<[1], [0], [0], [1], [0, 0, 1, 1], [], []>} : vector<8x32xf32>, vector<32x32xf32>, vector<8x32xf32> -> vector<8x32xf32>
    %cst_16 = arith.constant dense<0.000000e+00> : vector<8x32xf32>
    %16 = tpu.matmul %13, %15, %cst_16 {dimension_numbers = #tpu.dot_dimension_numbers<[1], [0], [0], [1], [0, 0, 1, 1], [], []>} : vector<8x8xf32>, vector<8x32xf32>, vector<8x32xf32> -> vector<8x32xf32>
    %cst_17 = arith.constant 0.000000e+00 : f32
    %17 = vector.broadcast %cst_17 : f32 to vector<8x32xf32>
    %18 = arith.maximumf %16, %17 : vector<8x32xf32>
    %c0_18 = arith.constant 0 : index
    %c0_19 = arith.constant 0 : index
    %19 = vector.load %arg12[%c0_18, %c0_19] : memref<1x32xf32, #tpu.memory_space<vmem>>, vector<1x32xf32>
    %c0_20 = arith.constant 0 : index
    %c0_21 = arith.constant 0 : index
    %20 = vector.load %arg13[%c0_20, %c0_21] : memref<1x32xf32, #tpu.memory_space<vmem>>, vector<1x32xf32>
    %cst_22 = arith.constant dense<0.000000e+00> : vector<8xf32>
    %21 = vector.multi_reduction <add>, %18, %cst_22 [1] : vector<8x32xf32> to vector<8xf32>
    %22 = vector.shape_cast %21 : vector<8xf32> to vector<8x1xf32>
    %cst_23 = arith.constant 3.200000e+01 : f32
    %23 = vector.broadcast %cst_23 : f32 to vector<8x1xf32>
    %24 = arith.divf %22, %23 : vector<8x1xf32>
    %25 = vector.broadcast %24 : vector<8x1xf32> to vector<8x32xf32>
    %26 = arith.subf %18, %25 : vector<8x32xf32>
    %27 = arith.mulf %26, %26 : vector<8x32xf32>
    %cst_24 = arith.constant dense<0.000000e+00> : vector<8xf32>
    %28 = vector.multi_reduction <add>, %27, %cst_24 [1] : vector<8x32xf32> to vector<8xf32>
    %29 = vector.shape_cast %28 : vector<8xf32> to vector<8x1xf32>
    %cst_25 = arith.constant 3.200000e+01 : f32
    %30 = vector.broadcast %cst_25 : f32 to vector<8x1xf32>
    %31 = arith.divf %29, %30 : vector<8x1xf32>
    %32 = vector.broadcast %24 : vector<8x1xf32> to vector<8x32xf32>
    %33 = arith.subf %18, %32 : vector<8x32xf32>
    %cst_26 = arith.constant 9.99999974E-6 : f32
    %34 = vector.broadcast %cst_26 : f32 to vector<8x1xf32>
    %35 = arith.addf %31, %34 : vector<8x1xf32>
    %36 = math.rsqrt %35 : vector<8x1xf32>
    %37 = vector.broadcast %36 : vector<8x1xf32> to vector<8x32xf32>
    %38 = arith.mulf %33, %37 : vector<8x32xf32>
    %39 = vector.broadcast %19 : vector<1x32xf32> to vector<8x32xf32>
    %40 = arith.mulf %38, %39 : vector<8x32xf32>
    %41 = vector.broadcast %20 : vector<1x32xf32> to vector<8x32xf32>
    %42 = arith.addf %40, %41 : vector<8x32xf32>
    %43 = arith.addf %42, %12 : vector<8x32xf32>
    %c0_27 = arith.constant 0 : index
    %c0_28 = arith.constant 0 : index
    %44 = vector.load %arg14[%c0_27, %c0_28] : memref<1x32xf32, #tpu.memory_space<vmem>>, vector<1x32xf32>
    %c0_29 = arith.constant 0 : index
    %c0_30 = arith.constant 0 : index
    %45 = vector.load %arg15[%c0_29, %c0_30] : memref<1x32xf32, #tpu.memory_space<vmem>>, vector<1x32xf32>
    %cst_31 = arith.constant dense<0.000000e+00> : vector<8xf32>
    %46 = vector.multi_reduction <add>, %43, %cst_31 [1] : vector<8x32xf32> to vector<8xf32>
    %47 = vector.shape_cast %46 : vector<8xf32> to vector<8x1xf32>
    %cst_32 = arith.constant 3.200000e+01 : f32
    %48 = vector.broadcast %cst_32 : f32 to vector<8x1xf32>
    %49 = arith.divf %47, %48 : vector<8x1xf32>
    %50 = vector.broadcast %49 : vector<8x1xf32> to vector<8x32xf32>
    %51 = arith.subf %43, %50 : vector<8x32xf32>
    %52 = arith.mulf %51, %51 : vector<8x32xf32>
    %cst_33 = arith.constant dense<0.000000e+00> : vector<8xf32>
    %53 = vector.multi_reduction <add>, %52, %cst_33 [1] : vector<8x32xf32> to vector<8xf32>
    %54 = vector.shape_cast %53 : vector<8xf32> to vector<8x1xf32>
    %cst_34 = arith.constant 3.200000e+01 : f32
    %55 = vector.broadcast %cst_34 : f32 to vector<8x1xf32>
    %56 = arith.divf %54, %55 : vector<8x1xf32>
    %57 = vector.broadcast %49 : vector<8x1xf32> to vector<8x32xf32>
    %58 = arith.subf %43, %57 : vector<8x32xf32>
    %cst_35 = arith.constant 9.99999974E-6 : f32
    %59 = vector.broadcast %cst_35 : f32 to vector<8x1xf32>
    %60 = arith.addf %56, %59 : vector<8x1xf32>
    %61 = math.rsqrt %60 : vector<8x1xf32>
    %62 = vector.broadcast %61 : vector<8x1xf32> to vector<8x32xf32>
    %63 = arith.mulf %58, %62 : vector<8x32xf32>
    %64 = vector.broadcast %44 : vector<1x32xf32> to vector<8x32xf32>
    %65 = arith.mulf %63, %64 : vector<8x32xf32>
    %66 = vector.broadcast %45 : vector<1x32xf32> to vector<8x32xf32>
    %67 = arith.addf %65, %66 : vector<8x32xf32>
    %c0_36 = arith.constant 0 : index
    %c0_37 = arith.constant 0 : index
    %68 = vector.load %arg16[%c0_36, %c0_37] : memref<32x32xf32, #tpu.memory_space<vmem>>, vector<32x32xf32>
    %cst_38 = arith.constant dense<0.000000e+00> : vector<8x32xf32>
    %69 = tpu.matmul %67, %68, %cst_38 {dimension_numbers = #tpu.dot_dimension_numbers<[1], [0], [0], [1], [0, 0, 1, 1], [], []>} : vector<8x32xf32>, vector<32x32xf32>, vector<8x32xf32> -> vector<8x32xf32>
    %cst_39 = arith.constant dense<0.000000e+00> : vector<8x32xf32>
    %70 = tpu.matmul %13, %69, %cst_39 {dimension_numbers = #tpu.dot_dimension_numbers<[1], [0], [0], [1], [0, 0, 1, 1], [], []>} : vector<8x8xf32>, vector<8x32xf32>, vector<8x32xf32> -> vector<8x32xf32>
    %cst_40 = arith.constant 0.000000e+00 : f32
    %71 = vector.broadcast %cst_40 : f32 to vector<8x32xf32>
    %72 = arith.maximumf %70, %71 : vector<8x32xf32>
    %c0_41 = arith.constant 0 : index
    %c0_42 = arith.constant 0 : index
    %73 = vector.load %arg17[%c0_41, %c0_42] : memref<1x32xf32, #tpu.memory_space<vmem>>, vector<1x32xf32>
    %c0_43 = arith.constant 0 : index
    %c0_44 = arith.constant 0 : index
    %74 = vector.load %arg18[%c0_43, %c0_44] : memref<1x32xf32, #tpu.memory_space<vmem>>, vector<1x32xf32>
    %cst_45 = arith.constant dense<0.000000e+00> : vector<8xf32>
    %75 = vector.multi_reduction <add>, %72, %cst_45 [1] : vector<8x32xf32> to vector<8xf32>
    %76 = vector.shape_cast %75 : vector<8xf32> to vector<8x1xf32>
    %cst_46 = arith.constant 3.200000e+01 : f32
    %77 = vector.broadcast %cst_46 : f32 to vector<8x1xf32>
    %78 = arith.divf %76, %77 : vector<8x1xf32>
    %79 = vector.broadcast %78 : vector<8x1xf32> to vector<8x32xf32>
    %80 = arith.subf %72, %79 : vector<8x32xf32>
    %81 = arith.mulf %80, %80 : vector<8x32xf32>
    %cst_47 = arith.constant dense<0.000000e+00> : vector<8xf32>
    %82 = vector.multi_reduction <add>, %81, %cst_47 [1] : vector<8x32xf32> to vector<8xf32>
    %83 = vector.shape_cast %82 : vector<8xf32> to vector<8x1xf32>
    %cst_48 = arith.constant 3.200000e+01 : f32
    %84 = vector.broadcast %cst_48 : f32 to vector<8x1xf32>
    %85 = arith.divf %83, %84 : vector<8x1xf32>
    %86 = vector.broadcast %78 : vector<8x1xf32> to vector<8x32xf32>
    %87 = arith.subf %72, %86 : vector<8x32xf32>
    %cst_49 = arith.constant 9.99999974E-6 : f32
    %88 = vector.broadcast %cst_49 : f32 to vector<8x1xf32>
    %89 = arith.addf %85, %88 : vector<8x1xf32>
    %90 = math.rsqrt %89 : vector<8x1xf32>
    %91 = vector.broadcast %90 : vector<8x1xf32> to vector<8x32xf32>
    %92 = arith.mulf %87, %91 : vector<8x32xf32>
    %93 = vector.broadcast %73 : vector<1x32xf32> to vector<8x32xf32>
    %94 = arith.mulf %92, %93 : vector<8x32xf32>
    %95 = vector.broadcast %74 : vector<1x32xf32> to vector<8x32xf32>
    %96 = arith.addf %94, %95 : vector<8x32xf32>
    %97 = arith.addf %96, %67 : vector<8x32xf32>
    %c0_50 = arith.constant 0 : index
    %c0_51 = arith.constant 0 : index
    %98 = vector.load %arg19[%c0_50, %c0_51] : memref<1x32xf32, #tpu.memory_space<vmem>>, vector<1x32xf32>
    %c0_52 = arith.constant 0 : index
    %c0_53 = arith.constant 0 : index
    %99 = vector.load %arg20[%c0_52, %c0_53] : memref<1x32xf32, #tpu.memory_space<vmem>>, vector<1x32xf32>
    %cst_54 = arith.constant dense<0.000000e+00> : vector<8xf32>
    %100 = vector.multi_reduction <add>, %97, %cst_54 [1] : vector<8x32xf32> to vector<8xf32>
    %101 = vector.shape_cast %100 : vector<8xf32> to vector<8x1xf32>
    %cst_55 = arith.constant 3.200000e+01 : f32
    %102 = vector.broadcast %cst_55 : f32 to vector<8x1xf32>
    %103 = arith.divf %101, %102 : vector<8x1xf32>
    %104 = vector.broadcast %103 : vector<8x1xf32> to vector<8x32xf32>
    %105 = arith.subf %97, %104 : vector<8x32xf32>
    %106 = arith.mulf %105, %105 : vector<8x32xf32>
    %cst_56 = arith.constant dense<0.000000e+00> : vector<8xf32>
    %107 = vector.multi_reduction <add>, %106, %cst_56 [1] : vector<8x32xf32> to vector<8xf32>
    %108 = vector.shape_cast %107 : vector<8xf32> to vector<8x1xf32>
    %cst_57 = arith.constant 3.200000e+01 : f32
    %109 = vector.broadcast %cst_57 : f32 to vector<8x1xf32>
    %110 = arith.divf %108, %109 : vector<8x1xf32>
    %111 = vector.broadcast %103 : vector<8x1xf32> to vector<8x32xf32>
    %112 = arith.subf %97, %111 : vector<8x32xf32>
    %cst_58 = arith.constant 9.99999974E-6 : f32
    %113 = vector.broadcast %cst_58 : f32 to vector<8x1xf32>
    %114 = arith.addf %110, %113 : vector<8x1xf32>
    %115 = math.rsqrt %114 : vector<8x1xf32>
    %116 = vector.broadcast %115 : vector<8x1xf32> to vector<8x32xf32>
    %117 = arith.mulf %112, %116 : vector<8x32xf32>
    %118 = vector.broadcast %98 : vector<1x32xf32> to vector<8x32xf32>
    %119 = arith.mulf %117, %118 : vector<8x32xf32>
    %120 = vector.broadcast %99 : vector<1x32xf32> to vector<8x32xf32>
    %121 = arith.addf %119, %120 : vector<8x32xf32>
    %122 = tpu.iota {dimensions = array<i32: 0>} : vector<80x8xi32>
    %123 = tpu.iota {dimensions = array<i32: 1>} : vector<80x8xi32>
    %c10_i32 = arith.constant 10 : i32
    %124 = vector.broadcast %c10_i32 : i32 to vector<80x8xi32>
    %125 = arith.muli %123, %124 : vector<80x8xi32>
    %126 = arith.subi %122, %125 : vector<80x8xi32>
    %c0_i32 = arith.constant 0 : i32
    %127 = vector.broadcast %c0_i32 : i32 to vector<80x8xi32>
    %128 = arith.cmpi sge, %126, %127 : vector<80x8xi32>
    %c10_i32_59 = arith.constant 10 : i32
    %129 = vector.broadcast %c10_i32_59 : i32 to vector<80x8xi32>
    %130 = arith.cmpi slt, %126, %129 : vector<80x8xi32>
    %131 = arith.andi %128, %130 : vector<80x8xi1>
    %cst_60 = arith.constant 1.000000e+00 : f32
    %cst_61 = arith.constant 0.000000e+00 : f32
    %132 = vector.broadcast %cst_60 : f32 to vector<80x8xf32>
    %133 = vector.broadcast %cst_61 : f32 to vector<80x8xf32>
    %134 = arith.select %131, %132, %133 : vector<80x8xi1>, vector<80x8xf32>
    %cst_62 = arith.constant dense<0.000000e+00> : vector<80x32xf32>
    %135 = tpu.matmul %134, %121, %cst_62 {dimension_numbers = #tpu.dot_dimension_numbers<[1], [0], [0], [1], [0, 0, 1, 1], [], []>} : vector<80x8xf32>, vector<8x32xf32>, vector<80x32xf32> -> vector<80x32xf32>
    %c0_63 = arith.constant 0 : index
    %c0_64 = arith.constant 0 : index
    %136 = vector.load %arg21[%c0_63, %c0_64] : memref<32x32xf32, #tpu.memory_space<vmem>>, vector<32x32xf32>
    %cst_65 = arith.constant dense<0.000000e+00> : vector<80x32xf32>
    %137 = tpu.matmul %135, %136, %cst_65 {dimension_numbers = #tpu.dot_dimension_numbers<[1], [0], [0], [1], [0, 0, 1, 1], [], []>} : vector<80x32xf32>, vector<32x32xf32>, vector<80x32xf32> -> vector<80x32xf32>
    %c0_66 = arith.constant 0 : index
    %c0_67 = arith.constant 0 : index
    %138 = vector.load %arg22[%c0_66, %c0_67] : memref<1x32xf32, #tpu.memory_space<vmem>>, vector<1x32xf32>
    %139 = vector.broadcast %138 : vector<1x32xf32> to vector<80x32xf32>
    %140 = arith.addf %137, %139 : vector<80x32xf32>
    %c0_68 = arith.constant 0 : index
    %c0_69 = arith.constant 0 : index
    %141 = vector.load %arg23[%c0_68, %c0_69] : memref<32x32xf32, #tpu.memory_space<vmem>>, vector<32x32xf32>
    %cst_70 = arith.constant dense<0.000000e+00> : vector<80x32xf32>
    %142 = tpu.matmul %135, %141, %cst_70 {dimension_numbers = #tpu.dot_dimension_numbers<[1], [0], [0], [1], [0, 0, 1, 1], [], []>} : vector<80x32xf32>, vector<32x32xf32>, vector<80x32xf32> -> vector<80x32xf32>
    %c0_71 = arith.constant 0 : index
    %c0_72 = arith.constant 0 : index
    %143 = vector.load %arg24[%c0_71, %c0_72] : memref<1x32xf32, #tpu.memory_space<vmem>>, vector<1x32xf32>
    %144 = vector.broadcast %143 : vector<1x32xf32> to vector<80x32xf32>
    %145 = arith.addf %142, %144 : vector<80x32xf32>
    %c0_73 = arith.constant 0 : index
    %c0_74 = arith.constant 0 : index
    %146 = vector.load %arg3[%c0_73, %c0_74] : memref<80x32xf32, #tpu.memory_space<vmem>>, vector<80x32xf32>
    %cst_75 = arith.constant 5.000000e-01 : f32
    %147 = vector.broadcast %cst_75 : f32 to vector<80x32xf32>
    %148 = arith.mulf %147, %145 : vector<80x32xf32>
    %149 = math.exp %148 : vector<80x32xf32>
    %150 = arith.mulf %146, %149 : vector<80x32xf32>
    %151 = arith.addf %140, %150 : vector<80x32xf32>
    %c0_76 = arith.constant 0 : index
    %c0_77 = arith.constant 0 : index
    %152 = vector.load %arg25[%c0_76, %c0_77] : memref<32x32xf32, #tpu.memory_space<vmem>>, vector<32x32xf32>
    %cst_78 = arith.constant dense<0.000000e+00> : vector<80x32xf32>
    %153 = tpu.matmul %151, %152, %cst_78 {dimension_numbers = #tpu.dot_dimension_numbers<[1], [0], [0], [1], [0, 0, 1, 1], [], []>} : vector<80x32xf32>, vector<32x32xf32>, vector<80x32xf32> -> vector<80x32xf32>
    %c0_79 = arith.constant 0 : index
    %c0_80 = arith.constant 0 : index
    %154 = vector.load %arg26[%c0_79, %c0_80] : memref<1x32xf32, #tpu.memory_space<vmem>>, vector<1x32xf32>
    %155 = vector.broadcast %154 : vector<1x32xf32> to vector<80x32xf32>
    %156 = arith.addf %153, %155 : vector<80x32xf32>
    %cst_81 = arith.constant 0.000000e+00 : f32
    %157 = vector.broadcast %cst_81 : f32 to vector<80x32xf32>
    %158 = arith.maximumf %156, %157 : vector<80x32xf32>
    %159 = arith.addf %158, %135 : vector<80x32xf32>
    %c0_82 = arith.constant 0 : index
    %c0_83 = arith.constant 0 : index
    %160 = vector.load %arg27[%c0_82, %c0_83] : memref<1x32xf32, #tpu.memory_space<vmem>>, vector<1x32xf32>
    %c0_84 = arith.constant 0 : index
    %c0_85 = arith.constant 0 : index
    %161 = vector.load %arg28[%c0_84, %c0_85] : memref<1x32xf32, #tpu.memory_space<vmem>>, vector<1x32xf32>
    %cst_86 = arith.constant dense<0.000000e+00> : vector<80xf32>
    %162 = vector.multi_reduction <add>, %159, %cst_86 [1] : vector<80x32xf32> to vector<80xf32>
    %163 = vector.shape_cast %162 : vector<80xf32> to vector<80x1xf32>
    %cst_87 = arith.constant 3.200000e+01 : f32
    %164 = vector.broadcast %cst_87 : f32 to vector<80x1xf32>
    %165 = arith.divf %163, %164 : vector<80x1xf32>
    %166 = vector.broadcast %165 : vector<80x1xf32> to vector<80x32xf32>
    %167 = arith.subf %159, %166 : vector<80x32xf32>
    %168 = arith.mulf %167, %167 : vector<80x32xf32>
    %cst_88 = arith.constant dense<0.000000e+00> : vector<80xf32>
    %169 = vector.multi_reduction <add>, %168, %cst_88 [1] : vector<80x32xf32> to vector<80xf32>
    %170 = vector.shape_cast %169 : vector<80xf32> to vector<80x1xf32>
    %cst_89 = arith.constant 3.200000e+01 : f32
    %171 = vector.broadcast %cst_89 : f32 to vector<80x1xf32>
    %172 = arith.divf %170, %171 : vector<80x1xf32>
    %173 = vector.broadcast %165 : vector<80x1xf32> to vector<80x32xf32>
    %174 = arith.subf %159, %173 : vector<80x32xf32>
    %cst_90 = arith.constant 9.99999974E-6 : f32
    %175 = vector.broadcast %cst_90 : f32 to vector<80x1xf32>
    %176 = arith.addf %172, %175 : vector<80x1xf32>
    %177 = math.rsqrt %176 : vector<80x1xf32>
    %178 = vector.broadcast %177 : vector<80x1xf32> to vector<80x32xf32>
    %179 = arith.mulf %174, %178 : vector<80x32xf32>
    %180 = vector.broadcast %160 : vector<1x32xf32> to vector<80x32xf32>
    %181 = arith.mulf %179, %180 : vector<80x32xf32>
    %182 = vector.broadcast %161 : vector<1x32xf32> to vector<80x32xf32>
    %183 = arith.addf %181, %182 : vector<80x32xf32>
    %c0_91 = arith.constant 0 : index
    %c0_92 = arith.constant 0 : index
    %184 = vector.load %arg29[%c0_91, %c0_92] : memref<32x96xf32, #tpu.memory_space<vmem>>, vector<32x96xf32>
    %cst_93 = arith.constant dense<0.000000e+00> : vector<80x96xf32>
    %185 = tpu.matmul %183, %184, %cst_93 {dimension_numbers = #tpu.dot_dimension_numbers<[1], [0], [0], [1], [0, 0, 1, 1], [], []>} : vector<80x32xf32>, vector<32x96xf32>, vector<80x96xf32> -> vector<80x96xf32>
    %c0_94 = arith.constant 0 : index
    %c0_95 = arith.constant 0 : index
    %186 = vector.load %arg30[%c0_94, %c0_95] : memref<1x96xf32, #tpu.memory_space<vmem>>, vector<1x96xf32>
    %187 = vector.broadcast %186 : vector<1x96xf32> to vector<80x96xf32>
    %188 = arith.addf %185, %187 : vector<80x96xf32>
    %189 = vector.extract_strided_slice %188 {offsets = [0, 0], sizes = [80, 32], strides = [1, 1]} : vector<80x96xf32> to vector<80x32xf32>
    %190 = vector.extract_strided_slice %188 {offsets = [0, 32], sizes = [80, 32], strides = [1, 1]} : vector<80x96xf32> to vector<80x32xf32>
    %191 = arith.truncf %190 : vector<80x32xf32> to vector<80x32xbf16>
    %192 = vector.extract_strided_slice %188 {offsets = [0, 64], sizes = [80, 32], strides = [1, 1]} : vector<80x96xf32> to vector<80x32xf32>
    %193 = arith.truncf %192 : vector<80x32xf32> to vector<80x32xbf16>
    %c0_96 = arith.constant 0 : index
    %c0_97 = arith.constant 0 : index
    %194 = vector.load %arg4[%c0_96, %c0_97] : memref<80x1xf32, #tpu.memory_space<vmem>>, vector<80x1xf32>
    %c0_98 = arith.constant 0 : index
    %c0_99 = arith.constant 0 : index
    %195 = vector.load %arg5[%c0_98, %c0_99] : memref<1x80xf32, #tpu.memory_space<vmem>>, vector<1x80xf32>
    %196 = vector.broadcast %194 : vector<80x1xf32> to vector<80x80xf32>
    %197 = vector.broadcast %195 : vector<1x80xf32> to vector<80x80xf32>
    %198 = arith.cmpf oeq, %196, %197 : vector<80x80xf32>
    %199 = tpu.iota {dimensions = array<i32: 1>} : vector<1x32xi32>
    %c0_i32_100 = arith.constant 0 : i32
    %200 = vector.broadcast %c0_i32_100 : i32 to vector<1x32xi32>
    %201 = arith.cmpi sge, %199, %200 : vector<1x32xi32>
    %c4_i32 = arith.constant 4 : i32
    %202 = vector.broadcast %c4_i32 : i32 to vector<1x32xi32>
    %203 = arith.cmpi slt, %199, %202 : vector<1x32xi32>
    %204 = arith.andi %201, %203 : vector<1x32xi1>
    %cst_101 = arith.constant 0.000000e+00 : f32
    %205 = vector.shape_cast %204 : vector<1x32xi1> to vector<1x32xi1>
    %206 = vector.broadcast %205 : vector<1x32xi1> to vector<80x32xi1>
    %207 = vector.broadcast %cst_101 : f32 to vector<80x32xf32>
    %208 = arith.select %206, %189, %207 : vector<80x32xi1>, vector<80x32xf32>
    %209 = arith.truncf %208 : vector<80x32xf32> to vector<80x32xbf16>
    %cst_102 = arith.constant dense<0.000000e+00> : vector<80x80xf32>
    %210 = tpu.matmul %209, %191, %cst_102 {dimension_numbers = #tpu.dot_dimension_numbers<[1], [1], [0], [0], [0, 0, 1, 0], [], []>} : vector<80x32xbf16>, vector<80x32xbf16>, vector<80x80xf32> -> vector<80x80xf32>
    %cst_103 = arith.constant -1.000000e+30 : f32
    %211 = vector.broadcast %cst_103 : f32 to vector<80x80xf32>
    %212 = arith.select %198, %210, %211 : vector<80x80xi1>, vector<80x80xf32>
    %cst_104 = arith.constant dense<0xFF800000> : vector<80xf32>
    %213 = vector.multi_reduction <maximumf>, %212, %cst_104 [1] : vector<80x80xf32> to vector<80xf32>
    %214 = vector.shape_cast %213 : vector<80xf32> to vector<80x1xf32>
    %215 = vector.broadcast %214 : vector<80x1xf32> to vector<80x80xf32>
    %216 = arith.subf %212, %215 : vector<80x80xf32>
    %217 = math.exp %216 : vector<80x80xf32>
    %cst_105 = arith.constant dense<0.000000e+00> : vector<80xf32>
    %218 = vector.multi_reduction <add>, %217, %cst_105 [1] : vector<80x80xf32> to vector<80xf32>
    %219 = vector.shape_cast %218 : vector<80xf32> to vector<80x1xf32>
    %220 = tpu.reciprocal %219 {approx = true} : vector<80x1xf32> -> vector<80x1xf32>
    %221 = arith.truncf %217 : vector<80x80xf32> to vector<80x80xbf16>
    %cst_106 = arith.constant dense<0.000000e+00> : vector<80x32xf32>
    %222 = tpu.matmul %221, %193, %cst_106 {dimension_numbers = #tpu.dot_dimension_numbers<[1], [0], [0], [1], [0, 0, 1, 1], [], []>} : vector<80x80xbf16>, vector<80x32xbf16>, vector<80x32xf32> -> vector<80x32xf32>
    %223 = vector.broadcast %220 : vector<80x1xf32> to vector<80x32xf32>
    %224 = arith.mulf %222, %223 : vector<80x32xf32>
    %cst_107 = arith.constant 0.000000e+00 : f32
    %225 = vector.shape_cast %204 : vector<1x32xi1> to vector<1x32xi1>
    %226 = vector.broadcast %225 : vector<1x32xi1> to vector<80x32xi1>
    %227 = vector.broadcast %cst_107 : f32 to vector<80x32xf32>
    %228 = arith.select %226, %224, %227 : vector<80x32xi1>, vector<80x32xf32>
    %c4_i32_108 = arith.constant 4 : i32
    %229 = vector.broadcast %c4_i32_108 : i32 to vector<1x32xi32>
    %230 = arith.cmpi sge, %199, %229 : vector<1x32xi32>
    %c8_i32 = arith.constant 8 : i32
    %231 = vector.broadcast %c8_i32 : i32 to vector<1x32xi32>
    %232 = arith.cmpi slt, %199, %231 : vector<1x32xi32>
    %233 = arith.andi %230, %232 : vector<1x32xi1>
    %cst_109 = arith.constant 0.000000e+00 : f32
    %234 = vector.shape_cast %233 : vector<1x32xi1> to vector<1x32xi1>
    %235 = vector.broadcast %234 : vector<1x32xi1> to vector<80x32xi1>
    %236 = vector.broadcast %cst_109 : f32 to vector<80x32xf32>
    %237 = arith.select %235, %189, %236 : vector<80x32xi1>, vector<80x32xf32>
    %238 = arith.truncf %237 : vector<80x32xf32> to vector<80x32xbf16>
    %cst_110 = arith.constant dense<0.000000e+00> : vector<80x80xf32>
    %239 = tpu.matmul %238, %191, %cst_110 {dimension_numbers = #tpu.dot_dimension_numbers<[1], [1], [0], [0], [0, 0, 1, 0], [], []>} : vector<80x32xbf16>, vector<80x32xbf16>, vector<80x80xf32> -> vector<80x80xf32>
    %cst_111 = arith.constant -1.000000e+30 : f32
    %240 = vector.broadcast %cst_111 : f32 to vector<80x80xf32>
    %241 = arith.select %198, %239, %240 : vector<80x80xi1>, vector<80x80xf32>
    %cst_112 = arith.constant dense<0xFF800000> : vector<80xf32>
    %242 = vector.multi_reduction <maximumf>, %241, %cst_112 [1] : vector<80x80xf32> to vector<80xf32>
    %243 = vector.shape_cast %242 : vector<80xf32> to vector<80x1xf32>
    %244 = vector.broadcast %243 : vector<80x1xf32> to vector<80x80xf32>
    %245 = arith.subf %241, %244 : vector<80x80xf32>
    %246 = math.exp %245 : vector<80x80xf32>
    %cst_113 = arith.constant dense<0.000000e+00> : vector<80xf32>
    %247 = vector.multi_reduction <add>, %246, %cst_113 [1] : vector<80x80xf32> to vector<80xf32>
    %248 = vector.shape_cast %247 : vector<80xf32> to vector<80x1xf32>
    %249 = tpu.reciprocal %248 {approx = true} : vector<80x1xf32> -> vector<80x1xf32>
    %250 = arith.truncf %246 : vector<80x80xf32> to vector<80x80xbf16>
    %cst_114 = arith.constant dense<0.000000e+00> : vector<80x32xf32>
    %251 = tpu.matmul %250, %193, %cst_114 {dimension_numbers = #tpu.dot_dimension_numbers<[1], [0], [0], [1], [0, 0, 1, 1], [], []>} : vector<80x80xbf16>, vector<80x32xbf16>, vector<80x32xf32> -> vector<80x32xf32>
    %252 = vector.broadcast %249 : vector<80x1xf32> to vector<80x32xf32>
    %253 = arith.mulf %251, %252 : vector<80x32xf32>
    %cst_115 = arith.constant 0.000000e+00 : f32
    %254 = vector.shape_cast %233 : vector<1x32xi1> to vector<1x32xi1>
    %255 = vector.broadcast %254 : vector<1x32xi1> to vector<80x32xi1>
    %256 = vector.broadcast %cst_115 : f32 to vector<80x32xf32>
    %257 = arith.select %255, %253, %256 : vector<80x32xi1>, vector<80x32xf32>
    %258 = arith.addf %228, %257 : vector<80x32xf32>
    %c8_i32_116 = arith.constant 8 : i32
    %259 = vector.broadcast %c8_i32_116 : i32 to vector<1x32xi32>
    %260 = arith.cmpi sge, %199, %259 : vector<1x32xi32>
    %c12_i32 = arith.constant 12 : i32
    %261 = vector.broadcast %c12_i32 : i32 to vector<1x32xi32>
    %262 = arith.cmpi slt, %199, %261 : vector<1x32xi32>
    %263 = arith.andi %260, %262 : vector<1x32xi1>
    %cst_117 = arith.constant 0.000000e+00 : f32
    %264 = vector.shape_cast %263 : vector<1x32xi1> to vector<1x32xi1>
    %265 = vector.broadcast %264 : vector<1x32xi1> to vector<80x32xi1>
    %266 = vector.broadcast %cst_117 : f32 to vector<80x32xf32>
    %267 = arith.select %265, %189, %266 : vector<80x32xi1>, vector<80x32xf32>
    %268 = arith.truncf %267 : vector<80x32xf32> to vector<80x32xbf16>
    %cst_118 = arith.constant dense<0.000000e+00> : vector<80x80xf32>
    %269 = tpu.matmul %268, %191, %cst_118 {dimension_numbers = #tpu.dot_dimension_numbers<[1], [1], [0], [0], [0, 0, 1, 0], [], []>} : vector<80x32xbf16>, vector<80x32xbf16>, vector<80x80xf32> -> vector<80x80xf32>
    %cst_119 = arith.constant -1.000000e+30 : f32
    %270 = vector.broadcast %cst_119 : f32 to vector<80x80xf32>
    %271 = arith.select %198, %269, %270 : vector<80x80xi1>, vector<80x80xf32>
    %cst_120 = arith.constant dense<0xFF800000> : vector<80xf32>
    %272 = vector.multi_reduction <maximumf>, %271, %cst_120 [1] : vector<80x80xf32> to vector<80xf32>
    %273 = vector.shape_cast %272 : vector<80xf32> to vector<80x1xf32>
    %274 = vector.broadcast %273 : vector<80x1xf32> to vector<80x80xf32>
    %275 = arith.subf %271, %274 : vector<80x80xf32>
    %276 = math.exp %275 : vector<80x80xf32>
    %cst_121 = arith.constant dense<0.000000e+00> : vector<80xf32>
    %277 = vector.multi_reduction <add>, %276, %cst_121 [1] : vector<80x80xf32> to vector<80xf32>
    %278 = vector.shape_cast %277 : vector<80xf32> to vector<80x1xf32>
    %279 = tpu.reciprocal %278 {approx = true} : vector<80x1xf32> -> vector<80x1xf32>
    %280 = arith.truncf %276 : vector<80x80xf32> to vector<80x80xbf16>
    %cst_122 = arith.constant dense<0.000000e+00> : vector<80x32xf32>
    %281 = tpu.matmul %280, %193, %cst_122 {dimension_numbers = #tpu.dot_dimension_numbers<[1], [0], [0], [1], [0, 0, 1, 1], [], []>} : vector<80x80xbf16>, vector<80x32xbf16>, vector<80x32xf32> -> vector<80x32xf32>
    %282 = vector.broadcast %279 : vector<80x1xf32> to vector<80x32xf32>
    %283 = arith.mulf %281, %282 : vector<80x32xf32>
    %cst_123 = arith.constant 0.000000e+00 : f32
    %284 = vector.shape_cast %263 : vector<1x32xi1> to vector<1x32xi1>
    %285 = vector.broadcast %284 : vector<1x32xi1> to vector<80x32xi1>
    %286 = vector.broadcast %cst_123 : f32 to vector<80x32xf32>
    %287 = arith.select %285, %283, %286 : vector<80x32xi1>, vector<80x32xf32>
    %288 = arith.addf %258, %287 : vector<80x32xf32>
    %c12_i32_124 = arith.constant 12 : i32
    %289 = vector.broadcast %c12_i32_124 : i32 to vector<1x32xi32>
    %290 = arith.cmpi sge, %199, %289 : vector<1x32xi32>
    %c16_i32 = arith.constant 16 : i32
    %291 = vector.broadcast %c16_i32 : i32 to vector<1x32xi32>
    %292 = arith.cmpi slt, %199, %291 : vector<1x32xi32>
    %293 = arith.andi %290, %292 : vector<1x32xi1>
    %cst_125 = arith.constant 0.000000e+00 : f32
    %294 = vector.shape_cast %293 : vector<1x32xi1> to vector<1x32xi1>
    %295 = vector.broadcast %294 : vector<1x32xi1> to vector<80x32xi1>
    %296 = vector.broadcast %cst_125 : f32 to vector<80x32xf32>
    %297 = arith.select %295, %189, %296 : vector<80x32xi1>, vector<80x32xf32>
    %298 = arith.truncf %297 : vector<80x32xf32> to vector<80x32xbf16>
    %cst_126 = arith.constant dense<0.000000e+00> : vector<80x80xf32>
    %299 = tpu.matmul %298, %191, %cst_126 {dimension_numbers = #tpu.dot_dimension_numbers<[1], [1], [0], [0], [0, 0, 1, 0], [], []>} : vector<80x32xbf16>, vector<80x32xbf16>, vector<80x80xf32> -> vector<80x80xf32>
    %cst_127 = arith.constant -1.000000e+30 : f32
    %300 = vector.broadcast %cst_127 : f32 to vector<80x80xf32>
    %301 = arith.select %198, %299, %300 : vector<80x80xi1>, vector<80x80xf32>
    %cst_128 = arith.constant dense<0xFF800000> : vector<80xf32>
    %302 = vector.multi_reduction <maximumf>, %301, %cst_128 [1] : vector<80x80xf32> to vector<80xf32>
    %303 = vector.shape_cast %302 : vector<80xf32> to vector<80x1xf32>
    %304 = vector.broadcast %303 : vector<80x1xf32> to vector<80x80xf32>
    %305 = arith.subf %301, %304 : vector<80x80xf32>
    %306 = math.exp %305 : vector<80x80xf32>
    %cst_129 = arith.constant dense<0.000000e+00> : vector<80xf32>
    %307 = vector.multi_reduction <add>, %306, %cst_129 [1] : vector<80x80xf32> to vector<80xf32>
    %308 = vector.shape_cast %307 : vector<80xf32> to vector<80x1xf32>
    %309 = tpu.reciprocal %308 {approx = true} : vector<80x1xf32> -> vector<80x1xf32>
    %310 = arith.truncf %306 : vector<80x80xf32> to vector<80x80xbf16>
    %cst_130 = arith.constant dense<0.000000e+00> : vector<80x32xf32>
    %311 = tpu.matmul %310, %193, %cst_130 {dimension_numbers = #tpu.dot_dimension_numbers<[1], [0], [0], [1], [0, 0, 1, 1], [], []>} : vector<80x80xbf16>, vector<80x32xbf16>, vector<80x32xf32> -> vector<80x32xf32>
    %312 = vector.broadcast %309 : vector<80x1xf32> to vector<80x32xf32>
    %313 = arith.mulf %311, %312 : vector<80x32xf32>
    %cst_131 = arith.constant 0.000000e+00 : f32
    %314 = vector.shape_cast %293 : vector<1x32xi1> to vector<1x32xi1>
    %315 = vector.broadcast %314 : vector<1x32xi1> to vector<80x32xi1>
    %316 = vector.broadcast %cst_131 : f32 to vector<80x32xf32>
    %317 = arith.select %315, %313, %316 : vector<80x32xi1>, vector<80x32xf32>
    %318 = arith.addf %288, %317 : vector<80x32xf32>
    %c16_i32_132 = arith.constant 16 : i32
    %319 = vector.broadcast %c16_i32_132 : i32 to vector<1x32xi32>
    %320 = arith.cmpi sge, %199, %319 : vector<1x32xi32>
    %c20_i32 = arith.constant 20 : i32
    %321 = vector.broadcast %c20_i32 : i32 to vector<1x32xi32>
    %322 = arith.cmpi slt, %199, %321 : vector<1x32xi32>
    %323 = arith.andi %320, %322 : vector<1x32xi1>
    %cst_133 = arith.constant 0.000000e+00 : f32
    %324 = vector.shape_cast %323 : vector<1x32xi1> to vector<1x32xi1>
    %325 = vector.broadcast %324 : vector<1x32xi1> to vector<80x32xi1>
    %326 = vector.broadcast %cst_133 : f32 to vector<80x32xf32>
    %327 = arith.select %325, %189, %326 : vector<80x32xi1>, vector<80x32xf32>
    %328 = arith.truncf %327 : vector<80x32xf32> to vector<80x32xbf16>
    %cst_134 = arith.constant dense<0.000000e+00> : vector<80x80xf32>
    %329 = tpu.matmul %328, %191, %cst_134 {dimension_numbers = #tpu.dot_dimension_numbers<[1], [1], [0], [0], [0, 0, 1, 0], [], []>} : vector<80x32xbf16>, vector<80x32xbf16>, vector<80x80xf32> -> vector<80x80xf32>
    %cst_135 = arith.constant -1.000000e+30 : f32
    %330 = vector.broadcast %cst_135 : f32 to vector<80x80xf32>
    %331 = arith.select %198, %329, %330 : vector<80x80xi1>, vector<80x80xf32>
    %cst_136 = arith.constant dense<0xFF800000> : vector<80xf32>
    %332 = vector.multi_reduction <maximumf>, %331, %cst_136 [1] : vector<80x80xf32> to vector<80xf32>
    %333 = vector.shape_cast %332 : vector<80xf32> to vector<80x1xf32>
    %334 = vector.broadcast %333 : vector<80x1xf32> to vector<80x80xf32>
    %335 = arith.subf %331, %334 : vector<80x80xf32>
    %336 = math.exp %335 : vector<80x80xf32>
    %cst_137 = arith.constant dense<0.000000e+00> : vector<80xf32>
    %337 = vector.multi_reduction <add>, %336, %cst_137 [1] : vector<80x80xf32> to vector<80xf32>
    %338 = vector.shape_cast %337 : vector<80xf32> to vector<80x1xf32>
    %339 = tpu.reciprocal %338 {approx = true} : vector<80x1xf32> -> vector<80x1xf32>
    %340 = arith.truncf %336 : vector<80x80xf32> to vector<80x80xbf16>
    %cst_138 = arith.constant dense<0.000000e+00> : vector<80x32xf32>
    %341 = tpu.matmul %340, %193, %cst_138 {dimension_numbers = #tpu.dot_dimension_numbers<[1], [0], [0], [1], [0, 0, 1, 1], [], []>} : vector<80x80xbf16>, vector<80x32xbf16>, vector<80x32xf32> -> vector<80x32xf32>
    %342 = vector.broadcast %339 : vector<80x1xf32> to vector<80x32xf32>
    %343 = arith.mulf %341, %342 : vector<80x32xf32>
    %cst_139 = arith.constant 0.000000e+00 : f32
    %344 = vector.shape_cast %323 : vector<1x32xi1> to vector<1x32xi1>
    %345 = vector.broadcast %344 : vector<1x32xi1> to vector<80x32xi1>
    %346 = vector.broadcast %cst_139 : f32 to vector<80x32xf32>
    %347 = arith.select %345, %343, %346 : vector<80x32xi1>, vector<80x32xf32>
    %348 = arith.addf %318, %347 : vector<80x32xf32>
    %c20_i32_140 = arith.constant 20 : i32
    %349 = vector.broadcast %c20_i32_140 : i32 to vector<1x32xi32>
    %350 = arith.cmpi sge, %199, %349 : vector<1x32xi32>
    %c24_i32 = arith.constant 24 : i32
    %351 = vector.broadcast %c24_i32 : i32 to vector<1x32xi32>
    %352 = arith.cmpi slt, %199, %351 : vector<1x32xi32>
    %353 = arith.andi %350, %352 : vector<1x32xi1>
    %cst_141 = arith.constant 0.000000e+00 : f32
    %354 = vector.shape_cast %353 : vector<1x32xi1> to vector<1x32xi1>
    %355 = vector.broadcast %354 : vector<1x32xi1> to vector<80x32xi1>
    %356 = vector.broadcast %cst_141 : f32 to vector<80x32xf32>
    %357 = arith.select %355, %189, %356 : vector<80x32xi1>, vector<80x32xf32>
    %358 = arith.truncf %357 : vector<80x32xf32> to vector<80x32xbf16>
    %cst_142 = arith.constant dense<0.000000e+00> : vector<80x80xf32>
    %359 = tpu.matmul %358, %191, %cst_142 {dimension_numbers = #tpu.dot_dimension_numbers<[1], [1], [0], [0], [0, 0, 1, 0], [], []>} : vector<80x32xbf16>, vector<80x32xbf16>, vector<80x80xf32> -> vector<80x80xf32>
    %cst_143 = arith.constant -1.000000e+30 : f32
    %360 = vector.broadcast %cst_143 : f32 to vector<80x80xf32>
    %361 = arith.select %198, %359, %360 : vector<80x80xi1>, vector<80x80xf32>
    %cst_144 = arith.constant dense<0xFF800000> : vector<80xf32>
    %362 = vector.multi_reduction <maximumf>, %361, %cst_144 [1] : vector<80x80xf32> to vector<80xf32>
    %363 = vector.shape_cast %362 : vector<80xf32> to vector<80x1xf32>
    %364 = vector.broadcast %363 : vector<80x1xf32> to vector<80x80xf32>
    %365 = arith.subf %361, %364 : vector<80x80xf32>
    %366 = math.exp %365 : vector<80x80xf32>
    %cst_145 = arith.constant dense<0.000000e+00> : vector<80xf32>
    %367 = vector.multi_reduction <add>, %366, %cst_145 [1] : vector<80x80xf32> to vector<80xf32>
    %368 = vector.shape_cast %367 : vector<80xf32> to vector<80x1xf32>
    %369 = tpu.reciprocal %368 {approx = true} : vector<80x1xf32> -> vector<80x1xf32>
    %370 = arith.truncf %366 : vector<80x80xf32> to vector<80x80xbf16>
    %cst_146 = arith.constant dense<0.000000e+00> : vector<80x32xf32>
    %371 = tpu.matmul %370, %193, %cst_146 {dimension_numbers = #tpu.dot_dimension_numbers<[1], [0], [0], [1], [0, 0, 1, 1], [], []>} : vector<80x80xbf16>, vector<80x32xbf16>, vector<80x32xf32> -> vector<80x32xf32>
    %372 = vector.broadcast %369 : vector<80x1xf32> to vector<80x32xf32>
    %373 = arith.mulf %371, %372 : vector<80x32xf32>
    %cst_147 = arith.constant 0.000000e+00 : f32
    %374 = vector.shape_cast %353 : vector<1x32xi1> to vector<1x32xi1>
    %375 = vector.broadcast %374 : vector<1x32xi1> to vector<80x32xi1>
    %376 = vector.broadcast %cst_147 : f32 to vector<80x32xf32>
    %377 = arith.select %375, %373, %376 : vector<80x32xi1>, vector<80x32xf32>
    %378 = arith.addf %348, %377 : vector<80x32xf32>
    %c24_i32_148 = arith.constant 24 : i32
    %379 = vector.broadcast %c24_i32_148 : i32 to vector<1x32xi32>
    %380 = arith.cmpi sge, %199, %379 : vector<1x32xi32>
    %c28_i32 = arith.constant 28 : i32
    %381 = vector.broadcast %c28_i32 : i32 to vector<1x32xi32>
    %382 = arith.cmpi slt, %199, %381 : vector<1x32xi32>
    %383 = arith.andi %380, %382 : vector<1x32xi1>
    %cst_149 = arith.constant 0.000000e+00 : f32
    %384 = vector.shape_cast %383 : vector<1x32xi1> to vector<1x32xi1>
    %385 = vector.broadcast %384 : vector<1x32xi1> to vector<80x32xi1>
    %386 = vector.broadcast %cst_149 : f32 to vector<80x32xf32>
    %387 = arith.select %385, %189, %386 : vector<80x32xi1>, vector<80x32xf32>
    %388 = arith.truncf %387 : vector<80x32xf32> to vector<80x32xbf16>
    %cst_150 = arith.constant dense<0.000000e+00> : vector<80x80xf32>
    %389 = tpu.matmul %388, %191, %cst_150 {dimension_numbers = #tpu.dot_dimension_numbers<[1], [1], [0], [0], [0, 0, 1, 0], [], []>} : vector<80x32xbf16>, vector<80x32xbf16>, vector<80x80xf32> -> vector<80x80xf32>
    %cst_151 = arith.constant -1.000000e+30 : f32
    %390 = vector.broadcast %cst_151 : f32 to vector<80x80xf32>
    %391 = arith.select %198, %389, %390 : vector<80x80xi1>, vector<80x80xf32>
    %cst_152 = arith.constant dense<0xFF800000> : vector<80xf32>
    %392 = vector.multi_reduction <maximumf>, %391, %cst_152 [1] : vector<80x80xf32> to vector<80xf32>
    %393 = vector.shape_cast %392 : vector<80xf32> to vector<80x1xf32>
    %394 = vector.broadcast %393 : vector<80x1xf32> to vector<80x80xf32>
    %395 = arith.subf %391, %394 : vector<80x80xf32>
    %396 = math.exp %395 : vector<80x80xf32>
    %cst_153 = arith.constant dense<0.000000e+00> : vector<80xf32>
    %397 = vector.multi_reduction <add>, %396, %cst_153 [1] : vector<80x80xf32> to vector<80xf32>
    %398 = vector.shape_cast %397 : vector<80xf32> to vector<80x1xf32>
    %399 = tpu.reciprocal %398 {approx = true} : vector<80x1xf32> -> vector<80x1xf32>
    %400 = arith.truncf %396 : vector<80x80xf32> to vector<80x80xbf16>
    %cst_154 = arith.constant dense<0.000000e+00> : vector<80x32xf32>
    %401 = tpu.matmul %400, %193, %cst_154 {dimension_numbers = #tpu.dot_dimension_numbers<[1], [0], [0], [1], [0, 0, 1, 1], [], []>} : vector<80x80xbf16>, vector<80x32xbf16>, vector<80x32xf32> -> vector<80x32xf32>
    %402 = vector.broadcast %399 : vector<80x1xf32> to vector<80x32xf32>
    %403 = arith.mulf %401, %402 : vector<80x32xf32>
    %cst_155 = arith.constant 0.000000e+00 : f32
    %404 = vector.shape_cast %383 : vector<1x32xi1> to vector<1x32xi1>
    %405 = vector.broadcast %404 : vector<1x32xi1> to vector<80x32xi1>
    %406 = vector.broadcast %cst_155 : f32 to vector<80x32xf32>
    %407 = arith.select %405, %403, %406 : vector<80x32xi1>, vector<80x32xf32>
    %408 = arith.addf %378, %407 : vector<80x32xf32>
    %c28_i32_156 = arith.constant 28 : i32
    %409 = vector.broadcast %c28_i32_156 : i32 to vector<1x32xi32>
    %410 = arith.cmpi sge, %199, %409 : vector<1x32xi32>
    %c32_i32 = arith.constant 32 : i32
    %411 = vector.broadcast %c32_i32 : i32 to vector<1x32xi32>
    %412 = arith.cmpi slt, %199, %411 : vector<1x32xi32>
    %413 = arith.andi %410, %412 : vector<1x32xi1>
    %cst_157 = arith.constant 0.000000e+00 : f32
    %414 = vector.shape_cast %413 : vector<1x32xi1> to vector<1x32xi1>
    %415 = vector.broadcast %414 : vector<1x32xi1> to vector<80x32xi1>
    %416 = vector.broadcast %cst_157 : f32 to vector<80x32xf32>
    %417 = arith.select %415, %189, %416 : vector<80x32xi1>, vector<80x32xf32>
    %418 = arith.truncf %417 : vector<80x32xf32> to vector<80x32xbf16>
    %cst_158 = arith.constant dense<0.000000e+00> : vector<80x80xf32>
    %419 = tpu.matmul %418, %191, %cst_158 {dimension_numbers = #tpu.dot_dimension_numbers<[1], [1], [0], [0], [0, 0, 1, 0], [], []>} : vector<80x32xbf16>, vector<80x32xbf16>, vector<80x80xf32> -> vector<80x80xf32>
    %cst_159 = arith.constant -1.000000e+30 : f32
    %420 = vector.broadcast %cst_159 : f32 to vector<80x80xf32>
    %421 = arith.select %198, %419, %420 : vector<80x80xi1>, vector<80x80xf32>
    %cst_160 = arith.constant dense<0xFF800000> : vector<80xf32>
    %422 = vector.multi_reduction <maximumf>, %421, %cst_160 [1] : vector<80x80xf32> to vector<80xf32>
    %423 = vector.shape_cast %422 : vector<80xf32> to vector<80x1xf32>
    %424 = vector.broadcast %423 : vector<80x1xf32> to vector<80x80xf32>
    %425 = arith.subf %421, %424 : vector<80x80xf32>
    %426 = math.exp %425 : vector<80x80xf32>
    %cst_161 = arith.constant dense<0.000000e+00> : vector<80xf32>
    %427 = vector.multi_reduction <add>, %426, %cst_161 [1] : vector<80x80xf32> to vector<80xf32>
    %428 = vector.shape_cast %427 : vector<80xf32> to vector<80x1xf32>
    %429 = tpu.reciprocal %428 {approx = true} : vector<80x1xf32> -> vector<80x1xf32>
    %430 = arith.truncf %426 : vector<80x80xf32> to vector<80x80xbf16>
    %cst_162 = arith.constant dense<0.000000e+00> : vector<80x32xf32>
    %431 = tpu.matmul %430, %193, %cst_162 {dimension_numbers = #tpu.dot_dimension_numbers<[1], [0], [0], [1], [0, 0, 1, 1], [], []>} : vector<80x80xbf16>, vector<80x32xbf16>, vector<80x32xf32> -> vector<80x32xf32>
    %432 = vector.broadcast %429 : vector<80x1xf32> to vector<80x32xf32>
    %433 = arith.mulf %431, %432 : vector<80x32xf32>
    %cst_163 = arith.constant 0.000000e+00 : f32
    %434 = vector.shape_cast %413 : vector<1x32xi1> to vector<1x32xi1>
    %435 = vector.broadcast %434 : vector<1x32xi1> to vector<80x32xi1>
    %436 = vector.broadcast %cst_163 : f32 to vector<80x32xf32>
    %437 = arith.select %435, %433, %436 : vector<80x32xi1>, vector<80x32xf32>
    %438 = arith.addf %408, %437 : vector<80x32xf32>
    %439 = arith.truncf %438 : vector<80x32xf32> to vector<80x32xbf16>
    %c0_164 = arith.constant 0 : index
    %c0_165 = arith.constant 0 : index
    %440 = vector.load %arg31[%c0_164, %c0_165] : memref<32x32xbf16, #tpu.memory_space<vmem>>, vector<32x32xbf16>
    %cst_166 = arith.constant dense<0.000000e+00> : vector<80x32xf32>
    %441 = tpu.matmul %439, %440, %cst_166 {dimension_numbers = #tpu.dot_dimension_numbers<[1], [0], [0], [1], [0, 0, 1, 1], [], []>} : vector<80x32xbf16>, vector<32x32xbf16>, vector<80x32xf32> -> vector<80x32xf32>
    %c0_167 = arith.constant 0 : index
    %c0_168 = arith.constant 0 : index
    %442 = vector.load %arg32[%c0_167, %c0_168] : memref<1x32xf32, #tpu.memory_space<vmem>>, vector<1x32xf32>
    %443 = vector.broadcast %442 : vector<1x32xf32> to vector<80x32xf32>
    %444 = arith.addf %441, %443 : vector<80x32xf32>
    %445 = arith.addf %183, %444 : vector<80x32xf32>
    %c0_169 = arith.constant 0 : index
    %c0_170 = arith.constant 0 : index
    %446 = vector.load %arg33[%c0_169, %c0_170] : memref<1x32xf32, #tpu.memory_space<vmem>>, vector<1x32xf32>
    %c0_171 = arith.constant 0 : index
    %c0_172 = arith.constant 0 : index
    %447 = vector.load %arg34[%c0_171, %c0_172] : memref<1x32xf32, #tpu.memory_space<vmem>>, vector<1x32xf32>
    %cst_173 = arith.constant dense<0.000000e+00> : vector<80xf32>
    %448 = vector.multi_reduction <add>, %445, %cst_173 [1] : vector<80x32xf32> to vector<80xf32>
    %449 = vector.shape_cast %448 : vector<80xf32> to vector<80x1xf32>
    %cst_174 = arith.constant 3.200000e+01 : f32
    %450 = vector.broadcast %cst_174 : f32 to vector<80x1xf32>
    %451 = arith.divf %449, %450 : vector<80x1xf32>
    %452 = vector.broadcast %451 : vector<80x1xf32> to vector<80x32xf32>
    %453 = arith.subf %445, %452 : vector<80x32xf32>
    %454 = arith.mulf %453, %453 : vector<80x32xf32>
    %cst_175 = arith.constant dense<0.000000e+00> : vector<80xf32>
    %455 = vector.multi_reduction <add>, %454, %cst_175 [1] : vector<80x32xf32> to vector<80xf32>
    %456 = vector.shape_cast %455 : vector<80xf32> to vector<80x1xf32>
    %cst_176 = arith.constant 3.200000e+01 : f32
    %457 = vector.broadcast %cst_176 : f32 to vector<80x1xf32>
    %458 = arith.divf %456, %457 : vector<80x1xf32>
    %459 = vector.broadcast %451 : vector<80x1xf32> to vector<80x32xf32>
    %460 = arith.subf %445, %459 : vector<80x32xf32>
    %cst_177 = arith.constant 9.99999974E-6 : f32
    %461 = vector.broadcast %cst_177 : f32 to vector<80x1xf32>
    %462 = arith.addf %458, %461 : vector<80x1xf32>
    %463 = math.rsqrt %462 : vector<80x1xf32>
    %464 = vector.broadcast %463 : vector<80x1xf32> to vector<80x32xf32>
    %465 = arith.mulf %460, %464 : vector<80x32xf32>
    %466 = vector.broadcast %446 : vector<1x32xf32> to vector<80x32xf32>
    %467 = arith.mulf %465, %466 : vector<80x32xf32>
    %468 = vector.broadcast %447 : vector<1x32xf32> to vector<80x32xf32>
    %469 = arith.addf %467, %468 : vector<80x32xf32>
    %470 = arith.truncf %469 : vector<80x32xf32> to vector<80x32xbf16>
    %c0_178 = arith.constant 0 : index
    %c0_179 = arith.constant 0 : index
    %471 = vector.load %arg35[%c0_178, %c0_179] : memref<32x2048xbf16, #tpu.memory_space<vmem>>, vector<32x2048xbf16>
    %cst_180 = arith.constant dense<0.000000e+00> : vector<80x2048xf32>
    %472 = tpu.matmul %470, %471, %cst_180 {dimension_numbers = #tpu.dot_dimension_numbers<[1], [0], [0], [1], [0, 0, 1, 1], [], []>} : vector<80x32xbf16>, vector<32x2048xbf16>, vector<80x2048xf32> -> vector<80x2048xf32>
    %c0_181 = arith.constant 0 : index
    %c0_182 = arith.constant 0 : index
    %473 = vector.load %arg36[%c0_181, %c0_182] : memref<1x2048xf32, #tpu.memory_space<vmem>>, vector<1x2048xf32>
    %474 = vector.broadcast %473 : vector<1x2048xf32> to vector<80x2048xf32>
    %475 = arith.addf %472, %474 : vector<80x2048xf32>
    %cst_183 = arith.constant 0.000000e+00 : f32
    %476 = vector.broadcast %cst_183 : f32 to vector<80x2048xf32>
    %477 = arith.maximumf %475, %476 : vector<80x2048xf32>
    %478 = arith.truncf %477 : vector<80x2048xf32> to vector<80x2048xbf16>
    %c0_184 = arith.constant 0 : index
    %c0_185 = arith.constant 0 : index
    %479 = vector.load %arg37[%c0_184, %c0_185] : memref<2048x32xbf16, #tpu.memory_space<vmem>>, vector<2048x32xbf16>
    %cst_186 = arith.constant dense<0.000000e+00> : vector<80x32xf32>
    %480 = tpu.matmul %478, %479, %cst_186 {dimension_numbers = #tpu.dot_dimension_numbers<[1], [0], [0], [1], [0, 0, 1, 1], [], []>} : vector<80x2048xbf16>, vector<2048x32xbf16>, vector<80x32xf32> -> vector<80x32xf32>
    %c0_187 = arith.constant 0 : index
    %c0_188 = arith.constant 0 : index
    %481 = vector.load %arg38[%c0_187, %c0_188] : memref<1x32xf32, #tpu.memory_space<vmem>>, vector<1x32xf32>
    %482 = vector.broadcast %481 : vector<1x32xf32> to vector<80x32xf32>
    %483 = arith.addf %480, %482 : vector<80x32xf32>
    %484 = arith.addf %469, %483 : vector<80x32xf32>
    %c0_189 = arith.constant 0 : index
    %c0_190 = arith.constant 0 : index
    %485 = vector.load %arg39[%c0_189, %c0_190] : memref<1x32xf32, #tpu.memory_space<vmem>>, vector<1x32xf32>
    %c0_191 = arith.constant 0 : index
    %c0_192 = arith.constant 0 : index
    %486 = vector.load %arg40[%c0_191, %c0_192] : memref<1x32xf32, #tpu.memory_space<vmem>>, vector<1x32xf32>
    %cst_193 = arith.constant dense<0.000000e+00> : vector<80xf32>
    %487 = vector.multi_reduction <add>, %484, %cst_193 [1] : vector<80x32xf32> to vector<80xf32>
    %488 = vector.shape_cast %487 : vector<80xf32> to vector<80x1xf32>
    %cst_194 = arith.constant 3.200000e+01 : f32
    %489 = vector.broadcast %cst_194 : f32 to vector<80x1xf32>
    %490 = arith.divf %488, %489 : vector<80x1xf32>
    %491 = vector.broadcast %490 : vector<80x1xf32> to vector<80x32xf32>
    %492 = arith.subf %484, %491 : vector<80x32xf32>
    %493 = arith.mulf %492, %492 : vector<80x32xf32>
    %cst_195 = arith.constant dense<0.000000e+00> : vector<80xf32>
    %494 = vector.multi_reduction <add>, %493, %cst_195 [1] : vector<80x32xf32> to vector<80xf32>
    %495 = vector.shape_cast %494 : vector<80xf32> to vector<80x1xf32>
    %cst_196 = arith.constant 3.200000e+01 : f32
    %496 = vector.broadcast %cst_196 : f32 to vector<80x1xf32>
    %497 = arith.divf %495, %496 : vector<80x1xf32>
    %498 = vector.broadcast %490 : vector<80x1xf32> to vector<80x32xf32>
    %499 = arith.subf %484, %498 : vector<80x32xf32>
    %cst_197 = arith.constant 9.99999974E-6 : f32
    %500 = vector.broadcast %cst_197 : f32 to vector<80x1xf32>
    %501 = arith.addf %497, %500 : vector<80x1xf32>
    %502 = math.rsqrt %501 : vector<80x1xf32>
    %503 = vector.broadcast %502 : vector<80x1xf32> to vector<80x32xf32>
    %504 = arith.mulf %499, %503 : vector<80x32xf32>
    %505 = vector.broadcast %485 : vector<1x32xf32> to vector<80x32xf32>
    %506 = arith.mulf %504, %505 : vector<80x32xf32>
    %507 = vector.broadcast %486 : vector<1x32xf32> to vector<80x32xf32>
    %508 = arith.addf %506, %507 : vector<80x32xf32>
    %c0_198 = arith.constant 0 : index
    %c0_199 = arith.constant 0 : index
    %509 = vector.load %arg41[%c0_198, %c0_199] : memref<32x8xf32, #tpu.memory_space<vmem>>, vector<32x8xf32>
    %cst_200 = arith.constant dense<0.000000e+00> : vector<80x8xf32>
    %510 = tpu.matmul %508, %509, %cst_200 {dimension_numbers = #tpu.dot_dimension_numbers<[1], [0], [0], [1], [0, 0, 1, 1], [], []>} : vector<80x32xf32>, vector<32x8xf32>, vector<80x8xf32> -> vector<80x8xf32>
    %c0_201 = arith.constant 0 : index
    %c0_202 = arith.constant 0 : index
    %511 = vector.load %arg42[%c0_201, %c0_202] : memref<1x8xf32, #tpu.memory_space<vmem>>, vector<1x8xf32>
    %512 = vector.broadcast %511 : vector<1x8xf32> to vector<80x8xf32>
    %513 = arith.addf %510, %512 : vector<80x8xf32>
    %c0_203 = arith.constant 0 : index
    %c0_204 = arith.constant 0 : index
    %514 = vector.load %arg43[%c0_203, %c0_204] : memref<80x8xf32, #tpu.memory_space<vmem>>, vector<80x8xf32>
    tpu.vector_store %arg43[%c0_203, %c0_204], %513 {strides = array<i32>} : memref<80x8xf32, #tpu.memory_space<vmem>>, vector<80x8xf32>,
    %c0_205 = arith.constant 0 : index
    %c0_206 = arith.constant 0 : index
    %515 = vector.load %arg6[%c0_205, %c0_206] : memref<80x8xf32, #tpu.memory_space<vmem>>, vector<80x8xf32>
    %516 = arith.subf %513, %515 : vector<80x8xf32>
    %517 = arith.mulf %516, %516 : vector<80x8xf32>
    %518 = vector.extract_strided_slice %517 {offsets = [0, 0], sizes = [40, 8], strides = [1, 1]} : vector<80x8xf32> to vector<40x8xf32>
    %519 = vector.extract_strided_slice %517 {offsets = [40, 0], sizes = [40, 8], strides = [1, 1]} : vector<80x8xf32> to vector<40x8xf32>
    %520 = arith.addf %518, %519 : vector<40x8xf32>
    %521 = math.sqrt %520 : vector<40x8xf32>
    %cst_207 = arith.constant dense<0.000000e+00> : vector<40xf32>
    %522 = vector.multi_reduction <add>, %521, %cst_207 [1] : vector<40x8xf32> to vector<40xf32>
    %523 = vector.shape_cast %522 : vector<40xf32> to vector<40x1xf32>
    %cst_208 = arith.constant dense<0.000000e+00> : vector<1xf32>
    %524 = vector.multi_reduction <add>, %523, %cst_208 [0] : vector<40x1xf32> to vector<1xf32>
    %525 = vector.shape_cast %524 : vector<1xf32> to vector<1x1xf32>
    %cst_209 = arith.constant 4.000000e+01 : f32
    %526 = vector.broadcast %cst_209 : f32 to vector<1x1xf32>
    %527 = arith.divf %525, %526 : vector<1x1xf32>
    %cst_210 = arith.constant 1.000000e+00 : f32
    %528 = vector.broadcast %cst_210 : f32 to vector<80x32xf32>
    %529 = arith.addf %528, %145 : vector<80x32xf32>
    %530 = arith.mulf %140, %140 : vector<80x32xf32>
    %531 = arith.subf %529, %530 : vector<80x32xf32>
    %532 = math.exp %145 : vector<80x32xf32>
    %533 = arith.subf %531, %532 : vector<80x32xf32>
    %cst_211 = arith.constant dense<0.000000e+00> : vector<80xf32>
    %534 = vector.multi_reduction <add>, %533, %cst_211 [1] : vector<80x32xf32> to vector<80xf32>
    %535 = vector.shape_cast %534 : vector<80xf32> to vector<80x1xf32>
    %cst_212 = arith.constant dense<0.000000e+00> : vector<1xf32>
    %536 = vector.multi_reduction <add>, %535, %cst_212 [0] : vector<80x1xf32> to vector<1xf32>
    %537 = vector.shape_cast %536 : vector<1xf32> to vector<1x1xf32>
    %cst_213 = arith.constant -5.000000e-01 : f32
    %538 = vector.broadcast %cst_213 : f32 to vector<1x1xf32>
    %539 = arith.mulf %538, %537 : vector<1x1xf32>
    %cst_214 = arith.constant 8.000000e+01 : f32
    %540 = vector.broadcast %cst_214 : f32 to vector<1x1xf32>
    %541 = arith.divf %539, %540 : vector<1x1xf32>
    %542 = tpu.iota {dimensions = array<i32: 0>} : vector<8x80xi32>
    %543 = tpu.iota {dimensions = array<i32: 1>} : vector<8x80xi32>
    %c10_i32_215 = arith.constant 10 : i32
    %544 = vector.broadcast %c10_i32_215 : i32 to vector<8x80xi32>
    %545 = arith.muli %542, %544 : vector<8x80xi32>
    %546 = arith.subi %543, %545 : vector<8x80xi32>
    %c0_i32_216 = arith.constant 0 : i32
    %547 = vector.broadcast %c0_i32_216 : i32 to vector<8x80xi32>
    %548 = arith.cmpi sge, %546, %547 : vector<8x80xi32>
    %c10_i32_217 = arith.constant 10 : i32
    %549 = vector.broadcast %c10_i32_217 : i32 to vector<8x80xi32>
    %550 = arith.cmpi slt, %546, %549 : vector<8x80xi32>
    %551 = arith.andi %548, %550 : vector<8x80xi1>
    %cst_218 = arith.constant 1.000000e-01 : f32
    %cst_219 = arith.constant 0.000000e+00 : f32
    %552 = vector.broadcast %cst_218 : f32 to vector<8x80xf32>
    %553 = vector.broadcast %cst_219 : f32 to vector<8x80xf32>
    %554 = arith.select %551, %552, %553 : vector<8x80xi1>, vector<8x80xf32>
    %cst_220 = arith.constant dense<0.000000e+00> : vector<8x32xf32>
    %555 = tpu.matmul %554, %151, %cst_220 {dimension_numbers = #tpu.dot_dimension_numbers<[1], [0], [0], [1], [0, 0, 1, 1], [], []>} : vector<8x80xf32>, vector<80x32xf32>, vector<8x32xf32> -> vector<8x32xf32>
    %cst_221 = arith.constant dense<0.000000e+00> : vector<8x8xf32>
    %556 = tpu.matmul %555, %555, %cst_221 {dimension_numbers = #tpu.dot_dimension_numbers<[1], [1], [0], [0], [0, 0, 1, 0], [], []>} : vector<8x32xf32>, vector<8x32xf32>, vector<8x8xf32> -> vector<8x8xf32>
    %c0_222 = arith.constant 0 : index
    %c0_223 = arith.constant 0 : index
    %557 = vector.load %arg2[%c0_222, %c0_223] : memref<8x8xf32, #tpu.memory_space<vmem>>, vector<8x8xf32>
    %cst_224 = arith.constant 0.000000e+00 : f32
    %558 = vector.broadcast %cst_224 : f32 to vector<8x8xf32>
    %559 = arith.maximumf %556, %558 : vector<8x8xf32>
    %560 = arith.mulf %556, %557 : vector<8x8xf32>
    %561 = arith.subf %559, %560 : vector<8x8xf32>
    %562 = math.absf %556 : vector<8x8xf32>
    %cst_225 = arith.constant 0.000000e+00 : f32
    %563 = vector.broadcast %cst_225 : f32 to vector<8x8xf32>
    %564 = arith.subf %563, %562 : vector<8x8xf32>
    %565 = math.exp %564 : vector<8x8xf32>
    %cst_226 = arith.constant 1.000000e+00 : f32
    %566 = vector.broadcast %cst_226 : f32 to vector<8x8xf32>
    %567 = arith.addf %566, %565 : vector<8x8xf32>
    %568 = math.log %567 : vector<8x8xf32>
    %569 = arith.addf %561, %568 : vector<8x8xf32>
    %cst_227 = arith.constant dense<0.000000e+00> : vector<8xf32>
    %570 = vector.multi_reduction <add>, %569, %cst_227 [1] : vector<8x8xf32> to vector<8xf32>
    %571 = vector.shape_cast %570 : vector<8xf32> to vector<8x1xf32>
    %cst_228 = arith.constant dense<0.000000e+00> : vector<1xf32>
    %572 = vector.multi_reduction <add>, %571, %cst_228 [0] : vector<8x1xf32> to vector<1xf32>
    %573 = vector.shape_cast %572 : vector<1xf32> to vector<1x1xf32>
    %cst_229 = arith.constant 6.400000e+01 : f32
    %574 = vector.broadcast %cst_229 : f32 to vector<1x1xf32>
    %575 = arith.divf %573, %574 : vector<1x1xf32>
    %576 = arith.addf %527, %541 : vector<1x1xf32>
    %577 = arith.addf %576, %575 : vector<1x1xf32>
    %c0_230 = arith.constant 0 : index
    %c0_231 = arith.constant 0 : index
    %578 = vector.load %arg44[%c0_230, %c0_231] : memref<1x1xf32, #tpu.memory_space<vmem>>, vector<1x1xf32>
    tpu.vector_store %arg44[%c0_230, %c0_231], %577 {strides = array<i32>} : memref<1x1xf32, #tpu.memory_space<vmem>>, vector<1x1xf32>,
    return
  }
}

</mosaic_0001>

<llo_original>
// kernel: _lambda_.1
$region0: #{_lambda_.1}
  #allocation0 [shape = 'u32[]', space=smem, size = 0x4, offset = 0x4, fixed_abs, tag = 'smem constant byte address 0x4 - core index']
  #allocation1 [shape = 'u32[144,128]{1,0:T(1,128)}', space=vmem, size = 0x12000, scoped, tag = 'internal scratch']
  %s0 = inlined_call_operand.smem [shape: u32[45], index: -1, kind: input, shape index: {}]
  %s1 = sld [smem:[%s0]]
  %s2 = scalar_lea.smem %s0, 1
  %s3 = sld [smem:[%s2]]
  %s4 = scalar_lea.smem %s0, 2
  %s5 = sld [smem:[%s4]]
  %s6 = scalar_lea.smem %s0, 3
  %s7 = sld [smem:[%s6]]
  %s8 = scalar_lea.smem %s0, 4
  %s9 = sld [smem:[%s8]]
  %s10 = scalar_lea.smem %s0, 5
  %s11 = sld [smem:[%s10]]
  %s12 = scalar_lea.smem %s0, 6
  %s13 = sld [smem:[%s12]]
  %s14 = scalar_lea.smem %s0, 7
  %s15 = sld [smem:[%s14]]
  %s16 = scalar_lea.smem %s0, 8
  %s17 = sld [smem:[%s16]]
  %s18 = scalar_lea.smem %s0, 9
  %s19 = sld [smem:[%s18]]
  %s20 = scalar_lea.smem %s0, 10
  %s21 = sld [smem:[%s20]]
  %s22 = scalar_lea.smem %s0, 11
  %s23 = sld [smem:[%s22]]
  %s24 = scalar_lea.smem %s0, 12
  %s25 = sld [smem:[%s24]]
  %s26 = scalar_lea.smem %s0, 13
  %s27 = sld [smem:[%s26]]
  %s28 = scalar_lea.smem %s0, 14
  %s29 = sld [smem:[%s28]]
  %s30 = scalar_lea.smem %s0, 15
  %s31 = sld [smem:[%s30]]
  %s32 = scalar_lea.smem %s0, 16
  %s33 = sld [smem:[%s32]]
  %s34 = scalar_lea.smem %s0, 17
  %s35 = sld [smem:[%s34]]
  %s36 = scalar_lea.smem %s0, 18
  %s37 = sld [smem:[%s36]]
  %s38 = scalar_lea.smem %s0, 19
  %s39 = sld [smem:[%s38]]
  %s40 = scalar_lea.smem %s0, 20
  %s41 = sld [smem:[%s40]]
  %s42 = scalar_lea.smem %s0, 21
  %s43 = sld [smem:[%s42]]
  %s44 = scalar_lea.smem %s0, 22
  %s45 = sld [smem:[%s44]]
  %s46 = scalar_lea.smem %s0, 23
  %s47 = sld [smem:[%s46]]
  %s48 = scalar_lea.smem %s0, 24
  %s49 = sld [smem:[%s48]]
  %s50 = scalar_lea.smem %s0, 25
  %s51 = sld [smem:[%s50]]
  %s52 = scalar_lea.smem %s0, 26
  %s53 = sld [smem:[%s52]]
  %s54 = scalar_lea.smem %s0, 27
  %s55 = sld [smem:[%s54]]
  %s56 = scalar_lea.smem %s0, 28
  %s57 = sld [smem:[%s56]]
  %s58 = scalar_lea.smem %s0, 29
  %s59 = sld [smem:[%s58]]
  %s60 = scalar_lea.smem %s0, 30
  %s61 = sld [smem:[%s60]]
  %s62 = scalar_lea.smem %s0, 31
  %s63 = sld [smem:[%s62]]
  %s64 = scalar_lea.smem %s0, 32
  %s65 = sld [smem:[%s64]]
  %s66 = scalar_lea.smem %s0, 33
  %s67 = sld [smem:[%s66]]
  %s68 = scalar_lea.smem %s0, 34
  %s69 = sld [smem:[%s68]]
  %s70 = scalar_lea.smem %s0, 35
  %s71 = sld [smem:[%s70]]
  %s72 = scalar_lea.smem %s0, 36
  %s73 = sld [smem:[%s72]]
  %s74 = scalar_lea.smem %s0, 37
  %s75 = sld [smem:[%s74]]
  %s76 = scalar_lea.smem %s0, 38
  %s77 = sld [smem:[%s76]]
  %s78 = scalar_lea.smem %s0, 39
  %s79 = sld [smem:[%s78]]
  %s80 = scalar_lea.smem %s0, 40
  %s81 = sld [smem:[%s80]]
  %s82 = scalar_lea.smem %s0, 41
  %s83 = sld [smem:[%s82]]
  %s84 = scalar_lea.smem %s0, 42
  %s85 = sld [smem:[%s84]]
  %s86 = scalar_lea.smem %s0, 43
  %s87 = sld [smem:[%s86]]
  %s88 = scalar_lea.smem %s0, 44
  %s89 = sld [smem:[%s88]]
  %90 = xla_tuple %s87, %s89
  %s91 = sld [smem:[#allocation0]]
  $region190: #{_lambda_.1} parent=0
    _
  %s93 = ssub.s32 1, %s91
  %s94 = scalar_select 0, %s93, %s91
  $region1: #{_lambda_.1} parent=0
    #allocation2 [shape = 'u8[512]{0}', space=vmem, size = 0x400, scoped, tag = 'output window, operand 1, single buffered']
    #allocation3 [shape = 's32[1]{0}', space=sflag, size = 0x4, scoped, tag = 'scoped memory for _lambda_.1']
    %95 = vsyncpa [#allocation3], 0
    // Predicated region
    $region2: #{_lambda_.1} parent=1 // pred_check
      _
    $region3: #{_lambda_.1} parent=1 // pred_check_branch
      %97 = sbr.rel (0) target = $region5
    $region4: #{_lambda_.1} parent=1 // pred_region
      _
    $region5: #{_lambda_.1} parent=1 // pred_fallthru
      _
    // Predicated region
    $region6: #{_lambda_.1} parent=1 // pred_check
      _
    $region7: #{_lambda_.1} parent=1 // pred_check_branch
      %99 = sbr.rel (0) target = $region9
    $region8: #{_lambda_.1} parent=1 // pred_region
      _
    $region9: #{_lambda_.1} parent=1 // pred_fallthru
      _
    // Predicated region
    $region10: #{_lambda_.1} parent=1 // pred_check
      _
    $region11: #{_lambda_.1} parent=1 // pred_check_branch
      %101 = sbr.rel (0) target = $region13
    $region12: #{_lambda_.1} parent=1 // pred_region
      _
    $region13: #{_lambda_.1} parent=1 // pred_fallthru
      _
    // Predicated region
    $region14: #{_lambda_.1} parent=1 // pred_check
      _
    $region15: #{_lambda_.1} parent=1 // pred_check_branch
      %103 = sbr.rel (0) target = $region17
    $region16: #{_lambda_.1} parent=1 // pred_region
      _
    $region17: #{_lambda_.1} parent=1 // pred_fallthru
      _
    // Predicated region
    $region18: #{_lambda_.1} parent=1 // pred_check
      _
    $region19: #{_lambda_.1} parent=1 // pred_check_branch
      %105 = sbr.rel (0) target = $region21
    $region20: #{_lambda_.1} parent=1 // pred_region
      _
    $region21: #{_lambda_.1} parent=1 // pred_fallthru
      _
    // Predicated region
    $region22: #{_lambda_.1} parent=1 // pred_check
      _
    $region23: #{_lambda_.1} parent=1 // pred_check_branch
      %107 = sbr.rel (0) target = $region25
    $region24: #{_lambda_.1} parent=1 // pred_region
      _
    $region25: #{_lambda_.1} parent=1 // pred_fallthru
      _
    // Predicated region
    $region26: #{_lambda_.1} parent=1 // pred_check
      _
    $region27: #{_lambda_.1} parent=1 // pred_check_branch
      %109 = sbr.rel (0) target = $region29
    $region28: #{_lambda_.1} parent=1 // pred_region
      _
    $region29: #{_lambda_.1} parent=1 // pred_fallthru
      _
    // Predicated region
    $region30: #{_lambda_.1} parent=1 // pred_check
      _
    $region31: #{_lambda_.1} parent=1 // pred_check_branch
      %111 = sbr.rel (0) target = $region33
    $region32: #{_lambda_.1} parent=1 // pred_region
      _
    $region33: #{_lambda_.1} parent=1 // pred_fallthru
      _
    // Predicated region
    $region34: #{_lambda_.1} parent=1 // pred_check
      _
    $region35: #{_lambda_.1} parent=1 // pred_check_branch
      %113 = sbr.rel (0) target = $region37
    $region36: #{_lambda_.1} parent=1 // pred_region
      _
    $region37: #{_lambda_.1} parent=1 // pred_fallthru
      _
    // Predicated region
    $region38: #{_lambda_.1} parent=1 // pred_check
      _
    $region39: #{_lambda_.1} parent=1 // pred_check_branch
      %115 = sbr.rel (0) target = $region41
    $region40: #{_lambda_.1} parent=1 // pred_region
      _
    $region41: #{_lambda_.1} parent=1 // pred_fallthru
      _
    // Predicated region
    $region42: #{_lambda_.1} parent=1 // pred_check
      _
    $region43: #{_lambda_.1} parent=1 // pred_check_branch
      %117 = sbr.rel (0) target = $region45
    $region44: #{_lambda_.1} parent=1 // pred_region
      _
    $region45: #{_lambda_.1} parent=1 // pred_fallthru
      _
    // Predicated region
    $region46: #{_lambda_.1} parent=1 // pred_check
      _
    $region47: #{_lambda_.1} parent=1 // pred_check_branch
      %119 = sbr.rel (0) target = $region49
    $region48: #{_lambda_.1} parent=1 // pred_region
      _
    $region49: #{_lambda_.1} parent=1 // pred_fallthru
      _
    // Predicated region
    $region50: #{_lambda_.1} parent=1 // pred_check
      _
    $region51: #{_lambda_.1} parent=1 // pred_check_branch
      %121 = sbr.rel (0) target = $region53
    $region52: #{_lambda_.1} parent=1 // pred_region
      _
    $region53: #{_lambda_.1} parent=1 // pred_fallthru
      _
    // Predicated region
    $region54: #{_lambda_.1} parent=1 // pred_check
      _
    $region55: #{_lambda_.1} parent=1 // pred_check_branch
      %123 = sbr.rel (0) target = $region57
    $region56: #{_lambda_.1} parent=1 // pred_region
      _
    $region57: #{_lambda_.1} parent=1 // pred_fallthru
      _
    // Predicated region
    $region58: #{_lambda_.1} parent=1 // pred_check
      _
    $region59: #{_lambda_.1} parent=1 // pred_check_branch
      %125 = sbr.rel (0) target = $region61
    $region60: #{_lambda_.1} parent=1 // pred_region
      _
    $region61: #{_lambda_.1} parent=1 // pred_fallthru
      _
    // Predicated region
    $region62: #{_lambda_.1} parent=1 // pred_check
      _
    $region63: #{_lambda_.1} parent=1 // pred_check_branch
      %127 = sbr.rel (0) target = $region65
    $region64: #{_lambda_.1} parent=1 // pred_region
      _
    $region65: #{_lambda_.1} parent=1 // pred_fallthru
      _
    // Predicated region
    $region66: #{_lambda_.1} parent=1 // pred_check
      _
    $region67: #{_lambda_.1} parent=1 // pred_check_branch
      %129 = sbr.rel (0) target = $region69
    $region68: #{_lambda_.1} parent=1 // pred_region
      _
    $region69: #{_lambda_.1} parent=1 // pred_fallthru
      _
    // Predicated region
    $region70: #{_lambda_.1} parent=1 // pred_check
      _
    $region71: #{_lambda_.1} parent=1 // pred_check_branch
      %131 = sbr.rel (0) target = $region73
    $region72: #{_lambda_.1} parent=1 // pred_region
      _
    $region73: #{_lambda_.1} parent=1 // pred_fallthru
      _
    // Predicated region
    $region74: #{_lambda_.1} parent=1 // pred_check
      _
    $region75: #{_lambda_.1} parent=1 // pred_check_branch
      %133 = sbr.rel (0) target = $region77
    $region76: #{_lambda_.1} parent=1 // pred_region
      _
    $region77: #{_lambda_.1} parent=1 // pred_fallthru
      _
    // Predicated region
    $region78: #{_lambda_.1} parent=1 // pred_check
      _
    $region79: #{_lambda_.1} parent=1 // pred_check_branch
      %135 = sbr.rel (0) target = $region81
    $region80: #{_lambda_.1} parent=1 // pred_region
      _
    $region81: #{_lambda_.1} parent=1 // pred_fallthru
      _
    // Predicated region
    $region82: #{_lambda_.1} parent=1 // pred_check
      _
    $region83: #{_lambda_.1} parent=1 // pred_check_branch
      %137 = sbr.rel (0) target = $region85
    $region84: #{_lambda_.1} parent=1 // pred_region
      _
    $region85: #{_lambda_.1} parent=1 // pred_fallthru
      _
    // Predicated region
    $region86: #{_lambda_.1} parent=1 // pred_check
      _
    $region87: #{_lambda_.1} parent=1 // pred_check_branch
      %139 = sbr.rel (0) target = $region89
    $region88: #{_lambda_.1} parent=1 // pred_region
      _
    $region89: #{_lambda_.1} parent=1 // pred_fallthru
      _
    // Predicated region
    $region90: #{_lambda_.1} parent=1 // pred_check
      _
    $region91: #{_lambda_.1} parent=1 // pred_check_branch
      %141 = sbr.rel (0) target = $region93
    $region92: #{_lambda_.1} parent=1 // pred_region
      _
    $region93: #{_lambda_.1} parent=1 // pred_fallthru
      _
    // Predicated region
    $region94: #{_lambda_.1} parent=1 // pred_check
      _
    $region95: #{_lambda_.1} parent=1 // pred_check_branch
      %143 = sbr.rel (0) target = $region97
    $region96: #{_lambda_.1} parent=1 // pred_region
      _
    $region97: #{_lambda_.1} parent=1 // pred_fallthru
      _
    // Predicated region
    $region98: #{_lambda_.1} parent=1 // pred_check
      _
    $region99: #{_lambda_.1} parent=1 // pred_check_branch
      %145 = sbr.rel (0) target = $region101
    $region100: #{_lambda_.1} parent=1 // pred_region
      _
    $region101: #{_lambda_.1} parent=1 // pred_fallthru
      _
    // Predicated region
    $region102: #{_lambda_.1} parent=1 // pred_check
      _
    $region103: #{_lambda_.1} parent=1 // pred_check_branch
      %147 = sbr.rel (0) target = $region105
    $region104: #{_lambda_.1} parent=1 // pred_region
      _
    $region105: #{_lambda_.1} parent=1 // pred_fallthru
      _
    // Predicated region
    $region106: #{_lambda_.1} parent=1 // pred_check
      _
    $region107: #{_lambda_.1} parent=1 // pred_check_branch
      %149 = sbr.rel (0) target = $region109
    $region108: #{_lambda_.1} parent=1 // pred_region
      _
    $region109: #{_lambda_.1} parent=1 // pred_fallthru
      _
    // Predicated region
    $region110: #{_lambda_.1} parent=1 // pred_check
      _
    $region111: #{_lambda_.1} parent=1 // pred_check_branch
      %151 = sbr.rel (0) target = $region113
    $region112: #{_lambda_.1} parent=1 // pred_region
      _
    $region113: #{_lambda_.1} parent=1 // pred_fallthru
      _
    // Predicated region
    $region114: #{_lambda_.1} parent=1 // pred_check
      _
    $region115: #{_lambda_.1} parent=1 // pred_check_branch
      %153 = sbr.rel (0) target = $region117
    $region116: #{_lambda_.1} parent=1 // pred_region
      _
    $region117: #{_lambda_.1} parent=1 // pred_fallthru
      _
    // Predicated region
    $region118: #{_lambda_.1} parent=1 // pred_check
      _
    $region119: #{_lambda_.1} parent=1 // pred_check_branch
      %155 = sbr.rel (0) target = $region121
    $region120: #{_lambda_.1} parent=1 // pred_region
      _
    $region121: #{_lambda_.1} parent=1 // pred_fallthru
      _
    // Predicated region
    $region122: #{_lambda_.1} parent=1 // pred_check
      _
    $region123: #{_lambda_.1} parent=1 // pred_check_branch
      %157 = sbr.rel (0) target = $region125
    $region124: #{_lambda_.1} parent=1 // pred_region
      _
    $region125: #{_lambda_.1} parent=1 // pred_fallthru
      _
    // Predicated region
    $region126: #{_lambda_.1} parent=1 // pred_check
      _
    $region127: #{_lambda_.1} parent=1 // pred_check_branch
      %159 = sbr.rel (0) target = $region129
    $region128: #{_lambda_.1} parent=1 // pred_region
      _
    $region129: #{_lambda_.1} parent=1 // pred_fallthru
      _
    // Predicated region
    $region130: #{_lambda_.1} parent=1 // pred_check
      _
    $region131: #{_lambda_.1} parent=1 // pred_check_branch
      %161 = sbr.rel (0) target = $region133
    $region132: #{_lambda_.1} parent=1 // pred_region
      _
    $region133: #{_lambda_.1} parent=1 // pred_fallthru
      _
    // Predicated region
    $region134: #{_lambda_.1} parent=1 // pred_check
      _
    $region135: #{_lambda_.1} parent=1 // pred_check_branch
      %163 = sbr.rel (0) target = $region137
    $region136: #{_lambda_.1} parent=1 // pred_region
      _
    $region137: #{_lambda_.1} parent=1 // pred_fallthru
      _
    // Predicated region
    $region138: #{_lambda_.1} parent=1 // pred_check
      _
    $region139: #{_lambda_.1} parent=1 // pred_check_branch
      %165 = sbr.rel (0) target = $region141
    $region140: #{_lambda_.1} parent=1 // pred_region
      _
    $region141: #{_lambda_.1} parent=1 // pred_fallthru
      _
    // Predicated region
    $region142: #{_lambda_.1} parent=1 // pred_check
      _
    $region143: #{_lambda_.1} parent=1 // pred_check_branch
      %167 = sbr.rel (0) target = $region145
    $region144: #{_lambda_.1} parent=1 // pred_region
      _
    $region145: #{_lambda_.1} parent=1 // pred_fallthru
      _
    // Predicated region
    $region146: #{_lambda_.1} parent=1 // pred_check
      _
    $region147: #{_lambda_.1} parent=1 // pred_check_branch
      %169 = sbr.rel (0) target = $region149
    $region148: #{_lambda_.1} parent=1 // pred_region
      _
    $region149: #{_lambda_.1} parent=1 // pred_fallthru
      _
    // Predicated region
    $region150: #{_lambda_.1} parent=1 // pred_check
      _
    $region151: #{_lambda_.1} parent=1 // pred_check_branch
      %171 = sbr.rel (0) target = $region153
    $region152: #{_lambda_.1} parent=1 // pred_region
      _
    $region153: #{_lambda_.1} parent=1 // pred_fallthru
      _
    // Predicated region
    $region154: #{_lambda_.1} parent=1 // pred_check
      _
    $region155: #{_lambda_.1} parent=1 // pred_check_branch
      %173 = sbr.rel (0) target = $region157
    $region156: #{_lambda_.1} parent=1 // pred_region
      _
    $region157: #{_lambda_.1} parent=1 // pred_fallthru
      _
    // Predicated region
    $region158: #{_lambda_.1} parent=1 // pred_check
      _
    $region159: #{_lambda_.1} parent=1 // pred_check_branch
      %175 = sbr.rel (0) target = $region161
    $region160: #{_lambda_.1} parent=1 // pred_region
      _
    $region161: #{_lambda_.1} parent=1 // pred_fallthru
      _
    // Predicated region
    $region162: #{_lambda_.1} parent=1 // pred_check
      _
    $region163: #{_lambda_.1} parent=1 // pred_check_branch
      %177 = sbr.rel (0) target = $region165
    $region164: #{_lambda_.1} parent=1 // pred_region
      _
    $region165: #{_lambda_.1} parent=1 // pred_fallthru
      _
    // Predicated region
    $region166: #{_lambda_.1} parent=1 // pred_check
      _
    $region167: #{_lambda_.1} parent=1 // pred_check_branch
      %179 = sbr.rel (0) target = $region169
    $region168: #{_lambda_.1} parent=1 // pred_region
      _
    $region169: #{_lambda_.1} parent=1 // pred_fallthru
      _
    // Predicated region
    $region170: #{_lambda_.1} parent=1 // pred_check
      _
    $region171: #{_lambda_.1} parent=1 // pred_check_branch
      %181 = sbr.rel (0) target = $region173
    $region172: #{_lambda_.1} parent=1 // pred_region
      _
    $region173: #{_lambda_.1} parent=1 // pred_fallthru
      _
    %v183 = vld [vmem:[%s1] sm:$0xff]
    %v184 = vld [vmem:[%s15] sm:$0xff]
    %v185 = vld [vmem:[%s17] sm:$0x1]
    %v187 = vlaneseq
    %v188 = vshrl.u32 %v187, 7
    %v189 = vsub.s32 0, %v188
    %v190 = vrot.slane %v185, %v189
    %vm192 = vcmask 64512
    %v194 = vsel %vm192, %v183, 0
    %196 = vmatprep.subr.mxu0 0.0
    %197 = vmatpush1.msra.mxu0 %v184
    %198 = vmatprep.subr.mxu0 0.0
    %199 = vmatpush1.msra.mxu0 0.0
    %200 = vmatprep.subr.mxu0 0.0
    %201 = vmatpush1.msra.mxu0 0.0
    %202 = vmatprep.subr.mxu0 0.0
    %203 = vmatpush1.msra.mxu0 0.0
    %204 = vmatprep.subr.mxu0 0.0
    %205 = vmatpush1.msra.mxu0 0.0
    %206 = vmatprep.subr.mxu0 0.0
    %207 = vmatpush1.msra.mxu0 0.0
    %208 = vmatprep.subr.mxu0 0.0
    %209 = vmatpush1.msra.mxu0 0.0
    %210 = vmatprep.subr.mxu0 0.0
    %211 = vmatpush1.msra.mxu0 0.0
    %212 = vmatprep.subr.mxu0 0.0
    %213 = vmatpush1.msra.mxu0 0.0
    %214 = vmatprep.subr.mxu0 0.0
    %215 = vmatpush1.msra.mxu0 0.0
    %216 = vmatprep.subr.mxu0 0.0
    %217 = vmatpush1.msra.mxu0 0.0
    %218 = vmatprep.subr.mxu0 0.0
    %219 = vmatpush1.msra.mxu0 0.0
    %220 = vmatprep.subr.mxu0 0.0
    %221 = vmatpush1.msra.mxu0 0.0
    %222 = vmatprep.subr.mxu0 0.0
    %223 = vmatpush1.msra.mxu0 0.0
    %224 = vmatprep.subr.mxu0 0.0
    %225 = vmatpush1.msra.mxu0 0.0
    %226 = vmatprep.subr.mxu0 0.0
    %227 = vmatpush1.msra.mxu0 0.0
    %228 = vmatprep.subr.mxu0 0.0
    %229 = vmatpush1.msra.mxu0 0.0
    %230 = vmatprep.subr.mxu0 0.0
    %231 = vmatpush1.msra.mxu0 0.0
    %232 = vmatprep.subr.mxu0 0.0
    %233 = vmatpush1.msra.mxu0 0.0
    %234 = vmatprep.subr.mxu0 0.0
    %235 = vmatpush1.msra.mxu0 0.0
    %236 = vmatprep.subr.mxu0 0.0
    %237 = vmatpush1.msra.mxu0 0.0
    %238 = vmatprep.subr.mxu0 0.0
    %239 = vmatpush1.msra.mxu0 0.0
    %240 = vmatprep.subr.mxu0 0.0
    %241 = vmatpush1.msra.mxu0 0.0
    %242 = vmatprep.subr.mxu0 0.0
    %243 = vmatpush1.msra.mxu0 0.0
    %244 = vmatprep.subr.mxu0 0.0
    %245 = vmatpush1.msra.mxu0 0.0
    %246 = vmatprep.subr.mxu0 0.0
    %247 = vmatpush1.msra.mxu0 0.0
    %248 = vmatprep.subr.mxu0 0.0
    %249 = vmatpush1.msra.mxu0 0.0
    %250 = vmatprep.subr.mxu0 0.0
    %251 = vmatpush1.msra.mxu0 0.0
    %252 = vmatprep.subr.mxu0 0.0
    %253 = vmatpush1.msra.mxu0 0.0
    %254 = vmatprep.subr.mxu0 0.0
    %255 = vmatpush1.msra.mxu0 0.0
    %256 = vmatprep.subr.mxu0 0.0
    %257 = vmatpush1.msra.mxu0 0.0
    %258 = vmatprep.subr.mxu0 0.0
    %259 = vmatpush1.msra.mxu0 0.0
    %260 = vmatprep.mubr.f32.mxu0 0.0
    %261 = vmatmul.mubr.f32.gmra.mrb[0].mxu0 %v194
    %v262 = vpop.f32.mrb[0].mxu0
    %v263 = vadd.f32 %v190, %v262
    %v264 = vpop.f32.mrb[0].mxu0
    %265 = vdwg.mxu0
    %v266 = vmax.f32 %v263, 0.0
    %v267 = vld [vmem:[%s19] sm:$0xff]
    %v268 = vld [vmem:[%s19 + $0x8] sm:$0xff]
    %v269 = vld [vmem:[%s19 + $0x10] sm:$0xff]
    %v270 = vld [vmem:[%s19 + $0x18] sm:$0xff]
    %v271 = vld [vmem:[%s21] sm:$0x1]
    %v273 = vlaneseq
    %v274 = vshrl.u32 %v273, 7
    %v275 = vsub.s32 0, %v274
    %v276 = vrot.slane %v271, %v275
    %vm278 = vcmask 261120
    %v280 = vsel %vm278, %v266, 0
    %282 = vmatprep.subr.mxu0 0.0
    %283 = vmatpush1.msra.mxu0 %v267
    %284 = vmatprep.subr.mxu0 0.0
    %285 = vmatpush1.msra.mxu0 %v268
    %286 = vmatprep.subr.mxu0 0.0
    %287 = vmatpush1.msra.mxu0 %v269
    %288 = vmatprep.subr.mxu0 0.0
    %289 = vmatpush1.msra.mxu0 %v270
    %290 = vmatprep.subr.mxu0 0.0
    %291 = vmatpush1.msra.mxu0 0.0
    %292 = vmatprep.subr.mxu0 0.0
    %293 = vmatpush1.msra.mxu0 0.0
    %294 = vmatprep.subr.mxu0 0.0
    %295 = vmatpush1.msra.mxu0 0.0
    %296 = vmatprep.subr.mxu0 0.0
    %297 = vmatpush1.msra.mxu0 0.0
    %298 = vmatprep.subr.mxu0 0.0
    %299 = vmatpush1.msra.mxu0 0.0
    %300 = vmatprep.subr.mxu0 0.0
    %301 = vmatpush1.msra.mxu0 0.0
    %302 = vmatprep.subr.mxu0 0.0
    %303 = vmatpush1.msra.mxu0 0.0
    %304 = vmatprep.subr.mxu0 0.0
    %305 = vmatpush1.msra.mxu0 0.0
    %306 = vmatprep.subr.mxu0 0.0
    %307 = vmatpush1.msra.mxu0 0.0
    %308 = vmatprep.subr.mxu0 0.0
    %309 = vmatpush1.msra.mxu0 0.0
    %310 = vmatprep.subr.mxu0 0.0
    %311 = vmatpush1.msra.mxu0 0.0
    %312 = vmatprep.subr.mxu0 0.0
    %313 = vmatpush1.msra.mxu0 0.0
    %314 = vmatprep.subr.mxu0 0.0
    %315 = vmatpush1.msra.mxu0 0.0
    %316 = vmatprep.subr.mxu0 0.0
    %317 = vmatpush1.msra.mxu0 0.0
    %318 = vmatprep.subr.mxu0 0.0
    %319 = vmatpush1.msra.mxu0 0.0
    %320 = vmatprep.subr.mxu0 0.0
    %321 = vmatpush1.msra.mxu0 0.0
    %322 = vmatprep.subr.mxu0 0.0
    %323 = vmatpush1.msra.mxu0 0.0
    %324 = vmatprep.subr.mxu0 0.0
    %325 = vmatpush1.msra.mxu0 0.0
    %326 = vmatprep.subr.mxu0 0.0
    %327 = vmatpush1.msra.mxu0 0.0
    %328 = vmatprep.subr.mxu0 0.0
    %329 = vmatpush1.msra.mxu0 0.0
    %330 = vmatprep.subr.mxu0 0.0
    %331 = vmatpush1.msra.mxu0 0.0
    %332 = vmatprep.subr.mxu0 0.0
    %333 = vmatpush1.msra.mxu0 0.0
    %334 = vmatprep.subr.mxu0 0.0
    %335 = vmatpush1.msra.mxu0 0.0
    %336 = vmatprep.subr.mxu0 0.0
    %337 = vmatpush1.msra.mxu0 0.0
    %338 = vmatprep.subr.mxu0 0.0
    %339 = vmatpush1.msra.mxu0 0.0
    %340 = vmatprep.subr.mxu0 0.0
    %341 = vmatpush1.msra.mxu0 0.0
    %342 = vmatprep.subr.mxu0 0.0
    %343 = vmatpush1.msra.mxu0 0.0
    %344 = vmatprep.subr.mxu0 0.0
    %345 = vmatpush1.msra.mxu0 0.0
    %346 = vmatprep.mubr.f32.mxu0 0.0
    %347 = vmatmul.mubr.f32.gmra.mrb[0].mxu0 %v280
    %v348 = vpop.f32.mrb[0].mxu0
    %v349 = vadd.f32 %v276, %v348
    %v350 = vpop.f32.mrb[0].mxu0
    %351 = vdwg.mxu0
    %v352 = vld [vmem:[%s3] sm:$0xff]
    %v353 = vld [vmem:[%s23] sm:$0xff]
    %v354 = vld [vmem:[%s23 + $0x8] sm:$0xff]
    %v355 = vld [vmem:[%s23 + $0x10] sm:$0xff]
    %v356 = vld [vmem:[%s23 + $0x18] sm:$0xff]
    %v358 = vsel %vm278, %v349, 0
    %360 = vmatprep.subr.mxu0 0.0
    %361 = vmatpush1.msra.mxu0 %v353
    %362 = vmatprep.subr.mxu0 0.0
    %363 = vmatpush1.msra.mxu0 %v354
    %364 = vmatprep.subr.mxu0 0.0
    %365 = vmatpush1.msra.mxu0 %v355
    %366 = vmatprep.subr.mxu0 0.0
    %367 = vmatpush1.msra.mxu0 %v356
    %368 = vmatprep.subr.mxu0 0.0
    %369 = vmatpush1.msra.mxu0 0.0
    %370 = vmatprep.subr.mxu0 0.0
    %371 = vmatpush1.msra.mxu0 0.0
    %372 = vmatprep.subr.mxu0 0.0
    %373 = vmatpush1.msra.mxu0 0.0
    %374 = vmatprep.subr.mxu0 0.0
    %375 = vmatpush1.msra.mxu0 0.0
    %376 = vmatprep.subr.mxu0 0.0
    %377 = vmatpush1.msra.mxu0 0.0
    %378 = vmatprep.subr.mxu0 0.0
    %379 = vmatpush1.msra.mxu0 0.0
    %380 = vmatprep.subr.mxu0 0.0
    %381 = vmatpush1.msra.mxu0 0.0
    %382 = vmatprep.subr.mxu0 0.0
    %383 = vmatpush1.msra.mxu0 0.0
    %384 = vmatprep.subr.mxu0 0.0
    %385 = vmatpush1.msra.mxu0 0.0
    %386 = vmatprep.subr.mxu0 0.0
    %387 = vmatpush1.msra.mxu0 0.0
    %388 = vmatprep.subr.mxu0 0.0
    %389 = vmatpush1.msra.mxu0 0.0
    %390 = vmatprep.subr.mxu0 0.0
    %391 = vmatpush1.msra.mxu0 0.0
    %392 = vmatprep.subr.mxu0 0.0
    %393 = vmatpush1.msra.mxu0 0.0
    %394 = vmatprep.subr.mxu0 0.0
    %395 = vmatpush1.msra.mxu0 0.0
    %396 = vmatprep.subr.mxu0 0.0
    %397 = vmatpush1.msra.mxu0 0.0
    %398 = vmatprep.subr.mxu0 0.0
    %399 = vmatpush1.msra.mxu0 0.0
    %400 = vmatprep.subr.mxu0 0.0
    %401 = vmatpush1.msra.mxu0 0.0
    %402 = vmatprep.subr.mxu0 0.0
    %403 = vmatpush1.msra.mxu0 0.0
    %404 = vmatprep.subr.mxu0 0.0
    %405 = vmatpush1.msra.mxu0 0.0
    %406 = vmatprep.subr.mxu0 0.0
    %407 = vmatpush1.msra.mxu0 0.0
    %408 = vmatprep.subr.mxu0 0.0
    %409 = vmatpush1.msra.mxu0 0.0
    %410 = vmatprep.subr.mxu0 0.0
    %411 = vmatpush1.msra.mxu0 0.0
    %412 = vmatprep.subr.mxu0 0.0
    %413 = vmatpush1.msra.mxu0 0.0
    %414 = vmatprep.subr.mxu0 0.0
    %415 = vmatpush1.msra.mxu0 0.0
    %416 = vmatprep.subr.mxu0 0.0
    %417 = vmatpush1.msra.mxu0 0.0
    %418 = vmatprep.subr.mxu0 0.0
    %419 = vmatpush1.msra.mxu0 0.0
    %420 = vmatprep.subr.mxu0 0.0
    %421 = vmatpush1.msra.mxu0 0.0
    %422 = vmatprep.subr.mxu0 0.0
    %423 = vmatpush1.msra.mxu0 0.0
    %424 = vmatprep.mubr.f32.mxu0 0.0
    %425 = vmatmul.mubr.f32.gmra.mrb[0].mxu0 %v358
    %v426 = vpop.f32.mrb[0].mxu0
    %v427 = vadd.f32 0.0, %v426
    %v428 = vpop.f32.mrb[0].mxu0
    %429 = vdwg.mxu0
    %v431 = vsel %vm192, %v352, 0
    %433 = vmatprep.subr.mxu0 0.0
    %434 = vmatpush1.msra.mxu0 %v427
    %435 = vmatprep.subr.mxu0 0.0
    %436 = vmatpush1.msra.mxu0 0.0
    %437 = vmatprep.subr.mxu0 0.0
    %438 = vmatpush1.msra.mxu0 0.0
    %439 = vmatprep.subr.mxu0 0.0
    %440 = vmatpush1.msra.mxu0 0.0
    %441 = vmatprep.subr.mxu0 0.0
    %442 = vmatpush1.msra.mxu0 0.0
    %443 = vmatprep.subr.mxu0 0.0
    %444 = vmatpush1.msra.mxu0 0.0
    %445 = vmatprep.subr.mxu0 0.0
    %446 = vmatpush1.msra.mxu0 0.0
    %447 = vmatprep.subr.mxu0 0.0
    %448 = vmatpush1.msra.mxu0 0.0
    %449 = vmatprep.subr.mxu0 0.0
    %450 = vmatpush1.msra.mxu0 0.0
    %451 = vmatprep.subr.mxu0 0.0
    %452 = vmatpush1.msra.mxu0 0.0
    %453 = vmatprep.subr.mxu0 0.0
    %454 = vmatpush1.msra.mxu0 0.0
    %455 = vmatprep.subr.mxu0 0.0
    %456 = vmatpush1.msra.mxu0 0.0
    %457 = vmatprep.subr.mxu0 0.0
    %458 = vmatpush1.msra.mxu0 0.0
    %459 = vmatprep.subr.mxu0 0.0
    %460 = vmatpush1.msra.mxu0 0.0
    %461 = vmatprep.subr.mxu0 0.0
    %462 = vmatpush1.msra.mxu0 0.0
    %463 = vmatprep.subr.mxu0 0.0
    %464 = vmatpush1.msra.mxu0 0.0
    %465 = vmatprep.subr.mxu0 0.0
    %466 = vmatpush1.msra.mxu0 0.0
    %467 = vmatprep.subr.mxu0 0.0
    %468 = vmatpush1.msra.mxu0 0.0
    %469 = vmatprep.subr.mxu0 0.0
    %470 = vmatpush1.msra.mxu0 0.0
    %471 = vmatprep.subr.mxu0 0.0
    %472 = vmatpush1.msra.mxu0 0.0
    %473 = vmatprep.subr.mxu0 0.0
    %474 = vmatpush1.msra.mxu0 0.0
    %475 = vmatprep.subr.mxu0 0.0
    %476 = vmatpush1.msra.mxu0 0.0
    %477 = vmatprep.subr.mxu0 0.0
    %478 = vmatpush1.msra.mxu0 0.0
    %479 = vmatprep.subr.mxu0 0.0
    %480 = vmatpush1.msra.mxu0 0.0
    %481 = vmatprep.subr.mxu0 0.0
    %482 = vmatpush1.msra.mxu0 0.0
    %483 = vmatprep.subr.mxu0 0.0
    %484 = vmatpush1.msra.mxu0 0.0
    %485 = vmatprep.subr.mxu0 0.0
    %486 = vmatpush1.msra.mxu0 0.0
    %487 = vmatprep.subr.mxu0 0.0
    %488 = vmatpush1.msra.mxu0 0.0
    %489 = vmatprep.subr.mxu0 0.0
    %490 = vmatpush1.msra.mxu0 0.0
    %491 = vmatprep.subr.mxu0 0.0
    %492 = vmatpush1.msra.mxu0 0.0
    %493 = vmatprep.subr.mxu0 0.0
    %494 = vmatpush1.msra.mxu0 0.0
    %495 = vmatprep.subr.mxu0 0.0
    %496 = vmatpush1.msra.mxu0 0.0
    %497 = vmatprep.mubr.f32.mxu0 0.0
    %498 = vmatmul.mubr.f32.gmra.mrb[0].mxu0 %v431
    %v499 = vpop.f32.mrb[0].mxu0
    %v500 = vadd.f32 0.0, %v499
    %v501 = vpop.f32.mrb[0].mxu0
    %502 = vdwg.mxu0
    %v503 = vmax.f32 %v500, 0.0
    %v504 = vld [vmem:[%s25] sm:$0x1]
    %v505 = vld [vmem:[%s27] sm:$0x1]
    %v506 = vsel %vm278, %v503, 0.0
    %507 = vadd.xlane.f32.xlu0 %v506
    %v508 = vpop.xlane.xlu0 %507
    %v509 = vrcp.pop 32.0
    %v510 = vmul.f32 %v508, %v509
    %v511 = vsub.f32 %v503, %v510
    %v512 = vmul.f32 %v511, %v511
    %v513 = vsel %vm278, %v512, 0.0
    %514 = vadd.xlane.f32.xlu0 %v513
    %v515 = vpop.xlane.xlu0 %514
    %v516 = vmul.f32 %v515, %v509
    %v517 = vadd.f32 %v516, 1e-05
    %v518 = vrsqrt.pop %v517
    %v519 = vmul.f32 %v511, %v518
    %v521 = vlaneseq
    %v522 = vshrl.u32 %v521, 7
    %v523 = vsub.s32 0, %v522
    %v524 = vrot.slane %v504, %v523
    %v526 = vmul.f32 %v519, %v524
    %v528 = vlaneseq
    %v529 = vshrl.u32 %v528, 7
    %v530 = vsub.s32 0, %v529
    %v531 = vrot.slane %v505, %v530
    %v533 = vadd.f32 %v526, %v531
    %v534 = vadd.f32 %v533, %v349
    %v535 = vld [vmem:[%s29] sm:$0x1]
    %v536 = vld [vmem:[%s31] sm:$0x1]
    %v537 = vsel %vm278, %v534, 0.0
    %538 = vadd.xlane.f32.xlu0 %v537
    %v539 = vpop.xlane.xlu0 %538
    %v540 = vmul.f32 %v539, %v509
    %v541 = vsub.f32 %v534, %v540
    %v542 = vmul.f32 %v541, %v541
    %v543 = vsel %vm278, %v542, 0.0
    %544 = vadd.xlane.f32.xlu0 %v543
    %v545 = vpop.xlane.xlu0 %544
    %v546 = vmul.f32 %v545, %v509
    %v547 = vadd.f32 %v546, 1e-05
    %v548 = vrsqrt.pop %v547
    %v549 = vmul.f32 %v541, %v548
    %v551 = vlaneseq
    %v552 = vshrl.u32 %v551, 7
    %v553 = vsub.s32 0, %v552
    %v554 = vrot.slane %v535, %v553
    %v556 = vmul.f32 %v549, %v554
    %v558 = vlaneseq
    %v559 = vshrl.u32 %v558, 7
    %v560 = vsub.s32 0, %v559
    %v561 = vrot.slane %v536, %v560
    %v563 = vadd.f32 %v556, %v561
    %v564 = vld [vmem:[%s33] sm:$0xff]
    %v565 = vld [vmem:[%s33 + $0x8] sm:$0xff]
    %v566 = vld [vmem:[%s33 + $0x10] sm:$0xff]
    %v567 = vld [vmem:[%s33 + $0x18] sm:$0xff]
    %v569 = vsel %vm278, %v563, 0
    %571 = vmatprep.subr.mxu0 0.0
    %572 = vmatpush1.msra.mxu0 %v564
    %573 = vmatprep.subr.mxu0 0.0
    %574 = vmatpush1.msra.mxu0 %v565
    %575 = vmatprep.subr.mxu0 0.0
    %576 = vmatpush1.msra.mxu0 %v566
    %577 = vmatprep.subr.mxu0 0.0
    %578 = vmatpush1.msra.mxu0 %v567
    %579 = vmatprep.subr.mxu0 0.0
    %580 = vmatpush1.msra.mxu0 0.0
    %581 = vmatprep.subr.mxu0 0.0
    %582 = vmatpush1.msra.mxu0 0.0
    %583 = vmatprep.subr.mxu0 0.0
    %584 = vmatpush1.msra.mxu0 0.0
    %585 = vmatprep.subr.mxu0 0.0
    %586 = vmatpush1.msra.mxu0 0.0
    %587 = vmatprep.subr.mxu0 0.0
    %588 = vmatpush1.msra.mxu0 0.0
    %589 = vmatprep.subr.mxu0 0.0
    %590 = vmatpush1.msra.mxu0 0.0
    %591 = vmatprep.subr.mxu0 0.0
    %592 = vmatpush1.msra.mxu0 0.0
    %593 = vmatprep.subr.mxu0 0.0
    %594 = vmatpush1.msra.mxu0 0.0
    %595 = vmatprep.subr.mxu0 0.0
    %596 = vmatpush1.msra.mxu0 0.0
    %597 = vmatprep.subr.mxu0 0.0
    %598 = vmatpush1.msra.mxu0 0.0
    %599 = vmatprep.subr.mxu0 0.0
    %600 = vmatpush1.msra.mxu0 0.0
    %601 = vmatprep.subr.mxu0 0.0
    %602 = vmatpush1.msra.mxu0 0.0
    %603 = vmatprep.subr.mxu0 0.0
    %604 = vmatpush1.msra.mxu0 0.0
    %605 = vmatprep.subr.mxu0 0.0
    %606 = vmatpush1.msra.mxu0 0.0
    %607 = vmatprep.subr.mxu0 0.0
    %608 = vmatpush1.msra.mxu0 0.0
    %609 = vmatprep.subr.mxu0 0.0
    %610 = vmatpush1.msra.mxu0 0.0
    %611 = vmatprep.subr.mxu0 0.0
    %612 = vmatpush1.msra.mxu0 0.0
    %613 = vmatprep.subr.mxu0 0.0
    %614 = vmatpush1.msra.mxu0 0.0
    %615 = vmatprep.subr.mxu0 0.0
    %616 = vmatpush1.msra.mxu0 0.0
    %617 = vmatprep.subr.mxu0 0.0
    %618 = vmatpush1.msra.mxu0 0.0
    %619 = vmatprep.subr.mxu0 0.0
    %620 = vmatpush1.msra.mxu0 0.0
    %621 = vmatprep.subr.mxu0 0.0
    %622 = vmatpush1.msra.mxu0 0.0
    %623 = vmatprep.subr.mxu0 0.0
    %624 = vmatpush1.msra.mxu0 0.0
    %625 = vmatprep.subr.mxu0 0.0
    %626 = vmatpush1.msra.mxu0 0.0
    %627 = vmatprep.subr.mxu0 0.0
    %628 = vmatpush1.msra.mxu0 0.0
    %629 = vmatprep.subr.mxu0 0.0
    %630 = vmatpush1.msra.mxu0 0.0
    %631 = vmatprep.subr.mxu0 0.0
    %632 = vmatpush1.msra.mxu0 0.0
    %633 = vmatprep.subr.mxu0 0.0
    %634 = vmatpush1.msra.mxu0 0.0
    %635 = vmatprep.mubr.f32.mxu0 0.0
    %636 = vmatmul.mubr.f32.gmra.mrb[0].mxu0 %v569
    %v637 = vpop.f32.mrb[0].mxu0
    %v638 = vadd.f32 0.0, %v637
    %v639 = vpop.f32.mrb[0].mxu0
    %640 = vdwg.mxu0
    %641 = vmatprep.subr.mxu0 0.0
    %642 = vmatpush1.msra.mxu0 %v638
    %643 = vmatprep.subr.mxu0 0.0
    %644 = vmatpush1.msra.mxu0 0.0
    %645 = vmatprep.subr.mxu0 0.0
    %646 = vmatpush1.msra.mxu0 0.0
    %647 = vmatprep.subr.mxu0 0.0
    %648 = vmatpush1.msra.mxu0 0.0
    %649 = vmatprep.subr.mxu0 0.0
    %650 = vmatpush1.msra.mxu0 0.0
    %651 = vmatprep.subr.mxu0 0.0
    %652 = vmatpush1.msra.mxu0 0.0
    %653 = vmatprep.subr.mxu0 0.0
    %654 = vmatpush1.msra.mxu0 0.0
    %655 = vmatprep.subr.mxu0 0.0
    %656 = vmatpush1.msra.mxu0 0.0
    %657 = vmatprep.subr.mxu0 0.0
    %658 = vmatpush1.msra.mxu0 0.0
    %659 = vmatprep.subr.mxu0 0.0
    %660 = vmatpush1.msra.mxu0 0.0
    %661 = vmatprep.subr.mxu0 0.0
    %662 = vmatpush1.msra.mxu0 0.0
    %663 = vmatprep.subr.mxu0 0.0
    %664 = vmatpush1.msra.mxu0 0.0
    %665 = vmatprep.subr.mxu0 0.0
    %666 = vmatpush1.msra.mxu0 0.0
    %667 = vmatprep.subr.mxu0 0.0
    %668 = vmatpush1.msra.mxu0 0.0
    %669 = vmatprep.subr.mxu0 0.0
    %670 = vmatpush1.msra.mxu0 0.0
    %671 = vmatprep.subr.mxu0 0.0
    %672 = vmatpush1.msra.mxu0 0.0
    %673 = vmatprep.subr.mxu0 0.0
    %674 = vmatpush1.msra.mxu0 0.0
    %675 = vmatprep.subr.mxu0 0.0
    %676 = vmatpush1.msra.mxu0 0.0
    %677 = vmatprep.subr.mxu0 0.0
    %678 = vmatpush1.msra.mxu0 0.0
    %679 = vmatprep.subr.mxu0 0.0
    %680 = vmatpush1.msra.mxu0 0.0
    %681 = vmatprep.subr.mxu0 0.0
    %682 = vmatpush1.msra.mxu0 0.0
    %683 = vmatprep.subr.mxu0 0.0
    %684 = vmatpush1.msra.mxu0 0.0
    %685 = vmatprep.subr.mxu0 0.0
    %686 = vmatpush1.msra.mxu0 0.0
    %687 = vmatprep.subr.mxu0 0.0
    %688 = vmatpush1.msra.mxu0 0.0
    %689 = vmatprep.subr.mxu0 0.0
    %690 = vmatpush1.msra.mxu0 0.0
    %691 = vmatprep.subr.mxu0 0.0
    %692 = vmatpush1.msra.mxu0 0.0
    %693 = vmatprep.subr.mxu0 0.0
    %694 = vmatpush1.msra.mxu0 0.0
    %695 = vmatprep.subr.mxu0 0.0
    %696 = vmatpush1.msra.mxu0 0.0
    %697 = vmatprep.subr.mxu0 0.0
    %698 = vmatpush1.msra.mxu0 0.0
    %699 = vmatprep.subr.mxu0 0.0
    %700 = vmatpush1.msra.mxu0 0.0
    %701 = vmatprep.subr.mxu0 0.0
    %702 = vmatpush1.msra.mxu0 0.0
    %703 = vmatprep.subr.mxu0 0.0
    %704 = vmatpush1.msra.mxu0 0.0
    %705 = vmatprep.mubr.f32.mxu0 0.0
    %706 = vmatmul.mubr.f32.gmra.mrb[0].mxu0 %v431
    %v707 = vpop.f32.mrb[0].mxu0
    %v708 = vadd.f32 0.0, %v707
    %v709 = vpop.f32.mrb[0].mxu0
    %710 = vdwg.mxu0
    %v711 = vmax.f32 %v708, 0.0
    %v712 = vld [vmem:[%s35] sm:$0x1]
    %v713 = vld [vmem:[%s37] sm:$0x1]
    %v714 = vsel %vm278, %v711, 0.0
    %715 = vadd.xlane.f32.xlu0 %v714
    %v716 = vpop.xlane.xlu0 %715
    %v717 = vmul.f32 %v716, %v509
    %v718 = vsub.f32 %v711, %v717
    %v719 = vmul.f32 %v718, %v718
    %v720 = vsel %vm278, %v719, 0.0
    %721 = vadd.xlane.f32.xlu0 %v720
    %v722 = vpop.xlane.xlu0 %721
    %v723 = vmul.f32 %v722, %v509
    %v724 = vadd.f32 %v723, 1e-05
    %v725 = vrsqrt.pop %v724
    %v726 = vmul.f32 %v718, %v725
    %v728 = vlaneseq
    %v729 = vshrl.u32 %v728, 7
    %v730 = vsub.s32 0, %v729
    %v731 = vrot.slane %v712, %v730
    %v733 = vmul.f32 %v726, %v731
    %v735 = vlaneseq
    %v736 = vshrl.u32 %v735, 7
    %v737 = vsub.s32 0, %v736
    %v738 = vrot.slane %v713, %v737
    %v740 = vadd.f32 %v733, %v738
    %v741 = vadd.f32 %v740, %v563
    %v742 = vld [vmem:[%s39] sm:$0x1]
    %v743 = vld [vmem:[%s41] sm:$0x1]
    %v744 = vsel %vm278, %v741, 0.0
    %745 = vadd.xlane.f32.xlu0 %v744
    %v746 = vpop.xlane.xlu0 %745
    %v747 = vmul.f32 %v746, %v509
    %v748 = vsub.f32 %v741, %v747
    %v749 = vmul.f32 %v748, %v748
    %v750 = vsel %vm278, %v749, 0.0
    %751 = vadd.xlane.f32.xlu0 %v750
    %v752 = vpop.xlane.xlu0 %751
    %v753 = vmul.f32 %v752, %v509
    %v754 = vadd.f32 %v753, 1e-05
    %v755 = vrsqrt.pop %v754
    %v756 = vmul.f32 %v748, %v755
    %v758 = vlaneseq
    %v759 = vshrl.u32 %v758, 7
    %v760 = vsub.s32 0, %v759
    %v761 = vrot.slane %v742, %v760
    %v763 = vmul.f32 %v756, %v761
    %v765 = vlaneseq
    %v766 = vshrl.u32 %v765, 7
    %v767 = vsub.s32 0, %v766
    %v768 = vrot.slane %v743, %v767
    %v770 = vadd.f32 %v763, %v768
    %v771 = vlaneseq
    %v772 = vshrl.u32 %v771, 7
    %v773 = vadd.s32 %v772, 8
    %v774 = vadd.s32 %v772, 16
    %v775 = vadd.s32 %v772, 24
    %v776 = vadd.s32 %v772, 32
    %v777 = vadd.s32 %v772, 40
    %v778 = vadd.s32 %v772, 48
    %v779 = vadd.s32 %v772, 56
    %v780 = vadd.s32 %v772, 64
    %v781 = vadd.s32 %v772, 72
    %v782 = vlaneseq
    %v783 = vand.u32 %v782, 127
    %v784 = vmul.u32 %v783, 10
    %v785 = vsub.s32 %v772, %v784
    %v786 = vsub.s32 %v773, %v784
    %v787 = vsub.s32 %v774, %v784
    %v788 = vsub.s32 %v775, %v784
    %v789 = vsub.s32 %v776, %v784
    %v790 = vsub.s32 %v777, %v784
    %v791 = vsub.s32 %v778, %v784
    %v792 = vsub.s32 %v779, %v784
    %v793 = vsub.s32 %v780, %v784
    %v794 = vsub.s32 %v781, %v784
    %vm795 = vcmp.ge.s32.totalorder %v785, 0
    %vm796 = vcmp.ge.s32.totalorder %v786, 0
    %vm797 = vcmp.ge.s32.totalorder %v787, 0
    %vm798 = vcmp.ge.s32.totalorder %v788, 0
    %vm799 = vcmp.ge.s32.totalorder %v789, 0
    %vm800 = vcmp.ge.s32.totalorder %v790, 0
    %vm801 = vcmp.ge.s32.totalorder %v791, 0
    %vm802 = vcmp.ge.s32.totalorder %v792, 0
    %vm803 = vcmp.ge.s32.totalorder %v793, 0
    %vm804 = vcmp.ge.s32.totalorder %v794, 0
    %vm805 = vcmp.lt.s32.totalorder %v785, 10
    %vm806 = vcmp.lt.s32.totalorder %v786, 10
    %vm807 = vcmp.lt.s32.totalorder %v787, 10
    %vm808 = vcmp.lt.s32.totalorder %v788, 10
    %vm809 = vcmp.lt.s32.totalorder %v789, 10
    %vm810 = vcmp.lt.s32.totalorder %v790, 10
    %vm811 = vcmp.lt.s32.totalorder %v791, 10
    %vm812 = vcmp.lt.s32.totalorder %v792, 10
    %vm813 = vcmp.lt.s32.totalorder %v793, 10
    %vm814 = vcmp.lt.s32.totalorder %v794, 10
    %vm815 = vmand %vm795, %vm805
    %vm816 = vmand %vm796, %vm806
    %vm817 = vmand %vm797, %vm807
    %vm818 = vmand %vm798, %vm808
    %vm819 = vmand %vm799, %vm809
    %vm820 = vmand %vm800, %vm810
    %vm821 = vmand %vm801, %vm811
    %vm822 = vmand %vm802, %vm812
    %vm823 = vmand %vm803, %vm813
    %vm824 = vmand %vm804, %vm814
    %v825 = vsel %vm815, 1.0, 0.0
    %v826 = vsel %vm816, 1.0, 0.0
    %v827 = vsel %vm817, 1.0, 0.0
    %v828 = vsel %vm818, 1.0, 0.0
    %v829 = vsel %vm819, 1.0, 0.0
    %v830 = vsel %vm820, 1.0, 0.0
    %v831 = vsel %vm821, 1.0, 0.0
    %v832 = vsel %vm822, 1.0, 0.0
    %v833 = vsel %vm823, 1.0, 0.0
    %v834 = vsel %vm824, 1.0, 0.0
    %v836 = vsel %vm192, %v825, 0
    %v839 = vsel %vm192, %v826, 0
    %v842 = vsel %vm192, %v827, 0
    %v845 = vsel %vm192, %v828, 0
    %v848 = vsel %vm192, %v829, 0
    %v851 = vsel %vm192, %v830, 0
    %v854 = vsel %vm192, %v831, 0
    %v857 = vsel %vm192, %v832, 0
    %v860 = vsel %vm192, %v833, 0
    %v863 = vsel %vm192, %v834, 0
    %865 = vmatprep.subr.mxu0 0.0
    %866 = vmatpush1.msra.mxu0 %v770
    %867 = vmatprep.subr.mxu0 0.0
    %868 = vmatpush1.msra.mxu0 0.0
    %869 = vmatprep.subr.mxu0 0.0
    %870 = vmatpush1.msra.mxu0 0.0
    %871 = vmatprep.subr.mxu0 0.0
    %872 = vmatpush1.msra.mxu0 0.0
    %873 = vmatprep.subr.mxu0 0.0
    %874 = vmatpush1.msra.mxu0 0.0
    %875 = vmatprep.subr.mxu0 0.0
    %876 = vmatpush1.msra.mxu0 0.0
    %877 = vmatprep.subr.mxu0 0.0
    %878 = vmatpush1.msra.mxu0 0.0
    %879 = vmatprep.subr.mxu0 0.0
    %880 = vmatpush1.msra.mxu0 0.0
    %881 = vmatprep.subr.mxu0 0.0
    %882 = vmatpush1.msra.mxu0 0.0
    %883 = vmatprep.subr.mxu0 0.0
    %884 = vmatpush1.msra.mxu0 0.0
    %885 = vmatprep.subr.mxu0 0.0
    %886 = vmatpush1.msra.mxu0 0.0
    %887 = vmatprep.subr.mxu0 0.0
    %888 = vmatpush1.msra.mxu0 0.0
    %889 = vmatprep.subr.mxu0 0.0
    %890 = vmatpush1.msra.mxu0 0.0
    %891 = vmatprep.subr.mxu0 0.0
    %892 = vmatpush1.msra.mxu0 0.0
    %893 = vmatprep.subr.mxu0 0.0
    %894 = vmatpush1.msra.mxu0 0.0
    %895 = vmatprep.subr.mxu0 0.0
    %896 = vmatpush1.msra.mxu0 0.0
    %897 = vmatprep.subr.mxu0 0.0
    %898 = vmatpush1.msra.mxu0 0.0
    %899 = vmatprep.subr.mxu0 0.0
    %900 = vmatpush1.msra.mxu0 0.0
    %901 = vmatprep.subr.mxu0 0.0
    %902 = vmatpush1.msra.mxu0 0.0
    %903 = vmatprep.subr.mxu0 0.0
    %904 = vmatpush1.msra.mxu0 0.0
    %905 = vmatprep.subr.mxu0 0.0
    %906 = vmatpush1.msra.mxu0 0.0
    %907 = vmatprep.subr.mxu0 0.0
    %908 = vmatpush1.msra.mxu0 0.0
    %909 = vmatprep.subr.mxu0 0.0
    %910 = vmatpush1.msra.mxu0 0.0
    %911 = vmatprep.subr.mxu0 0.0
    %912 = vmatpush1.msra.mxu0 0.0
    %913 = vmatprep.subr.mxu0 0.0
    %914 = vmatpush1.msra.mxu0 0.0
    %915 = vmatprep.subr.mxu0 0.0
    %916 = vmatpush1.msra.mxu0 0.0
    %917 = vmatprep.subr.mxu0 0.0
    %918 = vmatpush1.msra.mxu0 0.0
    %919 = vmatprep.subr.mxu0 0.0
    %920 = vmatpush1.msra.mxu0 0.0
    %921 = vmatprep.subr.mxu0 0.0
    %922 = vmatpush1.msra.mxu0 0.0
    %923 = vmatprep.subr.mxu0 0.0
    %924 = vmatpush1.msra.mxu0 0.0
    %925 = vmatprep.subr.mxu0 0.0
    %926 = vmatpush1.msra.mxu0 0.0
    %927 = vmatprep.subr.mxu0 0.0
    %928 = vmatpush1.msra.mxu0 0.0
    %929 = vmatprep.mubr.f32.mxu0 0.0
    %930 = vmatmul.mubr.f32.gmra.mrb[0].mxu0 %v836
    %v931 = vpop.f32.mrb[0].mxu0
    %v932 = vadd.f32 0.0, %v931
    %v933 = vpop.f32.mrb[0].mxu0
    %934 = vmatprep.mubr.f32.mxu0 0.0
    %935 = vmatmul.mubr.f32.gmra.mrb[0].mxu0 %v839
    %v936 = vpop.f32.mrb[0].mxu0
    %v937 = vadd.f32 0.0, %v936
    %v938 = vpop.f32.mrb[0].mxu0
    %939 = vmatprep.mubr.f32.mxu0 0.0
    %940 = vmatmul.mubr.f32.gmra.mrb[0].mxu0 %v842
    %v941 = vpop.f32.mrb[0].mxu0
    %v942 = vadd.f32 0.0, %v941
    %v943 = vpop.f32.mrb[0].mxu0
    %944 = vmatprep.mubr.f32.mxu0 0.0
    %945 = vmatmul.mubr.f32.gmra.mrb[0].mxu0 %v845
    %v946 = vpop.f32.mrb[0].mxu0
    %v947 = vadd.f32 0.0, %v946
    %v948 = vpop.f32.mrb[0].mxu0
    %949 = vmatprep.mubr.f32.mxu0 0.0
    %950 = vmatmul.mubr.f32.gmra.mrb[0].mxu0 %v848
    %v951 = vpop.f32.mrb[0].mxu0
    %v952 = vadd.f32 0.0, %v951
    %v953 = vpop.f32.mrb[0].mxu0
    %954 = vmatprep.mubr.f32.mxu0 0.0
    %955 = vmatmul.mubr.f32.gmra.mrb[0].mxu0 %v851
    %v956 = vpop.f32.mrb[0].mxu0
    %v957 = vadd.f32 0.0, %v956
    %v958 = vpop.f32.mrb[0].mxu0
    %959 = vmatprep.mubr.f32.mxu0 0.0
    %960 = vmatmul.mubr.f32.gmra.mrb[0].mxu0 %v854
    %v961 = vpop.f32.mrb[0].mxu0
    %v962 = vadd.f32 0.0, %v961
    %v963 = vpop.f32.mrb[0].mxu0
    %964 = vmatprep.mubr.f32.mxu0 0.0
    %965 = vmatmul.mubr.f32.gmra.mrb[0].mxu0 %v857
    %v966 = vpop.f32.mrb[0].mxu0
    %v967 = vadd.f32 0.0, %v966
    %v968 = vpop.f32.mrb[0].mxu0
    %969 = vmatprep.mubr.f32.mxu0 0.0
    %970 = vmatmul.mubr.f32.gmra.mrb[0].mxu0 %v860
    %v971 = vpop.f32.mrb[0].mxu0
    %v972 = vadd.f32 0.0, %v971
    %v973 = vpop.f32.mrb[0].mxu0
    %974 = vmatprep.mubr.f32.mxu0 0.0
    %975 = vmatmul.mubr.f32.gmra.mrb[0].mxu0 %v863
    %v976 = vpop.f32.mrb[0].mxu0
    %v977 = vadd.f32 0.0, %v976
    %v978 = vpop.f32.mrb[0].mxu0
    %979 = vdwg.mxu0
    %v980 = vld [vmem:[%s43] sm:$0xff]
    %v981 = vld [vmem:[%s43 + $0x8] sm:$0xff]
    %v982 = vld [vmem:[%s43 + $0x10] sm:$0xff]
    %v983 = vld [vmem:[%s43 + $0x18] sm:$0xff]
    %v984 = vld [vmem:[%s45] sm:$0x1]
    %v986 = vlaneseq
    %v987 = vshrl.u32 %v986, 7
    %v988 = vsub.s32 0, %v987
    %v989 = vrot.slane %v984, %v988
    %v992 = vsel %vm278, %v932, 0
    %v995 = vsel %vm278, %v937, 0
    %v998 = vsel %vm278, %v942, 0
    %v1001 = vsel %vm278, %v947, 0
    %v1004 = vsel %vm278, %v952, 0
    %v1007 = vsel %vm278, %v957, 0
    %v1010 = vsel %vm278, %v962, 0
    %v1013 = vsel %vm278, %v967, 0
    %v1016 = vsel %vm278, %v972, 0
    %v1019 = vsel %vm278, %v977, 0
    %1021 = vmatprep.subr.mxu0 0.0
    %1022 = vmatpush1.msra.mxu0 %v980
    %1023 = vmatprep.subr.mxu0 0.0
    %1024 = vmatpush1.msra.mxu0 %v981
    %1025 = vmatprep.subr.mxu0 0.0
    %1026 = vmatpush1.msra.mxu0 %v982
    %1027 = vmatprep.subr.mxu0 0.0
    %1028 = vmatpush1.msra.mxu0 %v983
    %1029 = vmatprep.subr.mxu0 0.0
    %1030 = vmatpush1.msra.mxu0 0.0
    %1031 = vmatprep.subr.mxu0 0.0
    %1032 = vmatpush1.msra.mxu0 0.0
    %1033 = vmatprep.subr.mxu0 0.0
    %1034 = vmatpush1.msra.mxu0 0.0
    %1035 = vmatprep.subr.mxu0 0.0
    %1036 = vmatpush1.msra.mxu0 0.0
    %1037 = vmatprep.subr.mxu0 0.0
    %1038 = vmatpush1.msra.mxu0 0.0
    %1039 = vmatprep.subr.mxu0 0.0
    %1040 = vmatpush1.msra.mxu0 0.0
    %1041 = vmatprep.subr.mxu0 0.0
    %1042 = vmatpush1.msra.mxu0 0.0
    %1043 = vmatprep.subr.mxu0 0.0
    %1044 = vmatpush1.msra.mxu0 0.0
    %1045 = vmatprep.subr.mxu0 0.0
    %1046 = vmatpush1.msra.mxu0 0.0
    %1047 = vmatprep.subr.mxu0 0.0
    %1048 = vmatpush1.msra.mxu0 0.0
    %1049 = vmatprep.subr.mxu0 0.0
    %1050 = vmatpush1.msra.mxu0 0.0
    %1051 = vmatprep.subr.mxu0 0.0
    %1052 = vmatpush1.msra.mxu0 0.0
    %1053 = vmatprep.subr.mxu0 0.0
    %1054 = vmatpush1.msra.mxu0 0.0
    %1055 = vmatprep.subr.mxu0 0.0
    %1056 = vmatpush1.msra.mxu0 0.0
    %1057 = vmatprep.subr.mxu0 0.0
    %1058 = vmatpush1.msra.mxu0 0.0
    %1059 = vmatprep.subr.mxu0 0.0
    %1060 = vmatpush1.msra.mxu0 0.0
    %1061 = vmatprep.subr.mxu0 0.0
    %1062 = vmatpush1.msra.mxu0 0.0
    %1063 = vmatprep.subr.mxu0 0.0
    %1064 = vmatpush1.msra.mxu0 0.0
    %1065 = vmatprep.subr.mxu0 0.0
    %1066 = vmatpush1.msra.mxu0 0.0
    %1067 = vmatprep.subr.mxu0 0.0
    %1068 = vmatpush1.msra.mxu0 0.0
    %1069 = vmatprep.subr.mxu0 0.0
    %1070 = vmatpush1.msra.mxu0 0.0
    %1071 = vmatprep.subr.mxu0 0.0
    %1072 = vmatpush1.msra.mxu0 0.0
    %1073 = vmatprep.subr.mxu0 0.0
    %1074 = vmatpush1.msra.mxu0 0.0
    %1075 = vmatprep.subr.mxu0 0.0
    %1076 = vmatpush1.msra.mxu0 0.0
    %1077 = vmatprep.subr.mxu0 0.0
    %1078 = vmatpush1.msra.mxu0 0.0
    %1079 = vmatprep.subr.mxu0 0.0
    %1080 = vmatpush1.msra.mxu0 0.0
    %1081 = vmatprep.subr.mxu0 0.0
    %1082 = vmatpush1.msra.mxu0 0.0
    %1083 = vmatprep.subr.mxu0 0.0
    %1084 = vmatpush1.msra.mxu0 0.0
    %1085 = vmatprep.mubr.f32.mxu0 0.0
    %1086 = vmatmul.mubr.f32.gmra.mrb[0].mxu0 %v992
    %v1087 = vpop.f32.mrb[0].mxu0
    %v1088 = vadd.f32 %v989, %v1087
    %v1089 = vpop.f32.mrb[0].mxu0
    %1090 = vmatprep.mubr.f32.mxu0 0.0
    %1091 = vmatmul.mubr.f32.gmra.mrb[0].mxu0 %v995
    %v1092 = vpop.f32.mrb[0].mxu0
    %v1093 = vadd.f32 %v989, %v1092
    %v1094 = vpop.f32.mrb[0].mxu0
    %1095 = vmatprep.mubr.f32.mxu0 0.0
    %1096 = vmatmul.mubr.f32.gmra.mrb[0].mxu0 %v998
    %v1097 = vpop.f32.mrb[0].mxu0
    %v1098 = vadd.f32 %v989, %v1097
    %v1099 = vpop.f32.mrb[0].mxu0
    %1100 = vmatprep.mubr.f32.mxu0 0.0
    %1101 = vmatmul.mubr.f32.gmra.mrb[0].mxu0 %v1001
    %v1102 = vpop.f32.mrb[0].mxu0
    %v1103 = vadd.f32 %v989, %v1102
    %v1104 = vpop.f32.mrb[0].mxu0
    %1105 = vmatprep.mubr.f32.mxu0 0.0
    %1106 = vmatmul.mubr.f32.gmra.mrb[0].mxu0 %v1004
    %v1107 = vpop.f32.mrb[0].mxu0
    %v1108 = vadd.f32 %v989, %v1107
    %v1109 = vpop.f32.mrb[0].mxu0
    %1110 = vmatprep.mubr.f32.mxu0 0.0
    %1111 = vmatmul.mubr.f32.gmra.mrb[0].mxu0 %v1007
    %v1112 = vpop.f32.mrb[0].mxu0
    %v1113 = vadd.f32 %v989, %v1112
    %v1114 = vpop.f32.mrb[0].mxu0
    %1115 = vmatprep.mubr.f32.mxu0 0.0
    %1116 = vmatmul.mubr.f32.gmra.mrb[0].mxu0 %v1010
    %v1117 = vpop.f32.mrb[0].mxu0
    %v1118 = vadd.f32 %v989, %v1117
    %v1119 = vpop.f32.mrb[0].mxu0
    %1120 = vmatprep.mubr.f32.mxu0 0.0
    %1121 = vmatmul.mubr.f32.gmra.mrb[0].mxu0 %v1013
    %v1122 = vpop.f32.mrb[0].mxu0
    %v1123 = vadd.f32 %v989, %v1122
    %v1124 = vpop.f32.mrb[0].mxu0
    %1125 = vmatprep.mubr.f32.mxu0 0.0
    %1126 = vmatmul.mubr.f32.gmra.mrb[0].mxu0 %v1016
    %v1127 = vpop.f32.mrb[0].mxu0
    %v1128 = vadd.f32 %v989, %v1127
    %v1129 = vpop.f32.mrb[0].mxu0
    %1130 = vmatprep.mubr.f32.mxu0 0.0
    %1131 = vmatmul.mubr.f32.gmra.mrb[0].mxu0 %v1019
    %v1132 = vpop.f32.mrb[0].mxu0
    %v1133 = vadd.f32 %v989, %v1132
    %v1134 = vpop.f32.mrb[0].mxu0
    %1135 = vdwg.mxu0
    %v1136 = vld [vmem:[%s47] sm:$0xff]
    %v1137 = vld [vmem:[%s47 + $0x8] sm:$0xff]
    %v1138 = vld [vmem:[%s47 + $0x10] sm:$0xff]
    %v1139 = vld [vmem:[%s47 + $0x18] sm:$0xff]
    %v1140 = vld [vmem:[%s49] sm:$0x1]
    %v1142 = vlaneseq
    %v1143 = vshrl.u32 %v1142, 7
    %v1144 = vsub.s32 0, %v1143
    %v1145 = vrot.slane %v1140, %v1144
    %1147 = vmatprep.subr.mxu0 0.0
    %1148 = vmatpush1.msra.mxu0 %v1136
    %1149 = vmatprep.subr.mxu0 0.0
    %1150 = vmatpush1.msra.mxu0 %v1137
    %1151 = vmatprep.subr.mxu0 0.0
    %1152 = vmatpush1.msra.mxu0 %v1138
    %1153 = vmatprep.subr.mxu0 0.0
    %1154 = vmatpush1.msra.mxu0 %v1139
    %1155 = vmatprep.subr.mxu0 0.0
    %1156 = vmatpush1.msra.mxu0 0.0
    %1157 = vmatprep.subr.mxu0 0.0
    %1158 = vmatpush1.msra.mxu0 0.0
    %1159 = vmatprep.subr.mxu0 0.0
    %1160 = vmatpush1.msra.mxu0 0.0
    %1161 = vmatprep.subr.mxu0 0.0
    %1162 = vmatpush1.msra.mxu0 0.0
    %1163 = vmatprep.subr.mxu0 0.0
    %1164 = vmatpush1.msra.mxu0 0.0
    %1165 = vmatprep.subr.mxu0 0.0
    %1166 = vmatpush1.msra.mxu0 0.0
    %1167 = vmatprep.subr.mxu0 0.0
    %1168 = vmatpush1.msra.mxu0 0.0
    %1169 = vmatprep.subr.mxu0 0.0
    %1170 = vmatpush1.msra.mxu0 0.0
    %1171 = vmatprep.subr.mxu0 0.0
    %1172 = vmatpush1.msra.mxu0 0.0
    %1173 = vmatprep.subr.mxu0 0.0
    %1174 = vmatpush1.msra.mxu0 0.0
    %1175 = vmatprep.subr.mxu0 0.0
    %1176 = vmatpush1.msra.mxu0 0.0
    %1177 = vmatprep.subr.mxu0 0.0
    %1178 = vmatpush1.msra.mxu0 0.0
    %1179 = vmatprep.subr.mxu0 0.0
    %1180 = vmatpush1.msra.mxu0 0.0
    %1181 = vmatprep.subr.mxu0 0.0
    %1182 = vmatpush1.msra.mxu0 0.0
    %1183 = vmatprep.subr.mxu0 0.0
    %1184 = vmatpush1.msra.mxu0 0.0
    %1185 = vmatprep.subr.mxu0 0.0
    %1186 = vmatpush1.msra.mxu0 0.0
    %1187 = vmatprep.subr.mxu0 0.0
    %1188 = vmatpush1.msra.mxu0 0.0
    %1189 = vmatprep.subr.mxu0 0.0
    %1190 = vmatpush1.msra.mxu0 0.0
    %1191 = vmatprep.subr.mxu0 0.0
    %1192 = vmatpush1.msra.mxu0 0.0
    %1193 = vmatprep.subr.mxu0 0.0
    %1194 = vmatpush1.msra.mxu0 0.0
    %1195 = vmatprep.subr.mxu0 0.0
    %1196 = vmatpush1.msra.mxu0 0.0
    %1197 = vmatprep.subr.mxu0 0.0
    %1198 = vmatpush1.msra.mxu0 0.0
    %1199 = vmatprep.subr.mxu0 0.0
    %1200 = vmatpush1.msra.mxu0 0.0
    %1201 = vmatprep.subr.mxu0 0.0
    %1202 = vmatpush1.msra.mxu0 0.0
    %1203 = vmatprep.subr.mxu0 0.0
    %1204 = vmatpush1.msra.mxu0 0.0
    %1205 = vmatprep.subr.mxu0 0.0
    %1206 = vmatpush1.msra.mxu0 0.0
    %1207 = vmatprep.subr.mxu0 0.0
    %1208 = vmatpush1.msra.mxu0 0.0
    %1209 = vmatprep.subr.mxu0 0.0
    %1210 = vmatpush1.msra.mxu0 0.0
    %1211 = vmatprep.mubr.f32.mxu0 0.0
    %1212 = vmatmul.mubr.f32.gmra.mrb[0].mxu0 %v992
    %v1213 = vpop.f32.mrb[0].mxu0
    %v1214 = vadd.f32 %v1145, %v1213
    %v1215 = vpop.f32.mrb[0].mxu0
    %1216 = vmatprep.mubr.f32.mxu0 0.0
    %1217 = vmatmul.mubr.f32.gmra.mrb[0].mxu0 %v995
    %v1218 = vpop.f32.mrb[0].mxu0
    %v1219 = vadd.f32 %v1145, %v1218
    %v1220 = vpop.f32.mrb[0].mxu0
    %1221 = vmatprep.mubr.f32.mxu0 0.0
    %1222 = vmatmul.mubr.f32.gmra.mrb[0].mxu0 %v998
    %v1223 = vpop.f32.mrb[0].mxu0
    %v1224 = vadd.f32 %v1145, %v1223
    %v1225 = vpop.f32.mrb[0].mxu0
    %1226 = vmatprep.mubr.f32.mxu0 0.0
    %1227 = vmatmul.mubr.f32.gmra.mrb[0].mxu0 %v1001
    %v1228 = vpop.f32.mrb[0].mxu0
    %v1229 = vadd.f32 %v1145, %v1228
    %v1230 = vpop.f32.mrb[0].mxu0
    %1231 = vmatprep.mubr.f32.mxu0 0.0
    %1232 = vmatmul.mubr.f32.gmra.mrb[0].mxu0 %v1004
    %v1233 = vpop.f32.mrb[0].mxu0
    %v1234 = vadd.f32 %v1145, %v1233
    %v1235 = vpop.f32.mrb[0].mxu0
    %1236 = vmatprep.mubr.f32.mxu0 0.0
    %1237 = vmatmul.mubr.f32.gmra.mrb[0].mxu0 %v1007
    %v1238 = vpop.f32.mrb[0].mxu0
    %v1239 = vadd.f32 %v1145, %v1238
    %v1240 = vpop.f32.mrb[0].mxu0
    %1241 = vmatprep.mubr.f32.mxu0 0.0
    %1242 = vmatmul.mubr.f32.gmra.mrb[0].mxu0 %v1010
    %v1243 = vpop.f32.mrb[0].mxu0
    %v1244 = vadd.f32 %v1145, %v1243
    %v1245 = vpop.f32.mrb[0].mxu0
    %1246 = vmatprep.mubr.f32.mxu0 0.0
    %1247 = vmatmul.mubr.f32.gmra.mrb[0].mxu0 %v1013
    %v1248 = vpop.f32.mrb[0].mxu0
    %v1249 = vadd.f32 %v1145, %v1248
    %v1250 = vpop.f32.mrb[0].mxu0
    %1251 = vmatprep.mubr.f32.mxu0 0.0
    %1252 = vmatmul.mubr.f32.gmra.mrb[0].mxu0 %v1016
    %v1253 = vpop.f32.mrb[0].mxu0
    %v1254 = vadd.f32 %v1145, %v1253
    %v1255 = vpop.f32.mrb[0].mxu0
    %1256 = vmatprep.mubr.f32.mxu0 0.0
    %1257 = vmatmul.mubr.f32.gmra.mrb[0].mxu0 %v1019
    %v1258 = vpop.f32.mrb[0].mxu0
    %v1259 = vadd.f32 %v1145, %v1258
    %v1260 = vpop.f32.mrb[0].mxu0
    %1261 = vdwg.mxu0
    %v1262 = vld [vmem:[%s7] sm:$0xff]
    %v1263 = vld [vmem:[%s7 + $0x8] sm:$0xff]
    %v1264 = vld [vmem:[%s7 + $0x10] sm:$0xff]
    %v1265 = vld [vmem:[%s7 + $0x18] sm:$0xff]
    %v1266 = vld [vmem:[%s7 + $0x20] sm:$0xff]
    %v1267 = vld [vmem:[%s7 + $0x28] sm:$0xff]
    %v1268 = vld [vmem:[%s7 + $0x30] sm:$0xff]
    %v1269 = vld [vmem:[%s7 + $0x38] sm:$0xff]
    %v1270 = vld [vmem:[%s7 + $0x40] sm:$0xff]
    %v1271 = vld [vmem:[%s7 + $0x48] sm:$0xff]
    %v1272 = vmul.f32 %v1214, 0.5
    %v1273 = vmul.f32 %v1219, 0.5
    %v1274 = vmul.f32 %v1224, 0.5
    %v1275 = vmul.f32 %v1229, 0.5
    %v1276 = vmul.f32 %v1234, 0.5
    %v1277 = vmul.f32 %v1239, 0.5
    %v1278 = vmul.f32 %v1244, 0.5
    %v1279 = vmul.f32 %v1249, 0.5
    %v1280 = vmul.f32 %v1254, 0.5
    %v1281 = vmul.f32 %v1259, 0.5
    %v1282 = vmul.f32 %v1272, 1.442695
    %v1283 = vpow.pop %v1282
    %v1284 = vmul.f32 %v1273, 1.442695
    %v1285 = vpow.pop %v1284
    %v1286 = vmul.f32 %v1274, 1.442695
    %v1287 = vpow.pop %v1286
    %v1288 = vmul.f32 %v1275, 1.442695
    %v1289 = vpow.pop %v1288
    %v1290 = vmul.f32 %v1276, 1.442695
    %v1291 = vpow.pop %v1290
    %v1292 = vmul.f32 %v1277, 1.442695
    %v1293 = vpow.pop %v1292
    %v1294 = vmul.f32 %v1278, 1.442695
    %v1295 = vpow.pop %v1294
    %v1296 = vmul.f32 %v1279, 1.442695
    %v1297 = vpow.pop %v1296
    %v1298 = vmul.f32 %v1280, 1.442695
    %v1299 = vpow.pop %v1298
    %v1300 = vmul.f32 %v1281, 1.442695
    %v1301 = vpow.pop %v1300
    %v1302 = vmul.f32 %v1262, %v1283
    %v1303 = vmul.f32 %v1263, %v1285
    %v1304 = vmul.f32 %v1264, %v1287
    %v1305 = vmul.f32 %v1265, %v1289
    %v1306 = vmul.f32 %v1266, %v1291
    %v1307 = vmul.f32 %v1267, %v1293
    %v1308 = vmul.f32 %v1268, %v1295
    %v1309 = vmul.f32 %v1269, %v1297
    %v1310 = vmul.f32 %v1270, %v1299
    %v1311 = vmul.f32 %v1271, %v1301
    %v1312 = vadd.f32 %v1088, %v1302
    %v1313 = vadd.f32 %v1093, %v1303
    %v1314 = vadd.f32 %v1098, %v1304
    %v1315 = vadd.f32 %v1103, %v1305
    %v1316 = vadd.f32 %v1108, %v1306
    %v1317 = vadd.f32 %v1113, %v1307
    %v1318 = vadd.f32 %v1118, %v1308
    %v1319 = vadd.f32 %v1123, %v1309
    %v1320 = vadd.f32 %v1128, %v1310
    %v1321 = vadd.f32 %v1133, %v1311
    %v1322 = vld [vmem:[%s51] sm:$0xff]
    %v1323 = vld [vmem:[%s51 + $0x8] sm:$0xff]
    %v1324 = vld [vmem:[%s51 + $0x10] sm:$0xff]
    %v1325 = vld [vmem:[%s51 + $0x18] sm:$0xff]
    %v1326 = vld [vmem:[%s53] sm:$0x1]
    %v1328 = vlaneseq
    %v1329 = vshrl.u32 %v1328, 7
    %v1330 = vsub.s32 0, %v1329
    %v1331 = vrot.slane %v1326, %v1330
    %v1334 = vsel %vm278, %v1312, 0
    %v1337 = vsel %vm278, %v1313, 0
    %v1340 = vsel %vm278, %v1314, 0
    %v1343 = vsel %vm278, %v1315, 0
    %v1346 = vsel %vm278, %v1316, 0
    %v1349 = vsel %vm278, %v1317, 0
    %v1352 = vsel %vm278, %v1318, 0
    %v1355 = vsel %vm278, %v1319, 0
    %v1358 = vsel %vm278, %v1320, 0
    %v1361 = vsel %vm278, %v1321, 0
    %1363 = vmatprep.subr.mxu0 0.0
    %1364 = vmatpush1.msra.mxu0 %v1322
    %1365 = vmatprep.subr.mxu0 0.0
    %1366 = vmatpush1.msra.mxu0 %v1323
    %1367 = vmatprep.subr.mxu0 0.0
    %1368 = vmatpush1.msra.mxu0 %v1324
    %1369 = vmatprep.subr.mxu0 0.0
    %1370 = vmatpush1.msra.mxu0 %v1325
    %1371 = vmatprep.subr.mxu0 0.0
    %1372 = vmatpush1.msra.mxu0 0.0
    %1373 = vmatprep.subr.mxu0 0.0
    %1374 = vmatpush1.msra.mxu0 0.0
    %1375 = vmatprep.subr.mxu0 0.0
    %1376 = vmatpush1.msra.mxu0 0.0
    %1377 = vmatprep.subr.mxu0 0.0
    %1378 = vmatpush1.msra.mxu0 0.0
    %1379 = vmatprep.subr.mxu0 0.0
    %1380 = vmatpush1.msra.mxu0 0.0
    %1381 = vmatprep.subr.mxu0 0.0
    %1382 = vmatpush1.msra.mxu0 0.0
    %1383 = vmatprep.subr.mxu0 0.0
    %1384 = vmatpush1.msra.mxu0 0.0
    %1385 = vmatprep.subr.mxu0 0.0
    %1386 = vmatpush1.msra.mxu0 0.0
    %1387 = vmatprep.subr.mxu0 0.0
    %1388 = vmatpush1.msra.mxu0 0.0
    %1389 = vmatprep.subr.mxu0 0.0
    %1390 = vmatpush1.msra.mxu0 0.0
    %1391 = vmatprep.subr.mxu0 0.0
    %1392 = vmatpush1.msra.mxu0 0.0
    %1393 = vmatprep.subr.mxu0 0.0
    %1394 = vmatpush1.msra.mxu0 0.0
    %1395 = vmatprep.subr.mxu0 0.0
    %1396 = vmatpush1.msra.mxu0 0.0
    %1397 = vmatprep.subr.mxu0 0.0
    %1398 = vmatpush1.msra.mxu0 0.0
    %1399 = vmatprep.subr.mxu0 0.0
    %1400 = vmatpush1.msra.mxu0 0.0
    %1401 = vmatprep.subr.mxu0 0.0
    %1402 = vmatpush1.msra.mxu0 0.0
    %1403 = vmatprep.subr.mxu0 0.0
    %1404 = vmatpush1.msra.mxu0 0.0
    %1405 = vmatprep.subr.mxu0 0.0
    %1406 = vmatpush1.msra.mxu0 0.0
    %1407 = vmatprep.subr.mxu0 0.0
    %1408 = vmatpush1.msra.mxu0 0.0
    %1409 = vmatprep.subr.mxu0 0.0
    %1410 = vmatpush1.msra.mxu0 0.0
    %1411 = vmatprep.subr.mxu0 0.0
    %1412 = vmatpush1.msra.mxu0 0.0
    %1413 = vmatprep.subr.mxu0 0.0
    %1414 = vmatpush1.msra.mxu0 0.0
    %1415 = vmatprep.subr.mxu0 0.0
    %1416 = vmatpush1.msra.mxu0 0.0
    %1417 = vmatprep.subr.mxu0 0.0
    %1418 = vmatpush1.msra.mxu0 0.0
    %1419 = vmatprep.subr.mxu0 0.0
    %1420 = vmatpush1.msra.mxu0 0.0
    %1421 = vmatprep.subr.mxu0 0.0
    %1422 = vmatpush1.msra.mxu0 0.0
    %1423 = vmatprep.subr.mxu0 0.0
    %1424 = vmatpush1.msra.mxu0 0.0
    %1425 = vmatprep.subr.mxu0 0.0
    %1426 = vmatpush1.msra.mxu0 0.0
    %1427 = vmatprep.mubr.f32.mxu0 0.0
    %1428 = vmatmul.mubr.f32.gmra.mrb[0].mxu0 %v1334
    %v1429 = vpop.f32.mrb[0].mxu0
    %v1430 = vadd.f32 %v1331, %v1429
    %v1431 = vpop.f32.mrb[0].mxu0
    %1432 = vmatprep.mubr.f32.mxu0 0.0
    %1433 = vmatmul.mubr.f32.gmra.mrb[0].mxu0 %v1337
    %v1434 = vpop.f32.mrb[0].mxu0
    %v1435 = vadd.f32 %v1331, %v1434
    %v1436 = vpop.f32.mrb[0].mxu0
    %1437 = vmatprep.mubr.f32.mxu0 0.0
    %1438 = vmatmul.mubr.f32.gmra.mrb[0].mxu0 %v1340
    %v1439 = vpop.f32.mrb[0].mxu0
    %v1440 = vadd.f32 %v1331, %v1439
    %v1441 = vpop.f32.mrb[0].mxu0
    %1442 = vmatprep.mubr.f32.mxu0 0.0
    %1443 = vmatmul.mubr.f32.gmra.mrb[0].mxu0 %v1343
    %v1444 = vpop.f32.mrb[0].mxu0
    %v1445 = vadd.f32 %v1331, %v1444
    %v1446 = vpop.f32.mrb[0].mxu0
    %1447 = vmatprep.mubr.f32.mxu0 0.0
    %1448 = vmatmul.mubr.f32.gmra.mrb[0].mxu0 %v1346
    %v1449 = vpop.f32.mrb[0].mxu0
    %v1450 = vadd.f32 %v1331, %v1449
    %v1451 = vpop.f32.mrb[0].mxu0
    %1452 = vmatprep.mubr.f32.mxu0 0.0
    %1453 = vmatmul.mubr.f32.gmra.mrb[0].mxu0 %v1349
    %v1454 = vpop.f32.mrb[0].mxu0
    %v1455 = vadd.f32 %v1331, %v1454
    %v1456 = vpop.f32.mrb[0].mxu0
    %1457 = vmatprep.mubr.f32.mxu0 0.0
    %1458 = vmatmul.mubr.f32.gmra.mrb[0].mxu0 %v1352
    %v1459 = vpop.f32.mrb[0].mxu0
    %v1460 = vadd.f32 %v1331, %v1459
    %v1461 = vpop.f32.mrb[0].mxu0
    %1462 = vmatprep.mubr.f32.mxu0 0.0
    %1463 = vmatmul.mubr.f32.gmra.mrb[0].mxu0 %v1355
    %v1464 = vpop.f32.mrb[0].mxu0
    %v1465 = vadd.f32 %v1331, %v1464
    %v1466 = vpop.f32.mrb[0].mxu0
    %1467 = vmatprep.mubr.f32.mxu0 0.0
    %1468 = vmatmul.mubr.f32.gmra.mrb[0].mxu0 %v1358
    %v1469 = vpop.f32.mrb[0].mxu0
    %v1470 = vadd.f32 %v1331, %v1469
    %v1471 = vpop.f32.mrb[0].mxu0
    %1472 = vmatprep.mubr.f32.mxu0 0.0
    %1473 = vmatmul.mubr.f32.gmra.mrb[0].mxu0 %v1361
    %v1474 = vpop.f32.mrb[0].mxu0
    %v1475 = vadd.f32 %v1331, %v1474
    %v1476 = vpop.f32.mrb[0].mxu0
    %1477 = vdwg.mxu0
    %v1478 = vmax.f32 %v1430, 0.0
    %v1479 = vmax.f32 %v1435, 0.0
    %v1480 = vmax.f32 %v1440, 0.0
    %v1481 = vmax.f32 %v1445, 0.0
    %v1482 = vmax.f32 %v1450, 0.0
    %v1483 = vmax.f32 %v1455, 0.0
    %v1484 = vmax.f32 %v1460, 0.0
    %v1485 = vmax.f32 %v1465, 0.0
    %v1486 = vmax.f32 %v1470, 0.0
    %v1487 = vmax.f32 %v1475, 0.0
    %v1488 = vadd.f32 %v1478, %v932
    %v1489 = vadd.f32 %v1479, %v937
    %v1490 = vadd.f32 %v1480, %v942
    %v1491 = vadd.f32 %v1481, %v947
    %v1492 = vadd.f32 %v1482, %v952
    %v1493 = vadd.f32 %v1483, %v957
    %v1494 = vadd.f32 %v1484, %v962
    %v1495 = vadd.f32 %v1485, %v967
    %v1496 = vadd.f32 %v1486, %v972
    %v1497 = vadd.f32 %v1487, %v977
    %v1498 = vld [vmem:[%s55] sm:$0x1]
    %v1499 = vld [vmem:[%s57] sm:$0x1]
    %v1500 = vsel %vm278, %v1488, 0.0
    %1501 = vadd.xlane.f32.xlu0 %v1500
    %v1502 = vpop.xlane.xlu0 %1501
    %v1503 = vsel %vm278, %v1489, 0.0
    %1504 = vadd.xlane.f32.xlu0 %v1503
    %v1505 = vpop.xlane.xlu0 %1504
    %v1506 = vsel %vm278, %v1490, 0.0
    %1507 = vadd.xlane.f32.xlu0 %v1506
    %v1508 = vpop.xlane.xlu0 %1507
    %v1509 = vsel %vm278, %v1491, 0.0
    %1510 = vadd.xlane.f32.xlu0 %v1509
    %v1511 = vpop.xlane.xlu0 %1510
    %v1512 = vsel %vm278, %v1492, 0.0
    %1513 = vadd.xlane.f32.xlu0 %v1512
    %v1514 = vpop.xlane.xlu0 %1513
    %v1515 = vsel %vm278, %v1493, 0.0
    %1516 = vadd.xlane.f32.xlu0 %v1515
    %v1517 = vpop.xlane.xlu0 %1516
    %v1518 = vsel %vm278, %v1494, 0.0
    %1519 = vadd.xlane.f32.xlu0 %v1518
    %v1520 = vpop.xlane.xlu0 %1519
    %v1521 = vsel %vm278, %v1495, 0.0
    %1522 = vadd.xlane.f32.xlu0 %v1521
    %v1523 = vpop.xlane.xlu0 %1522
    %v1524 = vsel %vm278, %v1496, 0.0
    %1525 = vadd.xlane.f32.xlu0 %v1524
    %v1526 = vpop.xlane.xlu0 %1525
    %v1527 = vsel %vm278, %v1497, 0.0
    %1528 = vadd.xlane.f32.xlu0 %v1527
    %v1529 = vpop.xlane.xlu0 %1528
    %v1530 = vmul.f32 %v1502, %v509
    %v1531 = vmul.f32 %v1505, %v509
    %v1532 = vmul.f32 %v1508, %v509
    %v1533 = vmul.f32 %v1511, %v509
    %v1534 = vmul.f32 %v1514, %v509
    %v1535 = vmul.f32 %v1517, %v509
    %v1536 = vmul.f32 %v1520, %v509
    %v1537 = vmul.f32 %v1523, %v509
    %v1538 = vmul.f32 %v1526, %v509
    %v1539 = vmul.f32 %v1529, %v509
    %v1540 = vsub.f32 %v1488, %v1530
    %v1541 = vsub.f32 %v1489, %v1531
    %v1542 = vsub.f32 %v1490, %v1532
    %v1543 = vsub.f32 %v1491, %v1533
    %v1544 = vsub.f32 %v1492, %v1534
    %v1545 = vsub.f32 %v1493, %v1535
    %v1546 = vsub.f32 %v1494, %v1536
    %v1547 = vsub.f32 %v1495, %v1537
    %v1548 = vsub.f32 %v1496, %v1538
    %v1549 = vsub.f32 %v1497, %v1539
    %v1550 = vmul.f32 %v1540, %v1540
    %v1551 = vmul.f32 %v1541, %v1541
    %v1552 = vmul.f32 %v1542, %v1542
    %v1553 = vmul.f32 %v1543, %v1543
    %v1554 = vmul.f32 %v1544, %v1544
    %v1555 = vmul.f32 %v1545, %v1545
    %v1556 = vmul.f32 %v1546, %v1546
    %v1557 = vmul.f32 %v1547, %v1547
    %v1558 = vmul.f32 %v1548, %v1548
    %v1559 = vmul.f32 %v1549, %v1549
    %v1560 = vsel %vm278, %v1550, 0.0
    %1561 = vadd.xlane.f32.xlu0 %v1560
    %v1562 = vpop.xlane.xlu0 %1561
    %v1563 = vsel %vm278, %v1551, 0.0
    %1564 = vadd.xlane.f32.xlu0 %v1563
    %v1565 = vpop.xlane.xlu0 %1564
    %v1566 = vsel %vm278, %v1552, 0.0
    %1567 = vadd.xlane.f32.xlu0 %v1566
    %v1568 = vpop.xlane.xlu0 %1567
    %v1569 = vsel %vm278, %v1553, 0.0
    %1570 = vadd.xlane.f32.xlu0 %v1569
    %v1571 = vpop.xlane.xlu0 %1570
    %v1572 = vsel %vm278, %v1554, 0.0
    %1573 = vadd.xlane.f32.xlu0 %v1572
    %v1574 = vpop.xlane.xlu0 %1573
    %v1575 = vsel %vm278, %v1555, 0.0
    %1576 = vadd.xlane.f32.xlu0 %v1575
    %v1577 = vpop.xlane.xlu0 %1576
    %v1578 = vsel %vm278, %v1556, 0.0
    %1579 = vadd.xlane.f32.xlu0 %v1578
    %v1580 = vpop.xlane.xlu0 %1579
    %v1581 = vsel %vm278, %v1557, 0.0
    %1582 = vadd.xlane.f32.xlu0 %v1581
    %v1583 = vpop.xlane.xlu0 %1582
    %v1584 = vsel %vm278, %v1558, 0.0
    %1585 = vadd.xlane.f32.xlu0 %v1584
    %v1586 = vpop.xlane.xlu0 %1585
    %v1587 = vsel %vm278, %v1559, 0.0
    %1588 = vadd.xlane.f32.xlu0 %v1587
    %v1589 = vpop.xlane.xlu0 %1588
    %v1590 = vmul.f32 %v1562, %v509
    %v1591 = vmul.f32 %v1565, %v509
    %v1592 = vmul.f32 %v1568, %v509
    %v1593 = vmul.f32 %v1571, %v509
    %v1594 = vmul.f32 %v1574, %v509
    %v1595 = vmul.f32 %v1577, %v509
    %v1596 = vmul.f32 %v1580, %v509
    %v1597 = vmul.f32 %v1583, %v509
    %v1598 = vmul.f32 %v1586, %v509
    %v1599 = vmul.f32 %v1589, %v509
    %v1600 = vadd.f32 %v1590, 1e-05
    %v1601 = vadd.f32 %v1591, 1e-05
    %v1602 = vadd.f32 %v1592, 1e-05
    %v1603 = vadd.f32 %v1593, 1e-05
    %v1604 = vadd.f32 %v1594, 1e-05
    %v1605 = vadd.f32 %v1595, 1e-05
    %v1606 = vadd.f32 %v1596, 1e-05
    %v1607 = vadd.f32 %v1597, 1e-05
    %v1608 = vadd.f32 %v1598, 1e-05
    %v1609 = vadd.f32 %v1599, 1e-05
    %v1610 = vrsqrt.pop %v1600
    %v1611 = vrsqrt.pop %v1601
    %v1612 = vrsqrt.pop %v1602
    %v1613 = vrsqrt.pop %v1603
    %v1614 = vrsqrt.pop %v1604
    %v1615 = vrsqrt.pop %v1605
    %v1616 = vrsqrt.pop %v1606
    %v1617 = vrsqrt.pop %v1607
    %v1618 = vrsqrt.pop %v1608
    %v1619 = vrsqrt.pop %v1609
    %v1620 = vmul.f32 %v1540, %v1610
    %v1621 = vmul.f32 %v1541, %v1611
    %v1622 = vmul.f32 %v1542, %v1612
    %v1623 = vmul.f32 %v1543, %v1613
    %v1624 = vmul.f32 %v1544, %v1614
    %v1625 = vmul.f32 %v1545, %v1615
    %v1626 = vmul.f32 %v1546, %v1616
    %v1627 = vmul.f32 %v1547, %v1617
    %v1628 = vmul.f32 %v1548, %v1618
    %v1629 = vmul.f32 %v1549, %v1619
    %v1631 = vlaneseq
    %v1632 = vshrl.u32 %v1631, 7
    %v1633 = vsub.s32 0, %v1632
    %v1634 = vrot.slane %v1498, %v1633
    %v1636 = vmul.f32 %v1620, %v1634
    %v1637 = vmul.f32 %v1621, %v1634
    %v1638 = vmul.f32 %v1622, %v1634
    %v1639 = vmul.f32 %v1623, %v1634
    %v1640 = vmul.f32 %v1624, %v1634
    %v1641 = vmul.f32 %v1625, %v1634
    %v1642 = vmul.f32 %v1626, %v1634
    %v1643 = vmul.f32 %v1627, %v1634
    %v1644 = vmul.f32 %v1628, %v1634
    %v1645 = vmul.f32 %v1629, %v1634
    %v1647 = vlaneseq
    %v1648 = vshrl.u32 %v1647, 7
    %v1649 = vsub.s32 0, %v1648
    %v1650 = vrot.slane %v1499, %v1649
    %v1652 = vadd.f32 %v1636, %v1650
    %v1653 = vadd.f32 %v1637, %v1650
    %v1654 = vadd.f32 %v1638, %v1650
    %v1655 = vadd.f32 %v1639, %v1650
    %v1656 = vadd.f32 %v1640, %v1650
    %v1657 = vadd.f32 %v1641, %v1650
    %v1658 = vadd.f32 %v1642, %v1650
    %v1659 = vadd.f32 %v1643, %v1650
    %v1660 = vadd.f32 %v1644, %v1650
    %v1661 = vadd.f32 %v1645, %v1650
    %v1662 = vld [vmem:[%s59] sm:$0xff]
    %v1663 = vld [vmem:[%s59 + $0x8] sm:$0xff]
    %v1664 = vld [vmem:[%s59 + $0x10] sm:$0xff]
    %v1665 = vld [vmem:[%s59 + $0x18] sm:$0xff]
    %v1666 = vld [vmem:[%s61] sm:$0x1]
    %v1668 = vlaneseq
    %v1669 = vshrl.u32 %v1668, 7
    %v1670 = vsub.s32 0, %v1669
    %v1671 = vrot.slane %v1666, %v1670
    %v1674 = vsel %vm278, %v1652, 0
    %v1677 = vsel %vm278, %v1653, 0
    %v1680 = vsel %vm278, %v1654, 0
    %v1683 = vsel %vm278, %v1655, 0
    %v1686 = vsel %vm278, %v1656, 0
    %v1689 = vsel %vm278, %v1657, 0
    %v1692 = vsel %vm278, %v1658, 0
    %v1695 = vsel %vm278, %v1659, 0
    %v1698 = vsel %vm278, %v1660, 0
    %v1701 = vsel %vm278, %v1661, 0
    %1703 = vmatprep.subr.mxu0 0.0
    %1704 = vmatpush1.msra.mxu0 %v1662
    %1705 = vmatprep.subr.mxu0 0.0
    %1706 = vmatpush1.msra.mxu0 %v1663
    %1707 = vmatprep.subr.mxu0 0.0
    %1708 = vmatpush1.msra.mxu0 %v1664
    %1709 = vmatprep.subr.mxu0 0.0
    %1710 = vmatpush1.msra.mxu0 %v1665
    %1711 = vmatprep.subr.mxu0 0.0
    %1712 = vmatpush1.msra.mxu0 0.0
    %1713 = vmatprep.subr.mxu0 0.0
    %1714 = vmatpush1.msra.mxu0 0.0
    %1715 = vmatprep.subr.mxu0 0.0
    %1716 = vmatpush1.msra.mxu0 0.0
    %1717 = vmatprep.subr.mxu0 0.0
    %1718 = vmatpush1.msra.mxu0 0.0
    %1719 = vmatprep.subr.mxu0 0.0
    %1720 = vmatpush1.msra.mxu0 0.0
    %1721 = vmatprep.subr.mxu0 0.0
    %1722 = vmatpush1.msra.mxu0 0.0
    %1723 = vmatprep.subr.mxu0 0.0
    %1724 = vmatpush1.msra.mxu0 0.0
    %1725 = vmatprep.subr.mxu0 0.0
    %1726 = vmatpush1.msra.mxu0 0.0
    %1727 = vmatprep.subr.mxu0 0.0
    %1728 = vmatpush1.msra.mxu0 0.0
    %1729 = vmatprep.subr.mxu0 0.0
    %1730 = vmatpush1.msra.mxu0 0.0
    %1731 = vmatprep.subr.mxu0 0.0
    %1732 = vmatpush1.msra.mxu0 0.0
    %1733 = vmatprep.subr.mxu0 0.0
    %1734 = vmatpush1.msra.mxu0 0.0
    %1735 = vmatprep.subr.mxu0 0.0
    %1736 = vmatpush1.msra.mxu0 0.0
    %1737 = vmatprep.subr.mxu0 0.0
    %1738 = vmatpush1.msra.mxu0 0.0
    %1739 = vmatprep.subr.mxu0 0.0
    %1740 = vmatpush1.msra.mxu0 0.0
    %1741 = vmatprep.subr.mxu0 0.0
    %1742 = vmatpush1.msra.mxu0 0.0
    %1743 = vmatprep.subr.mxu0 0.0
    %1744 = vmatpush1.msra.mxu0 0.0
    %1745 = vmatprep.subr.mxu0 0.0
    %1746 = vmatpush1.msra.mxu0 0.0
    %1747 = vmatprep.subr.mxu0 0.0
    %1748 = vmatpush1.msra.mxu0 0.0
    %1749 = vmatprep.subr.mxu0 0.0
    %1750 = vmatpush1.msra.mxu0 0.0
    %1751 = vmatprep.subr.mxu0 0.0
    %1752 = vmatpush1.msra.mxu0 0.0
    %1753 = vmatprep.subr.mxu0 0.0
    %1754 = vmatpush1.msra.mxu0 0.0
    %1755 = vmatprep.subr.mxu0 0.0
    %1756 = vmatpush1.msra.mxu0 0.0
    %1757 = vmatprep.subr.mxu0 0.0
    %1758 = vmatpush1.msra.mxu0 0.0
    %1759 = vmatprep.subr.mxu0 0.0
    %1760 = vmatpush1.msra.mxu0 0.0
    %1761 = vmatprep.subr.mxu0 0.0
    %1762 = vmatpush1.msra.mxu0 0.0
    %1763 = vmatprep.subr.mxu0 0.0
    %1764 = vmatpush1.msra.mxu0 0.0
    %1765 = vmatprep.subr.mxu0 0.0
    %1766 = vmatpush1.msra.mxu0 0.0
    %1767 = vmatprep.mubr.f32.mxu0 0.0
    %1768 = vmatmul.mubr.f32.gmra.mrb[0].mxu0 %v1674
    %v1769 = vpop.f32.mrb[0].mxu0
    %v1770 = vadd.f32 %v1671, %v1769
    %v1771 = vpop.f32.mrb[0].mxu0
    %1772 = vmatprep.mubr.f32.mxu0 0.0
    %1773 = vmatmul.mubr.f32.gmra.mrb[0].mxu0 %v1677
    %v1774 = vpop.f32.mrb[0].mxu0
    %v1775 = vadd.f32 %v1671, %v1774
    %v1776 = vpop.f32.mrb[0].mxu0
    %1777 = vmatprep.mubr.f32.mxu0 0.0
    %1778 = vmatmul.mubr.f32.gmra.mrb[0].mxu0 %v1680
    %v1779 = vpop.f32.mrb[0].mxu0
    %v1780 = vadd.f32 %v1671, %v1779
    %v1781 = vpop.f32.mrb[0].mxu0
    %1782 = vmatprep.mubr.f32.mxu0 0.0
    %1783 = vmatmul.mubr.f32.gmra.mrb[0].mxu0 %v1683
    %v1784 = vpop.f32.mrb[0].mxu0
    %v1785 = vadd.f32 %v1671, %v1784
    %v1786 = vpop.f32.mrb[0].mxu0
    %1787 = vmatprep.mubr.f32.mxu0 0.0
    %1788 = vmatmul.mubr.f32.gmra.mrb[0].mxu0 %v1686
    %v1789 = vpop.f32.mrb[0].mxu0
    %v1790 = vadd.f32 %v1671, %v1789
    %v1791 = vpop.f32.mrb[0].mxu0
    %1792 = vmatprep.mubr.f32.mxu0 0.0
    %1793 = vmatmul.mubr.f32.gmra.mrb[0].mxu0 %v1689
    %v1794 = vpop.f32.mrb[0].mxu0
    %v1795 = vadd.f32 %v1671, %v1794
    %v1796 = vpop.f32.mrb[0].mxu0
    %1797 = vmatprep.mubr.f32.mxu0 0.0
    %1798 = vmatmul.mubr.f32.gmra.mrb[0].mxu0 %v1692
    %v1799 = vpop.f32.mrb[0].mxu0
    %v1800 = vadd.f32 %v1671, %v1799
    %v1801 = vpop.f32.mrb[0].mxu0
    %1802 = vmatprep.mubr.f32.mxu0 0.0
    %1803 = vmatmul.mubr.f32.gmra.mrb[0].mxu0 %v1695
    %v1804 = vpop.f32.mrb[0].mxu0
    %v1805 = vadd.f32 %v1671, %v1804
    %v1806 = vpop.f32.mrb[0].mxu0
    %1807 = vmatprep.mubr.f32.mxu0 0.0
    %1808 = vmatmul.mubr.f32.gmra.mrb[0].mxu0 %v1698
    %v1809 = vpop.f32.mrb[0].mxu0
    %v1810 = vadd.f32 %v1671, %v1809
    %v1811 = vpop.f32.mrb[0].mxu0
    %1812 = vmatprep.mubr.f32.mxu0 0.0
    %1813 = vmatmul.mubr.f32.gmra.mrb[0].mxu0 %v1701
    %v1814 = vpop.f32.mrb[0].mxu0
    %v1815 = vadd.f32 %v1671, %v1814
    %v1816 = vpop.f32.mrb[0].mxu0
    %1817 = vdwg.mxu0
    %v1818 = vpack.c.bf16 %v1775, %v1770
    %v1819 = vpack.c.bf16 %v1785, %v1780
    %v1820 = vpack.c.bf16 %v1795, %v1790
    %v1821 = vpack.c.bf16 %v1805, %v1800
    %v1822 = vpack.c.bf16 %v1815, %v1810
    %v1823 = vld [vmem:[%s9] sm:$0xff]
    %v1824 = vld [vmem:[%s9 + $0x8] sm:$0xff]
    %v1825 = vld [vmem:[%s9 + $0x10] sm:$0xff]
    %v1826 = vld [vmem:[%s9 + $0x18] sm:$0xff]
    %v1827 = vld [vmem:[%s9 + $0x20] sm:$0xff]
    %v1828 = vld [vmem:[%s9 + $0x28] sm:$0xff]
    %v1829 = vld [vmem:[%s9 + $0x30] sm:$0xff]
    %v1830 = vld [vmem:[%s9 + $0x38] sm:$0xff]
    %v1831 = vld [vmem:[%s9 + $0x40] sm:$0xff]
    %v1832 = vld [vmem:[%s9 + $0x48] sm:$0xff]
    %v1833 = vld [vmem:[%s11] sm:$0x1]
    %1835 = vset.pattern.permute.xlu0 0
    %1836 = vperm.xlu0 %1835, %v1823
    %v1837 = vpop.permute.xlu0 %1836
    %1840 = vset.pattern.permute.xlu0 0
    %1841 = vperm.xlu0 %1840, %v1824
    %v1842 = vpop.permute.xlu0 %1841
    %1845 = vset.pattern.permute.xlu0 0
    %1846 = vperm.xlu0 %1845, %v1825
    %v1847 = vpop.permute.xlu0 %1846
    %1850 = vset.pattern.permute.xlu0 0
    %1851 = vperm.xlu0 %1850, %v1826
    %v1852 = vpop.permute.xlu0 %1851
    %1855 = vset.pattern.permute.xlu0 0
    %1856 = vperm.xlu0 %1855, %v1827
    %v1857 = vpop.permute.xlu0 %1856
    %1860 = vset.pattern.permute.xlu0 0
    %1861 = vperm.xlu0 %1860, %v1828
    %v1862 = vpop.permute.xlu0 %1861
    %1865 = vset.pattern.permute.xlu0 0
    %1866 = vperm.xlu0 %1865, %v1829
    %v1867 = vpop.permute.xlu0 %1866
    %1870 = vset.pattern.permute.xlu0 0
    %1871 = vperm.xlu0 %1870, %v1830
    %v1872 = vpop.permute.xlu0 %1871
    %1875 = vset.pattern.permute.xlu0 0
    %1876 = vperm.xlu0 %1875, %v1831
    %v1877 = vpop.permute.xlu0 %1876
    %1880 = vset.pattern.permute.xlu0 0
    %1881 = vperm.xlu0 %1880, %v1832
    %v1882 = vpop.permute.xlu0 %1881
    %v1885 = vlaneseq
    %v1886 = vshrl.u32 %v1885, 7
    %v1887 = vsub.s32 0, %v1886
    %v1888 = vrot.slane %v1833, %v1887
    %vm1890 = vcmp.eq.f32.partialorder %v1837, %v1888
    %vm1891 = vcmp.eq.f32.partialorder %v1842, %v1888
    %vm1892 = vcmp.eq.f32.partialorder %v1847, %v1888
    %vm1893 = vcmp.eq.f32.partialorder %v1852, %v1888
    %vm1894 = vcmp.eq.f32.partialorder %v1857, %v1888
    %vm1895 = vcmp.eq.f32.partialorder %v1862, %v1888
    %vm1896 = vcmp.eq.f32.partialorder %v1867, %v1888
    %vm1897 = vcmp.eq.f32.partialorder %v1872, %v1888
    %vm1898 = vcmp.eq.f32.partialorder %v1877, %v1888
    %vm1899 = vcmp.eq.f32.partialorder %v1882, %v1888
    %vm1900 = vcmp.ge.s32.totalorder %v783, 0
    %vm1901 = vcmp.lt.s32.totalorder %v783, 4
    %vm1902 = vmand %vm1900, %vm1901
    %v1903 = vsel %vm1902, 1, 0
    %vm1904 = vcmp.eq.s32.totalorder %v1903, 1
    %v1905 = vsel %vm1904, %v1770, 0.0
    %v1906 = vsel %vm1904, %v1775, 0.0
    %v1907 = vsel %vm1904, %v1780, 0.0
    %v1908 = vsel %vm1904, %v1785, 0.0
    %v1909 = vsel %vm1904, %v1790, 0.0
    %v1910 = vsel %vm1904, %v1795, 0.0
    %v1911 = vsel %vm1904, %v1800, 0.0
    %v1912 = vsel %vm1904, %v1805, 0.0
    %v1913 = vsel %vm1904, %v1810, 0.0
    %v1914 = vsel %vm1904, %v1815, 0.0
    %v1915 = vpack.c.bf16 %v1906, %v1905
    %v1916 = vpack.c.bf16 %v1908, %v1907
    %v1917 = vpack.c.bf16 %v1910, %v1909
    %v1918 = vpack.c.bf16 %v1912, %v1911
    %v1919 = vpack.c.bf16 %v1914, %v1913
    %1925 = vrot.lane.b32.xlu0 %v1818, 96
    %v1926 = vpop.permute.xlu0 %1925
    %1927 = vrot.lane.b32.xlu0 %v1819, 96
    %v1928 = vpop.permute.xlu0 %1927
    %1929 = vrot.lane.b32.xlu0 %v1820, 96
    %v1930 = vpop.permute.xlu0 %1929
    %1931 = vrot.lane.b32.xlu0 %v1821, 96
    %v1932 = vpop.permute.xlu0 %1931
    %1933 = vrot.lane.b32.xlu0 %v1822, 96
    %v1934 = vpop.permute.xlu0 %1933
    %v1936 = vsel %vm278, %v1915, 0
    %v1939 = vsel %vm278, %v1916, 0
    %v1942 = vsel %vm278, %v1917, 0
    %v1945 = vsel %vm278, %v1918, 0
    %v1948 = vsel %vm278, %v1919, 0
    %v1951 = vsel %vm278, %v1926, 0
    %v1954 = vsel %vm278, %v1928, 0
    %v1957 = vsel %vm278, %v1930, 0
    %v1960 = vsel %vm278, %v1932, 0
    %v1963 = vsel %vm278, %v1934, 0
    %1965 = vmatprep.subr.bf16.mxu0 0
    %1966 = vmatpush1.bf16.xpose.msra.mxu0 %v1951
    %1967 = vmatprep.subr.bf16.mxu0 0
    %1968 = vmatpush1.bf16.xpose.msra.mxu0 %v1954
    %1969 = vmatprep.subr.bf16.mxu0 0
    %1970 = vmatpush1.bf16.xpose.msra.mxu0 %v1957
    %1971 = vmatprep.subr.bf16.mxu0 0
    %1972 = vmatpush1.bf16.xpose.msra.mxu0 %v1960
    %1973 = vmatprep.subr.bf16.mxu0 0
    %1974 = vmatpush1.bf16.xpose.msra.mxu0 %v1963
    %1975 = vmatprep.subr.bf16.mxu0 0
    %1976 = vmatpush1.bf16.xpose.msra.mxu0 0
    %1977 = vmatprep.subr.bf16.mxu0 0
    %1978 = vmatpush1.bf16.xpose.msra.mxu0 0
    %1979 = vmatprep.subr.bf16.mxu0 0
    %1980 = vmatpush1.bf16.xpose.msra.mxu0 0
    %1981 = vmatprep.subr.bf16.mxu0 0
    %1982 = vmatpush1.bf16.xpose.msra.mxu0 0
    %1983 = vmatprep.subr.bf16.mxu0 0
    %1984 = vmatpush1.bf16.xpose.msra.mxu0 0
    %1985 = vmatprep.subr.bf16.mxu0 0
    %1986 = vmatpush1.bf16.xpose.msra.mxu0 0
    %1987 = vmatprep.subr.bf16.mxu0 0
    %1988 = vmatpush1.bf16.xpose.msra.mxu0 0
    %1989 = vmatprep.subr.bf16.mxu0 0
    %1990 = vmatpush1.bf16.xpose.msra.mxu0 0
    %1991 = vmatprep.subr.bf16.mxu0 0
    %1992 = vmatpush1.bf16.xpose.msra.mxu0 0
    %1993 = vmatprep.subr.bf16.mxu0 0
    %1994 = vmatpush1.bf16.xpose.msra.mxu0 0
    %1995 = vmatprep.subr.bf16.mxu0 0
    %1996 = vmatpush1.bf16.xpose.msra.mxu0 0
    %1997 = vmatprep.mubr.bf16.mxu0 0
    %1998 = vmatmul.mubr.bf16.gmra.mrb[0].mxu0 %v1936
    %v1999 = vpop.f32.mrb[0].mxu0
    %v2000 = vadd.f32 0.0, %v1999
    %v2001 = vpop.f32.mrb[0].mxu0
    %v2002 = vpop.f32.mrb[0].mxu0
    %v2003 = vadd.f32 0.0, %v2002
    %v2004 = vpop.f32.mrb[0].mxu0
    %2005 = vmatprep.mubr.bf16.mxu0 0
    %2006 = vmatmul.mubr.bf16.gmra.mrb[0].mxu0 %v1939
    %v2007 = vpop.f32.mrb[0].mxu0
    %v2008 = vadd.f32 0.0, %v2007
    %v2009 = vpop.f32.mrb[0].mxu0
    %v2010 = vpop.f32.mrb[0].mxu0
    %v2011 = vadd.f32 0.0, %v2010
    %v2012 = vpop.f32.mrb[0].mxu0
    %2013 = vmatprep.mubr.bf16.mxu0 0
    %2014 = vmatmul.mubr.bf16.gmra.mrb[0].mxu0 %v1942
    %v2015 = vpop.f32.mrb[0].mxu0
    %v2016 = vadd.f32 0.0, %v2015
    %v2017 = vpop.f32.mrb[0].mxu0
    %v2018 = vpop.f32.mrb[0].mxu0
    %v2019 = vadd.f32 0.0, %v2018
    %v2020 = vpop.f32.mrb[0].mxu0
    %2021 = vmatprep.mubr.bf16.mxu0 0
    %2022 = vmatmul.mubr.bf16.gmra.mrb[0].mxu0 %v1945
    %v2023 = vpop.f32.mrb[0].mxu0
    %v2024 = vadd.f32 0.0, %v2023
    %v2025 = vpop.f32.mrb[0].mxu0
    %v2026 = vpop.f32.mrb[0].mxu0
    %v2027 = vadd.f32 0.0, %v2026
    %v2028 = vpop.f32.mrb[0].mxu0
    %2029 = vmatprep.mubr.bf16.mxu0 0
    %2030 = vmatmul.mubr.bf16.gmra.mrb[0].mxu0 %v1948
    %v2031 = vpop.f32.mrb[0].mxu0
    %v2032 = vadd.f32 0.0, %v2031
    %v2033 = vpop.f32.mrb[0].mxu0
    %v2034 = vpop.f32.mrb[0].mxu0
    %v2035 = vadd.f32 0.0, %v2034
    %v2036 = vpop.f32.mrb[0].mxu0
    %2037 = vdwg.mxu0
    %v2038 = vsel %vm1890, %v2000, -1e+30
    %v2039 = vsel %vm1891, %v2003, -1e+30
    %v2040 = vsel %vm1892, %v2008, -1e+30
    %v2041 = vsel %vm1893, %v2011, -1e+30
    %v2042 = vsel %vm1894, %v2016, -1e+30
    %v2043 = vsel %vm1895, %v2019, -1e+30
    %v2044 = vsel %vm1896, %v2024, -1e+30
    %v2045 = vsel %vm1897, %v2027, -1e+30
    %v2046 = vsel %vm1898, %v2032, -1e+30
    %v2047 = vsel %vm1899, %v2035, -1e+30
    %vm2048 = vcmask 654336
    %v2049 = vsel %vm2048, %v2038, -inf
    %2050 = vmax.xlane.f32.xlu0 %v2049
    %v2051 = vpop.xlane.xlu0 %2050
    %v2052 = vsel %vm2048, %v2039, -inf
    %2053 = vmax.xlane.f32.xlu0 %v2052
    %v2054 = vpop.xlane.xlu0 %2053
    %v2055 = vsel %vm2048, %v2040, -inf
    %2056 = vmax.xlane.f32.xlu0 %v2055
    %v2057 = vpop.xlane.xlu0 %2056
    %v2058 = vsel %vm2048, %v2041, -inf
    %2059 = vmax.xlane.f32.xlu0 %v2058
    %v2060 = vpop.xlane.xlu0 %2059
    %v2061 = vsel %vm2048, %v2042, -inf
    %2062 = vmax.xlane.f32.xlu0 %v2061
    %v2063 = vpop.xlane.xlu0 %2062
    %v2064 = vsel %vm2048, %v2043, -inf
    %2065 = vmax.xlane.f32.xlu0 %v2064
    %v2066 = vpop.xlane.xlu0 %2065
    %v2067 = vsel %vm2048, %v2044, -inf
    %2068 = vmax.xlane.f32.xlu0 %v2067
    %v2069 = vpop.xlane.xlu0 %2068
    %v2070 = vsel %vm2048, %v2045, -inf
    %2071 = vmax.xlane.f32.xlu0 %v2070
    %v2072 = vpop.xlane.xlu0 %2071
    %v2073 = vsel %vm2048, %v2046, -inf
    %2074 = vmax.xlane.f32.xlu0 %v2073
    %v2075 = vpop.xlane.xlu0 %2074
    %v2076 = vsel %vm2048, %v2047, -inf
    %2077 = vmax.xlane.f32.xlu0 %v2076
    %v2078 = vpop.xlane.xlu0 %2077
    %v2079 = vsub.f32 %v2038, %v2051
    %v2080 = vsub.f32 %v2039, %v2054
    %v2081 = vsub.f32 %v2040, %v2057
    %v2082 = vsub.f32 %v2041, %v2060
    %v2083 = vsub.f32 %v2042, %v2063
    %v2084 = vsub.f32 %v2043, %v2066
    %v2085 = vsub.f32 %v2044, %v2069
    %v2086 = vsub.f32 %v2045, %v2072
    %v2087 = vsub.f32 %v2046, %v2075
    %v2088 = vsub.f32 %v2047, %v2078
    %v2089 = vmul.f32 %v2079, 1.442695
    %v2090 = vpow.pop %v2089
    %v2091 = vmul.f32 %v2080, 1.442695
    %v2092 = vpow.pop %v2091
    %v2093 = vmul.f32 %v2081, 1.442695
    %v2094 = vpow.pop %v2093
    %v2095 = vmul.f32 %v2082, 1.442695
    %v2096 = vpow.pop %v2095
    %v2097 = vmul.f32 %v2083, 1.442695
    %v2098 = vpow.pop %v2097
    %v2099 = vmul.f32 %v2084, 1.442695
    %v2100 = vpow.pop %v2099
    %v2101 = vmul.f32 %v2085, 1.442695
    %v2102 = vpow.pop %v2101
    %v2103 = vmul.f32 %v2086, 1.442695
    %v2104 = vpow.pop %v2103
    %v2105 = vmul.f32 %v2087, 1.442695
    %v2106 = vpow.pop %v2105
    %v2107 = vmul.f32 %v2088, 1.442695
    %v2108 = vpow.pop %v2107
    %v2109 = vsel %vm2048, %v2090, 0.0
    %2110 = vadd.xlane.f32.xlu0 %v2109
    %v2111 = vpop.xlane.xlu0 %2110
    %v2112 = vsel %vm2048, %v2092, 0.0
    %2113 = vadd.xlane.f32.xlu0 %v2112
    %v2114 = vpop.xlane.xlu0 %2113
    %v2115 = vsel %vm2048, %v2094, 0.0
    %2116 = vadd.xlane.f32.xlu0 %v2115
    %v2117 = vpop.xlane.xlu0 %2116
    %v2118 = vsel %vm2048, %v2096, 0.0
    %2119 = vadd.xlane.f32.xlu0 %v2118
    %v2120 = vpop.xlane.xlu0 %2119
    %v2121 = vsel %vm2048, %v2098, 0.0
    %2122 = vadd.xlane.f32.xlu0 %v2121
    %v2123 = vpop.xlane.xlu0 %2122
    %v2124 = vsel %vm2048, %v2100, 0.0
    %2125 = vadd.xlane.f32.xlu0 %v2124
    %v2126 = vpop.xlane.xlu0 %2125
    %v2127 = vsel %vm2048, %v2102, 0.0
    %2128 = vadd.xlane.f32.xlu0 %v2127
    %v2129 = vpop.xlane.xlu0 %2128
    %v2130 = vsel %vm2048, %v2104, 0.0
    %2131 = vadd.xlane.f32.xlu0 %v2130
    %v2132 = vpop.xlane.xlu0 %2131
    %v2133 = vsel %vm2048, %v2106, 0.0
    %2134 = vadd.xlane.f32.xlu0 %v2133
    %v2135 = vpop.xlane.xlu0 %2134
    %v2136 = vsel %vm2048, %v2108, 0.0
    %2137 = vadd.xlane.f32.xlu0 %v2136
    %v2138 = vpop.xlane.xlu0 %2137
    %v2139 = vrcp.pop %v2111
    %v2140 = vrcp.pop %v2114
    %v2141 = vrcp.pop %v2117
    %v2142 = vrcp.pop %v2120
    %v2143 = vrcp.pop %v2123
    %v2144 = vrcp.pop %v2126
    %v2145 = vrcp.pop %v2129
    %v2146 = vrcp.pop %v2132
    %v2147 = vrcp.pop %v2135
    %v2148 = vrcp.pop %v2138
    %v2149 = vpack.c.bf16 %v2092, %v2090
    %v2150 = vpack.c.bf16 %v2096, %v2094
    %v2151 = vpack.c.bf16 %v2100, %v2098
    %v2152 = vpack.c.bf16 %v2104, %v2102
    %v2153 = vpack.c.bf16 %v2108, %v2106
    %2154 = vrot.lane.b32.xlu0 %v1818, 64
    %v2155 = vpop.permute.xlu0 %2154
    %2156 = vrot.lane.b32.xlu0 %v1819, 64
    %v2157 = vpop.permute.xlu0 %2156
    %2158 = vrot.lane.b32.xlu0 %v1820, 64
    %v2159 = vpop.permute.xlu0 %2158
    %2160 = vrot.lane.b32.xlu0 %v1821, 64
    %v2161 = vpop.permute.xlu0 %2160
    %2162 = vrot.lane.b32.xlu0 %v1822, 64
    %v2163 = vpop.permute.xlu0 %2162
    %v2170 = vsel %vm2048, %v2149, 0
    %v2173 = vsel %vm2048, %v2150, 0
    %v2176 = vsel %vm2048, %v2151, 0
    %v2179 = vsel %vm2048, %v2152, 0
    %v2182 = vsel %vm2048, %v2153, 0
    %2184 = vmatprep.subr.bf16.mxu0 0
    %2185 = vmatpush1.bf16.msra.mxu0 %v2155
    %2186 = vmatprep.subr.bf16.mxu0 0
    %2187 = vmatpush1.bf16.msra.mxu0 %v2157
    %2188 = vmatprep.subr.bf16.mxu0 0
    %2189 = vmatpush1.bf16.msra.mxu0 %v2159
    %2190 = vmatprep.subr.bf16.mxu0 0
    %2191 = vmatpush1.bf16.msra.mxu0 %v2161
    %2192 = vmatprep.subr.bf16.mxu0 0
    %2193 = vmatpush1.bf16.msra.mxu0 %v2163
    %2194 = vmatprep.subr.bf16.mxu0 0
    %2195 = vmatpush1.bf16.msra.mxu0 0
    %2196 = vmatprep.subr.bf16.mxu0 0
    %2197 = vmatpush1.bf16.msra.mxu0 0
    %2198 = vmatprep.subr.bf16.mxu0 0
    %2199 = vmatpush1.bf16.msra.mxu0 0
    %2200 = vmatprep.subr.bf16.mxu0 0
    %2201 = vmatpush1.bf16.msra.mxu0 0
    %2202 = vmatprep.subr.bf16.mxu0 0
    %2203 = vmatpush1.bf16.msra.mxu0 0
    %2204 = vmatprep.subr.bf16.mxu0 0
    %2205 = vmatpush1.bf16.msra.mxu0 0
    %2206 = vmatprep.subr.bf16.mxu0 0
    %2207 = vmatpush1.bf16.msra.mxu0 0
    %2208 = vmatprep.subr.bf16.mxu0 0
    %2209 = vmatpush1.bf16.msra.mxu0 0
    %2210 = vmatprep.subr.bf16.mxu0 0
    %2211 = vmatpush1.bf16.msra.mxu0 0
    %2212 = vmatprep.subr.bf16.mxu0 0
    %2213 = vmatpush1.bf16.msra.mxu0 0
    %2214 = vmatprep.subr.bf16.mxu0 0
    %2215 = vmatpush1.bf16.msra.mxu0 0
    %2216 = vmatprep.mubr.bf16.mxu0 0
    %2217 = vmatmul.mubr.bf16.gmra.mrb[0].mxu0 %v2170
    %v2218 = vpop.f32.mrb[0].mxu0
    %v2219 = vadd.f32 0.0, %v2218
    %v2220 = vpop.f32.mrb[0].mxu0
    %v2221 = vpop.f32.mrb[0].mxu0
    %v2222 = vadd.f32 0.0, %v2221
    %v2223 = vpop.f32.mrb[0].mxu0
    %2224 = vmatprep.mubr.bf16.mxu0 0
    %2225 = vmatmul.mubr.bf16.gmra.mrb[0].mxu0 %v2173
    %v2226 = vpop.f32.mrb[0].mxu0
    %v2227 = vadd.f32 0.0, %v2226
    %v2228 = vpop.f32.mrb[0].mxu0
    %v2229 = vpop.f32.mrb[0].mxu0
    %v2230 = vadd.f32 0.0, %v2229
    %v2231 = vpop.f32.mrb[0].mxu0
    %2232 = vmatprep.mubr.bf16.mxu0 0
    %2233 = vmatmul.mubr.bf16.gmra.mrb[0].mxu0 %v2176
    %v2234 = vpop.f32.mrb[0].mxu0
    %v2235 = vadd.f32 0.0, %v2234
    %v2236 = vpop.f32.mrb[0].mxu0
    %v2237 = vpop.f32.mrb[0].mxu0
    %v2238 = vadd.f32 0.0, %v2237
    %v2239 = vpop.f32.mrb[0].mxu0
    %2240 = vmatprep.mubr.bf16.mxu0 0
    %2241 = vmatmul.mubr.bf16.gmra.mrb[0].mxu0 %v2179
    %v2242 = vpop.f32.mrb[0].mxu0
    %v2243 = vadd.f32 0.0, %v2242
    %v2244 = vpop.f32.mrb[0].mxu0
    %v2245 = vpop.f32.mrb[0].mxu0
    %v2246 = vadd.f32 0.0, %v2245
    %v2247 = vpop.f32.mrb[0].mxu0
    %2248 = vmatprep.mubr.bf16.mxu0 0
    %2249 = vmatmul.mubr.bf16.gmra.mrb[0].mxu0 %v2182
    %v2250 = vpop.f32.mrb[0].mxu0
    %v2251 = vadd.f32 0.0, %v2250
    %v2252 = vpop.f32.mrb[0].mxu0
    %v2253 = vpop.f32.mrb[0].mxu0
    %v2254 = vadd.f32 0.0, %v2253
    %v2255 = vpop.f32.mrb[0].mxu0
    %2256 = vdwg.mxu0
    %v2257 = vmul.f32 %v2219, %v2139
    %v2258 = vmul.f32 %v2222, %v2140
    %v2259 = vmul.f32 %v2227, %v2141
    %v2260 = vmul.f32 %v2230, %v2142
    %v2261 = vmul.f32 %v2235, %v2143
    %v2262 = vmul.f32 %v2238, %v2144
    %v2263 = vmul.f32 %v2243, %v2145
    %v2264 = vmul.f32 %v2246, %v2146
    %v2265 = vmul.f32 %v2251, %v2147
    %v2266 = vmul.f32 %v2254, %v2148
    %v2267 = vsel %vm1904, %v2257, 0.0
    %v2268 = vsel %vm1904, %v2258, 0.0
    %v2269 = vsel %vm1904, %v2259, 0.0
    %v2270 = vsel %vm1904, %v2260, 0.0
    %v2271 = vsel %vm1904, %v2261, 0.0
    %v2272 = vsel %vm1904, %v2262, 0.0
    %v2273 = vsel %vm1904, %v2263, 0.0
    %v2274 = vsel %vm1904, %v2264, 0.0
    %v2275 = vsel %vm1904, %v2265, 0.0
    %v2276 = vsel %vm1904, %v2266, 0.0
    %vm2277 = vcmp.ge.s32.totalorder %v783, 4
    %vm2278 = vcmp.lt.s32.totalorder %v783, 8
    %vm2279 = vmand %vm2277, %vm2278
    %v2280 = vsel %vm2279, 1, 0
    %vm2281 = vcmp.eq.s32.totalorder %v2280, 1
    %v2282 = vsel %vm2281, %v1770, 0.0
    %v2283 = vsel %vm2281, %v1775, 0.0
    %v2284 = vsel %vm2281, %v1780, 0.0
    %v2285 = vsel %vm2281, %v1785, 0.0
    %v2286 = vsel %vm2281, %v1790, 0.0
    %v2287 = vsel %vm2281, %v1795, 0.0
    %v2288 = vsel %vm2281, %v1800, 0.0
    %v2289 = vsel %vm2281, %v1805, 0.0
    %v2290 = vsel %vm2281, %v1810, 0.0
    %v2291 = vsel %vm2281, %v1815, 0.0
    %v2292 = vpack.c.bf16 %v2283, %v2282
    %v2293 = vpack.c.bf16 %v2285, %v2284
    %v2294 = vpack.c.bf16 %v2287, %v2286
    %v2295 = vpack.c.bf16 %v2289, %v2288
    %v2296 = vpack.c.bf16 %v2291, %v2290
    %v2298 = vsel %vm278, %v2292, 0
    %v2301 = vsel %vm278, %v2293, 0
    %v2304 = vsel %vm278, %v2294, 0
    %v2307 = vsel %vm278, %v2295, 0
    %v2310 = vsel %vm278, %v2296, 0
    %2312 = vmatprep.subr.bf16.mxu0 0
    %2313 = vmatpush1.bf16.xpose.msra.mxu0 %v1951
    %2314 = vmatprep.subr.bf16.mxu0 0
    %2315 = vmatpush1.bf16.xpose.msra.mxu0 %v1954
    %2316 = vmatprep.subr.bf16.mxu0 0
    %2317 = vmatpush1.bf16.xpose.msra.mxu0 %v1957
    %2318 = vmatprep.subr.bf16.mxu0 0
    %2319 = vmatpush1.bf16.xpose.msra.mxu0 %v1960
    %2320 = vmatprep.subr.bf16.mxu0 0
    %2321 = vmatpush1.bf16.xpose.msra.mxu0 %v1963
    %2322 = vmatprep.subr.bf16.mxu0 0
    %2323 = vmatpush1.bf16.xpose.msra.mxu0 0
    %2324 = vmatprep.subr.bf16.mxu0 0
    %2325 = vmatpush1.bf16.xpose.msra.mxu0 0
    %2326 = vmatprep.subr.bf16.mxu0 0
    %2327 = vmatpush1.bf16.xpose.msra.mxu0 0
    %2328 = vmatprep.subr.bf16.mxu0 0
    %2329 = vmatpush1.bf16.xpose.msra.mxu0 0
    %2330 = vmatprep.subr.bf16.mxu0 0
    %2331 = vmatpush1.bf16.xpose.msra.mxu0 0
    %2332 = vmatprep.subr.bf16.mxu0 0
    %2333 = vmatpush1.bf16.xpose.msra.mxu0 0
    %2334 = vmatprep.subr.bf16.mxu0 0
    %2335 = vmatpush1.bf16.xpose.msra.mxu0 0
    %2336 = vmatprep.subr.bf16.mxu0 0
    %2337 = vmatpush1.bf16.xpose.msra.mxu0 0
    %2338 = vmatprep.subr.bf16.mxu0 0
    %2339 = vmatpush1.bf16.xpose.msra.mxu0 0
    %2340 = vmatprep.subr.bf16.mxu0 0
    %2341 = vmatpush1.bf16.xpose.msra.mxu0 0
    %2342 = vmatprep.subr.bf16.mxu0 0
    %2343 = vmatpush1.bf16.xpose.msra.mxu0 0
    %2344 = vmatprep.mubr.bf16.mxu0 0
    %2345 = vmatmul.mubr.bf16.gmra.mrb[0].mxu0 %v2298
    %v2346 = vpop.f32.mrb[0].mxu0
    %v2347 = vadd.f32 0.0, %v2346
    %v2348 = vpop.f32.mrb[0].mxu0
    %v2349 = vpop.f32.mrb[0].mxu0
    %v2350 = vadd.f32 0.0, %v2349
    %v2351 = vpop.f32.mrb[0].mxu0
    %2352 = vmatprep.mubr.bf16.mxu0 0
    %2353 = vmatmul.mubr.bf16.gmra.mrb[0].mxu0 %v2301
    %v2354 = vpop.f32.mrb[0].mxu0
    %v2355 = vadd.f32 0.0, %v2354
    %v2356 = vpop.f32.mrb[0].mxu0
    %v2357 = vpop.f32.mrb[0].mxu0
    %v2358 = vadd.f32 0.0, %v2357
    %v2359 = vpop.f32.mrb[0].mxu0
    %2360 = vmatprep.mubr.bf16.mxu0 0
    %2361 = vmatmul.mubr.bf16.gmra.mrb[0].mxu0 %v2304
    %v2362 = vpop.f32.mrb[0].mxu0
    %v2363 = vadd.f32 0.0, %v2362
    %v2364 = vpop.f32.mrb[0].mxu0
    %v2365 = vpop.f32.mrb[0].mxu0
    %v2366 = vadd.f32 0.0, %v2365
    %v2367 = vpop.f32.mrb[0].mxu0
    %2368 = vmatprep.mubr.bf16.mxu0 0
    %2369 = vmatmul.mubr.bf16.gmra.mrb[0].mxu0 %v2307
    %v2370 = vpop.f32.mrb[0].mxu0
    %v2371 = vadd.f32 0.0, %v2370
    %v2372 = vpop.f32.mrb[0].mxu0
    %v2373 = vpop.f32.mrb[0].mxu0
    %v2374 = vadd.f32 0.0, %v2373
    %v2375 = vpop.f32.mrb[0].mxu0
    %2376 = vmatprep.mubr.bf16.mxu0 0
    %2377 = vmatmul.mubr.bf16.gmra.mrb[0].mxu0 %v2310
    %v2378 = vpop.f32.mrb[0].mxu0
    %v2379 = vadd.f32 0.0, %v2378
    %v2380 = vpop.f32.mrb[0].mxu0
    %v2381 = vpop.f32.mrb[0].mxu0
    %v2382 = vadd.f32 0.0, %v2381
    %v2383 = vpop.f32.mrb[0].mxu0
    %2384 = vdwg.mxu0
    %v2385 = vsel %vm1890, %v2347, -1e+30
    %v2386 = vsel %vm1891, %v2350, -1e+30
    %v2387 = vsel %vm1892, %v2355, -1e+30
    %v2388 = vsel %vm1893, %v2358, -1e+30
    %v2389 = vsel %vm1894, %v2363, -1e+30
    %v2390 = vsel %vm1895, %v2366, -1e+30
    %v2391 = vsel %vm1896, %v2371, -1e+30
    %v2392 = vsel %vm1897, %v2374, -1e+30
    %v2393 = vsel %vm1898, %v2379, -1e+30
    %v2394 = vsel %vm1899, %v2382, -1e+30
    %v2395 = vsel %vm2048, %v2385, -inf
    %2396 = vmax.xlane.f32.xlu0 %v2395
    %v2397 = vpop.xlane.xlu0 %2396
    %v2398 = vsel %vm2048, %v2386, -inf
    %2399 = vmax.xlane.f32.xlu0 %v2398
    %v2400 = vpop.xlane.xlu0 %2399
    %v2401 = vsel %vm2048, %v2387, -inf
    %2402 = vmax.xlane.f32.xlu0 %v2401
    %v2403 = vpop.xlane.xlu0 %2402
    %v2404 = vsel %vm2048, %v2388, -inf
    %2405 = vmax.xlane.f32.xlu0 %v2404
    %v2406 = vpop.xlane.xlu0 %2405
    %v2407 = vsel %vm2048, %v2389, -inf
    %2408 = vmax.xlane.f32.xlu0 %v2407
    %v2409 = vpop.xlane.xlu0 %2408
    %v2410 = vsel %vm2048, %v2390, -inf
    %2411 = vmax.xlane.f32.xlu0 %v2410
    %v2412 = vpop.xlane.xlu0 %2411
    %v2413 = vsel %vm2048, %v2391, -inf
    %2414 = vmax.xlane.f32.xlu0 %v2413
    %v2415 = vpop.xlane.xlu0 %2414
    %v2416 = vsel %vm2048, %v2392, -inf
    %2417 = vmax.xlane.f32.xlu0 %v2416
    %v2418 = vpop.xlane.xlu0 %2417
    %v2419 = vsel %vm2048, %v2393, -inf
    %2420 = vmax.xlane.f32.xlu0 %v2419
    %v2421 = vpop.xlane.xlu0 %2420
    %v2422 = vsel %vm2048, %v2394, -inf
    %2423 = vmax.xlane.f32.xlu0 %v2422
    %v2424 = vpop.xlane.xlu0 %2423
    %v2425 = vsub.f32 %v2385, %v2397
    %v2426 = vsub.f32 %v2386, %v2400
    %v2427 = vsub.f32 %v2387, %v2403
    %v2428 = vsub.f32 %v2388, %v2406
    %v2429 = vsub.f32 %v2389, %v2409
    %v2430 = vsub.f32 %v2390, %v2412
    %v2431 = vsub.f32 %v2391, %v2415
    %v2432 = vsub.f32 %v2392, %v2418
    %v2433 = vsub.f32 %v2393, %v2421
    %v2434 = vsub.f32 %v2394, %v2424
    %v2435 = vmul.f32 %v2425, 1.442695
    %v2436 = vpow.pop %v2435
    %v2437 = vmul.f32 %v2426, 1.442695
    %v2438 = vpow.pop %v2437
    %v2439 = vmul.f32 %v2427, 1.442695
    %v2440 = vpow.pop %v2439
    %v2441 = vmul.f32 %v2428, 1.442695
    %v2442 = vpow.pop %v2441
    %v2443 = vmul.f32 %v2429, 1.442695
    %v2444 = vpow.pop %v2443
    %v2445 = vmul.f32 %v2430, 1.442695
    %v2446 = vpow.pop %v2445
    %v2447 = vmul.f32 %v2431, 1.442695
    %v2448 = vpow.pop %v2447
    %v2449 = vmul.f32 %v2432, 1.442695
    %v2450 = vpow.pop %v2449
    %v2451 = vmul.f32 %v2433, 1.442695
    %v2452 = vpow.pop %v2451
    %v2453 = vmul.f32 %v2434, 1.442695
    %v2454 = vpow.pop %v2453
    %v2455 = vsel %vm2048, %v2436, 0.0
    %2456 = vadd.xlane.f32.xlu0 %v2455
    %v2457 = vpop.xlane.xlu0 %2456
    %v2458 = vsel %vm2048, %v2438, 0.0
    %2459 = vadd.xlane.f32.xlu0 %v2458
    %v2460 = vpop.xlane.xlu0 %2459
    %v2461 = vsel %vm2048, %v2440, 0.0
    %2462 = vadd.xlane.f32.xlu0 %v2461
    %v2463 = vpop.xlane.xlu0 %2462
    %v2464 = vsel %vm2048, %v2442, 0.0
    %2465 = vadd.xlane.f32.xlu0 %v2464
    %v2466 = vpop.xlane.xlu0 %2465
    %v2467 = vsel %vm2048, %v2444, 0.0
    %2468 = vadd.xlane.f32.xlu0 %v2467
    %v2469 = vpop.xlane.xlu0 %2468
    %v2470 = vsel %vm2048, %v2446, 0.0
    %2471 = vadd.xlane.f32.xlu0 %v2470
    %v2472 = vpop.xlane.xlu0 %2471
    %v2473 = vsel %vm2048, %v2448, 0.0
    %2474 = vadd.xlane.f32.xlu0 %v2473
    %v2475 = vpop.xlane.xlu0 %2474
    %v2476 = vsel %vm2048, %v2450, 0.0
    %2477 = vadd.xlane.f32.xlu0 %v2476
    %v2478 = vpop.xlane.xlu0 %2477
    %v2479 = vsel %vm2048, %v2452, 0.0
    %2480 = vadd.xlane.f32.xlu0 %v2479
    %v2481 = vpop.xlane.xlu0 %2480
    %v2482 = vsel %vm2048, %v2454, 0.0
    %2483 = vadd.xlane.f32.xlu0 %v2482
    %v2484 = vpop.xlane.xlu0 %2483
    %v2485 = vrcp.pop %v2457
    %v2486 = vrcp.pop %v2460
    %v2487 = vrcp.pop %v2463
    %v2488 = vrcp.pop %v2466
    %v2489 = vrcp.pop %v2469
    %v2490 = vrcp.pop %v2472
    %v2491 = vrcp.pop %v2475
    %v2492 = vrcp.pop %v2478
    %v2493 = vrcp.pop %v2481
    %v2494 = vrcp.pop %v2484
    %v2495 = vpack.c.bf16 %v2438, %v2436
    %v2496 = vpack.c.bf16 %v2442, %v2440
    %v2497 = vpack.c.bf16 %v2446, %v2444
    %v2498 = vpack.c.bf16 %v2450, %v2448
    %v2499 = vpack.c.bf16 %v2454, %v2452
    %v2501 = vsel %vm2048, %v2495, 0
    %v2504 = vsel %vm2048, %v2496, 0
    %v2507 = vsel %vm2048, %v2497, 0
    %v2510 = vsel %vm2048, %v2498, 0
    %v2513 = vsel %vm2048, %v2499, 0
    %2515 = vmatprep.subr.bf16.mxu0 0
    %2516 = vmatpush1.bf16.msra.mxu0 %v2155
    %2517 = vmatprep.subr.bf16.mxu0 0
    %2518 = vmatpush1.bf16.msra.mxu0 %v2157
    %2519 = vmatprep.subr.bf16.mxu0 0
    %2520 = vmatpush1.bf16.msra.mxu0 %v2159
    %2521 = vmatprep.subr.bf16.mxu0 0
    %2522 = vmatpush1.bf16.msra.mxu0 %v2161
    %2523 = vmatprep.subr.bf16.mxu0 0
    %2524 = vmatpush1.bf16.msra.mxu0 %v2163
    %2525 = vmatprep.subr.bf16.mxu0 0
    %2526 = vmatpush1.bf16.msra.mxu0 0
    %2527 = vmatprep.subr.bf16.mxu0 0
    %2528 = vmatpush1.bf16.msra.mxu0 0
    %2529 = vmatprep.subr.bf16.mxu0 0
    %2530 = vmatpush1.bf16.msra.mxu0 0
    %2531 = vmatprep.subr.bf16.mxu0 0
    %2532 = vmatpush1.bf16.msra.mxu0 0
    %2533 = vmatprep.subr.bf16.mxu0 0
    %2534 = vmatpush1.bf16.msra.mxu0 0
    %2535 = vmatprep.subr.bf16.mxu0 0
    %2536 = vmatpush1.bf16.msra.mxu0 0
    %2537 = vmatprep.subr.bf16.mxu0 0
    %2538 = vmatpush1.bf16.msra.mxu0 0
    %2539 = vmatprep.subr.bf16.mxu0 0
    %2540 = vmatpush1.bf16.msra.mxu0 0
    %2541 = vmatprep.subr.bf16.mxu0 0
    %2542 = vmatpush1.bf16.msra.mxu0 0
    %2543 = vmatprep.subr.bf16.mxu0 0
    %2544 = vmatpush1.bf16.msra.mxu0 0
    %2545 = vmatprep.subr.bf16.mxu0 0
    %2546 = vmatpush1.bf16.msra.mxu0 0
    %2547 = vmatprep.mubr.bf16.mxu0 0
    %2548 = vmatmul.mubr.bf16.gmra.mrb[0].mxu0 %v2501
    %v2549 = vpop.f32.mrb[0].mxu0
    %v2550 = vadd.f32 0.0, %v2549
    %v2551 = vpop.f32.mrb[0].mxu0
    %v2552 = vpop.f32.mrb[0].mxu0
    %v2553 = vadd.f32 0.0, %v2552
    %v2554 = vpop.f32.mrb[0].mxu0
    %2555 = vmatprep.mubr.bf16.mxu0 0
    %2556 = vmatmul.mubr.bf16.gmra.mrb[0].mxu0 %v2504
    %v2557 = vpop.f32.mrb[0].mxu0
    %v2558 = vadd.f32 0.0, %v2557
    %v2559 = vpop.f32.mrb[0].mxu0
    %v2560 = vpop.f32.mrb[0].mxu0
    %v2561 = vadd.f32 0.0, %v2560
    %v2562 = vpop.f32.mrb[0].mxu0
    %2563 = vmatprep.mubr.bf16.mxu0 0
    %2564 = vmatmul.mubr.bf16.gmra.mrb[0].mxu0 %v2507
    %v2565 = vpop.f32.mrb[0].mxu0
    %v2566 = vadd.f32 0.0, %v2565
    %v2567 = vpop.f32.mrb[0].mxu0
    %v2568 = vpop.f32.mrb[0].mxu0
    %v2569 = vadd.f32 0.0, %v2568
    %v2570 = vpop.f32.mrb[0].mxu0
    %2571 = vmatprep.mubr.bf16.mxu0 0
    %2572 = vmatmul.mubr.bf16.gmra.mrb[0].mxu0 %v2510
    %v2573 = vpop.f32.mrb[0].mxu0
    %v2574 = vadd.f32 0.0, %v2573
    %v2575 = vpop.f32.mrb[0].mxu0
    %v2576 = vpop.f32.mrb[0].mxu0
    %v2577 = vadd.f32 0.0, %v2576
    %v2578 = vpop.f32.mrb[0].mxu0
    %2579 = vmatprep.mubr.bf16.mxu0 0
    %2580 = vmatmul.mubr.bf16.gmra.mrb[0].mxu0 %v2513
    %v2581 = vpop.f32.mrb[0].mxu0
    %v2582 = vadd.f32 0.0, %v2581
    %v2583 = vpop.f32.mrb[0].mxu0
    %v2584 = vpop.f32.mrb[0].mxu0
    %v2585 = vadd.f32 0.0, %v2584
    %v2586 = vpop.f32.mrb[0].mxu0
    %2587 = vdwg.mxu0
    %v2588 = vmul.f32 %v2550, %v2485
    %v2589 = vmul.f32 %v2553, %v2486
    %v2590 = vmul.f32 %v2558, %v2487
    %v2591 = vmul.f32 %v2561, %v2488
    %v2592 = vmul.f32 %v2566, %v2489
    %v2593 = vmul.f32 %v2569, %v2490
    %v2594 = vmul.f32 %v2574, %v2491
    %v2595 = vmul.f32 %v2577, %v2492
    %v2596 = vmul.f32 %v2582, %v2493
    %v2597 = vmul.f32 %v2585, %v2494
    %v2598 = vsel %vm2281, %v2588, 0.0
    %v2599 = vsel %vm2281, %v2589, 0.0
    %v2600 = vsel %vm2281, %v2590, 0.0
    %v2601 = vsel %vm2281, %v2591, 0.0
    %v2602 = vsel %vm2281, %v2592, 0.0
    %v2603 = vsel %vm2281, %v2593, 0.0
    %v2604 = vsel %vm2281, %v2594, 0.0
    %v2605 = vsel %vm2281, %v2595, 0.0
    %v2606 = vsel %vm2281, %v2596, 0.0
    %v2607 = vsel %vm2281, %v2597, 0.0
    %v2608 = vadd.f32 %v2267, %v2598
    %v2609 = vadd.f32 %v2268, %v2599
    %v2610 = vadd.f32 %v2269, %v2600
    %v2611 = vadd.f32 %v2270, %v2601
    %v2612 = vadd.f32 %v2271, %v2602
    %v2613 = vadd.f32 %v2272, %v2603
    %v2614 = vadd.f32 %v2273, %v2604
    %v2615 = vadd.f32 %v2274, %v2605
    %v2616 = vadd.f32 %v2275, %v2606
    %v2617 = vadd.f32 %v2276, %v2607
    %vm2618 = vcmp.ge.s32.totalorder %v783, 8
    %vm2619 = vcmp.lt.s32.totalorder %v783, 12
    %vm2620 = vmand %vm2618, %vm2619
    %v2621 = vsel %vm2620, 1, 0
    %vm2622 = vcmp.eq.s32.totalorder %v2621, 1
    %v2623 = vsel %vm2622, %v1770, 0.0
    %v2624 = vsel %vm2622, %v1775, 0.0
    %v2625 = vsel %vm2622, %v1780, 0.0
    %v2626 = vsel %vm2622, %v1785, 0.0
    %v2627 = vsel %vm2622, %v1790, 0.0
    %v2628 = vsel %vm2622, %v1795, 0.0
    %v2629 = vsel %vm2622, %v1800, 0.0
    %v2630 = vsel %vm2622, %v1805, 0.0
    %v2631 = vsel %vm2622, %v1810, 0.0
    %v2632 = vsel %vm2622, %v1815, 0.0
    %v2633 = vpack.c.bf16 %v2624, %v2623
    %v2634 = vpack.c.bf16 %v2626, %v2625
    %v2635 = vpack.c.bf16 %v2628, %v2627
    %v2636 = vpack.c.bf16 %v2630, %v2629
    %v2637 = vpack.c.bf16 %v2632, %v2631
    %v2639 = vsel %vm278, %v2633, 0
    %v2642 = vsel %vm278, %v2634, 0
    %v2645 = vsel %vm278, %v2635, 0
    %v2648 = vsel %vm278, %v2636, 0
    %v2651 = vsel %vm278, %v2637, 0
    %2653 = vmatprep.subr.bf16.mxu0 0
    %2654 = vmatpush1.bf16.xpose.msra.mxu0 %v1951
    %2655 = vmatprep.subr.bf16.mxu0 0
    %2656 = vmatpush1.bf16.xpose.msra.mxu0 %v1954
    %2657 = vmatprep.subr.bf16.mxu0 0
    %2658 = vmatpush1.bf16.xpose.msra.mxu0 %v1957
    %2659 = vmatprep.subr.bf16.mxu0 0
    %2660 = vmatpush1.bf16.xpose.msra.mxu0 %v1960
    %2661 = vmatprep.subr.bf16.mxu0 0
    %2662 = vmatpush1.bf16.xpose.msra.mxu0 %v1963
    %2663 = vmatprep.subr.bf16.mxu0 0
    %2664 = vmatpush1.bf16.xpose.msra.mxu0 0
    %2665 = vmatprep.subr.bf16.mxu0 0
    %2666 = vmatpush1.bf16.xpose.msra.mxu0 0
    %2667 = vmatprep.subr.bf16.mxu0 0
    %2668 = vmatpush1.bf16.xpose.msra.mxu0 0
    %2669 = vmatprep.subr.bf16.mxu0 0
    %2670 = vmatpush1.bf16.xpose.msra.mxu0 0
    %2671 = vmatprep.subr.bf16.mxu0 0
    %2672 = vmatpush1.bf16.xpose.msra.mxu0 0
    %2673 = vmatprep.subr.bf16.mxu0 0
    %2674 = vmatpush1.bf16.xpose.msra.mxu0 0
    %2675 = vmatprep.subr.bf16.mxu0 0
    %2676 = vmatpush1.bf16.xpose.msra.mxu0 0
    %2677 = vmatprep.subr.bf16.mxu0 0
    %2678 = vmatpush1.bf16.xpose.msra.mxu0 0
    %2679 = vmatprep.subr.bf16.mxu0 0
    %2680 = vmatpush1.bf16.xpose.msra.mxu0 0
    %2681 = vmatprep.subr.bf16.mxu0 0
    %2682 = vmatpush1.bf16.xpose.msra.mxu0 0
    %2683 = vmatprep.subr.bf16.mxu0 0
    %2684 = vmatpush1.bf16.xpose.msra.mxu0 0
    %2685 = vmatprep.mubr.bf16.mxu0 0
    %2686 = vmatmul.mubr.bf16.gmra.mrb[0].mxu0 %v2639
    %v2687 = vpop.f32.mrb[0].mxu0
    %v2688 = vadd.f32 0.0, %v2687
    %v2689 = vpop.f32.mrb[0].mxu0
    %v2690 = vpop.f32.mrb[0].mxu0
    %v2691 = vadd.f32 0.0, %v2690
    %v2692 = vpop.f32.mrb[0].mxu0
    %2693 = vmatprep.mubr.bf16.mxu0 0
    %2694 = vmatmul.mubr.bf16.gmra.mrb[0].mxu0 %v2642
    %v2695 = vpop.f32.mrb[0].mxu0
    %v2696 = vadd.f32 0.0, %v2695
    %v2697 = vpop.f32.mrb[0].mxu0
    %v2698 = vpop.f32.mrb[0].mxu0
    %v2699 = vadd.f32 0.0, %v2698
    %v2700 = vpop.f32.mrb[0].mxu0
    %2701 = vmatprep.mubr.bf16.mxu0 0
    %2702 = vmatmul.mubr.bf16.gmra.mrb[0].mxu0 %v2645
    %v2703 = vpop.f32.mrb[0].mxu0
    %v2704 = vadd.f32 0.0, %v2703
    %v2705 = vpop.f32.mrb[0].mxu0
    %v2706 = vpop.f32.mrb[0].mxu0
    %v2707 = vadd.f32 0.0, %v2706
    %v2708 = vpop.f32.mrb[0].mxu0
    %2709 = vmatprep.mubr.bf16.mxu0 0
    %2710 = vmatmul.mubr.bf16.gmra.mrb[0].mxu0 %v2648
    %v2711 = vpop.f32.mrb[0].mxu0
    %v2712 = vadd.f32 0.0, %v2711
    %v2713 = vpop.f32.mrb[0].mxu0
    %v2714 = vpop.f32.mrb[0].mxu0
    %v2715 = vadd.f32 0.0, %v2714
    %v2716 = vpop.f32.mrb[0].mxu0
    %2717 = vmatprep.mubr.bf16.mxu0 0
    %2718 = vmatmul.mubr.bf16.gmra.mrb[0].mxu0 %v2651
    %v2719 = vpop.f32.mrb[0].mxu0
    %v2720 = vadd.f32 0.0, %v2719
    %v2721 = vpop.f32.mrb[0].mxu0
    %v2722 = vpop.f32.mrb[0].mxu0
    %v2723 = vadd.f32 0.0, %v2722
    %v2724 = vpop.f32.mrb[0].mxu0
    %2725 = vdwg.mxu0
    %v2726 = vsel %vm1890, %v2688, -1e+30
    %v2727 = vsel %vm1891, %v2691, -1e+30
    %v2728 = vsel %vm1892, %v2696, -1e+30
    %v2729 = vsel %vm1893, %v2699, -1e+30
    %v2730 = vsel %vm1894, %v2704, -1e+30
    %v2731 = vsel %vm1895, %v2707, -1e+30
    %v2732 = vsel %vm1896, %v2712, -1e+30
    %v2733 = vsel %vm1897, %v2715, -1e+30
    %v2734 = vsel %vm1898, %v2720, -1e+30
    %v2735 = vsel %vm1899, %v2723, -1e+30
    %v2736 = vsel %vm2048, %v2726, -inf
    %2737 = vmax.xlane.f32.xlu0 %v2736
    %v2738 = vpop.xlane.xlu0 %2737
    %v2739 = vsel %vm2048, %v2727, -inf
    %2740 = vmax.xlane.f32.xlu0 %v2739
    %v2741 = vpop.xlane.xlu0 %2740
    %v2742 = vsel %vm2048, %v2728, -inf
    %2743 = vmax.xlane.f32.xlu0 %v2742
    %v2744 = vpop.xlane.xlu0 %2743
    %v2745 = vsel %vm2048, %v2729, -inf
    %2746 = vmax.xlane.f32.xlu0 %v2745
    %v2747 = vpop.xlane.xlu0 %2746
    %v2748 = vsel %vm2048, %v2730, -inf
    %2749 = vmax.xlane.f32.xlu0 %v2748
    %v2750 = vpop.xlane.xlu0 %2749
    %v2751 = vsel %vm2048, %v2731, -inf
    %2752 = vmax.xlane.f32.xlu0 %v2751
    %v2753 = vpop.xlane.xlu0 %2752
    %v2754 = vsel %vm2048, %v2732, -inf
    %2755 = vmax.xlane.f32.xlu0 %v2754
    %v2756 = vpop.xlane.xlu0 %2755
    %v2757 = vsel %vm2048, %v2733, -inf
    %2758 = vmax.xlane.f32.xlu0 %v2757
    %v2759 = vpop.xlane.xlu0 %2758
    %v2760 = vsel %vm2048, %v2734, -inf
    %2761 = vmax.xlane.f32.xlu0 %v2760
    %v2762 = vpop.xlane.xlu0 %2761
    %v2763 = vsel %vm2048, %v2735, -inf
    %2764 = vmax.xlane.f32.xlu0 %v2763
    %v2765 = vpop.xlane.xlu0 %2764
    %v2766 = vsub.f32 %v2726, %v2738
    %v2767 = vsub.f32 %v2727, %v2741
    %v2768 = vsub.f32 %v2728, %v2744
    %v2769 = vsub.f32 %v2729, %v2747
    %v2770 = vsub.f32 %v2730, %v2750
    %v2771 = vsub.f32 %v2731, %v2753
    %v2772 = vsub.f32 %v2732, %v2756
    %v2773 = vsub.f32 %v2733, %v2759
    %v2774 = vsub.f32 %v2734, %v2762
    %v2775 = vsub.f32 %v2735, %v2765
    %v2776 = vmul.f32 %v2766, 1.442695
    %v2777 = vpow.pop %v2776
    %v2778 = vmul.f32 %v2767, 1.442695
    %v2779 = vpow.pop %v2778
    %v2780 = vmul.f32 %v2768, 1.442695
    %v2781 = vpow.pop %v2780
    %v2782 = vmul.f32 %v2769, 1.442695
    %v2783 = vpow.pop %v2782
    %v2784 = vmul.f32 %v2770, 1.442695
    %v2785 = vpow.pop %v2784
    %v2786 = vmul.f32 %v2771, 1.442695
    %v2787 = vpow.pop %v2786
    %v2788 = vmul.f32 %v2772, 1.442695
    %v2789 = vpow.pop %v2788
    %v2790 = vmul.f32 %v2773, 1.442695
    %v2791 = vpow.pop %v2790
    %v2792 = vmul.f32 %v2774, 1.442695
    %v2793 = vpow.pop %v2792
    %v2794 = vmul.f32 %v2775, 1.442695
    %v2795 = vpow.pop %v2794
    %v2796 = vsel %vm2048, %v2777, 0.0
    %2797 = vadd.xlane.f32.xlu0 %v2796
    %v2798 = vpop.xlane.xlu0 %2797
    %v2799 = vsel %vm2048, %v2779, 0.0
    %2800 = vadd.xlane.f32.xlu0 %v2799
    %v2801 = vpop.xlane.xlu0 %2800
    %v2802 = vsel %vm2048, %v2781, 0.0
    %2803 = vadd.xlane.f32.xlu0 %v2802
    %v2804 = vpop.xlane.xlu0 %2803
    %v2805 = vsel %vm2048, %v2783, 0.0
    %2806 = vadd.xlane.f32.xlu0 %v2805
    %v2807 = vpop.xlane.xlu0 %2806
    %v2808 = vsel %vm2048, %v2785, 0.0
    %2809 = vadd.xlane.f32.xlu0 %v2808
    %v2810 = vpop.xlane.xlu0 %2809
    %v2811 = vsel %vm2048, %v2787, 0.0
    %2812 = vadd.xlane.f32.xlu0 %v2811
    %v2813 = vpop.xlane.xlu0 %2812
    %v2814 = vsel %vm2048, %v2789, 0.0
    %2815 = vadd.xlane.f32.xlu0 %v2814
    %v2816 = vpop.xlane.xlu0 %2815
    %v2817 = vsel %vm2048, %v2791, 0.0
    %2818 = vadd.xlane.f32.xlu0 %v2817
    %v2819 = vpop.xlane.xlu0 %2818
    %v2820 = vsel %vm2048, %v2793, 0.0
    %2821 = vadd.xlane.f32.xlu0 %v2820
    %v2822 = vpop.xlane.xlu0 %2821
    %v2823 = vsel %vm2048, %v2795, 0.0
    %2824 = vadd.xlane.f32.xlu0 %v2823
    %v2825 = vpop.xlane.xlu0 %2824
    %v2826 = vrcp.pop %v2798
    %v2827 = vrcp.pop %v2801
    %v2828 = vrcp.pop %v2804
    %v2829 = vrcp.pop %v2807
    %v2830 = vrcp.pop %v2810
    %v2831 = vrcp.pop %v2813
    %v2832 = vrcp.pop %v2816
    %v2833 = vrcp.pop %v2819
    %v2834 = vrcp.pop %v2822
    %v2835 = vrcp.pop %v2825
    %v2836 = vpack.c.bf16 %v2779, %v2777
    %v2837 = vpack.c.bf16 %v2783, %v2781
    %v2838 = vpack.c.bf16 %v2787, %v2785
    %v2839 = vpack.c.bf16 %v2791, %v2789
    %v2840 = vpack.c.bf16 %v2795, %v2793
    %v2842 = vsel %vm2048, %v2836, 0
    %v2845 = vsel %vm2048, %v2837, 0
    %v2848 = vsel %vm2048, %v2838, 0
    %v2851 = vsel %vm2048, %v2839, 0
    %v2854 = vsel %vm2048, %v2840, 0
    %2856 = vmatprep.subr.bf16.mxu0 0
    %2857 = vmatpush1.bf16.msra.mxu0 %v2155
    %2858 = vmatprep.subr.bf16.mxu0 0
    %2859 = vmatpush1.bf16.msra.mxu0 %v2157
    %2860 = vmatprep.subr.bf16.mxu0 0
    %2861 = vmatpush1.bf16.msra.mxu0 %v2159
    %2862 = vmatprep.subr.bf16.mxu0 0
    %2863 = vmatpush1.bf16.msra.mxu0 %v2161
    %2864 = vmatprep.subr.bf16.mxu0 0
    %2865 = vmatpush1.bf16.msra.mxu0 %v2163
    %2866 = vmatprep.subr.bf16.mxu0 0
    %2867 = vmatpush1.bf16.msra.mxu0 0
    %2868 = vmatprep.subr.bf16.mxu0 0
    %2869 = vmatpush1.bf16.msra.mxu0 0
    %2870 = vmatprep.subr.bf16.mxu0 0
    %2871 = vmatpush1.bf16.msra.mxu0 0
    %2872 = vmatprep.subr.bf16.mxu0 0
    %2873 = vmatpush1.bf16.msra.mxu0 0
    %2874 = vmatprep.subr.bf16.mxu0 0
    %2875 = vmatpush1.bf16.msra.mxu0 0
    %2876 = vmatprep.subr.bf16.mxu0 0
    %2877 = vmatpush1.bf16.msra.mxu0 0
    %2878 = vmatprep.subr.bf16.mxu0 0
    %2879 = vmatpush1.bf16.msra.mxu0 0
    %2880 = vmatprep.subr.bf16.mxu0 0
    %2881 = vmatpush1.bf16.msra.mxu0 0
    %2882 = vmatprep.subr.bf16.mxu0 0
    %2883 = vmatpush1.bf16.msra.mxu0 0
    %2884 = vmatprep.subr.bf16.mxu0 0
    %2885 = vmatpush1.bf16.msra.mxu0 0
    %2886 = vmatprep.subr.bf16.mxu0 0
    %2887 = vmatpush1.bf16.msra.mxu0 0
    %2888 = vmatprep.mubr.bf16.mxu0 0
    %2889 = vmatmul.mubr.bf16.gmra.mrb[0].mxu0 %v2842
    %v2890 = vpop.f32.mrb[0].mxu0
    %v2891 = vadd.f32 0.0, %v2890
    %v2892 = vpop.f32.mrb[0].mxu0
    %v2893 = vpop.f32.mrb[0].mxu0
    %v2894 = vadd.f32 0.0, %v2893
    %v2895 = vpop.f32.mrb[0].mxu0
    %2896 = vmatprep.mubr.bf16.mxu0 0
    %2897 = vmatmul.mubr.bf16.gmra.mrb[0].mxu0 %v2845
    %v2898 = vpop.f32.mrb[0].mxu0
    %v2899 = vadd.f32 0.0, %v2898
    %v2900 = vpop.f32.mrb[0].mxu0
    %v2901 = vpop.f32.mrb[0].mxu0
    %v2902 = vadd.f32 0.0, %v2901
    %v2903 = vpop.f32.mrb[0].mxu0
    %2904 = vmatprep.mubr.bf16.mxu0 0
    %2905 = vmatmul.mubr.bf16.gmra.mrb[0].mxu0 %v2848
    %v2906 = vpop.f32.mrb[0].mxu0
    %v2907 = vadd.f32 0.0, %v2906
    %v2908 = vpop.f32.mrb[0].mxu0
    %v2909 = vpop.f32.mrb[0].mxu0
    %v2910 = vadd.f32 0.0, %v2909
    %v2911 = vpop.f32.mrb[0].mxu0
    %2912 = vmatprep.mubr.bf16.mxu0 0
    %2913 = vmatmul.mubr.bf16.gmra.mrb[0].mxu0 %v2851
    %v2914 = vpop.f32.mrb[0].mxu0
    %v2915 = vadd.f32 0.0, %v2914
    %v2916 = vpop.f32.mrb[0].mxu0
    %v2917 = vpop.f32.mrb[0].mxu0
    %v2918 = vadd.f32 0.0, %v2917
    %v2919 = vpop.f32.mrb[0].mxu0
    %2920 = vmatprep.mubr.bf16.mxu0 0
    %2921 = vmatmul.mubr.bf16.gmra.mrb[0].mxu0 %v2854
    %v2922 = vpop.f32.mrb[0].mxu0
    %v2923 = vadd.f32 0.0, %v2922
    %v2924 = vpop.f32.mrb[0].mxu0
    %v2925 = vpop.f32.mrb[0].mxu0
    %v2926 = vadd.f32 0.0, %v2925
    %v2927 = vpop.f32.mrb[0].mxu0
    %2928 = vdwg.mxu0
    %v2929 = vmul.f32 %v2891, %v2826
    %v2930 = vmul.f32 %v2894, %v2827
    %v2931 = vmul.f32 %v2899, %v2828
    %v2932 = vmul.f32 %v2902, %v2829
    %v2933 = vmul.f32 %v2907, %v2830
    %v2934 = vmul.f32 %v2910, %v2831
    %v2935 = vmul.f32 %v2915, %v2832
    %v2936 = vmul.f32 %v2918, %v2833
    %v2937 = vmul.f32 %v2923, %v2834
    %v2938 = vmul.f32 %v2926, %v2835
    %v2939 = vsel %vm2622, %v2929, 0.0
    %v2940 = vsel %vm2622, %v2930, 0.0
    %v2941 = vsel %vm2622, %v2931, 0.0
    %v2942 = vsel %vm2622, %v2932, 0.0
    %v2943 = vsel %vm2622, %v2933, 0.0
    %v2944 = vsel %vm2622, %v2934, 0.0
    %v2945 = vsel %vm2622, %v2935, 0.0
    %v2946 = vsel %vm2622, %v2936, 0.0
    %v2947 = vsel %vm2622, %v2937, 0.0
    %v2948 = vsel %vm2622, %v2938, 0.0
    %v2949 = vadd.f32 %v2608, %v2939
    %v2950 = vadd.f32 %v2609, %v2940
    %v2951 = vadd.f32 %v2610, %v2941
    %v2952 = vadd.f32 %v2611, %v2942
    %v2953 = vadd.f32 %v2612, %v2943
    %v2954 = vadd.f32 %v2613, %v2944
    %v2955 = vadd.f32 %v2614, %v2945
    %v2956 = vadd.f32 %v2615, %v2946
    %v2957 = vadd.f32 %v2616, %v2947
    %v2958 = vadd.f32 %v2617, %v2948
    %vm2959 = vcmp.ge.s32.totalorder %v783, 12
    %vm2960 = vcmp.lt.s32.totalorder %v783, 16
    %vm2961 = vmand %vm2959, %vm2960
    %v2962 = vsel %vm2961, 1, 0
    %vm2963 = vcmp.eq.s32.totalorder %v2962, 1
    %v2964 = vsel %vm2963, %v1770, 0.0
    %v2965 = vsel %vm2963, %v1775, 0.0
    %v2966 = vsel %vm2963, %v1780, 0.0
    %v2967 = vsel %vm2963, %v1785, 0.0
    %v2968 = vsel %vm2963, %v1790, 0.0
    %v2969 = vsel %vm2963, %v1795, 0.0
    %v2970 = vsel %vm2963, %v1800, 0.0
    %v2971 = vsel %vm2963, %v1805, 0.0
    %v2972 = vsel %vm2963, %v1810, 0.0
    %v2973 = vsel %vm2963, %v1815, 0.0
    %v2974 = vpack.c.bf16 %v2965, %v2964
    %v2975 = vpack.c.bf16 %v2967, %v2966
    %v2976 = vpack.c.bf16 %v2969, %v2968
    %v2977 = vpack.c.bf16 %v2971, %v2970
    %v2978 = vpack.c.bf16 %v2973, %v2972
    %v2980 = vsel %vm278, %v2974, 0
    %v2983 = vsel %vm278, %v2975, 0
    %v2986 = vsel %vm278, %v2976, 0
    %v2989 = vsel %vm278, %v2977, 0
    %v2992 = vsel %vm278, %v2978, 0
    %2994 = vmatprep.subr.bf16.mxu0 0
    %2995 = vmatpush1.bf16.xpose.msra.mxu0 %v1951
    %2996 = vmatprep.subr.bf16.mxu0 0
    %2997 = vmatpush1.bf16.xpose.msra.mxu0 %v1954
    %2998 = vmatprep.subr.bf16.mxu0 0
    %2999 = vmatpush1.bf16.xpose.msra.mxu0 %v1957
    %3000 = vmatprep.subr.bf16.mxu0 0
    %3001 = vmatpush1.bf16.xpose.msra.mxu0 %v1960
    %3002 = vmatprep.subr.bf16.mxu0 0
    %3003 = vmatpush1.bf16.xpose.msra.mxu0 %v1963
    %3004 = vmatprep.subr.bf16.mxu0 0
    %3005 = vmatpush1.bf16.xpose.msra.mxu0 0
    %3006 = vmatprep.subr.bf16.mxu0 0
    %3007 = vmatpush1.bf16.xpose.msra.mxu0 0
    %3008 = vmatprep.subr.bf16.mxu0 0
    %3009 = vmatpush1.bf16.xpose.msra.mxu0 0
    %3010 = vmatprep.subr.bf16.mxu0 0
    %3011 = vmatpush1.bf16.xpose.msra.mxu0 0
    %3012 = vmatprep.subr.bf16.mxu0 0
    %3013 = vmatpush1.bf16.xpose.msra.mxu0 0
    %3014 = vmatprep.subr.bf16.mxu0 0
    %3015 = vmatpush1.bf16.xpose.msra.mxu0 0
    %3016 = vmatprep.subr.bf16.mxu0 0
    %3017 = vmatpush1.bf16.xpose.msra.mxu0 0
    %3018 = vmatprep.subr.bf16.mxu0 0
    %3019 = vmatpush1.bf16.xpose.msra.mxu0 0
    %3020 = vmatprep.subr.bf16.mxu0 0
    %3021 = vmatpush1.bf16.xpose.msra.mxu0 0
    %3022 = vmatprep.subr.bf16.mxu0 0
    %3023 = vmatpush1.bf16.xpose.msra.mxu0 0
    %3024 = vmatprep.subr.bf16.mxu0 0
    %3025 = vmatpush1.bf16.xpose.msra.mxu0 0
    %3026 = vmatprep.mubr.bf16.mxu0 0
    %3027 = vmatmul.mubr.bf16.gmra.mrb[0].mxu0 %v2980
    %v3028 = vpop.f32.mrb[0].mxu0
    %v3029 = vadd.f32 0.0, %v3028
    %v3030 = vpop.f32.mrb[0].mxu0
    %v3031 = vpop.f32.mrb[0].mxu0
    %v3032 = vadd.f32 0.0, %v3031
    %v3033 = vpop.f32.mrb[0].mxu0
    %3034 = vmatprep.mubr.bf16.mxu0 0
    %3035 = vmatmul.mubr.bf16.gmra.mrb[0].mxu0 %v2983
    %v3036 = vpop.f32.mrb[0].mxu0
    %v3037 = vadd.f32 0.0, %v3036
    %v3038 = vpop.f32.mrb[0].mxu0
    %v3039 = vpop.f32.mrb[0].mxu0
    %v3040 = vadd.f32 0.0, %v3039
    %v3041 = vpop.f32.mrb[0].mxu0
    %3042 = vmatprep.mubr.bf16.mxu0 0
    %3043 = vmatmul.mubr.bf16.gmra.mrb[0].mxu0 %v2986
    %v3044 = vpop.f32.mrb[0].mxu0
    %v3045 = vadd.f32 0.0, %v3044
    %v3046 = vpop.f32.mrb[0].mxu0
    %v3047 = vpop.f32.mrb[0].mxu0
    %v3048 = vadd.f32 0.0, %v3047
    %v3049 = vpop.f32.mrb[0].mxu0
    %3050 = vmatprep.mubr.bf16.mxu0 0
    %3051 = vmatmul.mubr.bf16.gmra.mrb[0].mxu0 %v2989
    %v3052 = vpop.f32.mrb[0].mxu0
    %v3053 = vadd.f32 0.0, %v3052
    %v3054 = vpop.f32.mrb[0].mxu0
    %v3055 = vpop.f32.mrb[0].mxu0
    %v3056 = vadd.f32 0.0, %v3055
    %v3057 = vpop.f32.mrb[0].mxu0
    %3058 = vmatprep.mubr.bf16.mxu0 0
    %3059 = vmatmul.mubr.bf16.gmra.mrb[0].mxu0 %v2992
    %v3060 = vpop.f32.mrb[0].mxu0
    %v3061 = vadd.f32 0.0, %v3060
    %v3062 = vpop.f32.mrb[0].mxu0
    %v3063 = vpop.f32.mrb[0].mxu0
    %v3064 = vadd.f32 0.0, %v3063
    %v3065 = vpop.f32.mrb[0].mxu0
    %3066 = vdwg.mxu0
    %v3067 = vsel %vm1890, %v3029, -1e+30
    %v3068 = vsel %vm1891, %v3032, -1e+30
    %v3069 = vsel %vm1892, %v3037, -1e+30
    %v3070 = vsel %vm1893, %v3040, -1e+30
    %v3071 = vsel %vm1894, %v3045, -1e+30
    %v3072 = vsel %vm1895, %v3048, -1e+30
    %v3073 = vsel %vm1896, %v3053, -1e+30
    %v3074 = vsel %vm1897, %v3056, -1e+30
    %v3075 = vsel %vm1898, %v3061, -1e+30
    %v3076 = vsel %vm1899, %v3064, -1e+30
    %v3077 = vsel %vm2048, %v3067, -inf
    %3078 = vmax.xlane.f32.xlu0 %v3077
    %v3079 = vpop.xlane.xlu0 %3078
    %v3080 = vsel %vm2048, %v3068, -inf
    %3081 = vmax.xlane.f32.xlu0 %v3080
    %v3082 = vpop.xlane.xlu0 %3081
    %v3083 = vsel %vm2048, %v3069, -inf
    %3084 = vmax.xlane.f32.xlu0 %v3083
    %v3085 = vpop.xlane.xlu0 %3084
    %v3086 = vsel %vm2048, %v3070, -inf
    %3087 = vmax.xlane.f32.xlu0 %v3086
    %v3088 = vpop.xlane.xlu0 %3087
    %v3089 = vsel %vm2048, %v3071, -inf
    %3090 = vmax.xlane.f32.xlu0 %v3089
    %v3091 = vpop.xlane.xlu0 %3090
    %v3092 = vsel %vm2048, %v3072, -inf
    %3093 = vmax.xlane.f32.xlu0 %v3092
    %v3094 = vpop.xlane.xlu0 %3093
    %v3095 = vsel %vm2048, %v3073, -inf
    %3096 = vmax.xlane.f32.xlu0 %v3095
    %v3097 = vpop.xlane.xlu0 %3096
    %v3098 = vsel %vm2048, %v3074, -inf
    %3099 = vmax.xlane.f32.xlu0 %v3098
    %v3100 = vpop.xlane.xlu0 %3099
    %v3101 = vsel %vm2048, %v3075, -inf
    %3102 = vmax.xlane.f32.xlu0 %v3101
    %v3103 = vpop.xlane.xlu0 %3102
    %v3104 = vsel %vm2048, %v3076, -inf
    %3105 = vmax.xlane.f32.xlu0 %v3104
    %v3106 = vpop.xlane.xlu0 %3105
    %v3107 = vsub.f32 %v3067, %v3079
    %v3108 = vsub.f32 %v3068, %v3082
    %v3109 = vsub.f32 %v3069, %v3085
    %v3110 = vsub.f32 %v3070, %v3088
    %v3111 = vsub.f32 %v3071, %v3091
    %v3112 = vsub.f32 %v3072, %v3094
    %v3113 = vsub.f32 %v3073, %v3097
    %v3114 = vsub.f32 %v3074, %v3100
    %v3115 = vsub.f32 %v3075, %v3103
    %v3116 = vsub.f32 %v3076, %v3106
    %v3117 = vmul.f32 %v3107, 1.442695
    %v3118 = vpow.pop %v3117
    %v3119 = vmul.f32 %v3108, 1.442695
    %v3120 = vpow.pop %v3119
    %v3121 = vmul.f32 %v3109, 1.442695
    %v3122 = vpow.pop %v3121
    %v3123 = vmul.f32 %v3110, 1.442695
    %v3124 = vpow.pop %v3123
    %v3125 = vmul.f32 %v3111, 1.442695
    %v3126 = vpow.pop %v3125
    %v3127 = vmul.f32 %v3112, 1.442695
    %v3128 = vpow.pop %v3127
    %v3129 = vmul.f32 %v3113, 1.442695
    %v3130 = vpow.pop %v3129
    %v3131 = vmul.f32 %v3114, 1.442695
    %v3132 = vpow.pop %v3131
    %v3133 = vmul.f32 %v3115, 1.442695
    %v3134 = vpow.pop %v3133
    %v3135 = vmul.f32 %v3116, 1.442695
    %v3136 = vpow.pop %v3135
    %v3137 = vsel %vm2048, %v3118, 0.0
    %3138 = vadd.xlane.f32.xlu0 %v3137
    %v3139 = vpop.xlane.xlu0 %3138
    %v3140 = vsel %vm2048, %v3120, 0.0
    %3141 = vadd.xlane.f32.xlu0 %v3140
    %v3142 = vpop.xlane.xlu0 %3141
    %v3143 = vsel %vm2048, %v3122, 0.0
    %3144 = vadd.xlane.f32.xlu0 %v3143
    %v3145 = vpop.xlane.xlu0 %3144
    %v3146 = vsel %vm2048, %v3124, 0.0
    %3147 = vadd.xlane.f32.xlu0 %v3146
    %v3148 = vpop.xlane.xlu0 %3147
    %v3149 = vsel %vm2048, %v3126, 0.0
    %3150 = vadd.xlane.f32.xlu0 %v3149
    %v3151 = vpop.xlane.xlu0 %3150
    %v3152 = vsel %vm2048, %v3128, 0.0
    %3153 = vadd.xlane.f32.xlu0 %v3152
    %v3154 = vpop.xlane.xlu0 %3153
    %v3155 = vsel %vm2048, %v3130, 0.0
    %3156 = vadd.xlane.f32.xlu0 %v3155
    %v3157 = vpop.xlane.xlu0 %3156
    %v3158 = vsel %vm2048, %v3132, 0.0
    %3159 = vadd.xlane.f32.xlu0 %v3158
    %v3160 = vpop.xlane.xlu0 %3159
    %v3161 = vsel %vm2048, %v3134, 0.0
    %3162 = vadd.xlane.f32.xlu0 %v3161
    %v3163 = vpop.xlane.xlu0 %3162
    %v3164 = vsel %vm2048, %v3136, 0.0
    %3165 = vadd.xlane.f32.xlu0 %v3164
    %v3166 = vpop.xlane.xlu0 %3165
    %v3167 = vrcp.pop %v3139
    %v3168 = vrcp.pop %v3142
    %v3169 = vrcp.pop %v3145
    %v3170 = vrcp.pop %v3148
    %v3171 = vrcp.pop %v3151
    %v3172 = vrcp.pop %v3154
    %v3173 = vrcp.pop %v3157
    %v3174 = vrcp.pop %v3160
    %v3175 = vrcp.pop %v3163
    %v3176 = vrcp.pop %v3166
    %v3177 = vpack.c.bf16 %v3120, %v3118
    %v3178 = vpack.c.bf16 %v3124, %v3122
    %v3179 = vpack.c.bf16 %v3128, %v3126
    %v3180 = vpack.c.bf16 %v3132, %v3130
    %v3181 = vpack.c.bf16 %v3136, %v3134
    %v3183 = vsel %vm2048, %v3177, 0
    %v3186 = vsel %vm2048, %v3178, 0
    %v3189 = vsel %vm2048, %v3179, 0
    %v3192 = vsel %vm2048, %v3180, 0
    %v3195 = vsel %vm2048, %v3181, 0
    %3197 = vmatprep.subr.bf16.mxu0 0
    %3198 = vmatpush1.bf16.msra.mxu0 %v2155
    %3199 = vmatprep.subr.bf16.mxu0 0
    %3200 = vmatpush1.bf16.msra.mxu0 %v2157
    %3201 = vmatprep.subr.bf16.mxu0 0
    %3202 = vmatpush1.bf16.msra.mxu0 %v2159
    %3203 = vmatprep.subr.bf16.mxu0 0
    %3204 = vmatpush1.bf16.msra.mxu0 %v2161
    %3205 = vmatprep.subr.bf16.mxu0 0
    %3206 = vmatpush1.bf16.msra.mxu0 %v2163
    %3207 = vmatprep.subr.bf16.mxu0 0
    %3208 = vmatpush1.bf16.msra.mxu0 0
    %3209 = vmatprep.subr.bf16.mxu0 0
    %3210 = vmatpush1.bf16.msra.mxu0 0
    %3211 = vmatprep.subr.bf16.mxu0 0
    %3212 = vmatpush1.bf16.msra.mxu0 0
    %3213 = vmatprep.subr.bf16.mxu0 0
    %3214 = vmatpush1.bf16.msra.mxu0 0
    %3215 = vmatprep.subr.bf16.mxu0 0
    %3216 = vmatpush1.bf16.msra.mxu0 0
    %3217 = vmatprep.subr.bf16.mxu0 0
    %3218 = vmatpush1.bf16.msra.mxu0 0
    %3219 = vmatprep.subr.bf16.mxu0 0
    %3220 = vmatpush1.bf16.msra.mxu0 0
    %3221 = vmatprep.subr.bf16.mxu0 0
    %3222 = vmatpush1.bf16.msra.mxu0 0
    %3223 = vmatprep.subr.bf16.mxu0 0
    %3224 = vmatpush1.bf16.msra.mxu0 0
    %3225 = vmatprep.subr.bf16.mxu0 0
    %3226 = vmatpush1.bf16.msra.mxu0 0
    %3227 = vmatprep.subr.bf16.mxu0 0
    %3228 = vmatpush1.bf16.msra.mxu0 0
    %3229 = vmatprep.mubr.bf16.mxu0 0
    %3230 = vmatmul.mubr.bf16.gmra.mrb[0].mxu0 %v3183
    %v3231 = vpop.f32.mrb[0].mxu0
    %v3232 = vadd.f32 0.0, %v3231
    %v3233 = vpop.f32.mrb[0].mxu0
    %v3234 = vpop.f32.mrb[0].mxu0
    %v3235 = vadd.f32 0.0, %v3234
    %v3236 = vpop.f32.mrb[0].mxu0
    %3237 = vmatprep.mubr.bf16.mxu0 0
    %3238 = vmatmul.mubr.bf16.gmra.mrb[0].mxu0 %v3186
    %v3239 = vpop.f32.mrb[0].mxu0
    %v3240 = vadd.f32 0.0, %v3239
    %v3241 = vpop.f32.mrb[0].mxu0
    %v3242 = vpop.f32.mrb[0].mxu0
    %v3243 = vadd.f32 0.0, %v3242
    %v3244 = vpop.f32.mrb[0].mxu0
    %3245 = vmatprep.mubr.bf16.mxu0 0
    %3246 = vmatmul.mubr.bf16.gmra.mrb[0].mxu0 %v3189
    %v3247 = vpop.f32.mrb[0].mxu0
    %v3248 = vadd.f32 0.0, %v3247
    %v3249 = vpop.f32.mrb[0].mxu0
    %v3250 = vpop.f32.mrb[0].mxu0
    %v3251 = vadd.f32 0.0, %v3250
    %v3252 = vpop.f32.mrb[0].mxu0
    %3253 = vmatprep.mubr.bf16.mxu0 0
    %3254 = vmatmul.mubr.bf16.gmra.mrb[0].mxu0 %v3192
    %v3255 = vpop.f32.mrb[0].mxu0
    %v3256 = vadd.f32 0.0, %v3255
    %v3257 = vpop.f32.mrb[0].mxu0
    %v3258 = vpop.f32.mrb[0].mxu0
    %v3259 = vadd.f32 0.0, %v3258
    %v3260 = vpop.f32.mrb[0].mxu0
    %3261 = vmatprep.mubr.bf16.mxu0 0
    %3262 = vmatmul.mubr.bf16.gmra.mrb[0].mxu0 %v3195
    %v3263 = vpop.f32.mrb[0].mxu0
    %v3264 = vadd.f32 0.0, %v3263
    %v3265 = vpop.f32.mrb[0].mxu0
    %v3266 = vpop.f32.mrb[0].mxu0
    %v3267 = vadd.f32 0.0, %v3266
    %v3268 = vpop.f32.mrb[0].mxu0
    %3269 = vdwg.mxu0
    %v3270 = vmul.f32 %v3232, %v3167
    %v3271 = vmul.f32 %v3235, %v3168
    %v3272 = vmul.f32 %v3240, %v3169
    %v3273 = vmul.f32 %v3243, %v3170
    %v3274 = vmul.f32 %v3248, %v3171
    %v3275 = vmul.f32 %v3251, %v3172
    %v3276 = vmul.f32 %v3256, %v3173
    %v3277 = vmul.f32 %v3259, %v3174
    %v3278 = vmul.f32 %v3264, %v3175
    %v3279 = vmul.f32 %v3267, %v3176
    %v3280 = vsel %vm2963, %v3270, 0.0
    %v3281 = vsel %vm2963, %v3271, 0.0
    %v3282 = vsel %vm2963, %v3272, 0.0
    %v3283 = vsel %vm2963, %v3273, 0.0
    %v3284 = vsel %vm2963, %v3274, 0.0
    %v3285 = vsel %vm2963, %v3275, 0.0
    %v3286 = vsel %vm2963, %v3276, 0.0
    %v3287 = vsel %vm2963, %v3277, 0.0
    %v3288 = vsel %vm2963, %v3278, 0.0
    %v3289 = vsel %vm2963, %v3279, 0.0
    %v3290 = vadd.f32 %v2949, %v3280
    %v3291 = vadd.f32 %v2950, %v3281
    %v3292 = vadd.f32 %v2951, %v3282
    %v3293 = vadd.f32 %v2952, %v3283
    %v3294 = vadd.f32 %v2953, %v3284
    %v3295 = vadd.f32 %v2954, %v3285
    %v3296 = vadd.f32 %v2955, %v3286
    %v3297 = vadd.f32 %v2956, %v3287
    %v3298 = vadd.f32 %v2957, %v3288
    %v3299 = vadd.f32 %v2958, %v3289
    %vm3300 = vcmp.ge.s32.totalorder %v783, 16
    %vm3301 = vcmp.lt.s32.totalorder %v783, 20
    %vm3302 = vmand %vm3300, %vm3301
    %v3303 = vsel %vm3302, 1, 0
    %vm3304 = vcmp.eq.s32.totalorder %v3303, 1
    %v3305 = vsel %vm3304, %v1770, 0.0
    %v3306 = vsel %vm3304, %v1775, 0.0
    %v3307 = vsel %vm3304, %v1780, 0.0
    %v3308 = vsel %vm3304, %v1785, 0.0
    %v3309 = vsel %vm3304, %v1790, 0.0
    %v3310 = vsel %vm3304, %v1795, 0.0
    %v3311 = vsel %vm3304, %v1800, 0.0
    %v3312 = vsel %vm3304, %v1805, 0.0
    %v3313 = vsel %vm3304, %v1810, 0.0
    %v3314 = vsel %vm3304, %v1815, 0.0
    %v3315 = vpack.c.bf16 %v3306, %v3305
    %v3316 = vpack.c.bf16 %v3308, %v3307
    %v3317 = vpack.c.bf16 %v3310, %v3309
    %v3318 = vpack.c.bf16 %v3312, %v3311
    %v3319 = vpack.c.bf16 %v3314, %v3313
    %v3321 = vsel %vm278, %v3315, 0
    %v3324 = vsel %vm278, %v3316, 0
    %v3327 = vsel %vm278, %v3317, 0
    %v3330 = vsel %vm278, %v3318, 0
    %v3333 = vsel %vm278, %v3319, 0
    %3335 = vmatprep.subr.bf16.mxu0 0
    %3336 = vmatpush1.bf16.xpose.msra.mxu0 %v1951
    %3337 = vmatprep.subr.bf16.mxu0 0
    %3338 = vmatpush1.bf16.xpose.msra.mxu0 %v1954
    %3339 = vmatprep.subr.bf16.mxu0 0
    %3340 = vmatpush1.bf16.xpose.msra.mxu0 %v1957
    %3341 = vmatprep.subr.bf16.mxu0 0
    %3342 = vmatpush1.bf16.xpose.msra.mxu0 %v1960
    %3343 = vmatprep.subr.bf16.mxu0 0
    %3344 = vmatpush1.bf16.xpose.msra.mxu0 %v1963
    %3345 = vmatprep.subr.bf16.mxu0 0
    %3346 = vmatpush1.bf16.xpose.msra.mxu0 0
    %3347 = vmatprep.subr.bf16.mxu0 0
    %3348 = vmatpush1.bf16.xpose.msra.mxu0 0
    %3349 = vmatprep.subr.bf16.mxu0 0
    %3350 = vmatpush1.bf16.xpose.msra.mxu0 0
    %3351 = vmatprep.subr.bf16.mxu0 0
    %3352 = vmatpush1.bf16.xpose.msra.mxu0 0
    %3353 = vmatprep.subr.bf16.mxu0 0
    %3354 = vmatpush1.bf16.xpose.msra.mxu0 0
    %3355 = vmatprep.subr.bf16.mxu0 0
    %3356 = vmatpush1.bf16.xpose.msra.mxu0 0
    %3357 = vmatprep.subr.bf16.mxu0 0
    %3358 = vmatpush1.bf16.xpose.msra.mxu0 0
    %3359 = vmatprep.subr.bf16.mxu0 0
    %3360 = vmatpush1.bf16.xpose.msra.mxu0 0
    %3361 = vmatprep.subr.bf16.mxu0 0
    %3362 = vmatpush1.bf16.xpose.msra.mxu0 0
    %3363 = vmatprep.subr.bf16.mxu0 0
    %3364 = vmatpush1.bf16.xpose.msra.mxu0 0
    %3365 = vmatprep.subr.bf16.mxu0 0
    %3366 = vmatpush1.bf16.xpose.msra.mxu0 0
    %3367 = vmatprep.mubr.bf16.mxu0 0
    %3368 = vmatmul.mubr.bf16.gmra.mrb[0].mxu0 %v3321
    %v3369 = vpop.f32.mrb[0].mxu0
    %v3370 = vadd.f32 0.0, %v3369
    %v3371 = vpop.f32.mrb[0].mxu0
    %v3372 = vpop.f32.mrb[0].mxu0
    %v3373 = vadd.f32 0.0, %v3372
    %v3374 = vpop.f32.mrb[0].mxu0
    %3375 = vmatprep.mubr.bf16.mxu0 0
    %3376 = vmatmul.mubr.bf16.gmra.mrb[0].mxu0 %v3324
    %v3377 = vpop.f32.mrb[0].mxu0
    %v3378 = vadd.f32 0.0, %v3377
    %v3379 = vpop.f32.mrb[0].mxu0
    %v3380 = vpop.f32.mrb[0].mxu0
    %v3381 = vadd.f32 0.0, %v3380
    %v3382 = vpop.f32.mrb[0].mxu0
    %3383 = vmatprep.mubr.bf16.mxu0 0
    %3384 = vmatmul.mubr.bf16.gmra.mrb[0].mxu0 %v3327
    %v3385 = vpop.f32.mrb[0].mxu0
    %v3386 = vadd.f32 0.0, %v3385
    %v3387 = vpop.f32.mrb[0].mxu0
    %v3388 = vpop.f32.mrb[0].mxu0
    %v3389 = vadd.f32 0.0, %v3388
    %v3390 = vpop.f32.mrb[0].mxu0
    %3391 = vmatprep.mubr.bf16.mxu0 0
    %3392 = vmatmul.mubr.bf16.gmra.mrb[0].mxu0 %v3330
    %v3393 = vpop.f32.mrb[0].mxu0
    %v3394 = vadd.f32 0.0, %v3393
    %v3395 = vpop.f32.mrb[0].mxu0
    %v3396 = vpop.f32.mrb[0].mxu0
    %v3397 = vadd.f32 0.0, %v3396
    %v3398 = vpop.f32.mrb[0].mxu0
    %3399 = vmatprep.mubr.bf16.mxu0 0
    %3400 = vmatmul.mubr.bf16.gmra.mrb[0].mxu0 %v3333
    %v3401 = vpop.f32.mrb[0].mxu0
    %v3402 = vadd.f32 0.0, %v3401
    %v3403 = vpop.f32.mrb[0].mxu0
    %v3404 = vpop.f32.mrb[0].mxu0
    %v3405 = vadd.f32 0.0, %v3404
    %v3406 = vpop.f32.mrb[0].mxu0
    %3407 = vdwg.mxu0
    %v3408 = vsel %vm1890, %v3370, -1e+30
    %v3409 = vsel %vm1891, %v3373, -1e+30
    %v3410 = vsel %vm1892, %v3378, -1e+30
    %v3411 = vsel %vm1893, %v3381, -1e+30
    %v3412 = vsel %vm1894, %v3386, -1e+30
    %v3413 = vsel %vm1895, %v3389, -1e+30
    %v3414 = vsel %vm1896, %v3394, -1e+30
    %v3415 = vsel %vm1897, %v3397, -1e+30
    %v3416 = vsel %vm1898, %v3402, -1e+30
    %v3417 = vsel %vm1899, %v3405, -1e+30
    %v3418 = vsel %vm2048, %v3408, -inf
    %3419 = vmax.xlane.f32.xlu0 %v3418
    %v3420 = vpop.xlane.xlu0 %3419
    %v3421 = vsel %vm2048, %v3409, -inf
    %3422 = vmax.xlane.f32.xlu0 %v3421
    %v3423 = vpop.xlane.xlu0 %3422
    %v3424 = vsel %vm2048, %v3410, -inf
    %3425 = vmax.xlane.f32.xlu0 %v3424
    %v3426 = vpop.xlane.xlu0 %3425
    %v3427 = vsel %vm2048, %v3411, -inf
    %3428 = vmax.xlane.f32.xlu0 %v3427
    %v3429 = vpop.xlane.xlu0 %3428
    %v3430 = vsel %vm2048, %v3412, -inf
    %3431 = vmax.xlane.f32.xlu0 %v3430
    %v3432 = vpop.xlane.xlu0 %3431
    %v3433 = vsel %vm2048, %v3413, -inf
    %3434 = vmax.xlane.f32.xlu0 %v3433
    %v3435 = vpop.xlane.xlu0 %3434
    %v3436 = vsel %vm2048, %v3414, -inf
    %3437 = vmax.xlane.f32.xlu0 %v3436
    %v3438 = vpop.xlane.xlu0 %3437
    %v3439 = vsel %vm2048, %v3415, -inf
    %3440 = vmax.xlane.f32.xlu0 %v3439
    %v3441 = vpop.xlane.xlu0 %3440
    %v3442 = vsel %vm2048, %v3416, -inf
    %3443 = vmax.xlane.f32.xlu0 %v3442
    %v3444 = vpop.xlane.xlu0 %3443
    %v3445 = vsel %vm2048, %v3417, -inf
    %3446 = vmax.xlane.f32.xlu0 %v3445
    %v3447 = vpop.xlane.xlu0 %3446
    %v3448 = vsub.f32 %v3408, %v3420
    %v3449 = vsub.f32 %v3409, %v3423
    %v3450 = vsub.f32 %v3410, %v3426
    %v3451 = vsub.f32 %v3411, %v3429
    %v3452 = vsub.f32 %v3412, %v3432
    %v3453 = vsub.f32 %v3413, %v3435
    %v3454 = vsub.f32 %v3414, %v3438
    %v3455 = vsub.f32 %v3415, %v3441
    %v3456 = vsub.f32 %v3416, %v3444
    %v3457 = vsub.f32 %v3417, %v3447
    %v3458 = vmul.f32 %v3448, 1.442695
    %v3459 = vpow.pop %v3458
    %v3460 = vmul.f32 %v3449, 1.442695
    %v3461 = vpow.pop %v3460
    %v3462 = vmul.f32 %v3450, 1.442695
    %v3463 = vpow.pop %v3462
    %v3464 = vmul.f32 %v3451, 1.442695
    %v3465 = vpow.pop %v3464
    %v3466 = vmul.f32 %v3452, 1.442695
    %v3467 = vpow.pop %v3466
    %v3468 = vmul.f32 %v3453, 1.442695
    %v3469 = vpow.pop %v3468
    %v3470 = vmul.f32 %v3454, 1.442695
    %v3471 = vpow.pop %v3470
    %v3472 = vmul.f32 %v3455, 1.442695
    %v3473 = vpow.pop %v3472
    %v3474 = vmul.f32 %v3456, 1.442695
    %v3475 = vpow.pop %v3474
    %v3476 = vmul.f32 %v3457, 1.442695
    %v3477 = vpow.pop %v3476
    %v3478 = vsel %vm2048, %v3459, 0.0
    %3479 = vadd.xlane.f32.xlu0 %v3478
    %v3480 = vpop.xlane.xlu0 %3479
    %v3481 = vsel %vm2048, %v3461, 0.0
    %3482 = vadd.xlane.f32.xlu0 %v3481
    %v3483 = vpop.xlane.xlu0 %3482
    %v3484 = vsel %vm2048, %v3463, 0.0
    %3485 = vadd.xlane.f32.xlu0 %v3484
    %v3486 = vpop.xlane.xlu0 %3485
    %v3487 = vsel %vm2048, %v3465, 0.0
    %3488 = vadd.xlane.f32.xlu0 %v3487
    %v3489 = vpop.xlane.xlu0 %3488
    %v3490 = vsel %vm2048, %v3467, 0.0
    %3491 = vadd.xlane.f32.xlu0 %v3490
    %v3492 = vpop.xlane.xlu0 %3491
    %v3493 = vsel %vm2048, %v3469, 0.0
    %3494 = vadd.xlane.f32.xlu0 %v3493
    %v3495 = vpop.xlane.xlu0 %3494
    %v3496 = vsel %vm2048, %v3471, 0.0
    %3497 = vadd.xlane.f32.xlu0 %v3496
    %v3498 = vpop.xlane.xlu0 %3497
    %v3499 = vsel %vm2048, %v3473, 0.0
    %3500 = vadd.xlane.f32.xlu0 %v3499
    %v3501 = vpop.xlane.xlu0 %3500
    %v3502 = vsel %vm2048, %v3475, 0.0
    %3503 = vadd.xlane.f32.xlu0 %v3502
    %v3504 = vpop.xlane.xlu0 %3503
    %v3505 = vsel %vm2048, %v3477, 0.0
    %3506 = vadd.xlane.f32.xlu0 %v3505
    %v3507 = vpop.xlane.xlu0 %3506
    %v3508 = vrcp.pop %v3480
    %v3509 = vrcp.pop %v3483
    %v3510 = vrcp.pop %v3486
    %v3511 = vrcp.pop %v3489
    %v3512 = vrcp.pop %v3492
    %v3513 = vrcp.pop %v3495
    %v3514 = vrcp.pop %v3498
    %v3515 = vrcp.pop %v3501
    %v3516 = vrcp.pop %v3504
    %v3517 = vrcp.pop %v3507
    %v3518 = vpack.c.bf16 %v3461, %v3459
    %v3519 = vpack.c.bf16 %v3465, %v3463
    %v3520 = vpack.c.bf16 %v3469, %v3467
    %v3521 = vpack.c.bf16 %v3473, %v3471
    %v3522 = vpack.c.bf16 %v3477, %v3475
    %v3524 = vsel %vm2048, %v3518, 0
    %v3527 = vsel %vm2048, %v3519, 0
    %v3530 = vsel %vm2048, %v3520, 0
    %v3533 = vsel %vm2048, %v3521, 0
    %v3536 = vsel %vm2048, %v3522, 0
    %3538 = vmatprep.subr.bf16.mxu0 0
    %3539 = vmatpush1.bf16.msra.mxu0 %v2155
    %3540 = vmatprep.subr.bf16.mxu0 0
    %3541 = vmatpush1.bf16.msra.mxu0 %v2157
    %3542 = vmatprep.subr.bf16.mxu0 0
    %3543 = vmatpush1.bf16.msra.mxu0 %v2159
    %3544 = vmatprep.subr.bf16.mxu0 0
    %3545 = vmatpush1.bf16.msra.mxu0 %v2161
    %3546 = vmatprep.subr.bf16.mxu0 0
    %3547 = vmatpush1.bf16.msra.mxu0 %v2163
    %3548 = vmatprep.subr.bf16.mxu0 0
    %3549 = vmatpush1.bf16.msra.mxu0 0
    %3550 = vmatprep.subr.bf16.mxu0 0
    %3551 = vmatpush1.bf16.msra.mxu0 0
    %3552 = vmatprep.subr.bf16.mxu0 0
    %3553 = vmatpush1.bf16.msra.mxu0 0
    %3554 = vmatprep.subr.bf16.mxu0 0
    %3555 = vmatpush1.bf16.msra.mxu0 0
    %3556 = vmatprep.subr.bf16.mxu0 0
    %3557 = vmatpush1.bf16.msra.mxu0 0
    %3558 = vmatprep.subr.bf16.mxu0 0
    %3559 = vmatpush1.bf16.msra.mxu0 0
    %3560 = vmatprep.subr.bf16.mxu0 0
    %3561 = vmatpush1.bf16.msra.mxu0 0
    %3562 = vmatprep.subr.bf16.mxu0 0
    %3563 = vmatpush1.bf16.msra.mxu0 0
    %3564 = vmatprep.subr.bf16.mxu0 0
    %3565 = vmatpush1.bf16.msra.mxu0 0
    %3566 = vmatprep.subr.bf16.mxu0 0
    %3567 = vmatpush1.bf16.msra.mxu0 0
    %3568 = vmatprep.subr.bf16.mxu0 0
    %3569 = vmatpush1.bf16.msra.mxu0 0
    %3570 = vmatprep.mubr.bf16.mxu0 0
    %3571 = vmatmul.mubr.bf16.gmra.mrb[0].mxu0 %v3524
    %v3572 = vpop.f32.mrb[0].mxu0
    %v3573 = vadd.f32 0.0, %v3572
    %v3574 = vpop.f32.mrb[0].mxu0
    %v3575 = vpop.f32.mrb[0].mxu0
    %v3576 = vadd.f32 0.0, %v3575
    %v3577 = vpop.f32.mrb[0].mxu0
    %3578 = vmatprep.mubr.bf16.mxu0 0
    %3579 = vmatmul.mubr.bf16.gmra.mrb[0].mxu0 %v3527
    %v3580 = vpop.f32.mrb[0].mxu0
    %v3581 = vadd.f32 0.0, %v3580
    %v3582 = vpop.f32.mrb[0].mxu0
    %v3583 = vpop.f32.mrb[0].mxu0
    %v3584 = vadd.f32 0.0, %v3583
    %v3585 = vpop.f32.mrb[0].mxu0
    %3586 = vmatprep.mubr.bf16.mxu0 0
    %3587 = vmatmul.mubr.bf16.gmra.mrb[0].mxu0 %v3530
    %v3588 = vpop.f32.mrb[0].mxu0
    %v3589 = vadd.f32 0.0, %v3588
    %v3590 = vpop.f32.mrb[0].mxu0
    %v3591 = vpop.f32.mrb[0].mxu0
    %v3592 = vadd.f32 0.0, %v3591
    %v3593 = vpop.f32.mrb[0].mxu0
    %3594 = vmatprep.mubr.bf16.mxu0 0
    %3595 = vmatmul.mubr.bf16.gmra.mrb[0].mxu0 %v3533
    %v3596 = vpop.f32.mrb[0].mxu0
    %v3597 = vadd.f32 0.0, %v3596
    %v3598 = vpop.f32.mrb[0].mxu0
    %v3599 = vpop.f32.mrb[0].mxu0
    %v3600 = vadd.f32 0.0, %v3599
    %v3601 = vpop.f32.mrb[0].mxu0
    %3602 = vmatprep.mubr.bf16.mxu0 0
    %3603 = vmatmul.mubr.bf16.gmra.mrb[0].mxu0 %v3536
    %v3604 = vpop.f32.mrb[0].mxu0
    %v3605 = vadd.f32 0.0, %v3604
    %v3606 = vpop.f32.mrb[0].mxu0
    %v3607 = vpop.f32.mrb[0].mxu0
    %v3608 = vadd.f32 0.0, %v3607
    %v3609 = vpop.f32.mrb[0].mxu0
    %3610 = vdwg.mxu0
    %v3611 = vmul.f32 %v3573, %v3508
    %v3612 = vmul.f32 %v3576, %v3509
    %v3613 = vmul.f32 %v3581, %v3510
    %v3614 = vmul.f32 %v3584, %v3511
    %v3615 = vmul.f32 %v3589, %v3512
    %v3616 = vmul.f32 %v3592, %v3513
    %v3617 = vmul.f32 %v3597, %v3514
    %v3618 = vmul.f32 %v3600, %v3515
    %v3619 = vmul.f32 %v3605, %v3516
    %v3620 = vmul.f32 %v3608, %v3517
    %v3621 = vsel %vm3304, %v3611, 0.0
    %v3622 = vsel %vm3304, %v3612, 0.0
    %v3623 = vsel %vm3304, %v3613, 0.0
    %v3624 = vsel %vm3304, %v3614, 0.0
    %v3625 = vsel %vm3304, %v3615, 0.0
    %v3626 = vsel %vm3304, %v3616, 0.0
    %v3627 = vsel %vm3304, %v3617, 0.0
    %v3628 = vsel %vm3304, %v3618, 0.0
    %v3629 = vsel %vm3304, %v3619, 0.0
    %v3630 = vsel %vm3304, %v3620, 0.0
    %v3631 = vadd.f32 %v3290, %v3621
    %v3632 = vadd.f32 %v3291, %v3622
    %v3633 = vadd.f32 %v3292, %v3623
    %v3634 = vadd.f32 %v3293, %v3624
    %v3635 = vadd.f32 %v3294, %v3625
    %v3636 = vadd.f32 %v3295, %v3626
    %v3637 = vadd.f32 %v3296, %v3627
    %v3638 = vadd.f32 %v3297, %v3628
    %v3639 = vadd.f32 %v3298, %v3629
    %v3640 = vadd.f32 %v3299, %v3630
    %vm3641 = vcmp.ge.s32.totalorder %v783, 20
    %vm3642 = vcmp.lt.s32.totalorder %v783, 24
    %vm3643 = vmand %vm3641, %vm3642
    %v3644 = vsel %vm3643, 1, 0
    %vm3645 = vcmp.eq.s32.totalorder %v3644, 1
    %v3646 = vsel %vm3645, %v1770, 0.0
    %v3647 = vsel %vm3645, %v1775, 0.0
    %v3648 = vsel %vm3645, %v1780, 0.0
    %v3649 = vsel %vm3645, %v1785, 0.0
    %v3650 = vsel %vm3645, %v1790, 0.0
    %v3651 = vsel %vm3645, %v1795, 0.0
    %v3652 = vsel %vm3645, %v1800, 0.0
    %v3653 = vsel %vm3645, %v1805, 0.0
    %v3654 = vsel %vm3645, %v1810, 0.0
    %v3655 = vsel %vm3645, %v1815, 0.0
    %v3656 = vpack.c.bf16 %v3647, %v3646
    %v3657 = vpack.c.bf16 %v3649, %v3648
    %v3658 = vpack.c.bf16 %v3651, %v3650
    %v3659 = vpack.c.bf16 %v3653, %v3652
    %v3660 = vpack.c.bf16 %v3655, %v3654
    %v3662 = vsel %vm278, %v3656, 0
    %v3665 = vsel %vm278, %v3657, 0
    %v3668 = vsel %vm278, %v3658, 0
    %v3671 = vsel %vm278, %v3659, 0
    %v3674 = vsel %vm278, %v3660, 0
    %3676 = vmatprep.subr.bf16.mxu0 0
    %3677 = vmatpush1.bf16.xpose.msra.mxu0 %v1951
    %3678 = vmatprep.subr.bf16.mxu0 0
    %3679 = vmatpush1.bf16.xpose.msra.mxu0 %v1954
    %3680 = vmatprep.subr.bf16.mxu0 0
    %3681 = vmatpush1.bf16.xpose.msra.mxu0 %v1957
    %3682 = vmatprep.subr.bf16.mxu0 0
    %3683 = vmatpush1.bf16.xpose.msra.mxu0 %v1960
    %3684 = vmatprep.subr.bf16.mxu0 0
    %3685 = vmatpush1.bf16.xpose.msra.mxu0 %v1963
    %3686 = vmatprep.subr.bf16.mxu0 0
    %3687 = vmatpush1.bf16.xpose.msra.mxu0 0
    %3688 = vmatprep.subr.bf16.mxu0 0
    %3689 = vmatpush1.bf16.xpose.msra.mxu0 0
    %3690 = vmatprep.subr.bf16.mxu0 0
    %3691 = vmatpush1.bf16.xpose.msra.mxu0 0
    %3692 = vmatprep.subr.bf16.mxu0 0
    %3693 = vmatpush1.bf16.xpose.msra.mxu0 0
    %3694 = vmatprep.subr.bf16.mxu0 0
    %3695 = vmatpush1.bf16.xpose.msra.mxu0 0
    %3696 = vmatprep.subr.bf16.mxu0 0
    %3697 = vmatpush1.bf16.xpose.msra.mxu0 0
    %3698 = vmatprep.subr.bf16.mxu0 0
    %3699 = vmatpush1.bf16.xpose.msra.mxu0 0
    %3700 = vmatprep.subr.bf16.mxu0 0
    %3701 = vmatpush1.bf16.xpose.msra.mxu0 0
    %3702 = vmatprep.subr.bf16.mxu0 0
    %3703 = vmatpush1.bf16.xpose.msra.mxu0 0
    %3704 = vmatprep.subr.bf16.mxu0 0
    %3705 = vmatpush1.bf16.xpose.msra.mxu0 0
    %3706 = vmatprep.subr.bf16.mxu0 0
    %3707 = vmatpush1.bf16.xpose.msra.mxu0 0
    %3708 = vmatprep.mubr.bf16.mxu0 0
    %3709 = vmatmul.mubr.bf16.gmra.mrb[0].mxu0 %v3662
    %v3710 = vpop.f32.mrb[0].mxu0
    %v3711 = vadd.f32 0.0, %v3710
    %v3712 = vpop.f32.mrb[0].mxu0
    %v3713 = vpop.f32.mrb[0].mxu0
    %v3714 = vadd.f32 0.0, %v3713
    %v3715 = vpop.f32.mrb[0].mxu0
    %3716 = vmatprep.mubr.bf16.mxu0 0
    %3717 = vmatmul.mubr.bf16.gmra.mrb[0].mxu0 %v3665
    %v3718 = vpop.f32.mrb[0].mxu0
    %v3719 = vadd.f32 0.0, %v3718
    %v3720 = vpop.f32.mrb[0].mxu0
    %v3721 = vpop.f32.mrb[0].mxu0
    %v3722 = vadd.f32 0.0, %v3721
    %v3723 = vpop.f32.mrb[0].mxu0
    %3724 = vmatprep.mubr.bf16.mxu0 0
    %3725 = vmatmul.mubr.bf16.gmra.mrb[0].mxu0 %v3668
    %v3726 = vpop.f32.mrb[0].mxu0
    %v3727 = vadd.f32 0.0, %v3726
    %v3728 = vpop.f32.mrb[0].mxu0
    %v3729 = vpop.f32.mrb[0].mxu0
    %v3730 = vadd.f32 0.0, %v3729
    %v3731 = vpop.f32.mrb[0].mxu0
    %3732 = vmatprep.mubr.bf16.mxu0 0
    %3733 = vmatmul.mubr.bf16.gmra.mrb[0].mxu0 %v3671
    %v3734 = vpop.f32.mrb[0].mxu0
    %v3735 = vadd.f32 0.0, %v3734
    %v3736 = vpop.f32.mrb[0].mxu0
    %v3737 = vpop.f32.mrb[0].mxu0
    %v3738 = vadd.f32 0.0, %v3737
    %v3739 = vpop.f32.mrb[0].mxu0
    %3740 = vmatprep.mubr.bf16.mxu0 0
    %3741 = vmatmul.mubr.bf16.gmra.mrb[0].mxu0 %v3674
    %v3742 = vpop.f32.mrb[0].mxu0
    %v3743 = vadd.f32 0.0, %v3742
    %v3744 = vpop.f32.mrb[0].mxu0
    %v3745 = vpop.f32.mrb[0].mxu0
    %v3746 = vadd.f32 0.0, %v3745
    %v3747 = vpop.f32.mrb[0].mxu0
    %3748 = vdwg.mxu0
    %v3749 = vsel %vm1890, %v3711, -1e+30
    %v3750 = vsel %vm1891, %v3714, -1e+30
    %v3751 = vsel %vm1892, %v3719, -1e+30
    %v3752 = vsel %vm1893, %v3722, -1e+30
    %v3753 = vsel %vm1894, %v3727, -1e+30
    %v3754 = vsel %vm1895, %v3730, -1e+30
    %v3755 = vsel %vm1896, %v3735, -1e+30
    %v3756 = vsel %vm1897, %v3738, -1e+30
    %v3757 = vsel %vm1898, %v3743, -1e+30
    %v3758 = vsel %vm1899, %v3746, -1e+30
    %v3759 = vsel %vm2048, %v3749, -inf
    %3760 = vmax.xlane.f32.xlu0 %v3759
    %v3761 = vpop.xlane.xlu0 %3760
    %v3762 = vsel %vm2048, %v3750, -inf
    %3763 = vmax.xlane.f32.xlu0 %v3762
    %v3764 = vpop.xlane.xlu0 %3763
    %v3765 = vsel %vm2048, %v3751, -inf
    %3766 = vmax.xlane.f32.xlu0 %v3765
    %v3767 = vpop.xlane.xlu0 %3766
    %v3768 = vsel %vm2048, %v3752, -inf
    %3769 = vmax.xlane.f32.xlu0 %v3768
    %v3770 = vpop.xlane.xlu0 %3769
    %v3771 = vsel %vm2048, %v3753, -inf
    %3772 = vmax.xlane.f32.xlu0 %v3771
    %v3773 = vpop.xlane.xlu0 %3772
    %v3774 = vsel %vm2048, %v3754, -inf
    %3775 = vmax.xlane.f32.xlu0 %v3774
    %v3776 = vpop.xlane.xlu0 %3775
    %v3777 = vsel %vm2048, %v3755, -inf
    %3778 = vmax.xlane.f32.xlu0 %v3777
    %v3779 = vpop.xlane.xlu0 %3778
    %v3780 = vsel %vm2048, %v3756, -inf
    %3781 = vmax.xlane.f32.xlu0 %v3780
    %v3782 = vpop.xlane.xlu0 %3781
    %v3783 = vsel %vm2048, %v3757, -inf
    %3784 = vmax.xlane.f32.xlu0 %v3783
    %v3785 = vpop.xlane.xlu0 %3784
    %v3786 = vsel %vm2048, %v3758, -inf
    %3787 = vmax.xlane.f32.xlu0 %v3786
    %v3788 = vpop.xlane.xlu0 %3787
    %v3789 = vsub.f32 %v3749, %v3761
    %v3790 = vsub.f32 %v3750, %v3764
    %v3791 = vsub.f32 %v3751, %v3767
    %v3792 = vsub.f32 %v3752, %v3770
    %v3793 = vsub.f32 %v3753, %v3773
    %v3794 = vsub.f32 %v3754, %v3776
    %v3795 = vsub.f32 %v3755, %v3779
    %v3796 = vsub.f32 %v3756, %v3782
    %v3797 = vsub.f32 %v3757, %v3785
    %v3798 = vsub.f32 %v3758, %v3788
    %v3799 = vmul.f32 %v3789, 1.442695
    %v3800 = vpow.pop %v3799
    %v3801 = vmul.f32 %v3790, 1.442695
    %v3802 = vpow.pop %v3801
    %v3803 = vmul.f32 %v3791, 1.442695
    %v3804 = vpow.pop %v3803
    %v3805 = vmul.f32 %v3792, 1.442695
    %v3806 = vpow.pop %v3805
    %v3807 = vmul.f32 %v3793, 1.442695
    %v3808 = vpow.pop %v3807
    %v3809 = vmul.f32 %v3794, 1.442695
    %v3810 = vpow.pop %v3809
    %v3811 = vmul.f32 %v3795, 1.442695
    %v3812 = vpow.pop %v3811
    %v3813 = vmul.f32 %v3796, 1.442695
    %v3814 = vpow.pop %v3813
    %v3815 = vmul.f32 %v3797, 1.442695
    %v3816 = vpow.pop %v3815
    %v3817 = vmul.f32 %v3798, 1.442695
    %v3818 = vpow.pop %v3817
    %v3819 = vsel %vm2048, %v3800, 0.0
    %3820 = vadd.xlane.f32.xlu0 %v3819
    %v3821 = vpop.xlane.xlu0 %3820
    %v3822 = vsel %vm2048, %v3802, 0.0
    %3823 = vadd.xlane.f32.xlu0 %v3822
    %v3824 = vpop.xlane.xlu0 %3823
    %v3825 = vsel %vm2048, %v3804, 0.0
    %3826 = vadd.xlane.f32.xlu0 %v3825
    %v3827 = vpop.xlane.xlu0 %3826
    %v3828 = vsel %vm2048, %v3806, 0.0
    %3829 = vadd.xlane.f32.xlu0 %v3828
    %v3830 = vpop.xlane.xlu0 %3829
    %v3831 = vsel %vm2048, %v3808, 0.0
    %3832 = vadd.xlane.f32.xlu0 %v3831
    %v3833 = vpop.xlane.xlu0 %3832
    %v3834 = vsel %vm2048, %v3810, 0.0
    %3835 = vadd.xlane.f32.xlu0 %v3834
    %v3836 = vpop.xlane.xlu0 %3835
    %v3837 = vsel %vm2048, %v3812, 0.0
    %3838 = vadd.xlane.f32.xlu0 %v3837
    %v3839 = vpop.xlane.xlu0 %3838
    %v3840 = vsel %vm2048, %v3814, 0.0
    %3841 = vadd.xlane.f32.xlu0 %v3840
    %v3842 = vpop.xlane.xlu0 %3841
    %v3843 = vsel %vm2048, %v3816, 0.0
    %3844 = vadd.xlane.f32.xlu0 %v3843
    %v3845 = vpop.xlane.xlu0 %3844
    %v3846 = vsel %vm2048, %v3818, 0.0
    %3847 = vadd.xlane.f32.xlu0 %v3846
    %v3848 = vpop.xlane.xlu0 %3847
    %v3849 = vrcp.pop %v3821
    %v3850 = vrcp.pop %v3824
    %v3851 = vrcp.pop %v3827
    %v3852 = vrcp.pop %v3830
    %v3853 = vrcp.pop %v3833
    %v3854 = vrcp.pop %v3836
    %v3855 = vrcp.pop %v3839
    %v3856 = vrcp.pop %v3842
    %v3857 = vrcp.pop %v3845
    %v3858 = vrcp.pop %v3848
    %v3859 = vpack.c.bf16 %v3802, %v3800
    %v3860 = vpack.c.bf16 %v3806, %v3804
    %v3861 = vpack.c.bf16 %v3810, %v3808
    %v3862 = vpack.c.bf16 %v3814, %v3812
    %v3863 = vpack.c.bf16 %v3818, %v3816
    %v3865 = vsel %vm2048, %v3859, 0
    %v3868 = vsel %vm2048, %v3860, 0
    %v3871 = vsel %vm2048, %v3861, 0
    %v3874 = vsel %vm2048, %v3862, 0
    %v3877 = vsel %vm2048, %v3863, 0
    %3879 = vmatprep.subr.bf16.mxu0 0
    %3880 = vmatpush1.bf16.msra.mxu0 %v2155
    %3881 = vmatprep.subr.bf16.mxu0 0
    %3882 = vmatpush1.bf16.msra.mxu0 %v2157
    %3883 = vmatprep.subr.bf16.mxu0 0
    %3884 = vmatpush1.bf16.msra.mxu0 %v2159
    %3885 = vmatprep.subr.bf16.mxu0 0
    %3886 = vmatpush1.bf16.msra.mxu0 %v2161
    %3887 = vmatprep.subr.bf16.mxu0 0
    %3888 = vmatpush1.bf16.msra.mxu0 %v2163
    %3889 = vmatprep.subr.bf16.mxu0 0
    %3890 = vmatpush1.bf16.msra.mxu0 0
    %3891 = vmatprep.subr.bf16.mxu0 0
    %3892 = vmatpush1.bf16.msra.mxu0 0
    %3893 = vmatprep.subr.bf16.mxu0 0
    %3894 = vmatpush1.bf16.msra.mxu0 0
    %3895 = vmatprep.subr.bf16.mxu0 0
    %3896 = vmatpush1.bf16.msra.mxu0 0
    %3897 = vmatprep.subr.bf16.mxu0 0
    %3898 = vmatpush1.bf16.msra.mxu0 0
    %3899 = vmatprep.subr.bf16.mxu0 0
    %3900 = vmatpush1.bf16.msra.mxu0 0
    %3901 = vmatprep.subr.bf16.mxu0 0
    %3902 = vmatpush1.bf16.msra.mxu0 0
    %3903 = vmatprep.subr.bf16.mxu0 0
    %3904 = vmatpush1.bf16.msra.mxu0 0
    %3905 = vmatprep.subr.bf16.mxu0 0
    %3906 = vmatpush1.bf16.msra.mxu0 0
    %3907 = vmatprep.subr.bf16.mxu0 0
    %3908 = vmatpush1.bf16.msra.mxu0 0
    %3909 = vmatprep.subr.bf16.mxu0 0
    %3910 = vmatpush1.bf16.msra.mxu0 0
    %3911 = vmatprep.mubr.bf16.mxu0 0
    %3912 = vmatmul.mubr.bf16.gmra.mrb[0].mxu0 %v3865
    %v3913 = vpop.f32.mrb[0].mxu0
    %v3914 = vadd.f32 0.0, %v3913
    %v3915 = vpop.f32.mrb[0].mxu0
    %v3916 = vpop.f32.mrb[0].mxu0
    %v3917 = vadd.f32 0.0, %v3916
    %v3918 = vpop.f32.mrb[0].mxu0
    %3919 = vmatprep.mubr.bf16.mxu0 0
    %3920 = vmatmul.mubr.bf16.gmra.mrb[0].mxu0 %v3868
    %v3921 = vpop.f32.mrb[0].mxu0
    %v3922 = vadd.f32 0.0, %v3921
    %v3923 = vpop.f32.mrb[0].mxu0
    %v3924 = vpop.f32.mrb[0].mxu0
    %v3925 = vadd.f32 0.0, %v3924
    %v3926 = vpop.f32.mrb[0].mxu0
    %3927 = vmatprep.mubr.bf16.mxu0 0
    %3928 = vmatmul.mubr.bf16.gmra.mrb[0].mxu0 %v3871
    %v3929 = vpop.f32.mrb[0].mxu0
    %v3930 = vadd.f32 0.0, %v3929
    %v3931 = vpop.f32.mrb[0].mxu0
    %v3932 = vpop.f32.mrb[0].mxu0
    %v3933 = vadd.f32 0.0, %v3932
    %v3934 = vpop.f32.mrb[0].mxu0
    %3935 = vmatprep.mubr.bf16.mxu0 0
    %3936 = vmatmul.mubr.bf16.gmra.mrb[0].mxu0 %v3874
    %v3937 = vpop.f32.mrb[0].mxu0
    %v3938 = vadd.f32 0.0, %v3937
    %v3939 = vpop.f32.mrb[0].mxu0
    %v3940 = vpop.f32.mrb[0].mxu0
    %v3941 = vadd.f32 0.0, %v3940
    %v3942 = vpop.f32.mrb[0].mxu0
    %3943 = vmatprep.mubr.bf16.mxu0 0
    %3944 = vmatmul.mubr.bf16.gmra.mrb[0].mxu0 %v3877
    %v3945 = vpop.f32.mrb[0].mxu0
    %v3946 = vadd.f32 0.0, %v3945
    %v3947 = vpop.f32.mrb[0].mxu0
    %v3948 = vpop.f32.mrb[0].mxu0
    %v3949 = vadd.f32 0.0, %v3948
    %v3950 = vpop.f32.mrb[0].mxu0
    %3951 = vdwg.mxu0
    %v3952 = vmul.f32 %v3914, %v3849
    %v3953 = vmul.f32 %v3917, %v3850
    %v3954 = vmul.f32 %v3922, %v3851
    %v3955 = vmul.f32 %v3925, %v3852
    %v3956 = vmul.f32 %v3930, %v3853
    %v3957 = vmul.f32 %v3933, %v3854
    %v3958 = vmul.f32 %v3938, %v3855
    %v3959 = vmul.f32 %v3941, %v3856
    %v3960 = vmul.f32 %v3946, %v3857
    %v3961 = vmul.f32 %v3949, %v3858
    %v3962 = vsel %vm3645, %v3952, 0.0
    %v3963 = vsel %vm3645, %v3953, 0.0
    %v3964 = vsel %vm3645, %v3954, 0.0
    %v3965 = vsel %vm3645, %v3955, 0.0
    %v3966 = vsel %vm3645, %v3956, 0.0
    %v3967 = vsel %vm3645, %v3957, 0.0
    %v3968 = vsel %vm3645, %v3958, 0.0
    %v3969 = vsel %vm3645, %v3959, 0.0
    %v3970 = vsel %vm3645, %v3960, 0.0
    %v3971 = vsel %vm3645, %v3961, 0.0
    %v3972 = vadd.f32 %v3631, %v3962
    %v3973 = vadd.f32 %v3632, %v3963
    %v3974 = vadd.f32 %v3633, %v3964
    %v3975 = vadd.f32 %v3634, %v3965
    %v3976 = vadd.f32 %v3635, %v3966
    %v3977 = vadd.f32 %v3636, %v3967
    %v3978 = vadd.f32 %v3637, %v3968
    %v3979 = vadd.f32 %v3638, %v3969
    %v3980 = vadd.f32 %v3639, %v3970
    %v3981 = vadd.f32 %v3640, %v3971
    %vm3982 = vcmp.ge.s32.totalorder %v783, 24
    %vm3983 = vcmp.lt.s32.totalorder %v783, 28
    %vm3984 = vmand %vm3982, %vm3983
    %v3985 = vsel %vm3984, 1, 0
    %vm3986 = vcmp.eq.s32.totalorder %v3985, 1
    %v3987 = vsel %vm3986, %v1770, 0.0
    %v3988 = vsel %vm3986, %v1775, 0.0
    %v3989 = vsel %vm3986, %v1780, 0.0
    %v3990 = vsel %vm3986, %v1785, 0.0
    %v3991 = vsel %vm3986, %v1790, 0.0
    %v3992 = vsel %vm3986, %v1795, 0.0
    %v3993 = vsel %vm3986, %v1800, 0.0
    %v3994 = vsel %vm3986, %v1805, 0.0
    %v3995 = vsel %vm3986, %v1810, 0.0
    %v3996 = vsel %vm3986, %v1815, 0.0
    %v3997 = vpack.c.bf16 %v3988, %v3987
    %v3998 = vpack.c.bf16 %v3990, %v3989
    %v3999 = vpack.c.bf16 %v3992, %v3991
    %v4000 = vpack.c.bf16 %v3994, %v3993
    %v4001 = vpack.c.bf16 %v3996, %v3995
    %v4003 = vsel %vm278, %v3997, 0
    %v4006 = vsel %vm278, %v3998, 0
    %v4009 = vsel %vm278, %v3999, 0
    %v4012 = vsel %vm278, %v4000, 0
    %v4015 = vsel %vm278, %v4001, 0
    %4017 = vmatprep.subr.bf16.mxu0 0
    %4018 = vmatpush1.bf16.xpose.msra.mxu0 %v1951
    %4019 = vmatprep.subr.bf16.mxu0 0
    %4020 = vmatpush1.bf16.xpose.msra.mxu0 %v1954
    %4021 = vmatprep.subr.bf16.mxu0 0
    %4022 = vmatpush1.bf16.xpose.msra.mxu0 %v1957
    %4023 = vmatprep.subr.bf16.mxu0 0
    %4024 = vmatpush1.bf16.xpose.msra.mxu0 %v1960
    %4025 = vmatprep.subr.bf16.mxu0 0
    %4026 = vmatpush1.bf16.xpose.msra.mxu0 %v1963
    %4027 = vmatprep.subr.bf16.mxu0 0
    %4028 = vmatpush1.bf16.xpose.msra.mxu0 0
    %4029 = vmatprep.subr.bf16.mxu0 0
    %4030 = vmatpush1.bf16.xpose.msra.mxu0 0
    %4031 = vmatprep.subr.bf16.mxu0 0
    %4032 = vmatpush1.bf16.xpose.msra.mxu0 0
    %4033 = vmatprep.subr.bf16.mxu0 0
    %4034 = vmatpush1.bf16.xpose.msra.mxu0 0
    %4035 = vmatprep.subr.bf16.mxu0 0
    %4036 = vmatpush1.bf16.xpose.msra.mxu0 0
    %4037 = vmatprep.subr.bf16.mxu0 0
    %4038 = vmatpush1.bf16.xpose.msra.mxu0 0
    %4039 = vmatprep.subr.bf16.mxu0 0
    %4040 = vmatpush1.bf16.xpose.msra.mxu0 0
    %4041 = vmatprep.subr.bf16.mxu0 0
    %4042 = vmatpush1.bf16.xpose.msra.mxu0 0
    %4043 = vmatprep.subr.bf16.mxu0 0
    %4044 = vmatpush1.bf16.xpose.msra.mxu0 0
    %4045 = vmatprep.subr.bf16.mxu0 0
    %4046 = vmatpush1.bf16.xpose.msra.mxu0 0
    %4047 = vmatprep.subr.bf16.mxu0 0
    %4048 = vmatpush1.bf16.xpose.msra.mxu0 0
    %4049 = vmatprep.mubr.bf16.mxu0 0
    %4050 = vmatmul.mubr.bf16.gmra.mrb[0].mxu0 %v4003
    %v4051 = vpop.f32.mrb[0].mxu0
    %v4052 = vadd.f32 0.0, %v4051
    %v4053 = vpop.f32.mrb[0].mxu0
    %v4054 = vpop.f32.mrb[0].mxu0
    %v4055 = vadd.f32 0.0, %v4054
    %v4056 = vpop.f32.mrb[0].mxu0
    %4057 = vmatprep.mubr.bf16.mxu0 0
    %4058 = vmatmul.mubr.bf16.gmra.mrb[0].mxu0 %v4006
    %v4059 = vpop.f32.mrb[0].mxu0
    %v4060 = vadd.f32 0.0, %v4059
    %v4061 = vpop.f32.mrb[0].mxu0
    %v4062 = vpop.f32.mrb[0].mxu0
    %v4063 = vadd.f32 0.0, %v4062
    %v4064 = vpop.f32.mrb[0].mxu0
    %4065 = vmatprep.mubr.bf16.mxu0 0
    %4066 = vmatmul.mubr.bf16.gmra.mrb[0].mxu0 %v4009
    %v4067 = vpop.f32.mrb[0].mxu0
    %v4068 = vadd.f32 0.0, %v4067
    %v4069 = vpop.f32.mrb[0].mxu0
    %v4070 = vpop.f32.mrb[0].mxu0
    %v4071 = vadd.f32 0.0, %v4070
    %v4072 = vpop.f32.mrb[0].mxu0
    %4073 = vmatprep.mubr.bf16.mxu0 0
    %4074 = vmatmul.mubr.bf16.gmra.mrb[0].mxu0 %v4012
    %v4075 = vpop.f32.mrb[0].mxu0
    %v4076 = vadd.f32 0.0, %v4075
    %v4077 = vpop.f32.mrb[0].mxu0
    %v4078 = vpop.f32.mrb[0].mxu0
    %v4079 = vadd.f32 0.0, %v4078
    %v4080 = vpop.f32.mrb[0].mxu0
    %4081 = vmatprep.mubr.bf16.mxu0 0
    %4082 = vmatmul.mubr.bf16.gmra.mrb[0].mxu0 %v4015
    %v4083 = vpop.f32.mrb[0].mxu0
    %v4084 = vadd.f32 0.0, %v4083
    %v4085 = vpop.f32.mrb[0].mxu0
    %v4086 = vpop.f32.mrb[0].mxu0
    %v4087 = vadd.f32 0.0, %v4086
    %v4088 = vpop.f32.mrb[0].mxu0
    %4089 = vdwg.mxu0
    %v4090 = vsel %vm1890, %v4052, -1e+30
    %v4091 = vsel %vm1891, %v4055, -1e+30
    %v4092 = vsel %vm1892, %v4060, -1e+30
    %v4093 = vsel %vm1893, %v4063, -1e+30
    %v4094 = vsel %vm1894, %v4068, -1e+30
    %v4095 = vsel %vm1895, %v4071, -1e+30
    %v4096 = vsel %vm1896, %v4076, -1e+30
    %v4097 = vsel %vm1897, %v4079, -1e+30
    %v4098 = vsel %vm1898, %v4084, -1e+30
    %v4099 = vsel %vm1899, %v4087, -1e+30
    %v4100 = vsel %vm2048, %v4090, -inf
    %4101 = vmax.xlane.f32.xlu0 %v4100
    %v4102 = vpop.xlane.xlu0 %4101
    %v4103 = vsel %vm2048, %v4091, -inf
    %4104 = vmax.xlane.f32.xlu0 %v4103
    %v4105 = vpop.xlane.xlu0 %4104
    %v4106 = vsel %vm2048, %v4092, -inf
    %4107 = vmax.xlane.f32.xlu0 %v4106
    %v4108 = vpop.xlane.xlu0 %4107
    %v4109 = vsel %vm2048, %v4093, -inf
    %4110 = vmax.xlane.f32.xlu0 %v4109
    %v4111 = vpop.xlane.xlu0 %4110
    %v4112 = vsel %vm2048, %v4094, -inf
    %4113 = vmax.xlane.f32.xlu0 %v4112
    %v4114 = vpop.xlane.xlu0 %4113
    %v4115 = vsel %vm2048, %v4095, -inf
    %4116 = vmax.xlane.f32.xlu0 %v4115
    %v4117 = vpop.xlane.xlu0 %4116
    %v4118 = vsel %vm2048, %v4096, -inf
    %4119 = vmax.xlane.f32.xlu0 %v4118
    %v4120 = vpop.xlane.xlu0 %4119
    %v4121 = vsel %vm2048, %v4097, -inf
    %4122 = vmax.xlane.f32.xlu0 %v4121
    %v4123 = vpop.xlane.xlu0 %4122
    %v4124 = vsel %vm2048, %v4098, -inf
    %4125 = vmax.xlane.f32.xlu0 %v4124
    %v4126 = vpop.xlane.xlu0 %4125
    %v4127 = vsel %vm2048, %v4099, -inf
    %4128 = vmax.xlane.f32.xlu0 %v4127
    %v4129 = vpop.xlane.xlu0 %4128
    %v4130 = vsub.f32 %v4090, %v4102
    %v4131 = vsub.f32 %v4091, %v4105
    %v4132 = vsub.f32 %v4092, %v4108
    %v4133 = vsub.f32 %v4093, %v4111
    %v4134 = vsub.f32 %v4094, %v4114
    %v4135 = vsub.f32 %v4095, %v4117
    %v4136 = vsub.f32 %v4096, %v4120
    %v4137 = vsub.f32 %v4097, %v4123
    %v4138 = vsub.f32 %v4098, %v4126
    %v4139 = vsub.f32 %v4099, %v4129
    %v4140 = vmul.f32 %v4130, 1.442695
    %v4141 = vpow.pop %v4140
    %v4142 = vmul.f32 %v4131, 1.442695
    %v4143 = vpow.pop %v4142
    %v4144 = vmul.f32 %v4132, 1.442695
    %v4145 = vpow.pop %v4144
    %v4146 = vmul.f32 %v4133, 1.442695
    %v4147 = vpow.pop %v4146
    %v4148 = vmul.f32 %v4134, 1.442695
    %v4149 = vpow.pop %v4148
    %v4150 = vmul.f32 %v4135, 1.442695
    %v4151 = vpow.pop %v4150
    %v4152 = vmul.f32 %v4136, 1.442695
    %v4153 = vpow.pop %v4152
    %v4154 = vmul.f32 %v4137, 1.442695
    %v4155 = vpow.pop %v4154
    %v4156 = vmul.f32 %v4138, 1.442695
    %v4157 = vpow.pop %v4156
    %v4158 = vmul.f32 %v4139, 1.442695
    %v4159 = vpow.pop %v4158
    %v4160 = vsel %vm2048, %v4141, 0.0
    %4161 = vadd.xlane.f32.xlu0 %v4160
    %v4162 = vpop.xlane.xlu0 %4161
    %v4163 = vsel %vm2048, %v4143, 0.0
    %4164 = vadd.xlane.f32.xlu0 %v4163
    %v4165 = vpop.xlane.xlu0 %4164
    %v4166 = vsel %vm2048, %v4145, 0.0
    %4167 = vadd.xlane.f32.xlu0 %v4166
    %v4168 = vpop.xlane.xlu0 %4167
    %v4169 = vsel %vm2048, %v4147, 0.0
    %4170 = vadd.xlane.f32.xlu0 %v4169
    %v4171 = vpop.xlane.xlu0 %4170
    %v4172 = vsel %vm2048, %v4149, 0.0
    %4173 = vadd.xlane.f32.xlu0 %v4172
    %v4174 = vpop.xlane.xlu0 %4173
    %v4175 = vsel %vm2048, %v4151, 0.0
    %4176 = vadd.xlane.f32.xlu0 %v4175
    %v4177 = vpop.xlane.xlu0 %4176
    %v4178 = vsel %vm2048, %v4153, 0.0
    %4179 = vadd.xlane.f32.xlu0 %v4178
    %v4180 = vpop.xlane.xlu0 %4179
    %v4181 = vsel %vm2048, %v4155, 0.0
    %4182 = vadd.xlane.f32.xlu0 %v4181
    %v4183 = vpop.xlane.xlu0 %4182
    %v4184 = vsel %vm2048, %v4157, 0.0
    %4185 = vadd.xlane.f32.xlu0 %v4184
    %v4186 = vpop.xlane.xlu0 %4185
    %v4187 = vsel %vm2048, %v4159, 0.0
    %4188 = vadd.xlane.f32.xlu0 %v4187
    %v4189 = vpop.xlane.xlu0 %4188
    %v4190 = vrcp.pop %v4162
    %v4191 = vrcp.pop %v4165
    %v4192 = vrcp.pop %v4168
    %v4193 = vrcp.pop %v4171
    %v4194 = vrcp.pop %v4174
    %v4195 = vrcp.pop %v4177
    %v4196 = vrcp.pop %v4180
    %v4197 = vrcp.pop %v4183
    %v4198 = vrcp.pop %v4186
    %v4199 = vrcp.pop %v4189
    %v4200 = vpack.c.bf16 %v4143, %v4141
    %v4201 = vpack.c.bf16 %v4147, %v4145
    %v4202 = vpack.c.bf16 %v4151, %v4149
    %v4203 = vpack.c.bf16 %v4155, %v4153
    %v4204 = vpack.c.bf16 %v4159, %v4157
    %v4206 = vsel %vm2048, %v4200, 0
    %v4209 = vsel %vm2048, %v4201, 0
    %v4212 = vsel %vm2048, %v4202, 0
    %v4215 = vsel %vm2048, %v4203, 0
    %v4218 = vsel %vm2048, %v4204, 0
    %4220 = vmatprep.subr.bf16.mxu0 0
    %4221 = vmatpush1.bf16.msra.mxu0 %v2155
    %4222 = vmatprep.subr.bf16.mxu0 0
    %4223 = vmatpush1.bf16.msra.mxu0 %v2157
    %4224 = vmatprep.subr.bf16.mxu0 0
    %4225 = vmatpush1.bf16.msra.mxu0 %v2159
    %4226 = vmatprep.subr.bf16.mxu0 0
    %4227 = vmatpush1.bf16.msra.mxu0 %v2161
    %4228 = vmatprep.subr.bf16.mxu0 0
    %4229 = vmatpush1.bf16.msra.mxu0 %v2163
    %4230 = vmatprep.subr.bf16.mxu0 0
    %4231 = vmatpush1.bf16.msra.mxu0 0
    %4232 = vmatprep.subr.bf16.mxu0 0
    %4233 = vmatpush1.bf16.msra.mxu0 0
    %4234 = vmatprep.subr.bf16.mxu0 0
    %4235 = vmatpush1.bf16.msra.mxu0 0
    %4236 = vmatprep.subr.bf16.mxu0 0
    %4237 = vmatpush1.bf16.msra.mxu0 0
    %4238 = vmatprep.subr.bf16.mxu0 0
    %4239 = vmatpush1.bf16.msra.mxu0 0
    %4240 = vmatprep.subr.bf16.mxu0 0
    %4241 = vmatpush1.bf16.msra.mxu0 0
    %4242 = vmatprep.subr.bf16.mxu0 0
    %4243 = vmatpush1.bf16.msra.mxu0 0
    %4244 = vmatprep.subr.bf16.mxu0 0
    %4245 = vmatpush1.bf16.msra.mxu0 0
    %4246 = vmatprep.subr.bf16.mxu0 0
    %4247 = vmatpush1.bf16.msra.mxu0 0
    %4248 = vmatprep.subr.bf16.mxu0 0
    %4249 = vmatpush1.bf16.msra.mxu0 0
    %4250 = vmatprep.subr.bf16.mxu0 0
    %4251 = vmatpush1.bf16.msra.mxu0 0
    %4252 = vmatprep.mubr.bf16.mxu0 0
    %4253 = vmatmul.mubr.bf16.gmra.mrb[0].mxu0 %v4206
    %v4254 = vpop.f32.mrb[0].mxu0
    %v4255 = vadd.f32 0.0, %v4254
    %v4256 = vpop.f32.mrb[0].mxu0
    %v4257 = vpop.f32.mrb[0].mxu0
    %v4258 = vadd.f32 0.0, %v4257
    %v4259 = vpop.f32.mrb[0].mxu0
    %4260 = vmatprep.mubr.bf16.mxu0 0
    %4261 = vmatmul.mubr.bf16.gmra.mrb[0].mxu0 %v4209
    %v4262 = vpop.f32.mrb[0].mxu0
    %v4263 = vadd.f32 0.0, %v4262
    %v4264 = vpop.f32.mrb[0].mxu0
    %v4265 = vpop.f32.mrb[0].mxu0
    %v4266 = vadd.f32 0.0, %v4265
    %v4267 = vpop.f32.mrb[0].mxu0
    %4268 = vmatprep.mubr.bf16.mxu0 0
    %4269 = vmatmul.mubr.bf16.gmra.mrb[0].mxu0 %v4212
    %v4270 = vpop.f32.mrb[0].mxu0
    %v4271 = vadd.f32 0.0, %v4270
    %v4272 = vpop.f32.mrb[0].mxu0
    %v4273 = vpop.f32.mrb[0].mxu0
    %v4274 = vadd.f32 0.0, %v4273
    %v4275 = vpop.f32.mrb[0].mxu0
    %4276 = vmatprep.mubr.bf16.mxu0 0
    %4277 = vmatmul.mubr.bf16.gmra.mrb[0].mxu0 %v4215
    %v4278 = vpop.f32.mrb[0].mxu0
    %v4279 = vadd.f32 0.0, %v4278
    %v4280 = vpop.f32.mrb[0].mxu0
    %v4281 = vpop.f32.mrb[0].mxu0
    %v4282 = vadd.f32 0.0, %v4281
    %v4283 = vpop.f32.mrb[0].mxu0
    %4284 = vmatprep.mubr.bf16.mxu0 0
    %4285 = vmatmul.mubr.bf16.gmra.mrb[0].mxu0 %v4218
    %v4286 = vpop.f32.mrb[0].mxu0
    %v4287 = vadd.f32 0.0, %v4286
    %v4288 = vpop.f32.mrb[0].mxu0
    %v4289 = vpop.f32.mrb[0].mxu0
    %v4290 = vadd.f32 0.0, %v4289
    %v4291 = vpop.f32.mrb[0].mxu0
    %4292 = vdwg.mxu0
    %v4293 = vmul.f32 %v4255, %v4190
    %v4294 = vmul.f32 %v4258, %v4191
    %v4295 = vmul.f32 %v4263, %v4192
    %v4296 = vmul.f32 %v4266, %v4193
    %v4297 = vmul.f32 %v4271, %v4194
    %v4298 = vmul.f32 %v4274, %v4195
    %v4299 = vmul.f32 %v4279, %v4196
    %v4300 = vmul.f32 %v4282, %v4197
    %v4301 = vmul.f32 %v4287, %v4198
    %v4302 = vmul.f32 %v4290, %v4199
    %v4303 = vsel %vm3986, %v4293, 0.0
    %v4304 = vsel %vm3986, %v4294, 0.0
    %v4305 = vsel %vm3986, %v4295, 0.0
    %v4306 = vsel %vm3986, %v4296, 0.0
    %v4307 = vsel %vm3986, %v4297, 0.0
    %v4308 = vsel %vm3986, %v4298, 0.0
    %v4309 = vsel %vm3986, %v4299, 0.0
    %v4310 = vsel %vm3986, %v4300, 0.0
    %v4311 = vsel %vm3986, %v4301, 0.0
    %v4312 = vsel %vm3986, %v4302, 0.0
    %v4313 = vadd.f32 %v3972, %v4303
    %v4314 = vadd.f32 %v3973, %v4304
    %v4315 = vadd.f32 %v3974, %v4305
    %v4316 = vadd.f32 %v3975, %v4306
    %v4317 = vadd.f32 %v3976, %v4307
    %v4318 = vadd.f32 %v3977, %v4308
    %v4319 = vadd.f32 %v3978, %v4309
    %v4320 = vadd.f32 %v3979, %v4310
    %v4321 = vadd.f32 %v3980, %v4311
    %v4322 = vadd.f32 %v3981, %v4312
    %vm4323 = vcmp.ge.s32.totalorder %v783, 28
    %vm4324 = vcmp.lt.s32.totalorder %v783, 32
    %vm4325 = vmand %vm4323, %vm4324
    %v4326 = vsel %vm4325, 1, 0
    %vm4327 = vcmp.eq.s32.totalorder %v4326, 1
    %v4328 = vsel %vm4327, %v1770, 0.0
    %v4329 = vsel %vm4327, %v1775, 0.0
    %v4330 = vsel %vm4327, %v1780, 0.0
    %v4331 = vsel %vm4327, %v1785, 0.0
    %v4332 = vsel %vm4327, %v1790, 0.0
    %v4333 = vsel %vm4327, %v1795, 0.0
    %v4334 = vsel %vm4327, %v1800, 0.0
    %v4335 = vsel %vm4327, %v1805, 0.0
    %v4336 = vsel %vm4327, %v1810, 0.0
    %v4337 = vsel %vm4327, %v1815, 0.0
    %v4338 = vpack.c.bf16 %v4329, %v4328
    %v4339 = vpack.c.bf16 %v4331, %v4330
    %v4340 = vpack.c.bf16 %v4333, %v4332
    %v4341 = vpack.c.bf16 %v4335, %v4334
    %v4342 = vpack.c.bf16 %v4337, %v4336
    %v4344 = vsel %vm278, %v4338, 0
    %v4347 = vsel %vm278, %v4339, 0
    %v4350 = vsel %vm278, %v4340, 0
    %v4353 = vsel %vm278, %v4341, 0
    %v4356 = vsel %vm278, %v4342, 0
    %4358 = vmatprep.subr.bf16.mxu0 0
    %4359 = vmatpush1.bf16.xpose.msra.mxu0 %v1951
    %4360 = vmatprep.subr.bf16.mxu0 0
    %4361 = vmatpush1.bf16.xpose.msra.mxu0 %v1954
    %4362 = vmatprep.subr.bf16.mxu0 0
    %4363 = vmatpush1.bf16.xpose.msra.mxu0 %v1957
    %4364 = vmatprep.subr.bf16.mxu0 0
    %4365 = vmatpush1.bf16.xpose.msra.mxu0 %v1960
    %4366 = vmatprep.subr.bf16.mxu0 0
    %4367 = vmatpush1.bf16.xpose.msra.mxu0 %v1963
    %4368 = vmatprep.subr.bf16.mxu0 0
    %4369 = vmatpush1.bf16.xpose.msra.mxu0 0
    %4370 = vmatprep.subr.bf16.mxu0 0
    %4371 = vmatpush1.bf16.xpose.msra.mxu0 0
    %4372 = vmatprep.subr.bf16.mxu0 0
    %4373 = vmatpush1.bf16.xpose.msra.mxu0 0
    %4374 = vmatprep.subr.bf16.mxu0 0
    %4375 = vmatpush1.bf16.xpose.msra.mxu0 0
    %4376 = vmatprep.subr.bf16.mxu0 0
    %4377 = vmatpush1.bf16.xpose.msra.mxu0 0
    %4378 = vmatprep.subr.bf16.mxu0 0
    %4379 = vmatpush1.bf16.xpose.msra.mxu0 0
    %4380 = vmatprep.subr.bf16.mxu0 0
    %4381 = vmatpush1.bf16.xpose.msra.mxu0 0
    %4382 = vmatprep.subr.bf16.mxu0 0
    %4383 = vmatpush1.bf16.xpose.msra.mxu0 0
    %4384 = vmatprep.subr.bf16.mxu0 0
    %4385 = vmatpush1.bf16.xpose.msra.mxu0 0
    %4386 = vmatprep.subr.bf16.mxu0 0
    %4387 = vmatpush1.bf16.xpose.msra.mxu0 0
    %4388 = vmatprep.subr.bf16.mxu0 0
    %4389 = vmatpush1.bf16.xpose.msra.mxu0 0
    %4390 = vmatprep.mubr.bf16.mxu0 0
    %4391 = vmatmul.mubr.bf16.gmra.mrb[0].mxu0 %v4344
    %v4392 = vpop.f32.mrb[0].mxu0
    %v4393 = vadd.f32 0.0, %v4392
    %v4394 = vpop.f32.mrb[0].mxu0
    %v4395 = vpop.f32.mrb[0].mxu0
    %v4396 = vadd.f32 0.0, %v4395
    %v4397 = vpop.f32.mrb[0].mxu0
    %4398 = vmatprep.mubr.bf16.mxu0 0
    %4399 = vmatmul.mubr.bf16.gmra.mrb[0].mxu0 %v4347
    %v4400 = vpop.f32.mrb[0].mxu0
    %v4401 = vadd.f32 0.0, %v4400
    %v4402 = vpop.f32.mrb[0].mxu0
    %v4403 = vpop.f32.mrb[0].mxu0
    %v4404 = vadd.f32 0.0, %v4403
    %v4405 = vpop.f32.mrb[0].mxu0
    %4406 = vmatprep.mubr.bf16.mxu0 0
    %4407 = vmatmul.mubr.bf16.gmra.mrb[0].mxu0 %v4350
    %v4408 = vpop.f32.mrb[0].mxu0
    %v4409 = vadd.f32 0.0, %v4408
    %v4410 = vpop.f32.mrb[0].mxu0
    %v4411 = vpop.f32.mrb[0].mxu0
    %v4412 = vadd.f32 0.0, %v4411
    %v4413 = vpop.f32.mrb[0].mxu0
    %4414 = vmatprep.mubr.bf16.mxu0 0
    %4415 = vmatmul.mubr.bf16.gmra.mrb[0].mxu0 %v4353
    %v4416 = vpop.f32.mrb[0].mxu0
    %v4417 = vadd.f32 0.0, %v4416
    %v4418 = vpop.f32.mrb[0].mxu0
    %v4419 = vpop.f32.mrb[0].mxu0
    %v4420 = vadd.f32 0.0, %v4419
    %v4421 = vpop.f32.mrb[0].mxu0
    %4422 = vmatprep.mubr.bf16.mxu0 0
    %4423 = vmatmul.mubr.bf16.gmra.mrb[0].mxu0 %v4356
    %v4424 = vpop.f32.mrb[0].mxu0
    %v4425 = vadd.f32 0.0, %v4424
    %v4426 = vpop.f32.mrb[0].mxu0
    %v4427 = vpop.f32.mrb[0].mxu0
    %v4428 = vadd.f32 0.0, %v4427
    %v4429 = vpop.f32.mrb[0].mxu0
    %4430 = vdwg.mxu0
    %v4431 = vsel %vm1890, %v4393, -1e+30
    %v4432 = vsel %vm1891, %v4396, -1e+30
    %v4433 = vsel %vm1892, %v4401, -1e+30
    %v4434 = vsel %vm1893, %v4404, -1e+30
    %v4435 = vsel %vm1894, %v4409, -1e+30
    %v4436 = vsel %vm1895, %v4412, -1e+30
    %v4437 = vsel %vm1896, %v4417, -1e+30
    %v4438 = vsel %vm1897, %v4420, -1e+30
    %v4439 = vsel %vm1898, %v4425, -1e+30
    %v4440 = vsel %vm1899, %v4428, -1e+30
    %v4441 = vsel %vm2048, %v4431, -inf
    %4442 = vmax.xlane.f32.xlu0 %v4441
    %v4443 = vpop.xlane.xlu0 %4442
    %v4444 = vsel %vm2048, %v4432, -inf
    %4445 = vmax.xlane.f32.xlu0 %v4444
    %v4446 = vpop.xlane.xlu0 %4445
    %v4447 = vsel %vm2048, %v4433, -inf
    %4448 = vmax.xlane.f32.xlu0 %v4447
    %v4449 = vpop.xlane.xlu0 %4448
    %v4450 = vsel %vm2048, %v4434, -inf
    %4451 = vmax.xlane.f32.xlu0 %v4450
    %v4452 = vpop.xlane.xlu0 %4451
    %v4453 = vsel %vm2048, %v4435, -inf
    %4454 = vmax.xlane.f32.xlu0 %v4453
    %v4455 = vpop.xlane.xlu0 %4454
    %v4456 = vsel %vm2048, %v4436, -inf
    %4457 = vmax.xlane.f32.xlu0 %v4456
    %v4458 = vpop.xlane.xlu0 %4457
    %v4459 = vsel %vm2048, %v4437, -inf
    %4460 = vmax.xlane.f32.xlu0 %v4459
    %v4461 = vpop.xlane.xlu0 %4460
    %v4462 = vsel %vm2048, %v4438, -inf
    %4463 = vmax.xlane.f32.xlu0 %v4462
    %v4464 = vpop.xlane.xlu0 %4463
    %v4465 = vsel %vm2048, %v4439, -inf
    %4466 = vmax.xlane.f32.xlu0 %v4465
    %v4467 = vpop.xlane.xlu0 %4466
    %v4468 = vsel %vm2048, %v4440, -inf
    %4469 = vmax.xlane.f32.xlu0 %v4468
    %v4470 = vpop.xlane.xlu0 %4469
    %v4471 = vsub.f32 %v4431, %v4443
    %v4472 = vsub.f32 %v4432, %v4446
    %v4473 = vsub.f32 %v4433, %v4449
    %v4474 = vsub.f32 %v4434, %v4452
    %v4475 = vsub.f32 %v4435, %v4455
    %v4476 = vsub.f32 %v4436, %v4458
    %v4477 = vsub.f32 %v4437, %v4461
    %v4478 = vsub.f32 %v4438, %v4464
    %v4479 = vsub.f32 %v4439, %v4467
    %v4480 = vsub.f32 %v4440, %v4470
    %v4481 = vmul.f32 %v4471, 1.442695
    %v4482 = vpow.pop %v4481
    %v4483 = vmul.f32 %v4472, 1.442695
    %v4484 = vpow.pop %v4483
    %v4485 = vmul.f32 %v4473, 1.442695
    %v4486 = vpow.pop %v4485
    %v4487 = vmul.f32 %v4474, 1.442695
    %v4488 = vpow.pop %v4487
    %v4489 = vmul.f32 %v4475, 1.442695
    %v4490 = vpow.pop %v4489
    %v4491 = vmul.f32 %v4476, 1.442695
    %v4492 = vpow.pop %v4491
    %v4493 = vmul.f32 %v4477, 1.442695
    %v4494 = vpow.pop %v4493
    %v4495 = vmul.f32 %v4478, 1.442695
    %v4496 = vpow.pop %v4495
    %v4497 = vmul.f32 %v4479, 1.442695
    %v4498 = vpow.pop %v4497
    %v4499 = vmul.f32 %v4480, 1.442695
    %v4500 = vpow.pop %v4499
    %v4501 = vsel %vm2048, %v4482, 0.0
    %4502 = vadd.xlane.f32.xlu0 %v4501
    %v4503 = vpop.xlane.xlu0 %4502
    %v4504 = vsel %vm2048, %v4484, 0.0
    %4505 = vadd.xlane.f32.xlu0 %v4504
    %v4506 = vpop.xlane.xlu0 %4505
    %v4507 = vsel %vm2048, %v4486, 0.0
    %4508 = vadd.xlane.f32.xlu0 %v4507
    %v4509 = vpop.xlane.xlu0 %4508
    %v4510 = vsel %vm2048, %v4488, 0.0
    %4511 = vadd.xlane.f32.xlu0 %v4510
    %v4512 = vpop.xlane.xlu0 %4511
    %v4513 = vsel %vm2048, %v4490, 0.0
    %4514 = vadd.xlane.f32.xlu0 %v4513
    %v4515 = vpop.xlane.xlu0 %4514
    %v4516 = vsel %vm2048, %v4492, 0.0
    %4517 = vadd.xlane.f32.xlu0 %v4516
    %v4518 = vpop.xlane.xlu0 %4517
    %v4519 = vsel %vm2048, %v4494, 0.0
    %4520 = vadd.xlane.f32.xlu0 %v4519
    %v4521 = vpop.xlane.xlu0 %4520
    %v4522 = vsel %vm2048, %v4496, 0.0
    %4523 = vadd.xlane.f32.xlu0 %v4522
    %v4524 = vpop.xlane.xlu0 %4523
    %v4525 = vsel %vm2048, %v4498, 0.0
    %4526 = vadd.xlane.f32.xlu0 %v4525
    %v4527 = vpop.xlane.xlu0 %4526
    %v4528 = vsel %vm2048, %v4500, 0.0
    %4529 = vadd.xlane.f32.xlu0 %v4528
    %v4530 = vpop.xlane.xlu0 %4529
    %v4531 = vrcp.pop %v4503
    %v4532 = vrcp.pop %v4506
    %v4533 = vrcp.pop %v4509
    %v4534 = vrcp.pop %v4512
    %v4535 = vrcp.pop %v4515
    %v4536 = vrcp.pop %v4518
    %v4537 = vrcp.pop %v4521
    %v4538 = vrcp.pop %v4524
    %v4539 = vrcp.pop %v4527
    %v4540 = vrcp.pop %v4530
    %v4541 = vpack.c.bf16 %v4484, %v4482
    %v4542 = vpack.c.bf16 %v4488, %v4486
    %v4543 = vpack.c.bf16 %v4492, %v4490
    %v4544 = vpack.c.bf16 %v4496, %v4494
    %v4545 = vpack.c.bf16 %v4500, %v4498
    %v4547 = vsel %vm2048, %v4541, 0
    %v4550 = vsel %vm2048, %v4542, 0
    %v4553 = vsel %vm2048, %v4543, 0
    %v4556 = vsel %vm2048, %v4544, 0
    %v4559 = vsel %vm2048, %v4545, 0
    %4561 = vmatprep.subr.bf16.mxu0 0
    %4562 = vmatpush1.bf16.msra.mxu0 %v2155
    %4563 = vmatprep.subr.bf16.mxu0 0
    %4564 = vmatpush1.bf16.msra.mxu0 %v2157
    %4565 = vmatprep.subr.bf16.mxu0 0
    %4566 = vmatpush1.bf16.msra.mxu0 %v2159
    %4567 = vmatprep.subr.bf16.mxu0 0
    %4568 = vmatpush1.bf16.msra.mxu0 %v2161
    %4569 = vmatprep.subr.bf16.mxu0 0
    %4570 = vmatpush1.bf16.msra.mxu0 %v2163
    %4571 = vmatprep.subr.bf16.mxu0 0
    %4572 = vmatpush1.bf16.msra.mxu0 0
    %4573 = vmatprep.subr.bf16.mxu0 0
    %4574 = vmatpush1.bf16.msra.mxu0 0
    %4575 = vmatprep.subr.bf16.mxu0 0
    %4576 = vmatpush1.bf16.msra.mxu0 0
    %4577 = vmatprep.subr.bf16.mxu0 0
    %4578 = vmatpush1.bf16.msra.mxu0 0
    %4579 = vmatprep.subr.bf16.mxu0 0
    %4580 = vmatpush1.bf16.msra.mxu0 0
    %4581 = vmatprep.subr.bf16.mxu0 0
    %4582 = vmatpush1.bf16.msra.mxu0 0
    %4583 = vmatprep.subr.bf16.mxu0 0
    %4584 = vmatpush1.bf16.msra.mxu0 0
    %4585 = vmatprep.subr.bf16.mxu0 0
    %4586 = vmatpush1.bf16.msra.mxu0 0
    %4587 = vmatprep.subr.bf16.mxu0 0
    %4588 = vmatpush1.bf16.msra.mxu0 0
    %4589 = vmatprep.subr.bf16.mxu0 0
    %4590 = vmatpush1.bf16.msra.mxu0 0
    %4591 = vmatprep.subr.bf16.mxu0 0
    %4592 = vmatpush1.bf16.msra.mxu0 0
    %4593 = vmatprep.mubr.bf16.mxu0 0
    %4594 = vmatmul.mubr.bf16.gmra.mrb[0].mxu0 %v4547
    %v4595 = vpop.f32.mrb[0].mxu0
    %v4596 = vadd.f32 0.0, %v4595
    %v4597 = vpop.f32.mrb[0].mxu0
    %v4598 = vpop.f32.mrb[0].mxu0
    %v4599 = vadd.f32 0.0, %v4598
    %v4600 = vpop.f32.mrb[0].mxu0
    %4601 = vmatprep.mubr.bf16.mxu0 0
    %4602 = vmatmul.mubr.bf16.gmra.mrb[0].mxu0 %v4550
    %v4603 = vpop.f32.mrb[0].mxu0
    %v4604 = vadd.f32 0.0, %v4603
    %v4605 = vpop.f32.mrb[0].mxu0
    %v4606 = vpop.f32.mrb[0].mxu0
    %v4607 = vadd.f32 0.0, %v4606
    %v4608 = vpop.f32.mrb[0].mxu0
    %4609 = vmatprep.mubr.bf16.mxu0 0
    %4610 = vmatmul.mubr.bf16.gmra.mrb[0].mxu0 %v4553
    %v4611 = vpop.f32.mrb[0].mxu0
    %v4612 = vadd.f32 0.0, %v4611
    %v4613 = vpop.f32.mrb[0].mxu0
    %v4614 = vpop.f32.mrb[0].mxu0
    %v4615 = vadd.f32 0.0, %v4614
    %v4616 = vpop.f32.mrb[0].mxu0
    %4617 = vmatprep.mubr.bf16.mxu0 0
    %4618 = vmatmul.mubr.bf16.gmra.mrb[0].mxu0 %v4556
    %v4619 = vpop.f32.mrb[0].mxu0
    %v4620 = vadd.f32 0.0, %v4619
    %v4621 = vpop.f32.mrb[0].mxu0
    %v4622 = vpop.f32.mrb[0].mxu0
    %v4623 = vadd.f32 0.0, %v4622
    %v4624 = vpop.f32.mrb[0].mxu0
    %4625 = vmatprep.mubr.bf16.mxu0 0
    %4626 = vmatmul.mubr.bf16.gmra.mrb[0].mxu0 %v4559
    %v4627 = vpop.f32.mrb[0].mxu0
    %v4628 = vadd.f32 0.0, %v4627
    %v4629 = vpop.f32.mrb[0].mxu0
    %v4630 = vpop.f32.mrb[0].mxu0
    %v4631 = vadd.f32 0.0, %v4630
    %v4632 = vpop.f32.mrb[0].mxu0
    %4633 = vdwg.mxu0
    %v4634 = vmul.f32 %v4596, %v4531
    %v4635 = vmul.f32 %v4599, %v4532
    %v4636 = vmul.f32 %v4604, %v4533
    %v4637 = vmul.f32 %v4607, %v4534
    %v4638 = vmul.f32 %v4612, %v4535
    %v4639 = vmul.f32 %v4615, %v4536
    %v4640 = vmul.f32 %v4620, %v4537
    %v4641 = vmul.f32 %v4623, %v4538
    %v4642 = vmul.f32 %v4628, %v4539
    %v4643 = vmul.f32 %v4631, %v4540
    %v4644 = vsel %vm4327, %v4634, 0.0
    %v4645 = vsel %vm4327, %v4635, 0.0
    %v4646 = vsel %vm4327, %v4636, 0.0
    %v4647 = vsel %vm4327, %v4637, 0.0
    %v4648 = vsel %vm4327, %v4638, 0.0
    %v4649 = vsel %vm4327, %v4639, 0.0
    %v4650 = vsel %vm4327, %v4640, 0.0
    %v4651 = vsel %vm4327, %v4641, 0.0
    %v4652 = vsel %vm4327, %v4642, 0.0
    %v4653 = vsel %vm4327, %v4643, 0.0
    %v4654 = vadd.f32 %v4313, %v4644
    %v4655 = vadd.f32 %v4314, %v4645
    %v4656 = vadd.f32 %v4315, %v4646
    %v4657 = vadd.f32 %v4316, %v4647
    %v4658 = vadd.f32 %v4317, %v4648
    %v4659 = vadd.f32 %v4318, %v4649
    %v4660 = vadd.f32 %v4319, %v4650
    %v4661 = vadd.f32 %v4320, %v4651
    %v4662 = vadd.f32 %v4321, %v4652
    %v4663 = vadd.f32 %v4322, %v4653
    %v4664 = vpack.c.bf16 %v4655, %v4654
    %v4665 = vpack.c.bf16 %v4657, %v4656
    %v4666 = vpack.c.bf16 %v4659, %v4658
    %v4667 = vpack.c.bf16 %v4661, %v4660
    %v4668 = vpack.c.bf16 %v4663, %v4662
    %v4669 = vld [vmem:[%s63] sm:$0xf]
    %v4670 = vld [vmem:[%s63 + $0x4] sm:$0xf]
    %v4671 = vld [vmem:[%s63 + $0x8] sm:$0xf]
    %v4672 = vld [vmem:[%s63 + $0xc] sm:$0xf]
    %v4673 = vld [vmem:[%s65] sm:$0x1]
    %v4675 = vlaneseq
    %v4676 = vshrl.u32 %v4675, 7
    %v4677 = vsub.s32 0, %v4676
    %v4678 = vrot.slane %v4673, %v4677
    %v4684 = vunpack.c.l.b16 %v4669
    %v4685 = vunpack.c.l.b16 %v4670
    %v4686 = vunpack.c.l.b16 %v4671
    %v4687 = vunpack.c.l.b16 %v4672
    %v4688 = vpack.c.b16 %v4685, %v4684
    %v4689 = vpack.c.b16 %v4687, %v4686
    %v4693 = vsel %vm278, %v4664, 0
    %v4696 = vsel %vm278, %v4665, 0
    %v4699 = vsel %vm278, %v4666, 0
    %v4702 = vsel %vm278, %v4667, 0
    %v4705 = vsel %vm278, %v4668, 0
    %4707 = vmatprep.subr.bf16.mxu0 0
    %4708 = vmatpush1.bf16.msra.mxu0 %v4688
    %4709 = vmatprep.subr.bf16.mxu0 0
    %4710 = vmatpush1.bf16.msra.mxu0 %v4689
    %4711 = vmatprep.subr.bf16.mxu0 0
    %4712 = vmatpush1.bf16.msra.mxu0 0
    %4713 = vmatprep.subr.bf16.mxu0 0
    %4714 = vmatpush1.bf16.msra.mxu0 0
    %4715 = vmatprep.subr.bf16.mxu0 0
    %4716 = vmatpush1.bf16.msra.mxu0 0
    %4717 = vmatprep.subr.bf16.mxu0 0
    %4718 = vmatpush1.bf16.msra.mxu0 0
    %4719 = vmatprep.subr.bf16.mxu0 0
    %4720 = vmatpush1.bf16.msra.mxu0 0
    %4721 = vmatprep.subr.bf16.mxu0 0
    %4722 = vmatpush1.bf16.msra.mxu0 0
    %4723 = vmatprep.subr.bf16.mxu0 0
    %4724 = vmatpush1.bf16.msra.mxu0 0
    %4725 = vmatprep.subr.bf16.mxu0 0
    %4726 = vmatpush1.bf16.msra.mxu0 0
    %4727 = vmatprep.subr.bf16.mxu0 0
    %4728 = vmatpush1.bf16.msra.mxu0 0
    %4729 = vmatprep.subr.bf16.mxu0 0
    %4730 = vmatpush1.bf16.msra.mxu0 0
    %4731 = vmatprep.subr.bf16.mxu0 0
    %4732 = vmatpush1.bf16.msra.mxu0 0
    %4733 = vmatprep.subr.bf16.mxu0 0
    %4734 = vmatpush1.bf16.msra.mxu0 0
    %4735 = vmatprep.subr.bf16.mxu0 0
    %4736 = vmatpush1.bf16.msra.mxu0 0
    %4737 = vmatprep.subr.bf16.mxu0 0
    %4738 = vmatpush1.bf16.msra.mxu0 0
    %4739 = vmatprep.mubr.bf16.mxu0 0
    %4740 = vmatmul.mubr.bf16.gmra.mrb[0].mxu0 %v4693
    %v4741 = vpop.f32.mrb[0].mxu0
    %v4742 = vadd.f32 %v4678, %v4741
    %v4743 = vpop.f32.mrb[0].mxu0
    %v4744 = vpop.f32.mrb[0].mxu0
    %v4745 = vadd.f32 %v4678, %v4744
    %v4746 = vpop.f32.mrb[0].mxu0
    %4747 = vmatprep.mubr.bf16.mxu0 0
    %4748 = vmatmul.mubr.bf16.gmra.mrb[0].mxu0 %v4696
    %v4749 = vpop.f32.mrb[0].mxu0
    %v4750 = vadd.f32 %v4678, %v4749
    %v4751 = vpop.f32.mrb[0].mxu0
    %v4752 = vpop.f32.mrb[0].mxu0
    %v4753 = vadd.f32 %v4678, %v4752
    %v4754 = vpop.f32.mrb[0].mxu0
    %4755 = vmatprep.mubr.bf16.mxu0 0
    %4756 = vmatmul.mubr.bf16.gmra.mrb[0].mxu0 %v4699
    %v4757 = vpop.f32.mrb[0].mxu0
    %v4758 = vadd.f32 %v4678, %v4757
    %v4759 = vpop.f32.mrb[0].mxu0
    %v4760 = vpop.f32.mrb[0].mxu0
    %v4761 = vadd.f32 %v4678, %v4760
    %v4762 = vpop.f32.mrb[0].mxu0
    %4763 = vmatprep.mubr.bf16.mxu0 0
    %4764 = vmatmul.mubr.bf16.gmra.mrb[0].mxu0 %v4702
    %v4765 = vpop.f32.mrb[0].mxu0
    %v4766 = vadd.f32 %v4678, %v4765
    %v4767 = vpop.f32.mrb[0].mxu0
    %v4768 = vpop.f32.mrb[0].mxu0
    %v4769 = vadd.f32 %v4678, %v4768
    %v4770 = vpop.f32.mrb[0].mxu0
    %4771 = vmatprep.mubr.bf16.mxu0 0
    %4772 = vmatmul.mubr.bf16.gmra.mrb[0].mxu0 %v4705
    %v4773 = vpop.f32.mrb[0].mxu0
    %v4774 = vadd.f32 %v4678, %v4773
    %v4775 = vpop.f32.mrb[0].mxu0
    %v4776 = vpop.f32.mrb[0].mxu0
    %v4777 = vadd.f32 %v4678, %v4776
    %v4778 = vpop.f32.mrb[0].mxu0
    %4779 = vdwg.mxu0
    %v4780 = vadd.f32 %v1652, %v4742
    %v4781 = vadd.f32 %v1653, %v4745
    %v4782 = vadd.f32 %v1654, %v4750
    %v4783 = vadd.f32 %v1655, %v4753
    %v4784 = vadd.f32 %v1656, %v4758
    %v4785 = vadd.f32 %v1657, %v4761
    %v4786 = vadd.f32 %v1658, %v4766
    %v4787 = vadd.f32 %v1659, %v4769
    %v4788 = vadd.f32 %v1660, %v4774
    %v4789 = vadd.f32 %v1661, %v4777
    %v4790 = vld [vmem:[%s67] sm:$0x1]
    %v4791 = vld [vmem:[%s69] sm:$0x1]
    %v4792 = vsel %vm278, %v4780, 0.0
    %4793 = vadd.xlane.f32.xlu0 %v4792
    %v4794 = vpop.xlane.xlu0 %4793
    %v4795 = vsel %vm278, %v4781, 0.0
    %4796 = vadd.xlane.f32.xlu0 %v4795
    %v4797 = vpop.xlane.xlu0 %4796
    %v4798 = vsel %vm278, %v4782, 0.0
    %4799 = vadd.xlane.f32.xlu0 %v4798
    %v4800 = vpop.xlane.xlu0 %4799
    %v4801 = vsel %vm278, %v4783, 0.0
    %4802 = vadd.xlane.f32.xlu0 %v4801
    %v4803 = vpop.xlane.xlu0 %4802
    %v4804 = vsel %vm278, %v4784, 0.0
    %4805 = vadd.xlane.f32.xlu0 %v4804
    %v4806 = vpop.xlane.xlu0 %4805
    %v4807 = vsel %vm278, %v4785, 0.0
    %4808 = vadd.xlane.f32.xlu0 %v4807
    %v4809 = vpop.xlane.xlu0 %4808
    %v4810 = vsel %vm278, %v4786, 0.0
    %4811 = vadd.xlane.f32.xlu0 %v4810
    %v4812 = vpop.xlane.xlu0 %4811
    %v4813 = vsel %vm278, %v4787, 0.0
    %4814 = vadd.xlane.f32.xlu0 %v4813
    %v4815 = vpop.xlane.xlu0 %4814
    %v4816 = vsel %vm278, %v4788, 0.0
    %4817 = vadd.xlane.f32.xlu0 %v4816
    %v4818 = vpop.xlane.xlu0 %4817
    %v4819 = vsel %vm278, %v4789, 0.0
    %4820 = vadd.xlane.f32.xlu0 %v4819
    %v4821 = vpop.xlane.xlu0 %4820
    %v4822 = vmul.f32 %v4794, %v509
    %v4823 = vmul.f32 %v4797, %v509
    %v4824 = vmul.f32 %v4800, %v509
    %v4825 = vmul.f32 %v4803, %v509
    %v4826 = vmul.f32 %v4806, %v509
    %v4827 = vmul.f32 %v4809, %v509
    %v4828 = vmul.f32 %v4812, %v509
    %v4829 = vmul.f32 %v4815, %v509
    %v4830 = vmul.f32 %v4818, %v509
    %v4831 = vmul.f32 %v4821, %v509
    %v4832 = vsub.f32 %v4780, %v4822
    %v4833 = vsub.f32 %v4781, %v4823
    %v4834 = vsub.f32 %v4782, %v4824
    %v4835 = vsub.f32 %v4783, %v4825
    %v4836 = vsub.f32 %v4784, %v4826
    %v4837 = vsub.f32 %v4785, %v4827
    %v4838 = vsub.f32 %v4786, %v4828
    %v4839 = vsub.f32 %v4787, %v4829
    %v4840 = vsub.f32 %v4788, %v4830
    %v4841 = vsub.f32 %v4789, %v4831
    %v4842 = vmul.f32 %v4832, %v4832
    %v4843 = vmul.f32 %v4833, %v4833
    %v4844 = vmul.f32 %v4834, %v4834
    %v4845 = vmul.f32 %v4835, %v4835
    %v4846 = vmul.f32 %v4836, %v4836
    %v4847 = vmul.f32 %v4837, %v4837
    %v4848 = vmul.f32 %v4838, %v4838
    %v4849 = vmul.f32 %v4839, %v4839
    %v4850 = vmul.f32 %v4840, %v4840
    %v4851 = vmul.f32 %v4841, %v4841
    %v4852 = vsel %vm278, %v4842, 0.0
    %4853 = vadd.xlane.f32.xlu0 %v4852
    %v4854 = vpop.xlane.xlu0 %4853
    %v4855 = vsel %vm278, %v4843, 0.0
    %4856 = vadd.xlane.f32.xlu0 %v4855
    %v4857 = vpop.xlane.xlu0 %4856
    %v4858 = vsel %vm278, %v4844, 0.0
    %4859 = vadd.xlane.f32.xlu0 %v4858
    %v4860 = vpop.xlane.xlu0 %4859
    %v4861 = vsel %vm278, %v4845, 0.0
    %4862 = vadd.xlane.f32.xlu0 %v4861
    %v4863 = vpop.xlane.xlu0 %4862
    %v4864 = vsel %vm278, %v4846, 0.0
    %4865 = vadd.xlane.f32.xlu0 %v4864
    %v4866 = vpop.xlane.xlu0 %4865
    %v4867 = vsel %vm278, %v4847, 0.0
    %4868 = vadd.xlane.f32.xlu0 %v4867
    %v4869 = vpop.xlane.xlu0 %4868
    %v4870 = vsel %vm278, %v4848, 0.0
    %4871 = vadd.xlane.f32.xlu0 %v4870
    %v4872 = vpop.xlane.xlu0 %4871
    %v4873 = vsel %vm278, %v4849, 0.0
    %4874 = vadd.xlane.f32.xlu0 %v4873
    %v4875 = vpop.xlane.xlu0 %4874
    %v4876 = vsel %vm278, %v4850, 0.0
    %4877 = vadd.xlane.f32.xlu0 %v4876
    %v4878 = vpop.xlane.xlu0 %4877
    %v4879 = vsel %vm278, %v4851, 0.0
    %4880 = vadd.xlane.f32.xlu0 %v4879
    %v4881 = vpop.xlane.xlu0 %4880
    %v4882 = vmul.f32 %v4854, %v509
    %v4883 = vmul.f32 %v4857, %v509
    %v4884 = vmul.f32 %v4860, %v509
    %v4885 = vmul.f32 %v4863, %v509
    %v4886 = vmul.f32 %v4866, %v509
    %v4887 = vmul.f32 %v4869, %v509
    %v4888 = vmul.f32 %v4872, %v509
    %v4889 = vmul.f32 %v4875, %v509
    %v4890 = vmul.f32 %v4878, %v509
    %v4891 = vmul.f32 %v4881, %v509
    %v4892 = vadd.f32 %v4882, 1e-05
    %v4893 = vadd.f32 %v4883, 1e-05
    %v4894 = vadd.f32 %v4884, 1e-05
    %v4895 = vadd.f32 %v4885, 1e-05
    %v4896 = vadd.f32 %v4886, 1e-05
    %v4897 = vadd.f32 %v4887, 1e-05
    %v4898 = vadd.f32 %v4888, 1e-05
    %v4899 = vadd.f32 %v4889, 1e-05
    %v4900 = vadd.f32 %v4890, 1e-05
    %v4901 = vadd.f32 %v4891, 1e-05
    %v4902 = vrsqrt.pop %v4892
    %v4903 = vrsqrt.pop %v4893
    %v4904 = vrsqrt.pop %v4894
    %v4905 = vrsqrt.pop %v4895
    %v4906 = vrsqrt.pop %v4896
    %v4907 = vrsqrt.pop %v4897
    %v4908 = vrsqrt.pop %v4898
    %v4909 = vrsqrt.pop %v4899
    %v4910 = vrsqrt.pop %v4900
    %v4911 = vrsqrt.pop %v4901
    %v4912 = vmul.f32 %v4832, %v4902
    %v4913 = vmul.f32 %v4833, %v4903
    %v4914 = vmul.f32 %v4834, %v4904
    %v4915 = vmul.f32 %v4835, %v4905
    %v4916 = vmul.f32 %v4836, %v4906
    %v4917 = vmul.f32 %v4837, %v4907
    %v4918 = vmul.f32 %v4838, %v4908
    %v4919 = vmul.f32 %v4839, %v4909
    %v4920 = vmul.f32 %v4840, %v4910
    %v4921 = vmul.f32 %v4841, %v4911
    %v4923 = vlaneseq
    %v4924 = vshrl.u32 %v4923, 7
    %v4925 = vsub.s32 0, %v4924
    %v4926 = vrot.slane %v4790, %v4925
    %v4928 = vmul.f32 %v4912, %v4926
    %v4929 = vmul.f32 %v4913, %v4926
    %v4930 = vmul.f32 %v4914, %v4926
    %v4931 = vmul.f32 %v4915, %v4926
    %v4932 = vmul.f32 %v4916, %v4926
    %v4933 = vmul.f32 %v4917, %v4926
    %v4934 = vmul.f32 %v4918, %v4926
    %v4935 = vmul.f32 %v4919, %v4926
    %v4936 = vmul.f32 %v4920, %v4926
    %v4937 = vmul.f32 %v4921, %v4926
    %v4939 = vlaneseq
    %v4940 = vshrl.u32 %v4939, 7
    %v4941 = vsub.s32 0, %v4940
    %v4942 = vrot.slane %v4791, %v4941
    %v4944 = vadd.f32 %v4928, %v4942
    %v4945 = vadd.f32 %v4929, %v4942
    %v4946 = vadd.f32 %v4930, %v4942
    %v4947 = vadd.f32 %v4931, %v4942
    %v4948 = vadd.f32 %v4932, %v4942
    %v4949 = vadd.f32 %v4933, %v4942
    %v4950 = vadd.f32 %v4934, %v4942
    %v4951 = vadd.f32 %v4935, %v4942
    %v4952 = vadd.f32 %v4936, %v4942
    %v4953 = vadd.f32 %v4937, %v4942
    %v4954 = vpack.c.bf16 %v4945, %v4944
    %v4955 = vpack.c.bf16 %v4947, %v4946
    %v4956 = vpack.c.bf16 %v4949, %v4948
    %v4957 = vpack.c.bf16 %v4951, %v4950
    %v4958 = vpack.c.bf16 %v4953, %v4952
    %v4959 = vld [vmem:[%s71] sm:$0xff]
    %v4960 = vld [vmem:[%s71 + $0x8] sm:$0xff]
    %v4961 = vld [vmem:[%s71 + $0x10] sm:$0xff]
    %v4962 = vld [vmem:[%s71 + $0x18] sm:$0xff]
    %v4963 = vld [vmem:[%s71 + $0x20] sm:$0xff]
    %v4964 = vld [vmem:[%s71 + $0x28] sm:$0xff]
    %v4965 = vld [vmem:[%s71 + $0x30] sm:$0xff]
    %v4966 = vld [vmem:[%s71 + $0x38] sm:$0xff]
    %v4967 = vld [vmem:[%s71 + $0x40] sm:$0xff]
    %v4968 = vld [vmem:[%s71 + $0x48] sm:$0xff]
    %v4969 = vld [vmem:[%s71 + $0x50] sm:$0xff]
    %v4970 = vld [vmem:[%s71 + $0x58] sm:$0xff]
    %v4971 = vld [vmem:[%s71 + $0x60] sm:$0xff]
    %v4972 = vld [vmem:[%s71 + $0x68] sm:$0xff]
    %v4973 = vld [vmem:[%s71 + $0x70] sm:$0xff]
    %v4974 = vld [vmem:[%s71 + $0x78] sm:$0xff]
    %v4975 = vld [vmem:[%s71 + $0x80] sm:$0xff]
    %v4976 = vld [vmem:[%s71 + $0x88] sm:$0xff]
    %v4977 = vld [vmem:[%s71 + $0x90] sm:$0xff]
    %v4978 = vld [vmem:[%s71 + $0x98] sm:$0xff]
    %v4979 = vld [vmem:[%s71 + $0xa0] sm:$0xff]
    %v4980 = vld [vmem:[%s71 + $0xa8] sm:$0xff]
    %v4981 = vld [vmem:[%s71 + $0xb0] sm:$0xff]
    %v4982 = vld [vmem:[%s71 + $0xb8] sm:$0xff]
    %v4983 = vld [vmem:[%s71 + $0xc0] sm:$0xff]
    %v4984 = vld [vmem:[%s71 + $0xc8] sm:$0xff]
    %v4985 = vld [vmem:[%s71 + $0xd0] sm:$0xff]
    %v4986 = vld [vmem:[%s71 + $0xd8] sm:$0xff]
    %v4987 = vld [vmem:[%s71 + $0xe0] sm:$0xff]
    %v4988 = vld [vmem:[%s71 + $0xe8] sm:$0xff]
    %v4989 = vld [vmem:[%s71 + $0xf0] sm:$0xff]
    %v4990 = vld [vmem:[%s71 + $0xf8] sm:$0xff]
    %v4991 = vld [vmem:[%s73] sm:$0xff]
    %v4992 = vld [vmem:[%s73 + $0x8] sm:$0xff]
    %v4995 = vlaneseq
    %v4996 = vshrl.u32 %v4995, 7
    %v4997 = vsub.s32 0, %v4996
    %v4998 = vrot.slane %v4991, %v4997
    %v4999 = vlaneseq
    %v5000 = vshrl.u32 %v4999, 7
    %v5001 = vsub.s32 1, %v5000
    %v5002 = vrot.slane %v4991, %v5001
    %v5003 = vlaneseq
    %v5004 = vshrl.u32 %v5003, 7
    %v5005 = vsub.s32 2, %v5004
    %v5006 = vrot.slane %v4991, %v5005
    %v5007 = vlaneseq
    %v5008 = vshrl.u32 %v5007, 7
    %v5009 = vsub.s32 3, %v5008
    %v5010 = vrot.slane %v4991, %v5009
    %v5011 = vlaneseq
    %v5012 = vshrl.u32 %v5011, 7
    %v5013 = vsub.s32 4, %v5012
    %v5014 = vrot.slane %v4991, %v5013
    %v5015 = vlaneseq
    %v5016 = vshrl.u32 %v5015, 7
    %v5017 = vsub.s32 5, %v5016
    %v5018 = vrot.slane %v4991, %v5017
    %v5019 = vlaneseq
    %v5020 = vshrl.u32 %v5019, 7
    %v5021 = vsub.s32 6, %v5020
    %v5022 = vrot.slane %v4991, %v5021
    %v5023 = vlaneseq
    %v5024 = vshrl.u32 %v5023, 7
    %v5025 = vsub.s32 7, %v5024
    %v5026 = vrot.slane %v4991, %v5025
    %v5027 = vlaneseq
    %v5028 = vshrl.u32 %v5027, 7
    %v5029 = vsub.s32 0, %v5028
    %v5030 = vrot.slane %v4992, %v5029
    %v5031 = vlaneseq
    %v5032 = vshrl.u32 %v5031, 7
    %v5033 = vsub.s32 1, %v5032
    %v5034 = vrot.slane %v4992, %v5033
    %v5035 = vlaneseq
    %v5036 = vshrl.u32 %v5035, 7
    %v5037 = vsub.s32 2, %v5036
    %v5038 = vrot.slane %v4992, %v5037
    %v5039 = vlaneseq
    %v5040 = vshrl.u32 %v5039, 7
    %v5041 = vsub.s32 3, %v5040
    %v5042 = vrot.slane %v4992, %v5041
    %v5043 = vlaneseq
    %v5044 = vshrl.u32 %v5043, 7
    %v5045 = vsub.s32 4, %v5044
    %v5046 = vrot.slane %v4992, %v5045
    %v5047 = vlaneseq
    %v5048 = vshrl.u32 %v5047, 7
    %v5049 = vsub.s32 5, %v5048
    %v5050 = vrot.slane %v4992, %v5049
    %v5051 = vlaneseq
    %v5052 = vshrl.u32 %v5051, 7
    %v5053 = vsub.s32 6, %v5052
    %v5054 = vrot.slane %v4992, %v5053
    %v5055 = vlaneseq
    %v5056 = vshrl.u32 %v5055, 7
    %v5057 = vsub.s32 7, %v5056
    %v5058 = vrot.slane %v4992, %v5057
    %v5107 = vunpack.c.l.b16 %v4959
    %v5108 = vunpack.c.h.b16 %v4959
    %v5109 = vunpack.c.l.b16 %v4960
    %v5110 = vunpack.c.h.b16 %v4960
    %v5111 = vunpack.c.l.b16 %v4961
    %v5112 = vunpack.c.h.b16 %v4961
    %v5113 = vunpack.c.l.b16 %v4962
    %v5114 = vunpack.c.h.b16 %v4962
    %v5115 = vunpack.c.l.b16 %v4963
    %v5116 = vunpack.c.h.b16 %v4963
    %v5117 = vunpack.c.l.b16 %v4964
    %v5118 = vunpack.c.h.b16 %v4964
    %v5119 = vunpack.c.l.b16 %v4965
    %v5120 = vunpack.c.h.b16 %v4965
    %v5121 = vunpack.c.l.b16 %v4966
    %v5122 = vunpack.c.h.b16 %v4966
    %v5123 = vunpack.c.l.b16 %v4967
    %v5124 = vunpack.c.h.b16 %v4967
    %v5125 = vunpack.c.l.b16 %v4968
    %v5126 = vunpack.c.h.b16 %v4968
    %v5127 = vunpack.c.l.b16 %v4969
    %v5128 = vunpack.c.h.b16 %v4969
    %v5129 = vunpack.c.l.b16 %v4970
    %v5130 = vunpack.c.h.b16 %v4970
    %v5131 = vunpack.c.l.b16 %v4971
    %v5132 = vunpack.c.h.b16 %v4971
    %v5133 = vunpack.c.l.b16 %v4972
    %v5134 = vunpack.c.h.b16 %v4972
    %v5135 = vunpack.c.l.b16 %v4973
    %v5136 = vunpack.c.h.b16 %v4973
    %v5137 = vunpack.c.l.b16 %v4974
    %v5138 = vunpack.c.h.b16 %v4974
    %v5139 = vunpack.c.l.b16 %v4975
    %v5140 = vunpack.c.h.b16 %v4975
    %v5141 = vunpack.c.l.b16 %v4976
    %v5142 = vunpack.c.h.b16 %v4976
    %v5143 = vunpack.c.l.b16 %v4977
    %v5144 = vunpack.c.h.b16 %v4977
    %v5145 = vunpack.c.l.b16 %v4978
    %v5146 = vunpack.c.h.b16 %v4978
    %v5147 = vunpack.c.l.b16 %v4979
    %v5148 = vunpack.c.h.b16 %v4979
    %v5149 = vunpack.c.l.b16 %v4980
    %v5150 = vunpack.c.h.b16 %v4980
    %v5151 = vunpack.c.l.b16 %v4981
    %v5152 = vunpack.c.h.b16 %v4981
    %v5153 = vunpack.c.l.b16 %v4982
    %v5154 = vunpack.c.h.b16 %v4982
    %v5155 = vunpack.c.l.b16 %v4983
    %v5156 = vunpack.c.h.b16 %v4983
    %v5157 = vunpack.c.l.b16 %v4984
    %v5158 = vunpack.c.h.b16 %v4984
    %v5159 = vunpack.c.l.b16 %v4985
    %v5160 = vunpack.c.h.b16 %v4985
    %v5161 = vunpack.c.l.b16 %v4986
    %v5162 = vunpack.c.h.b16 %v4986
    %v5163 = vunpack.c.l.b16 %v4987
    %v5164 = vunpack.c.h.b16 %v4987
    %v5165 = vunpack.c.l.b16 %v4988
    %v5166 = vunpack.c.h.b16 %v4988
    %v5167 = vunpack.c.l.b16 %v4989
    %v5168 = vunpack.c.h.b16 %v4989
    %v5169 = vunpack.c.l.b16 %v4990
    %v5170 = vunpack.c.h.b16 %v4990
    %v5171 = vpack.c.b16 %v5123, %v5107
    %v5172 = vpack.c.b16 %v5124, %v5108
    %v5173 = vpack.c.b16 %v5125, %v5109
    %v5174 = vpack.c.b16 %v5126, %v5110
    %v5175 = vpack.c.b16 %v5127, %v5111
    %v5176 = vpack.c.b16 %v5128, %v5112
    %v5177 = vpack.c.b16 %v5129, %v5113
    %v5178 = vpack.c.b16 %v5130, %v5114
    %v5179 = vpack.c.b16 %v5131, %v5115
    %v5180 = vpack.c.b16 %v5132, %v5116
    %v5181 = vpack.c.b16 %v5133, %v5117
    %v5182 = vpack.c.b16 %v5134, %v5118
    %v5183 = vpack.c.b16 %v5135, %v5119
    %v5184 = vpack.c.b16 %v5136, %v5120
    %v5185 = vpack.c.b16 %v5137, %v5121
    %v5186 = vpack.c.b16 %v5138, %v5122
    %v5187 = vpack.c.b16 %v5155, %v5139
    %v5188 = vpack.c.b16 %v5156, %v5140
    %v5189 = vpack.c.b16 %v5157, %v5141
    %v5190 = vpack.c.b16 %v5158, %v5142
    %v5191 = vpack.c.b16 %v5159, %v5143
    %v5192 = vpack.c.b16 %v5160, %v5144
    %v5193 = vpack.c.b16 %v5161, %v5145
    %v5194 = vpack.c.b16 %v5162, %v5146
    %v5195 = vpack.c.b16 %v5163, %v5147
    %v5196 = vpack.c.b16 %v5164, %v5148
    %v5197 = vpack.c.b16 %v5165, %v5149
    %v5198 = vpack.c.b16 %v5166, %v5150
    %v5199 = vpack.c.b16 %v5167, %v5151
    %v5200 = vpack.c.b16 %v5168, %v5152
    %v5201 = vpack.c.b16 %v5169, %v5153
    %v5202 = vpack.c.b16 %v5170, %v5154
    %v5236 = vsel %vm278, %v4954, 0
    %v5239 = vsel %vm278, %v4955, 0
    %v5242 = vsel %vm278, %v4956, 0
    %v5245 = vsel %vm278, %v4957, 0
    %v5248 = vsel %vm278, %v4958, 0
    %5250 = vmatprep.subr.bf16.mxu0 %v5172
    %5251 = vmatpush1.bf16.msra.mxu0 %v5171
    %5252 = vmatprep.subr.bf16.mxu0 %v5188
    %5253 = vmatpush1.bf16.msra.mxu0 %v5187
    %5254 = vmatprep.subr.bf16.mxu0 0
    %5255 = vmatpush1.bf16.msra.mxu0 0
    %5256 = vmatprep.subr.bf16.mxu0 0
    %5257 = vmatpush1.bf16.msra.mxu0 0
    %5258 = vmatprep.subr.bf16.mxu0 0
    %5259 = vmatpush1.bf16.msra.mxu0 0
    %5260 = vmatprep.subr.bf16.mxu0 0
    %5261 = vmatpush1.bf16.msra.mxu0 0
    %5262 = vmatprep.subr.bf16.mxu0 0
    %5263 = vmatpush1.bf16.msra.mxu0 0
    %5264 = vmatprep.subr.bf16.mxu0 0
    %5265 = vmatpush1.bf16.msra.mxu0 0
    %5266 = vmatprep.subr.bf16.mxu0 0
    %5267 = vmatpush1.bf16.msra.mxu0 0
    %5268 = vmatprep.subr.bf16.mxu0 0
    %5269 = vmatpush1.bf16.msra.mxu0 0
    %5270 = vmatprep.subr.bf16.mxu0 0
    %5271 = vmatpush1.bf16.msra.mxu0 0
    %5272 = vmatprep.subr.bf16.mxu0 0
    %5273 = vmatpush1.bf16.msra.mxu0 0
    %5274 = vmatprep.subr.bf16.mxu0 0
    %5275 = vmatpush1.bf16.msra.mxu0 0
    %5276 = vmatprep.subr.bf16.mxu0 0
    %5277 = vmatpush1.bf16.msra.mxu0 0
    %5278 = vmatprep.subr.bf16.mxu0 0
    %5279 = vmatpush1.bf16.msra.mxu0 0
    %5280 = vmatprep.subr.bf16.mxu0 0
    %5281 = vmatpush1.bf16.msra.mxu0 0
    %5282 = vmatprep.mubr.bf16.mxu0 0
    %5283 = vmatmul.mubr.bf16.gmra.mrb[0].mxu0 %v5236
    %v5284 = vpop.f32.mrb[0].mxu0
    %v5285 = vadd.f32 %v4998, %v5284
    %v5286 = vpop.f32.mrb[0].mxu0
    %v5287 = vadd.f32 %v5002, %v5286
    %v5288 = vpop.f32.mrb[0].mxu0
    %v5289 = vadd.f32 %v4998, %v5288
    %v5290 = vpop.f32.mrb[0].mxu0
    %v5291 = vadd.f32 %v5002, %v5290
    %5292 = vmatprep.mubr.bf16.mxu0 0
    %5293 = vmatmul.mubr.bf16.gmra.mrb[0].mxu0 %v5239
    %v5294 = vpop.f32.mrb[0].mxu0
    %v5295 = vadd.f32 %v4998, %v5294
    %v5296 = vpop.f32.mrb[0].mxu0
    %v5297 = vadd.f32 %v5002, %v5296
    %v5298 = vpop.f32.mrb[0].mxu0
    %v5299 = vadd.f32 %v4998, %v5298
    %v5300 = vpop.f32.mrb[0].mxu0
    %v5301 = vadd.f32 %v5002, %v5300
    %5302 = vmatprep.mubr.bf16.mxu0 0
    %5303 = vmatmul.mubr.bf16.gmra.mrb[0].mxu0 %v5242
    %v5304 = vpop.f32.mrb[0].mxu0
    %v5305 = vadd.f32 %v4998, %v5304
    %v5306 = vpop.f32.mrb[0].mxu0
    %v5307 = vadd.f32 %v5002, %v5306
    %v5308 = vpop.f32.mrb[0].mxu0
    %v5309 = vadd.f32 %v4998, %v5308
    %v5310 = vpop.f32.mrb[0].mxu0
    %v5311 = vadd.f32 %v5002, %v5310
    %5312 = vmatprep.mubr.bf16.mxu0 0
    %5313 = vmatmul.mubr.bf16.gmra.mrb[0].mxu0 %v5245
    %v5314 = vpop.f32.mrb[0].mxu0
    %v5315 = vadd.f32 %v4998, %v5314
    %v5316 = vpop.f32.mrb[0].mxu0
    %v5317 = vadd.f32 %v5002, %v5316
    %v5318 = vpop.f32.mrb[0].mxu0
    %v5319 = vadd.f32 %v4998, %v5318
    %v5320 = vpop.f32.mrb[0].mxu0
    %v5321 = vadd.f32 %v5002, %v5320
    %5322 = vmatprep.mubr.bf16.mxu0 0
    %5323 = vmatmul.mubr.bf16.gmra.mrb[0].mxu0 %v5248
    %v5324 = vpop.f32.mrb[0].mxu0
    %v5325 = vadd.f32 %v4998, %v5324
    %v5326 = vpop.f32.mrb[0].mxu0
    %v5327 = vadd.f32 %v5002, %v5326
    %v5328 = vpop.f32.mrb[0].mxu0
    %v5329 = vadd.f32 %v4998, %v5328
    %v5330 = vpop.f32.mrb[0].mxu0
    %v5331 = vadd.f32 %v5002, %v5330
    %5332 = vdwg.mxu0
    %5333 = vmatprep.subr.bf16.mxu0 %v5174
    %5334 = vmatpush1.bf16.msra.mxu0 %v5173
    %5335 = vmatprep.subr.bf16.mxu0 %v5190
    %5336 = vmatpush1.bf16.msra.mxu0 %v5189
    %5337 = vmatprep.subr.bf16.mxu0 0
    %5338 = vmatpush1.bf16.msra.mxu0 0
    %5339 = vmatprep.subr.bf16.mxu0 0
    %5340 = vmatpush1.bf16.msra.mxu0 0
    %5341 = vmatprep.subr.bf16.mxu0 0
    %5342 = vmatpush1.bf16.msra.mxu0 0
    %5343 = vmatprep.subr.bf16.mxu0 0
    %5344 = vmatpush1.bf16.msra.mxu0 0
    %5345 = vmatprep.subr.bf16.mxu0 0
    %5346 = vmatpush1.bf16.msra.mxu0 0
    %5347 = vmatprep.subr.bf16.mxu0 0
    %5348 = vmatpush1.bf16.msra.mxu0 0
    %5349 = vmatprep.subr.bf16.mxu0 0
    %5350 = vmatpush1.bf16.msra.mxu0 0
    %5351 = vmatprep.subr.bf16.mxu0 0
    %5352 = vmatpush1.bf16.msra.mxu0 0
    %5353 = vmatprep.subr.bf16.mxu0 0
    %5354 = vmatpush1.bf16.msra.mxu0 0
    %5355 = vmatprep.subr.bf16.mxu0 0
    %5356 = vmatpush1.bf16.msra.mxu0 0
    %5357 = vmatprep.subr.bf16.mxu0 0
    %5358 = vmatpush1.bf16.msra.mxu0 0
    %5359 = vmatprep.subr.bf16.mxu0 0
    %5360 = vmatpush1.bf16.msra.mxu0 0
    %5361 = vmatprep.subr.bf16.mxu0 0
    %5362 = vmatpush1.bf16.msra.mxu0 0
    %5363 = vmatprep.subr.bf16.mxu0 0
    %5364 = vmatpush1.bf16.msra.mxu0 0
    %5365 = vmatprep.mubr.bf16.mxu0 0
    %5366 = vmatmul.mubr.bf16.gmra.mrb[0].mxu0 %v5236
    %v5367 = vpop.f32.mrb[0].mxu0
    %v5368 = vadd.f32 %v5006, %v5367
    %v5369 = vpop.f32.mrb[0].mxu0
    %v5370 = vadd.f32 %v5010, %v5369
    %v5371 = vpop.f32.mrb[0].mxu0
    %v5372 = vadd.f32 %v5006, %v5371
    %v5373 = vpop.f32.mrb[0].mxu0
    %v5374 = vadd.f32 %v5010, %v5373
    %5375 = vmatprep.mubr.bf16.mxu0 0
    %5376 = vmatmul.mubr.bf16.gmra.mrb[0].mxu0 %v5239
    %v5377 = vpop.f32.mrb[0].mxu0
    %v5378 = vadd.f32 %v5006, %v5377
    %v5379 = vpop.f32.mrb[0].mxu0
    %v5380 = vadd.f32 %v5010, %v5379
    %v5381 = vpop.f32.mrb[0].mxu0
    %v5382 = vadd.f32 %v5006, %v5381
    %v5383 = vpop.f32.mrb[0].mxu0
    %v5384 = vadd.f32 %v5010, %v5383
    %5385 = vmatprep.mubr.bf16.mxu0 0
    %5386 = vmatmul.mubr.bf16.gmra.mrb[0].mxu0 %v5242
    %v5387 = vpop.f32.mrb[0].mxu0
    %v5388 = vadd.f32 %v5006, %v5387
    %v5389 = vpop.f32.mrb[0].mxu0
    %v5390 = vadd.f32 %v5010, %v5389
    %v5391 = vpop.f32.mrb[0].mxu0
    %v5392 = vadd.f32 %v5006, %v5391
    %v5393 = vpop.f32.mrb[0].mxu0
    %v5394 = vadd.f32 %v5010, %v5393
    %5395 = vmatprep.mubr.bf16.mxu0 0
    %5396 = vmatmul.mubr.bf16.gmra.mrb[0].mxu0 %v5245
    %v5397 = vpop.f32.mrb[0].mxu0
    %v5398 = vadd.f32 %v5006, %v5397
    %v5399 = vpop.f32.mrb[0].mxu0
    %v5400 = vadd.f32 %v5010, %v5399
    %v5401 = vpop.f32.mrb[0].mxu0
    %v5402 = vadd.f32 %v5006, %v5401
    %v5403 = vpop.f32.mrb[0].mxu0
    %v5404 = vadd.f32 %v5010, %v5403
    %5405 = vmatprep.mubr.bf16.mxu0 0
    %5406 = vmatmul.mubr.bf16.gmra.mrb[0].mxu0 %v5248
    %v5407 = vpop.f32.mrb[0].mxu0
    %v5408 = vadd.f32 %v5006, %v5407
    %v5409 = vpop.f32.mrb[0].mxu0
    %v5410 = vadd.f32 %v5010, %v5409
    %v5411 = vpop.f32.mrb[0].mxu0
    %v5412 = vadd.f32 %v5006, %v5411
    %v5413 = vpop.f32.mrb[0].mxu0
    %v5414 = vadd.f32 %v5010, %v5413
    %5415 = vdwg.mxu0
    %5416 = vmatprep.subr.bf16.mxu0 %v5176
    %5417 = vmatpush1.bf16.msra.mxu0 %v5175
    %5418 = vmatprep.subr.bf16.mxu0 %v5192
    %5419 = vmatpush1.bf16.msra.mxu0 %v5191
    %5420 = vmatprep.subr.bf16.mxu0 0
    %5421 = vmatpush1.bf16.msra.mxu0 0
    %5422 = vmatprep.subr.bf16.mxu0 0
    %5423 = vmatpush1.bf16.msra.mxu0 0
    %5424 = vmatprep.subr.bf16.mxu0 0
    %5425 = vmatpush1.bf16.msra.mxu0 0
    %5426 = vmatprep.subr.bf16.mxu0 0
    %5427 = vmatpush1.bf16.msra.mxu0 0
    %5428 = vmatprep.subr.bf16.mxu0 0
    %5429 = vmatpush1.bf16.msra.mxu0 0
    %5430 = vmatprep.subr.bf16.mxu0 0
    %5431 = vmatpush1.bf16.msra.mxu0 0
    %5432 = vmatprep.subr.bf16.mxu0 0
    %5433 = vmatpush1.bf16.msra.mxu0 0
    %5434 = vmatprep.subr.bf16.mxu0 0
    %5435 = vmatpush1.bf16.msra.mxu0 0
    %5436 = vmatprep.subr.bf16.mxu0 0
    %5437 = vmatpush1.bf16.msra.mxu0 0
    %5438 = vmatprep.subr.bf16.mxu0 0
    %5439 = vmatpush1.bf16.msra.mxu0 0
    %5440 = vmatprep.subr.bf16.mxu0 0
    %5441 = vmatpush1.bf16.msra.mxu0 0
    %5442 = vmatprep.subr.bf16.mxu0 0
    %5443 = vmatpush1.bf16.msra.mxu0 0
    %5444 = vmatprep.subr.bf16.mxu0 0
    %5445 = vmatpush1.bf16.msra.mxu0 0
    %5446 = vmatprep.subr.bf16.mxu0 0
    %5447 = vmatpush1.bf16.msra.mxu0 0
    %5448 = vmatprep.mubr.bf16.mxu0 0
    %5449 = vmatmul.mubr.bf16.gmra.mrb[0].mxu0 %v5236
    %v5450 = vpop.f32.mrb[0].mxu0
    %v5451 = vadd.f32 %v5014, %v5450
    %v5452 = vpop.f32.mrb[0].mxu0
    %v5453 = vadd.f32 %v5018, %v5452
    %v5454 = vpop.f32.mrb[0].mxu0
    %v5455 = vadd.f32 %v5014, %v5454
    %v5456 = vpop.f32.mrb[0].mxu0
    %v5457 = vadd.f32 %v5018, %v5456
    %5458 = vmatprep.mubr.bf16.mxu0 0
    %5459 = vmatmul.mubr.bf16.gmra.mrb[0].mxu0 %v5239
    %v5460 = vpop.f32.mrb[0].mxu0
    %v5461 = vadd.f32 %v5014, %v5460
    %v5462 = vpop.f32.mrb[0].mxu0
    %v5463 = vadd.f32 %v5018, %v5462
    %v5464 = vpop.f32.mrb[0].mxu0
    %v5465 = vadd.f32 %v5014, %v5464
    %v5466 = vpop.f32.mrb[0].mxu0
    %v5467 = vadd.f32 %v5018, %v5466
    %5468 = vmatprep.mubr.bf16.mxu0 0
    %5469 = vmatmul.mubr.bf16.gmra.mrb[0].mxu0 %v5242
    %v5470 = vpop.f32.mrb[0].mxu0
    %v5471 = vadd.f32 %v5014, %v5470
    %v5472 = vpop.f32.mrb[0].mxu0
    %v5473 = vadd.f32 %v5018, %v5472
    %v5474 = vpop.f32.mrb[0].mxu0
    %v5475 = vadd.f32 %v5014, %v5474
    %v5476 = vpop.f32.mrb[0].mxu0
    %v5477 = vadd.f32 %v5018, %v5476
    %5478 = vmatprep.mubr.bf16.mxu0 0
    %5479 = vmatmul.mubr.bf16.gmra.mrb[0].mxu0 %v5245
    %v5480 = vpop.f32.mrb[0].mxu0
    %v5481 = vadd.f32 %v5014, %v5480
    %v5482 = vpop.f32.mrb[0].mxu0
    %v5483 = vadd.f32 %v5018, %v5482
    %v5484 = vpop.f32.mrb[0].mxu0
    %v5485 = vadd.f32 %v5014, %v5484
    %v5486 = vpop.f32.mrb[0].mxu0
    %v5487 = vadd.f32 %v5018, %v5486
    %5488 = vmatprep.mubr.bf16.mxu0 0
    %5489 = vmatmul.mubr.bf16.gmra.mrb[0].mxu0 %v5248
    %v5490 = vpop.f32.mrb[0].mxu0
    %v5491 = vadd.f32 %v5014, %v5490
    %v5492 = vpop.f32.mrb[0].mxu0
    %v5493 = vadd.f32 %v5018, %v5492
    %v5494 = vpop.f32.mrb[0].mxu0
    %v5495 = vadd.f32 %v5014, %v5494
    %v5496 = vpop.f32.mrb[0].mxu0
    %v5497 = vadd.f32 %v5018, %v5496
    %5498 = vdwg.mxu0
    %5499 = vmatprep.subr.bf16.mxu0 %v5178
    %5500 = vmatpush1.bf16.msra.mxu0 %v5177
    %5501 = vmatprep.subr.bf16.mxu0 %v5194
    %5502 = vmatpush1.bf16.msra.mxu0 %v5193
    %5503 = vmatprep.subr.bf16.mxu0 0
    %5504 = vmatpush1.bf16.msra.mxu0 0
    %5505 = vmatprep.subr.bf16.mxu0 0
    %5506 = vmatpush1.bf16.msra.mxu0 0
    %5507 = vmatprep.subr.bf16.mxu0 0
    %5508 = vmatpush1.bf16.msra.mxu0 0
    %5509 = vmatprep.subr.bf16.mxu0 0
    %5510 = vmatpush1.bf16.msra.mxu0 0
    %5511 = vmatprep.subr.bf16.mxu0 0
    %5512 = vmatpush1.bf16.msra.mxu0 0
    %5513 = vmatprep.subr.bf16.mxu0 0
    %5514 = vmatpush1.bf16.msra.mxu0 0
    %5515 = vmatprep.subr.bf16.mxu0 0
    %5516 = vmatpush1.bf16.msra.mxu0 0
    %5517 = vmatprep.subr.bf16.mxu0 0
    %5518 = vmatpush1.bf16.msra.mxu0 0
    %5519 = vmatprep.subr.bf16.mxu0 0
    %5520 = vmatpush1.bf16.msra.mxu0 0
    %5521 = vmatprep.subr.bf16.mxu0 0
    %5522 = vmatpush1.bf16.msra.mxu0 0
    %5523 = vmatprep.subr.bf16.mxu0 0
    %5524 = vmatpush1.bf16.msra.mxu0 0
    %5525 = vmatprep.subr.bf16.mxu0 0
    %5526 = vmatpush1.bf16.msra.mxu0 0
    %5527 = vmatprep.subr.bf16.mxu0 0
    %5528 = vmatpush1.bf16.msra.mxu0 0
    %5529 = vmatprep.subr.bf16.mxu0 0
    %5530 = vmatpush1.bf16.msra.mxu0 0
    %5531 = vmatprep.mubr.bf16.mxu0 0
    %5532 = vmatmul.mubr.bf16.gmra.mrb[0].mxu0 %v5236
    %v5533 = vpop.f32.mrb[0].mxu0
    %v5534 = vadd.f32 %v5022, %v5533
    %v5535 = vpop.f32.mrb[0].mxu0
    %v5536 = vadd.f32 %v5026, %v5535
    %v5537 = vpop.f32.mrb[0].mxu0
    %v5538 = vadd.f32 %v5022, %v5537
    %v5539 = vpop.f32.mrb[0].mxu0
    %v5540 = vadd.f32 %v5026, %v5539
    %5541 = vmatprep.mubr.bf16.mxu0 0
    %5542 = vmatmul.mubr.bf16.gmra.mrb[0].mxu0 %v5239
    %v5543 = vpop.f32.mrb[0].mxu0
    %v5544 = vadd.f32 %v5022, %v5543
    %v5545 = vpop.f32.mrb[0].mxu0
    %v5546 = vadd.f32 %v5026, %v5545
    %v5547 = vpop.f32.mrb[0].mxu0
    %v5548 = vadd.f32 %v5022, %v5547
    %v5549 = vpop.f32.mrb[0].mxu0
    %v5550 = vadd.f32 %v5026, %v5549
    %5551 = vmatprep.mubr.bf16.mxu0 0
    %5552 = vmatmul.mubr.bf16.gmra.mrb[0].mxu0 %v5242
    %v5553 = vpop.f32.mrb[0].mxu0
    %v5554 = vadd.f32 %v5022, %v5553
    %v5555 = vpop.f32.mrb[0].mxu0
    %v5556 = vadd.f32 %v5026, %v5555
    %v5557 = vpop.f32.mrb[0].mxu0
    %v5558 = vadd.f32 %v5022, %v5557
    %v5559 = vpop.f32.mrb[0].mxu0
    %v5560 = vadd.f32 %v5026, %v5559
    %5561 = vmatprep.mubr.bf16.mxu0 0
    %5562 = vmatmul.mubr.bf16.gmra.mrb[0].mxu0 %v5245
    %v5563 = vpop.f32.mrb[0].mxu0
    %v5564 = vadd.f32 %v5022, %v5563
    %v5565 = vpop.f32.mrb[0].mxu0
    %v5566 = vadd.f32 %v5026, %v5565
    %v5567 = vpop.f32.mrb[0].mxu0
    %v5568 = vadd.f32 %v5022, %v5567
    %v5569 = vpop.f32.mrb[0].mxu0
    %v5570 = vadd.f32 %v5026, %v5569
    %5571 = vmatprep.mubr.bf16.mxu0 0
    %5572 = vmatmul.mubr.bf16.gmra.mrb[0].mxu0 %v5248
    %v5573 = vpop.f32.mrb[0].mxu0
    %v5574 = vadd.f32 %v5022, %v5573
    %v5575 = vpop.f32.mrb[0].mxu0
    %v5576 = vadd.f32 %v5026, %v5575
    %v5577 = vpop.f32.mrb[0].mxu0
    %v5578 = vadd.f32 %v5022, %v5577
    %v5579 = vpop.f32.mrb[0].mxu0
    %v5580 = vadd.f32 %v5026, %v5579
    %5581 = vdwg.mxu0
    %5582 = vmatprep.subr.bf16.mxu0 %v5180
    %5583 = vmatpush1.bf16.msra.mxu0 %v5179
    %5584 = vmatprep.subr.bf16.mxu0 %v5196
    %5585 = vmatpush1.bf16.msra.mxu0 %v5195
    %5586 = vmatprep.subr.bf16.mxu0 0
    %5587 = vmatpush1.bf16.msra.mxu0 0
    %5588 = vmatprep.subr.bf16.mxu0 0
    %5589 = vmatpush1.bf16.msra.mxu0 0
    %5590 = vmatprep.subr.bf16.mxu0 0
    %5591 = vmatpush1.bf16.msra.mxu0 0
    %5592 = vmatprep.subr.bf16.mxu0 0
    %5593 = vmatpush1.bf16.msra.mxu0 0
    %5594 = vmatprep.subr.bf16.mxu0 0
    %5595 = vmatpush1.bf16.msra.mxu0 0
    %5596 = vmatprep.subr.bf16.mxu0 0
    %5597 = vmatpush1.bf16.msra.mxu0 0
    %5598 = vmatprep.subr.bf16.mxu0 0
    %5599 = vmatpush1.bf16.msra.mxu0 0
    %5600 = vmatprep.subr.bf16.mxu0 0
    %5601 = vmatpush1.bf16.msra.mxu0 0
    %5602 = vmatprep.subr.bf16.mxu0 0
    %5603 = vmatpush1.bf16.msra.mxu0 0
    %5604 = vmatprep.subr.bf16.mxu0 0
    %5605 = vmatpush1.bf16.msra.mxu0 0
    %5606 = vmatprep.subr.bf16.mxu0 0
    %5607 = vmatpush1.bf16.msra.mxu0 0
    %5608 = vmatprep.subr.bf16.mxu0 0
    %5609 = vmatpush1.bf16.msra.mxu0 0
    %5610 = vmatprep.subr.bf16.mxu0 0
    %5611 = vmatpush1.bf16.msra.mxu0 0
    %5612 = vmatprep.subr.bf16.mxu0 0
    %5613 = vmatpush1.bf16.msra.mxu0 0
    %5614 = vmatprep.mubr.bf16.mxu0 0
    %5615 = vmatmul.mubr.bf16.gmra.mrb[0].mxu0 %v5236
    %v5616 = vpop.f32.mrb[0].mxu0
    %v5617 = vadd.f32 %v5030, %v5616
    %v5618 = vpop.f32.mrb[0].mxu0
    %v5619 = vadd.f32 %v5034, %v5618
    %v5620 = vpop.f32.mrb[0].mxu0
    %v5621 = vadd.f32 %v5030, %v5620
    %v5622 = vpop.f32.mrb[0].mxu0
    %v5623 = vadd.f32 %v5034, %v5622
    %5624 = vmatprep.mubr.bf16.mxu0 0
    %5625 = vmatmul.mubr.bf16.gmra.mrb[0].mxu0 %v5239
    %v5626 = vpop.f32.mrb[0].mxu0
    %v5627 = vadd.f32 %v5030, %v5626
    %v5628 = vpop.f32.mrb[0].mxu0
    %v5629 = vadd.f32 %v5034, %v5628
    %v5630 = vpop.f32.mrb[0].mxu0
    %v5631 = vadd.f32 %v5030, %v5630
    %v5632 = vpop.f32.mrb[0].mxu0
    %v5633 = vadd.f32 %v5034, %v5632
    %5634 = vmatprep.mubr.bf16.mxu0 0
    %5635 = vmatmul.mubr.bf16.gmra.mrb[0].mxu0 %v5242
    %v5636 = vpop.f32.mrb[0].mxu0
    %v5637 = vadd.f32 %v5030, %v5636
    %v5638 = vpop.f32.mrb[0].mxu0
    %v5639 = vadd.f32 %v5034, %v5638
    %v5640 = vpop.f32.mrb[0].mxu0
    %v5641 = vadd.f32 %v5030, %v5640
    %v5642 = vpop.f32.mrb[0].mxu0
    %v5643 = vadd.f32 %v5034, %v5642
    %5644 = vmatprep.mubr.bf16.mxu0 0
    %5645 = vmatmul.mubr.bf16.gmra.mrb[0].mxu0 %v5245
    %v5646 = vpop.f32.mrb[0].mxu0
    %v5647 = vadd.f32 %v5030, %v5646
    %v5648 = vpop.f32.mrb[0].mxu0
    %v5649 = vadd.f32 %v5034, %v5648
    %v5650 = vpop.f32.mrb[0].mxu0
    %v5651 = vadd.f32 %v5030, %v5650
    %v5652 = vpop.f32.mrb[0].mxu0
    %v5653 = vadd.f32 %v5034, %v5652
    %5654 = vmatprep.mubr.bf16.mxu0 0
    %5655 = vmatmul.mubr.bf16.gmra.mrb[0].mxu0 %v5248
    %v5656 = vpop.f32.mrb[0].mxu0
    %v5657 = vadd.f32 %v5030, %v5656
    %v5658 = vpop.f32.mrb[0].mxu0
    %v5659 = vadd.f32 %v5034, %v5658
    %v5660 = vpop.f32.mrb[0].mxu0
    %v5661 = vadd.f32 %v5030, %v5660
    %v5662 = vpop.f32.mrb[0].mxu0
    %v5663 = vadd.f32 %v5034, %v5662
    %5664 = vdwg.mxu0
    %5665 = vmatprep.subr.bf16.mxu0 %v5182
    %5666 = vmatpush1.bf16.msra.mxu0 %v5181
    %5667 = vmatprep.subr.bf16.mxu0 %v5198
    %5668 = vmatpush1.bf16.msra.mxu0 %v5197
    %5669 = vmatprep.subr.bf16.mxu0 0
    %5670 = vmatpush1.bf16.msra.mxu0 0
    %5671 = vmatprep.subr.bf16.mxu0 0
    %5672 = vmatpush1.bf16.msra.mxu0 0
    %5673 = vmatprep.subr.bf16.mxu0 0
    %5674 = vmatpush1.bf16.msra.mxu0 0
    %5675 = vmatprep.subr.bf16.mxu0 0
    %5676 = vmatpush1.bf16.msra.mxu0 0
    %5677 = vmatprep.subr.bf16.mxu0 0
    %5678 = vmatpush1.bf16.msra.mxu0 0
    %5679 = vmatprep.subr.bf16.mxu0 0
    %5680 = vmatpush1.bf16.msra.mxu0 0
    %5681 = vmatprep.subr.bf16.mxu0 0
    %5682 = vmatpush1.bf16.msra.mxu0 0
    %5683 = vmatprep.subr.bf16.mxu0 0
    %5684 = vmatpush1.bf16.msra.mxu0 0
    %5685 = vmatprep.subr.bf16.mxu0 0
    %5686 = vmatpush1.bf16.msra.mxu0 0
    %5687 = vmatprep.subr.bf16.mxu0 0
    %5688 = vmatpush1.bf16.msra.mxu0 0
    %5689 = vmatprep.subr.bf16.mxu0 0
    %5690 = vmatpush1.bf16.msra.mxu0 0
    %5691 = vmatprep.subr.bf16.mxu0 0
    %5692 = vmatpush1.bf16.msra.mxu0 0
    %5693 = vmatprep.subr.bf16.mxu0 0
    %5694 = vmatpush1.bf16.msra.mxu0 0
    %5695 = vmatprep.subr.bf16.mxu0 0
    %5696 = vmatpush1.bf16.msra.mxu0 0
    %5697 = vmatprep.mubr.bf16.mxu0 0
    %5698 = vmatmul.mubr.bf16.gmra.mrb[0].mxu0 %v5236
    %v5699 = vpop.f32.mrb[0].mxu0
    %v5700 = vadd.f32 %v5038, %v5699
    %v5701 = vpop.f32.mrb[0].mxu0
    %v5702 = vadd.f32 %v5042, %v5701
    %v5703 = vpop.f32.mrb[0].mxu0
    %v5704 = vadd.f32 %v5038, %v5703
    %v5705 = vpop.f32.mrb[0].mxu0
    %v5706 = vadd.f32 %v5042, %v5705
    %5707 = vmatprep.mubr.bf16.mxu0 0
    %5708 = vmatmul.mubr.bf16.gmra.mrb[0].mxu0 %v5239
    %v5709 = vpop.f32.mrb[0].mxu0
    %v5710 = vadd.f32 %v5038, %v5709
    %v5711 = vpop.f32.mrb[0].mxu0
    %v5712 = vadd.f32 %v5042, %v5711
    %v5713 = vpop.f32.mrb[0].mxu0
    %v5714 = vadd.f32 %v5038, %v5713
    %v5715 = vpop.f32.mrb[0].mxu0
    %v5716 = vadd.f32 %v5042, %v5715
    %5717 = vmatprep.mubr.bf16.mxu0 0
    %5718 = vmatmul.mubr.bf16.gmra.mrb[0].mxu0 %v5242
    %v5719 = vpop.f32.mrb[0].mxu0
    %v5720 = vadd.f32 %v5038, %v5719
    %v5721 = vpop.f32.mrb[0].mxu0
    %v5722 = vadd.f32 %v5042, %v5721
    %v5723 = vpop.f32.mrb[0].mxu0
    %v5724 = vadd.f32 %v5038, %v5723
    %v5725 = vpop.f32.mrb[0].mxu0
    %v5726 = vadd.f32 %v5042, %v5725
    %5727 = vmatprep.mubr.bf16.mxu0 0
    %5728 = vmatmul.mubr.bf16.gmra.mrb[0].mxu0 %v5245
    %v5729 = vpop.f32.mrb[0].mxu0
    %v5730 = vadd.f32 %v5038, %v5729
    %v5731 = vpop.f32.mrb[0].mxu0
    %v5732 = vadd.f32 %v5042, %v5731
    %v5733 = vpop.f32.mrb[0].mxu0
    %v5734 = vadd.f32 %v5038, %v5733
    %v5735 = vpop.f32.mrb[0].mxu0
    %v5736 = vadd.f32 %v5042, %v5735
    %5737 = vmatprep.mubr.bf16.mxu0 0
    %5738 = vmatmul.mubr.bf16.gmra.mrb[0].mxu0 %v5248
    %v5739 = vpop.f32.mrb[0].mxu0
    %v5740 = vadd.f32 %v5038, %v5739
    %v5741 = vpop.f32.mrb[0].mxu0
    %v5742 = vadd.f32 %v5042, %v5741
    %v5743 = vpop.f32.mrb[0].mxu0
    %v5744 = vadd.f32 %v5038, %v5743
    %v5745 = vpop.f32.mrb[0].mxu0
    %v5746 = vadd.f32 %v5042, %v5745
    %5747 = vdwg.mxu0
    %5748 = vmatprep.subr.bf16.mxu0 %v5184
    %5749 = vmatpush1.bf16.msra.mxu0 %v5183
    %5750 = vmatprep.subr.bf16.mxu0 %v5200
    %5751 = vmatpush1.bf16.msra.mxu0 %v5199
    %5752 = vmatprep.subr.bf16.mxu0 0
    %5753 = vmatpush1.bf16.msra.mxu0 0
    %5754 = vmatprep.subr.bf16.mxu0 0
    %5755 = vmatpush1.bf16.msra.mxu0 0
    %5756 = vmatprep.subr.bf16.mxu0 0
    %5757 = vmatpush1.bf16.msra.mxu0 0
    %5758 = vmatprep.subr.bf16.mxu0 0
    %5759 = vmatpush1.bf16.msra.mxu0 0
    %5760 = vmatprep.subr.bf16.mxu0 0
    %5761 = vmatpush1.bf16.msra.mxu0 0
    %5762 = vmatprep.subr.bf16.mxu0 0
    %5763 = vmatpush1.bf16.msra.mxu0 0
    %5764 = vmatprep.subr.bf16.mxu0 0
    %5765 = vmatpush1.bf16.msra.mxu0 0
    %5766 = vmatprep.subr.bf16.mxu0 0
    %5767 = vmatpush1.bf16.msra.mxu0 0
    %5768 = vmatprep.subr.bf16.mxu0 0
    %5769 = vmatpush1.bf16.msra.mxu0 0
    %5770 = vmatprep.subr.bf16.mxu0 0
    %5771 = vmatpush1.bf16.msra.mxu0 0
    %5772 = vmatprep.subr.bf16.mxu0 0
    %5773 = vmatpush1.bf16.msra.mxu0 0
    %5774 = vmatprep.subr.bf16.mxu0 0
    %5775 = vmatpush1.bf16.msra.mxu0 0
    %5776 = vmatprep.subr.bf16.mxu0 0
    %5777 = vmatpush1.bf16.msra.mxu0 0
    %5778 = vmatprep.subr.bf16.mxu0 0
    %5779 = vmatpush1.bf16.msra.mxu0 0
    %5780 = vmatprep.mubr.bf16.mxu0 0
    %5781 = vmatmul.mubr.bf16.gmra.mrb[0].mxu0 %v5236
    %v5782 = vpop.f32.mrb[0].mxu0
    %v5783 = vadd.f32 %v5046, %v5782
    %v5784 = vpop.f32.mrb[0].mxu0
    %v5785 = vadd.f32 %v5050, %v5784
    %v5786 = vpop.f32.mrb[0].mxu0
    %v5787 = vadd.f32 %v5046, %v5786
    %v5788 = vpop.f32.mrb[0].mxu0
    %v5789 = vadd.f32 %v5050, %v5788
    %5790 = vmatprep.mubr.bf16.mxu0 0
    %5791 = vmatmul.mubr.bf16.gmra.mrb[0].mxu0 %v5239
    %v5792 = vpop.f32.mrb[0].mxu0
    %v5793 = vadd.f32 %v5046, %v5792
    %v5794 = vpop.f32.mrb[0].mxu0
    %v5795 = vadd.f32 %v5050, %v5794
    %v5796 = vpop.f32.mrb[0].mxu0
    %v5797 = vadd.f32 %v5046, %v5796
    %v5798 = vpop.f32.mrb[0].mxu0
    %v5799 = vadd.f32 %v5050, %v5798
    %5800 = vmatprep.mubr.bf16.mxu0 0
    %5801 = vmatmul.mubr.bf16.gmra.mrb[0].mxu0 %v5242
    %v5802 = vpop.f32.mrb[0].mxu0
    %v5803 = vadd.f32 %v5046, %v5802
    %v5804 = vpop.f32.mrb[0].mxu0
    %v5805 = vadd.f32 %v5050, %v5804
    %v5806 = vpop.f32.mrb[0].mxu0
    %v5807 = vadd.f32 %v5046, %v5806
    %v5808 = vpop.f32.mrb[0].mxu0
    %v5809 = vadd.f32 %v5050, %v5808
    %5810 = vmatprep.mubr.bf16.mxu0 0
    %5811 = vmatmul.mubr.bf16.gmra.mrb[0].mxu0 %v5245
    %v5812 = vpop.f32.mrb[0].mxu0
    %v5813 = vadd.f32 %v5046, %v5812
    %v5814 = vpop.f32.mrb[0].mxu0
    %v5815 = vadd.f32 %v5050, %v5814
    %v5816 = vpop.f32.mrb[0].mxu0
    %v5817 = vadd.f32 %v5046, %v5816
    %v5818 = vpop.f32.mrb[0].mxu0
    %v5819 = vadd.f32 %v5050, %v5818
    %5820 = vmatprep.mubr.bf16.mxu0 0
    %5821 = vmatmul.mubr.bf16.gmra.mrb[0].mxu0 %v5248
    %v5822 = vpop.f32.mrb[0].mxu0
    %v5823 = vadd.f32 %v5046, %v5822
    %v5824 = vpop.f32.mrb[0].mxu0
    %v5825 = vadd.f32 %v5050, %v5824
    %v5826 = vpop.f32.mrb[0].mxu0
    %v5827 = vadd.f32 %v5046, %v5826
    %v5828 = vpop.f32.mrb[0].mxu0
    %v5829 = vadd.f32 %v5050, %v5828
    %5830 = vdwg.mxu0
    %5831 = vmatprep.subr.bf16.mxu0 %v5186
    %5832 = vmatpush1.bf16.msra.mxu0 %v5185
    %5833 = vmatprep.subr.bf16.mxu0 %v5202
    %5834 = vmatpush1.bf16.msra.mxu0 %v5201
    %5835 = vmatprep.subr.bf16.mxu0 0
    %5836 = vmatpush1.bf16.msra.mxu0 0
    %5837 = vmatprep.subr.bf16.mxu0 0
    %5838 = vmatpush1.bf16.msra.mxu0 0
    %5839 = vmatprep.subr.bf16.mxu0 0
    %5840 = vmatpush1.bf16.msra.mxu0 0
    %5841 = vmatprep.subr.bf16.mxu0 0
    %5842 = vmatpush1.bf16.msra.mxu0 0
    %5843 = vmatprep.subr.bf16.mxu0 0
    %5844 = vmatpush1.bf16.msra.mxu0 0
    %5845 = vmatprep.subr.bf16.mxu0 0
    %5846 = vmatpush1.bf16.msra.mxu0 0
    %5847 = vmatprep.subr.bf16.mxu0 0
    %5848 = vmatpush1.bf16.msra.mxu0 0
    %5849 = vmatprep.subr.bf16.mxu0 0
    %5850 = vmatpush1.bf16.msra.mxu0 0
    %5851 = vmatprep.subr.bf16.mxu0 0
    %5852 = vmatpush1.bf16.msra.mxu0 0
    %5853 = vmatprep.subr.bf16.mxu0 0
    %5854 = vmatpush1.bf16.msra.mxu0 0
    %5855 = vmatprep.subr.bf16.mxu0 0
    %5856 = vmatpush1.bf16.msra.mxu0 0
    %5857 = vmatprep.subr.bf16.mxu0 0
    %5858 = vmatpush1.bf16.msra.mxu0 0
    %5859 = vmatprep.subr.bf16.mxu0 0
    %5860 = vmatpush1.bf16.msra.mxu0 0
    %5861 = vmatprep.subr.bf16.mxu0 0
    %5862 = vmatpush1.bf16.msra.mxu0 0
    %5863 = vmatprep.mubr.bf16.mxu0 0
    %5864 = vmatmul.mubr.bf16.gmra.mrb[0].mxu0 %v5236
    %v5865 = vpop.f32.mrb[0].mxu0
    %v5866 = vadd.f32 %v5054, %v5865
    %v5867 = vpop.f32.mrb[0].mxu0
    %v5868 = vadd.f32 %v5058, %v5867
    %v5869 = vpop.f32.mrb[0].mxu0
    %v5870 = vadd.f32 %v5054, %v5869
    %v5871 = vpop.f32.mrb[0].mxu0
    %v5872 = vadd.f32 %v5058, %v5871
    %5873 = vmatprep.mubr.bf16.mxu0 0
    %5874 = vmatmul.mubr.bf16.gmra.mrb[0].mxu0 %v5239
    %v5875 = vpop.f32.mrb[0].mxu0
    %v5876 = vadd.f32 %v5054, %v5875
    %v5877 = vpop.f32.mrb[0].mxu0
    %v5878 = vadd.f32 %v5058, %v5877
    %v5879 = vpop.f32.mrb[0].mxu0
    %v5880 = vadd.f32 %v5054, %v5879
    %v5881 = vpop.f32.mrb[0].mxu0
    %v5882 = vadd.f32 %v5058, %v5881
    %5883 = vmatprep.mubr.bf16.mxu0 0
    %5884 = vmatmul.mubr.bf16.gmra.mrb[0].mxu0 %v5242
    %v5885 = vpop.f32.mrb[0].mxu0
    %v5886 = vadd.f32 %v5054, %v5885
    %v5887 = vpop.f32.mrb[0].mxu0
    %v5888 = vadd.f32 %v5058, %v5887
    %v5889 = vpop.f32.mrb[0].mxu0
    %v5890 = vadd.f32 %v5054, %v5889
    %v5891 = vpop.f32.mrb[0].mxu0
    %v5892 = vadd.f32 %v5058, %v5891
    %5893 = vmatprep.mubr.bf16.mxu0 0
    %5894 = vmatmul.mubr.bf16.gmra.mrb[0].mxu0 %v5245
    %v5895 = vpop.f32.mrb[0].mxu0
    %v5896 = vadd.f32 %v5054, %v5895
    %v5897 = vpop.f32.mrb[0].mxu0
    %v5898 = vadd.f32 %v5058, %v5897
    %v5899 = vpop.f32.mrb[0].mxu0
    %v5900 = vadd.f32 %v5054, %v5899
    %v5901 = vpop.f32.mrb[0].mxu0
    %v5902 = vadd.f32 %v5058, %v5901
    %5903 = vmatprep.mubr.bf16.mxu0 0
    %5904 = vmatmul.mubr.bf16.gmra.mrb[0].mxu0 %v5248
    %v5905 = vpop.f32.mrb[0].mxu0
    %v5906 = vadd.f32 %v5054, %v5905
    %v5907 = vpop.f32.mrb[0].mxu0
    %v5908 = vadd.f32 %v5058, %v5907
    %v5909 = vpop.f32.mrb[0].mxu0
    %v5910 = vadd.f32 %v5054, %v5909
    %v5911 = vpop.f32.mrb[0].mxu0
    %v5912 = vadd.f32 %v5058, %v5911
    %5913 = vdwg.mxu0
    %v5914 = vmax.f32 %v5285, 0.0
    %v5915 = vmax.f32 %v5287, 0.0
    %v5916 = vmax.f32 %v5368, 0.0
    %v5917 = vmax.f32 %v5370, 0.0
    %v5918 = vmax.f32 %v5451, 0.0
    %v5919 = vmax.f32 %v5453, 0.0
    %v5920 = vmax.f32 %v5534, 0.0
    %v5921 = vmax.f32 %v5536, 0.0
    %v5922 = vmax.f32 %v5617, 0.0
    %v5923 = vmax.f32 %v5619, 0.0
    %v5924 = vmax.f32 %v5700, 0.0
    %v5925 = vmax.f32 %v5702, 0.0
    %v5926 = vmax.f32 %v5783, 0.0
    %v5927 = vmax.f32 %v5785, 0.0
    %v5928 = vmax.f32 %v5866, 0.0
    %v5929 = vmax.f32 %v5868, 0.0
    %v5930 = vmax.f32 %v5289, 0.0
    %v5931 = vmax.f32 %v5291, 0.0
    %v5932 = vmax.f32 %v5372, 0.0
    %v5933 = vmax.f32 %v5374, 0.0
    %v5934 = vmax.f32 %v5455, 0.0
    %v5935 = vmax.f32 %v5457, 0.0
    %v5936 = vmax.f32 %v5538, 0.0
    %v5937 = vmax.f32 %v5540, 0.0
    %v5938 = vmax.f32 %v5621, 0.0
    %v5939 = vmax.f32 %v5623, 0.0
    %v5940 = vmax.f32 %v5704, 0.0
    %v5941 = vmax.f32 %v5706, 0.0
    %v5942 = vmax.f32 %v5787, 0.0
    %v5943 = vmax.f32 %v5789, 0.0
    %v5944 = vmax.f32 %v5870, 0.0
    %v5945 = vmax.f32 %v5872, 0.0
    %v5946 = vmax.f32 %v5295, 0.0
    %v5947 = vmax.f32 %v5297, 0.0
    %v5948 = vmax.f32 %v5378, 0.0
    %v5949 = vmax.f32 %v5380, 0.0
    %v5950 = vmax.f32 %v5461, 0.0
    %v5951 = vmax.f32 %v5463, 0.0
    %v5952 = vmax.f32 %v5544, 0.0
    %v5953 = vmax.f32 %v5546, 0.0
    %v5954 = vmax.f32 %v5627, 0.0
    %v5955 = vmax.f32 %v5629, 0.0
    %v5956 = vmax.f32 %v5710, 0.0
    %v5957 = vmax.f32 %v5712, 0.0
    %v5958 = vmax.f32 %v5793, 0.0
    %v5959 = vmax.f32 %v5795, 0.0
    %v5960 = vmax.f32 %v5876, 0.0
    %v5961 = vmax.f32 %v5878, 0.0
    %v5962 = vmax.f32 %v5299, 0.0
    %v5963 = vmax.f32 %v5301, 0.0
    %v5964 = vmax.f32 %v5382, 0.0
    %v5965 = vmax.f32 %v5384, 0.0
    %v5966 = vmax.f32 %v5465, 0.0
    %v5967 = vmax.f32 %v5467, 0.0
    %v5968 = vmax.f32 %v5548, 0.0
    %v5969 = vmax.f32 %v5550, 0.0
    %v5970 = vmax.f32 %v5631, 0.0
    %v5971 = vmax.f32 %v5633, 0.0
    %v5972 = vmax.f32 %v5714, 0.0
    %v5973 = vmax.f32 %v5716, 0.0
    %v5974 = vmax.f32 %v5797, 0.0
    %v5975 = vmax.f32 %v5799, 0.0
    %v5976 = vmax.f32 %v5880, 0.0
    %v5977 = vmax.f32 %v5882, 0.0
    %v5978 = vmax.f32 %v5305, 0.0
    %v5979 = vmax.f32 %v5307, 0.0
    %v5980 = vmax.f32 %v5388, 0.0
    %v5981 = vmax.f32 %v5390, 0.0
    %v5982 = vmax.f32 %v5471, 0.0
    %v5983 = vmax.f32 %v5473, 0.0
    %v5984 = vmax.f32 %v5554, 0.0
    %v5985 = vmax.f32 %v5556, 0.0
    %v5986 = vmax.f32 %v5637, 0.0
    %v5987 = vmax.f32 %v5639, 0.0
    %v5988 = vmax.f32 %v5720, 0.0
    %v5989 = vmax.f32 %v5722, 0.0
    %v5990 = vmax.f32 %v5803, 0.0
    %v5991 = vmax.f32 %v5805, 0.0
    %v5992 = vmax.f32 %v5886, 0.0
    %v5993 = vmax.f32 %v5888, 0.0
    %v5994 = vmax.f32 %v5309, 0.0
    %v5995 = vmax.f32 %v5311, 0.0
    %v5996 = vmax.f32 %v5392, 0.0
    %v5997 = vmax.f32 %v5394, 0.0
    %v5998 = vmax.f32 %v5475, 0.0
    %v5999 = vmax.f32 %v5477, 0.0
    %v6000 = vmax.f32 %v5558, 0.0
    %v6001 = vmax.f32 %v5560, 0.0
    %v6002 = vmax.f32 %v5641, 0.0
    %v6003 = vmax.f32 %v5643, 0.0
    %v6004 = vmax.f32 %v5724, 0.0
    %v6005 = vmax.f32 %v5726, 0.0
    %v6006 = vmax.f32 %v5807, 0.0
    %v6007 = vmax.f32 %v5809, 0.0
    %v6008 = vmax.f32 %v5890, 0.0
    %v6009 = vmax.f32 %v5892, 0.0
    %v6010 = vmax.f32 %v5315, 0.0
    %v6011 = vmax.f32 %v5317, 0.0
    %v6012 = vmax.f32 %v5398, 0.0
    %v6013 = vmax.f32 %v5400, 0.0
    %v6014 = vmax.f32 %v5481, 0.0
    %v6015 = vmax.f32 %v5483, 0.0
    %v6016 = vmax.f32 %v5564, 0.0
    %v6017 = vmax.f32 %v5566, 0.0
    %v6018 = vmax.f32 %v5647, 0.0
    %v6019 = vmax.f32 %v5649, 0.0
    %v6020 = vmax.f32 %v5730, 0.0
    %v6021 = vmax.f32 %v5732, 0.0
    %v6022 = vmax.f32 %v5813, 0.0
    %v6023 = vmax.f32 %v5815, 0.0
    %v6024 = vmax.f32 %v5896, 0.0
    %v6025 = vmax.f32 %v5898, 0.0
    %v6026 = vmax.f32 %v5319, 0.0
    %v6027 = vmax.f32 %v5321, 0.0
    %v6028 = vmax.f32 %v5402, 0.0
    %v6029 = vmax.f32 %v5404, 0.0
    %v6030 = vmax.f32 %v5485, 0.0
    %v6031 = vmax.f32 %v5487, 0.0
    %v6032 = vmax.f32 %v5568, 0.0
    %v6033 = vmax.f32 %v5570, 0.0
    %v6034 = vmax.f32 %v5651, 0.0
    %v6035 = vmax.f32 %v5653, 0.0
    %v6036 = vmax.f32 %v5734, 0.0
    %v6037 = vmax.f32 %v5736, 0.0
    %v6038 = vmax.f32 %v5817, 0.0
    %v6039 = vmax.f32 %v5819, 0.0
    %v6040 = vmax.f32 %v5900, 0.0
    %v6041 = vmax.f32 %v5902, 0.0
    %v6042 = vmax.f32 %v5325, 0.0
    %v6043 = vmax.f32 %v5327, 0.0
    %v6044 = vmax.f32 %v5408, 0.0
    %v6045 = vmax.f32 %v5410, 0.0
    %v6046 = vmax.f32 %v5491, 0.0
    %v6047 = vmax.f32 %v5493, 0.0
    %v6048 = vmax.f32 %v5574, 0.0
    %v6049 = vmax.f32 %v5576, 0.0
    %v6050 = vmax.f32 %v5657, 0.0
    %v6051 = vmax.f32 %v5659, 0.0
    %v6052 = vmax.f32 %v5740, 0.0
    %v6053 = vmax.f32 %v5742, 0.0
    %v6054 = vmax.f32 %v5823, 0.0
    %v6055 = vmax.f32 %v5825, 0.0
    %v6056 = vmax.f32 %v5906, 0.0
    %v6057 = vmax.f32 %v5908, 0.0
    %v6058 = vmax.f32 %v5329, 0.0
    %v6059 = vmax.f32 %v5331, 0.0
    %v6060 = vmax.f32 %v5412, 0.0
    %v6061 = vmax.f32 %v5414, 0.0
    %v6062 = vmax.f32 %v5495, 0.0
    %v6063 = vmax.f32 %v5497, 0.0
    %v6064 = vmax.f32 %v5578, 0.0
    %v6065 = vmax.f32 %v5580, 0.0
    %v6066 = vmax.f32 %v5661, 0.0
    %v6067 = vmax.f32 %v5663, 0.0
    %v6068 = vmax.f32 %v5744, 0.0
    %v6069 = vmax.f32 %v5746, 0.0
    %v6070 = vmax.f32 %v5827, 0.0
    %v6071 = vmax.f32 %v5829, 0.0
    %v6072 = vmax.f32 %v5910, 0.0
    %v6073 = vmax.f32 %v5912, 0.0
    %v6074 = vpack.c.bf16 %v5930, %v5914
    %v6075 = vpack.c.bf16 %v5931, %v5915
    %v6076 = vpack.c.bf16 %v5932, %v5916
    %v6077 = vpack.c.bf16 %v5933, %v5917
    %v6078 = vpack.c.bf16 %v5934, %v5918
    %v6079 = vpack.c.bf16 %v5935, %v5919
    %v6080 = vpack.c.bf16 %v5936, %v5920
    %v6081 = vpack.c.bf16 %v5937, %v5921
    %v6082 = vpack.c.bf16 %v5938, %v5922
    %v6083 = vpack.c.bf16 %v5939, %v5923
    %v6084 = vpack.c.bf16 %v5940, %v5924
    %v6085 = vpack.c.bf16 %v5941, %v5925
    %v6086 = vpack.c.bf16 %v5942, %v5926
    %v6087 = vpack.c.bf16 %v5943, %v5927
    %v6088 = vpack.c.bf16 %v5944, %v5928
    %v6089 = vpack.c.bf16 %v5945, %v5929
    %v6090 = vpack.c.bf16 %v5962, %v5946
    %v6091 = vpack.c.bf16 %v5963, %v5947
    %v6092 = vpack.c.bf16 %v5964, %v5948
    %v6093 = vpack.c.bf16 %v5965, %v5949
    %v6094 = vpack.c.bf16 %v5966, %v5950
    %v6095 = vpack.c.bf16 %v5967, %v5951
    %v6096 = vpack.c.bf16 %v5968, %v5952
    %v6097 = vpack.c.bf16 %v5969, %v5953
    %v6098 = vpack.c.bf16 %v5970, %v5954
    %v6099 = vpack.c.bf16 %v5971, %v5955
    %v6100 = vpack.c.bf16 %v5972, %v5956
    %v6101 = vpack.c.bf16 %v5973, %v5957
    %v6102 = vpack.c.bf16 %v5974, %v5958
    %v6103 = vpack.c.bf16 %v5975, %v5959
    %v6104 = vpack.c.bf16 %v5976, %v5960
    %v6105 = vpack.c.bf16 %v5977, %v5961
    %v6106 = vpack.c.bf16 %v5994, %v5978
    %v6107 = vpack.c.bf16 %v5995, %v5979
    %v6108 = vpack.c.bf16 %v5996, %v5980
    %v6109 = vpack.c.bf16 %v5997, %v5981
    %v6110 = vpack.c.bf16 %v5998, %v5982
    %v6111 = vpack.c.bf16 %v5999, %v5983
    %v6112 = vpack.c.bf16 %v6000, %v5984
    %v6113 = vpack.c.bf16 %v6001, %v5985
    %v6114 = vpack.c.bf16 %v6002, %v5986
    %v6115 = vpack.c.bf16 %v6003, %v5987
    %v6116 = vpack.c.bf16 %v6004, %v5988
    %v6117 = vpack.c.bf16 %v6005, %v5989
    %v6118 = vpack.c.bf16 %v6006, %v5990
    %v6119 = vpack.c.bf16 %v6007, %v5991
    %v6120 = vpack.c.bf16 %v6008, %v5992
    %v6121 = vpack.c.bf16 %v6009, %v5993
    %v6122 = vpack.c.bf16 %v6026, %v6010
    %v6123 = vpack.c.bf16 %v6027, %v6011
    %v6124 = vpack.c.bf16 %v6028, %v6012
    %v6125 = vpack.c.bf16 %v6029, %v6013
    %v6126 = vpack.c.bf16 %v6030, %v6014
    %v6127 = vpack.c.bf16 %v6031, %v6015
    %v6128 = vpack.c.bf16 %v6032, %v6016
    %v6129 = vpack.c.bf16 %v6033, %v6017
    %v6130 = vpack.c.bf16 %v6034, %v6018
    %v6131 = vpack.c.bf16 %v6035, %v6019
    %v6132 = vpack.c.bf16 %v6036, %v6020
    %v6133 = vpack.c.bf16 %v6037, %v6021
    %v6134 = vpack.c.bf16 %v6038, %v6022
    %v6135 = vpack.c.bf16 %v6039, %v6023
    %v6136 = vpack.c.bf16 %v6040, %v6024
    %v6137 = vpack.c.bf16 %v6041, %v6025
    %v6138 = vpack.c.bf16 %v6058, %v6042
    %v6139 = vpack.c.bf16 %v6059, %v6043
    %v6140 = vpack.c.bf16 %v6060, %v6044
    %v6141 = vpack.c.bf16 %v6061, %v6045
    %v6142 = vpack.c.bf16 %v6062, %v6046
    %v6143 = vpack.c.bf16 %v6063, %v6047
    %v6144 = vpack.c.bf16 %v6064, %v6048
    %v6145 = vpack.c.bf16 %v6065, %v6049
    %v6146 = vpack.c.bf16 %v6066, %v6050
    %v6147 = vpack.c.bf16 %v6067, %v6051
    %v6148 = vpack.c.bf16 %v6068, %v6052
    %v6149 = vpack.c.bf16 %v6069, %v6053
    %v6150 = vpack.c.bf16 %v6070, %v6054
    %v6151 = vpack.c.bf16 %v6071, %v6055
    %v6152 = vpack.c.bf16 %v6072, %v6056
    %v6153 = vpack.c.bf16 %v6073, %v6057
    %v6154 = vld [vmem:[%s75] sm:$0xf]
    %v6155 = vld [vmem:[%s75 + $0x4] sm:$0xf]
    %v6156 = vld [vmem:[%s75 + $0x8] sm:$0xf]
    %v6157 = vld [vmem:[%s75 + $0xc] sm:$0xf]
    %v6158 = vld [vmem:[%s75 + $0x10] sm:$0xf]
    %v6159 = vld [vmem:[%s75 + $0x14] sm:$0xf]
    %v6160 = vld [vmem:[%s75 + $0x18] sm:$0xf]
    %v6161 = vld [vmem:[%s75 + $0x1c] sm:$0xf]
    %v6162 = vld [vmem:[%s75 + $0x20] sm:$0xf]
    %v6163 = vld [vmem:[%s75 + $0x24] sm:$0xf]
    %v6164 = vld [vmem:[%s75 + $0x28] sm:$0xf]
    %v6165 = vld [vmem:[%s75 + $0x2c] sm:$0xf]
    %v6166 = vld [vmem:[%s75 + $0x30] sm:$0xf]
    %v6167 = vld [vmem:[%s75 + $0x34] sm:$0xf]
    %v6168 = vld [vmem:[%s75 + $0x38] sm:$0xf]
    %v6169 = vld [vmem:[%s75 + $0x3c] sm:$0xf]
    %v6170 = vld [vmem:[%s75 + $0x40] sm:$0xf]
    %v6171 = vld [vmem:[%s75 + $0x44] sm:$0xf]
    %v6172 = vld [vmem:[%s75 + $0x48] sm:$0xf]
    %v6173 = vld [vmem:[%s75 + $0x4c] sm:$0xf]
    %v6174 = vld [vmem:[%s75 + $0x50] sm:$0xf]
    %v6175 = vld [vmem:[%s75 + $0x54] sm:$0xf]
    %v6176 = vld [vmem:[%s75 + $0x58] sm:$0xf]
    %v6177 = vld [vmem:[%s75 + $0x5c] sm:$0xf]
    %v6178 = vld [vmem:[%s75 + $0x60] sm:$0xf]
    %v6179 = vld [vmem:[%s75 + $0x64] sm:$0xf]
    %v6180 = vld [vmem:[%s75 + $0x68] sm:$0xf]
    %v6181 = vld [vmem:[%s75 + $0x6c] sm:$0xf]
    %v6182 = vld [vmem:[%s75 + $0x70] sm:$0xf]
    %v6183 = vld [vmem:[%s75 + $0x74] sm:$0xf]
    %v6184 = vld [vmem:[%s75 + $0x78] sm:$0xf]
    %v6185 = vld [vmem:[%s75 + $0x7c] sm:$0xf]
    %v6186 = vld [vmem:[%s75 + $0x80] sm:$0xf]
    %v6187 = vld [vmem:[%s75 + $0x84] sm:$0xf]
    %v6188 = vld [vmem:[%s75 + $0x88] sm:$0xf]
    %v6189 = vld [vmem:[%s75 + $0x8c] sm:$0xf]
    %v6190 = vld [vmem:[%s75 + $0x90] sm:$0xf]
    %v6191 = vld [vmem:[%s75 + $0x94] sm:$0xf]
    %v6192 = vld [vmem:[%s75 + $0x98] sm:$0xf]
    %v6193 = vld [vmem:[%s75 + $0x9c] sm:$0xf]
    %v6194 = vld [vmem:[%s75 + $0xa0] sm:$0xf]
    %v6195 = vld [vmem:[%s75 + $0xa4] sm:$0xf]
    %v6196 = vld [vmem:[%s75 + $0xa8] sm:$0xf]
    %v6197 = vld [vmem:[%s75 + $0xac] sm:$0xf]
    %v6198 = vld [vmem:[%s75 + $0xb0] sm:$0xf]
    %v6199 = vld [vmem:[%s75 + $0xb4] sm:$0xf]
    %v6200 = vld [vmem:[%s75 + $0xb8] sm:$0xf]
    %v6201 = vld [vmem:[%s75 + $0xbc] sm:$0xf]
    %v6202 = vld [vmem:[%s75 + $0xc0] sm:$0xf]
    %v6203 = vld [vmem:[%s75 + $0xc4] sm:$0xf]
    %v6204 = vld [vmem:[%s75 + $0xc8] sm:$0xf]
    %v6205 = vld [vmem:[%s75 + $0xcc] sm:$0xf]
    %v6206 = vld [vmem:[%s75 + $0xd0] sm:$0xf]
    %v6207 = vld [vmem:[%s75 + $0xd4] sm:$0xf]
    %v6208 = vld [vmem:[%s75 + $0xd8] sm:$0xf]
    %v6209 = vld [vmem:[%s75 + $0xdc] sm:$0xf]
    %v6210 = vld [vmem:[%s75 + $0xe0] sm:$0xf]
    %v6211 = vld [vmem:[%s75 + $0xe4] sm:$0xf]
    %v6212 = vld [vmem:[%s75 + $0xe8] sm:$0xf]
    %v6213 = vld [vmem:[%s75 + $0xec] sm:$0xf]
    %v6214 = vld [vmem:[%s75 + $0xf0] sm:$0xf]
    %v6215 = vld [vmem:[%s75 + $0xf4] sm:$0xf]
    %v6216 = vld [vmem:[%s75 + $0xf8] sm:$0xf]
    %v6217 = vld [vmem:[%s75 + $0xfc] sm:$0xf]
    %v6218 = vld [vmem:[%s75 + $0x100] sm:$0xf]
    %v6219 = vld [vmem:[%s75 + $0x104] sm:$0xf]
    %v6220 = vld [vmem:[%s75 + $0x108] sm:$0xf]
    %v6221 = vld [vmem:[%s75 + $0x10c] sm:$0xf]
    %v6222 = vld [vmem:[%s75 + $0x110] sm:$0xf]
    %v6223 = vld [vmem:[%s75 + $0x114] sm:$0xf]
    %v6224 = vld [vmem:[%s75 + $0x118] sm:$0xf]
    %v6225 = vld [vmem:[%s75 + $0x11c] sm:$0xf]
    %v6226 = vld [vmem:[%s75 + $0x120] sm:$0xf]
    %v6227 = vld [vmem:[%s75 + $0x124] sm:$0xf]
    %v6228 = vld [vmem:[%s75 + $0x128] sm:$0xf]
    %v6229 = vld [vmem:[%s75 + $0x12c] sm:$0xf]
    %v6230 = vld [vmem:[%s75 + $0x130] sm:$0xf]
    %v6231 = vld [vmem:[%s75 + $0x134] sm:$0xf]
    %v6232 = vld [vmem:[%s75 + $0x138] sm:$0xf]
    %v6233 = vld [vmem:[%s75 + $0x13c] sm:$0xf]
    %v6234 = vld [vmem:[%s75 + $0x140] sm:$0xf]
    %v6235 = vld [vmem:[%s75 + $0x144] sm:$0xf]
    %v6236 = vld [vmem:[%s75 + $0x148] sm:$0xf]
    %v6237 = vld [vmem:[%s75 + $0x14c] sm:$0xf]
    %v6238 = vld [vmem:[%s75 + $0x150] sm:$0xf]
    %v6239 = vld [vmem:[%s75 + $0x154] sm:$0xf]
    %v6240 = vld [vmem:[%s75 + $0x158] sm:$0xf]
    %v6241 = vld [vmem:[%s75 + $0x15c] sm:$0xf]
    %v6242 = vld [vmem:[%s75 + $0x160] sm:$0xf]
    %v6243 = vld [vmem:[%s75 + $0x164] sm:$0xf]
    %v6244 = vld [vmem:[%s75 + $0x168] sm:$0xf]
    %v6245 = vld [vmem:[%s75 + $0x16c] sm:$0xf]
    %v6246 = vld [vmem:[%s75 + $0x170] sm:$0xf]
    %v6247 = vld [vmem:[%s75 + $0x174] sm:$0xf]
    %v6248 = vld [vmem:[%s75 + $0x178] sm:$0xf]
    %v6249 = vld [vmem:[%s75 + $0x17c] sm:$0xf]
    %v6250 = vld [vmem:[%s75 + $0x180] sm:$0xf]
    %v6251 = vld [vmem:[%s75 + $0x184] sm:$0xf]
    %v6252 = vld [vmem:[%s75 + $0x188] sm:$0xf]
    %v6253 = vld [vmem:[%s75 + $0x18c] sm:$0xf]
    %v6254 = vld [vmem:[%s75 + $0x190] sm:$0xf]
    %v6255 = vld [vmem:[%s75 + $0x194] sm:$0xf]
    %v6256 = vld [vmem:[%s75 + $0x198] sm:$0xf]
    %v6257 = vld [vmem:[%s75 + $0x19c] sm:$0xf]
    %v6258 = vld [vmem:[%s75 + $0x1a0] sm:$0xf]
    %v6259 = vld [vmem:[%s75 + $0x1a4] sm:$0xf]
    %v6260 = vld [vmem:[%s75 + $0x1a8] sm:$0xf]
    %v6261 = vld [vmem:[%s75 + $0x1ac] sm:$0xf]
    %v6262 = vld [vmem:[%s75 + $0x1b0] sm:$0xf]
    %v6263 = vld [vmem:[%s75 + $0x1b4] sm:$0xf]
    %v6264 = vld [vmem:[%s75 + $0x1b8] sm:$0xf]
    %v6265 = vld [vmem:[%s75 + $0x1bc] sm:$0xf]
    %v6266 = vld [vmem:[%s75 + $0x1c0] sm:$0xf]
    %v6267 = vld [vmem:[%s75 + $0x1c4] sm:$0xf]
    %v6268 = vld [vmem:[%s75 + $0x1c8] sm:$0xf]
    %v6269 = vld [vmem:[%s75 + $0x1cc] sm:$0xf]
    %v6270 = vld [vmem:[%s75 + $0x1d0] sm:$0xf]
    %v6271 = vld [vmem:[%s75 + $0x1d4] sm:$0xf]
    %v6272 = vld [vmem:[%s75 + $0x1d8] sm:$0xf]
    %v6273 = vld [vmem:[%s75 + $0x1dc] sm:$0xf]
    %v6274 = vld [vmem:[%s75 + $0x1e0] sm:$0xf]
    %v6275 = vld [vmem:[%s75 + $0x1e4] sm:$0xf]
    %v6276 = vld [vmem:[%s75 + $0x1e8] sm:$0xf]
    %v6277 = vld [vmem:[%s75 + $0x1ec] sm:$0xf]
    %v6278 = vld [vmem:[%s75 + $0x1f0] sm:$0xf]
    %v6279 = vld [vmem:[%s75 + $0x1f4] sm:$0xf]
    %v6280 = vld [vmem:[%s75 + $0x1f8] sm:$0xf]
    %v6281 = vld [vmem:[%s75 + $0x1fc] sm:$0xf]
    %v6282 = vld [vmem:[%s75 + $0x200] sm:$0xf]
    %v6283 = vld [vmem:[%s75 + $0x204] sm:$0xf]
    %v6284 = vld [vmem:[%s75 + $0x208] sm:$0xf]
    %v6285 = vld [vmem:[%s75 + $0x20c] sm:$0xf]
    %v6286 = vld [vmem:[%s75 + $0x210] sm:$0xf]
    %v6287 = vld [vmem:[%s75 + $0x214] sm:$0xf]
    %v6288 = vld [vmem:[%s75 + $0x218] sm:$0xf]
    %v6289 = vld [vmem:[%s75 + $0x21c] sm:$0xf]
    %v6290 = vld [vmem:[%s75 + $0x220] sm:$0xf]
    %v6291 = vld [vmem:[%s75 + $0x224] sm:$0xf]
    %v6292 = vld [vmem:[%s75 + $0x228] sm:$0xf]
    %v6293 = vld [vmem:[%s75 + $0x22c] sm:$0xf]
    %v6294 = vld [vmem:[%s75 + $0x230] sm:$0xf]
    %v6295 = vld [vmem:[%s75 + $0x234] sm:$0xf]
    %v6296 = vld [vmem:[%s75 + $0x238] sm:$0xf]
    %v6297 = vld [vmem:[%s75 + $0x23c] sm:$0xf]
    %v6298 = vld [vmem:[%s75 + $0x240] sm:$0xf]
    %v6299 = vld [vmem:[%s75 + $0x244] sm:$0xf]
    %v6300 = vld [vmem:[%s75 + $0x248] sm:$0xf]
    %v6301 = vld [vmem:[%s75 + $0x24c] sm:$0xf]
    %v6302 = vld [vmem:[%s75 + $0x250] sm:$0xf]
    %v6303 = vld [vmem:[%s75 + $0x254] sm:$0xf]
    %v6304 = vld [vmem:[%s75 + $0x258] sm:$0xf]
    %v6305 = vld [vmem:[%s75 + $0x25c] sm:$0xf]
    %v6306 = vld [vmem:[%s75 + $0x260] sm:$0xf]
    %v6307 = vld [vmem:[%s75 + $0x264] sm:$0xf]
    %v6308 = vld [vmem:[%s75 + $0x268] sm:$0xf]
    %v6309 = vld [vmem:[%s75 + $0x26c] sm:$0xf]
    %v6310 = vld [vmem:[%s75 + $0x270] sm:$0xf]
    %v6311 = vld [vmem:[%s75 + $0x274] sm:$0xf]
    %v6312 = vld [vmem:[%s75 + $0x278] sm:$0xf]
    %v6313 = vld [vmem:[%s75 + $0x27c] sm:$0xf]
    %v6314 = vld [vmem:[%s75 + $0x280] sm:$0xf]
    %v6315 = vld [vmem:[%s75 + $0x284] sm:$0xf]
    %v6316 = vld [vmem:[%s75 + $0x288] sm:$0xf]
    %v6317 = vld [vmem:[%s75 + $0x28c] sm:$0xf]
    %v6318 = vld [vmem:[%s75 + $0x290] sm:$0xf]
    %v6319 = vld [vmem:[%s75 + $0x294] sm:$0xf]
    %v6320 = vld [vmem:[%s75 + $0x298] sm:$0xf]
    %v6321 = vld [vmem:[%s75 + $0x29c] sm:$0xf]
    %v6322 = vld [vmem:[%s75 + $0x2a0] sm:$0xf]
    %v6323 = vld [vmem:[%s75 + $0x2a4] sm:$0xf]
    %v6324 = vld [vmem:[%s75 + $0x2a8] sm:$0xf]
    %v6325 = vld [vmem:[%s75 + $0x2ac] sm:$0xf]
    %v6326 = vld [vmem:[%s75 + $0x2b0] sm:$0xf]
    %v6327 = vld [vmem:[%s75 + $0x2b4] sm:$0xf]
    %v6328 = vld [vmem:[%s75 + $0x2b8] sm:$0xf]
    %v6329 = vld [vmem:[%s75 + $0x2bc] sm:$0xf]
    %v6330 = vld [vmem:[%s75 + $0x2c0] sm:$0xf]
    %v6331 = vld [vmem:[%s75 + $0x2c4] sm:$0xf]
    %v6332 = vld [vmem:[%s75 + $0x2c8] sm:$0xf]
    %v6333 = vld [vmem:[%s75 + $0x2cc] sm:$0xf]
    %v6334 = vld [vmem:[%s75 + $0x2d0] sm:$0xf]
    %v6335 = vld [vmem:[%s75 + $0x2d4] sm:$0xf]
    %v6336 = vld [vmem:[%s75 + $0x2d8] sm:$0xf]
    %v6337 = vld [vmem:[%s75 + $0x2dc] sm:$0xf]
    %v6338 = vld [vmem:[%s75 + $0x2e0] sm:$0xf]
    %v6339 = vld [vmem:[%s75 + $0x2e4] sm:$0xf]
    %v6340 = vld [vmem:[%s75 + $0x2e8] sm:$0xf]
    %v6341 = vld [vmem:[%s75 + $0x2ec] sm:$0xf]
    %v6342 = vld [vmem:[%s75 + $0x2f0] sm:$0xf]
    %v6343 = vld [vmem:[%s75 + $0x2f4] sm:$0xf]
    %v6344 = vld [vmem:[%s75 + $0x2f8] sm:$0xf]
    %v6345 = vld [vmem:[%s75 + $0x2fc] sm:$0xf]
    %v6346 = vld [vmem:[%s75 + $0x300] sm:$0xf]
    %v6347 = vld [vmem:[%s75 + $0x304] sm:$0xf]
    %v6348 = vld [vmem:[%s75 + $0x308] sm:$0xf]
    %v6349 = vld [vmem:[%s75 + $0x30c] sm:$0xf]
    %v6350 = vld [vmem:[%s75 + $0x310] sm:$0xf]
    %v6351 = vld [vmem:[%s75 + $0x314] sm:$0xf]
    %v6352 = vld [vmem:[%s75 + $0x318] sm:$0xf]
    %v6353 = vld [vmem:[%s75 + $0x31c] sm:$0xf]
    %v6354 = vld [vmem:[%s75 + $0x320] sm:$0xf]
    %v6355 = vld [vmem:[%s75 + $0x324] sm:$0xf]
    %v6356 = vld [vmem:[%s75 + $0x328] sm:$0xf]
    %v6357 = vld [vmem:[%s75 + $0x32c] sm:$0xf]
    %v6358 = vld [vmem:[%s75 + $0x330] sm:$0xf]
    %v6359 = vld [vmem:[%s75 + $0x334] sm:$0xf]
    %v6360 = vld [vmem:[%s75 + $0x338] sm:$0xf]
    %v6361 = vld [vmem:[%s75 + $0x33c] sm:$0xf]
    %v6362 = vld [vmem:[%s75 + $0x340] sm:$0xf]
    %v6363 = vld [vmem:[%s75 + $0x344] sm:$0xf]
    %v6364 = vld [vmem:[%s75 + $0x348] sm:$0xf]
    %v6365 = vld [vmem:[%s75 + $0x34c] sm:$0xf]
    %v6366 = vld [vmem:[%s75 + $0x350] sm:$0xf]
    %v6367 = vld [vmem:[%s75 + $0x354] sm:$0xf]
    %v6368 = vld [vmem:[%s75 + $0x358] sm:$0xf]
    %v6369 = vld [vmem:[%s75 + $0x35c] sm:$0xf]
    %v6370 = vld [vmem:[%s75 + $0x360] sm:$0xf]
    %v6371 = vld [vmem:[%s75 + $0x364] sm:$0xf]
    %v6372 = vld [vmem:[%s75 + $0x368] sm:$0xf]
    %v6373 = vld [vmem:[%s75 + $0x36c] sm:$0xf]
    %v6374 = vld [vmem:[%s75 + $0x370] sm:$0xf]
    %v6375 = vld [vmem:[%s75 + $0x374] sm:$0xf]
    %v6376 = vld [vmem:[%s75 + $0x378] sm:$0xf]
    %v6377 = vld [vmem:[%s75 + $0x37c] sm:$0xf]
    %v6378 = vld [vmem:[%s75 + $0x380] sm:$0xf]
    %v6379 = vld [vmem:[%s75 + $0x384] sm:$0xf]
    %v6380 = vld [vmem:[%s75 + $0x388] sm:$0xf]
    %v6381 = vld [vmem:[%s75 + $0x38c] sm:$0xf]
    %v6382 = vld [vmem:[%s75 + $0x390] sm:$0xf]
    %v6383 = vld [vmem:[%s75 + $0x394] sm:$0xf]
    %v6384 = vld [vmem:[%s75 + $0x398] sm:$0xf]
    %v6385 = vld [vmem:[%s75 + $0x39c] sm:$0xf]
    %v6386 = vld [vmem:[%s75 + $0x3a0] sm:$0xf]
    %v6387 = vld [vmem:[%s75 + $0x3a4] sm:$0xf]
    %v6388 = vld [vmem:[%s75 + $0x3a8] sm:$0xf]
    %v6389 = vld [vmem:[%s75 + $0x3ac] sm:$0xf]
    %v6390 = vld [vmem:[%s75 + $0x3b0] sm:$0xf]
    %v6391 = vld [vmem:[%s75 + $0x3b4] sm:$0xf]
    %v6392 = vld [vmem:[%s75 + $0x3b8] sm:$0xf]
    %v6393 = vld [vmem:[%s75 + $0x3bc] sm:$0xf]
    %v6394 = vld [vmem:[%s75 + $0x3c0] sm:$0xf]
    %v6395 = vld [vmem:[%s75 + $0x3c4] sm:$0xf]
    %v6396 = vld [vmem:[%s75 + $0x3c8] sm:$0xf]
    %v6397 = vld [vmem:[%s75 + $0x3cc] sm:$0xf]
    %v6398 = vld [vmem:[%s75 + $0x3d0] sm:$0xf]
    %v6399 = vld [vmem:[%s75 + $0x3d4] sm:$0xf]
    %v6400 = vld [vmem:[%s75 + $0x3d8] sm:$0xf]
    %v6401 = vld [vmem:[%s75 + $0x3dc] sm:$0xf]
    %v6402 = vld [vmem:[%s75 + $0x3e0] sm:$0xf]
    %v6403 = vld [vmem:[%s75 + $0x3e4] sm:$0xf]
    %v6404 = vld [vmem:[%s75 + $0x3e8] sm:$0xf]
    %v6405 = vld [vmem:[%s75 + $0x3ec] sm:$0xf]
    %v6406 = vld [vmem:[%s75 + $0x3f0] sm:$0xf]
    %v6407 = vld [vmem:[%s75 + $0x3f4] sm:$0xf]
    %v6408 = vld [vmem:[%s75 + $0x3f8] sm:$0xf]
    %v6409 = vld [vmem:[%s75 + $0x3fc] sm:$0xf]
    %v6410 = vld [vmem:[%s77] sm:$0x1]
    %v6412 = vlaneseq
    %v6413 = vshrl.u32 %v6412, 7
    %v6414 = vsub.s32 0, %v6413
    %v6415 = vrot.slane %v6410, %v6414
    %v6673 = vunpack.c.l.b16 %v6154
    %v6674 = vunpack.c.l.b16 %v6155
    %v6675 = vunpack.c.l.b16 %v6156
    %v6676 = vunpack.c.l.b16 %v6157
    %v6677 = vunpack.c.l.b16 %v6158
    %v6678 = vunpack.c.l.b16 %v6159
    %v6679 = vunpack.c.l.b16 %v6160
    %v6680 = vunpack.c.l.b16 %v6161
    %v6681 = vunpack.c.l.b16 %v6162
    %v6682 = vunpack.c.l.b16 %v6163
    %v6683 = vunpack.c.l.b16 %v6164
    %v6684 = vunpack.c.l.b16 %v6165
    %v6685 = vunpack.c.l.b16 %v6166
    %v6686 = vunpack.c.l.b16 %v6167
    %v6687 = vunpack.c.l.b16 %v6168
    %v6688 = vunpack.c.l.b16 %v6169
    %v6689 = vunpack.c.l.b16 %v6170
    %v6690 = vunpack.c.l.b16 %v6171
    %v6691 = vunpack.c.l.b16 %v6172
    %v6692 = vunpack.c.l.b16 %v6173
    %v6693 = vunpack.c.l.b16 %v6174
    %v6694 = vunpack.c.l.b16 %v6175
    %v6695 = vunpack.c.l.b16 %v6176
    %v6696 = vunpack.c.l.b16 %v6177
    %v6697 = vunpack.c.l.b16 %v6178
    %v6698 = vunpack.c.l.b16 %v6179
    %v6699 = vunpack.c.l.b16 %v6180
    %v6700 = vunpack.c.l.b16 %v6181
    %v6701 = vunpack.c.l.b16 %v6182
    %v6702 = vunpack.c.l.b16 %v6183
    %v6703 = vunpack.c.l.b16 %v6184
    %v6704 = vunpack.c.l.b16 %v6185
    %v6705 = vunpack.c.l.b16 %v6186
    %v6706 = vunpack.c.l.b16 %v6187
    %v6707 = vunpack.c.l.b16 %v6188
    %v6708 = vunpack.c.l.b16 %v6189
    %v6709 = vunpack.c.l.b16 %v6190
    %v6710 = vunpack.c.l.b16 %v6191
    %v6711 = vunpack.c.l.b16 %v6192
    %v6712 = vunpack.c.l.b16 %v6193
    %v6713 = vunpack.c.l.b16 %v6194
    %v6714 = vunpack.c.l.b16 %v6195
    %v6715 = vunpack.c.l.b16 %v6196
    %v6716 = vunpack.c.l.b16 %v6197
    %v6717 = vunpack.c.l.b16 %v6198
    %v6718 = vunpack.c.l.b16 %v6199
    %v6719 = vunpack.c.l.b16 %v6200
    %v6720 = vunpack.c.l.b16 %v6201
    %v6721 = vunpack.c.l.b16 %v6202
    %v6722 = vunpack.c.l.b16 %v6203
    %v6723 = vunpack.c.l.b16 %v6204
    %v6724 = vunpack.c.l.b16 %v6205
    %v6725 = vunpack.c.l.b16 %v6206
    %v6726 = vunpack.c.l.b16 %v6207
    %v6727 = vunpack.c.l.b16 %v6208
    %v6728 = vunpack.c.l.b16 %v6209
    %v6729 = vunpack.c.l.b16 %v6210
    %v6730 = vunpack.c.l.b16 %v6211
    %v6731 = vunpack.c.l.b16 %v6212
    %v6732 = vunpack.c.l.b16 %v6213
    %v6733 = vunpack.c.l.b16 %v6214
    %v6734 = vunpack.c.l.b16 %v6215
    %v6735 = vunpack.c.l.b16 %v6216
    %v6736 = vunpack.c.l.b16 %v6217
    %v6737 = vunpack.c.l.b16 %v6218
    %v6738 = vunpack.c.l.b16 %v6219
    %v6739 = vunpack.c.l.b16 %v6220
    %v6740 = vunpack.c.l.b16 %v6221
    %v6741 = vunpack.c.l.b16 %v6222
    %v6742 = vunpack.c.l.b16 %v6223
    %v6743 = vunpack.c.l.b16 %v6224
    %v6744 = vunpack.c.l.b16 %v6225
    %v6745 = vunpack.c.l.b16 %v6226
    %v6746 = vunpack.c.l.b16 %v6227
    %v6747 = vunpack.c.l.b16 %v6228
    %v6748 = vunpack.c.l.b16 %v6229
    %v6749 = vunpack.c.l.b16 %v6230
    %v6750 = vunpack.c.l.b16 %v6231
    %v6751 = vunpack.c.l.b16 %v6232
    %v6752 = vunpack.c.l.b16 %v6233
    %v6753 = vunpack.c.l.b16 %v6234
    %v6754 = vunpack.c.l.b16 %v6235
    %v6755 = vunpack.c.l.b16 %v6236
    %v6756 = vunpack.c.l.b16 %v6237
    %v6757 = vunpack.c.l.b16 %v6238
    %v6758 = vunpack.c.l.b16 %v6239
    %v6759 = vunpack.c.l.b16 %v6240
    %v6760 = vunpack.c.l.b16 %v6241
    %v6761 = vunpack.c.l.b16 %v6242
    %v6762 = vunpack.c.l.b16 %v6243
    %v6763 = vunpack.c.l.b16 %v6244
    %v6764 = vunpack.c.l.b16 %v6245
    %v6765 = vunpack.c.l.b16 %v6246
    %v6766 = vunpack.c.l.b16 %v6247
    %v6767 = vunpack.c.l.b16 %v6248
    %v6768 = vunpack.c.l.b16 %v6249
    %v6769 = vunpack.c.l.b16 %v6250
    %v6770 = vunpack.c.l.b16 %v6251
    %v6771 = vunpack.c.l.b16 %v6252
    %v6772 = vunpack.c.l.b16 %v6253
    %v6773 = vunpack.c.l.b16 %v6254
    %v6774 = vunpack.c.l.b16 %v6255
    %v6775 = vunpack.c.l.b16 %v6256
    %v6776 = vunpack.c.l.b16 %v6257
    %v6777 = vunpack.c.l.b16 %v6258
    %v6778 = vunpack.c.l.b16 %v6259
    %v6779 = vunpack.c.l.b16 %v6260
    %v6780 = vunpack.c.l.b16 %v6261
    %v6781 = vunpack.c.l.b16 %v6262
    %v6782 = vunpack.c.l.b16 %v6263
    %v6783 = vunpack.c.l.b16 %v6264
    %v6784 = vunpack.c.l.b16 %v6265
    %v6785 = vunpack.c.l.b16 %v6266
    %v6786 = vunpack.c.l.b16 %v6267
    %v6787 = vunpack.c.l.b16 %v6268
    %v6788 = vunpack.c.l.b16 %v6269
    %v6789 = vunpack.c.l.b16 %v6270
    %v6790 = vunpack.c.l.b16 %v6271
    %v6791 = vunpack.c.l.b16 %v6272
    %v6792 = vunpack.c.l.b16 %v6273
    %v6793 = vunpack.c.l.b16 %v6274
    %v6794 = vunpack.c.l.b16 %v6275
    %v6795 = vunpack.c.l.b16 %v6276
    %v6796 = vunpack.c.l.b16 %v6277
    %v6797 = vunpack.c.l.b16 %v6278
    %v6798 = vunpack.c.l.b16 %v6279
    %v6799 = vunpack.c.l.b16 %v6280
    %v6800 = vunpack.c.l.b16 %v6281
    %v6801 = vunpack.c.l.b16 %v6282
    %v6802 = vunpack.c.l.b16 %v6283
    %v6803 = vunpack.c.l.b16 %v6284
    %v6804 = vunpack.c.l.b16 %v6285
    %v6805 = vunpack.c.l.b16 %v6286
    %v6806 = vunpack.c.l.b16 %v6287
    %v6807 = vunpack.c.l.b16 %v6288
    %v6808 = vunpack.c.l.b16 %v6289
    %v6809 = vunpack.c.l.b16 %v6290
    %v6810 = vunpack.c.l.b16 %v6291
    %v6811 = vunpack.c.l.b16 %v6292
    %v6812 = vunpack.c.l.b16 %v6293
    %v6813 = vunpack.c.l.b16 %v6294
    %v6814 = vunpack.c.l.b16 %v6295
    %v6815 = vunpack.c.l.b16 %v6296
    %v6816 = vunpack.c.l.b16 %v6297
    %v6817 = vunpack.c.l.b16 %v6298
    %v6818 = vunpack.c.l.b16 %v6299
    %v6819 = vunpack.c.l.b16 %v6300
    %v6820 = vunpack.c.l.b16 %v6301
    %v6821 = vunpack.c.l.b16 %v6302
    %v6822 = vunpack.c.l.b16 %v6303
    %v6823 = vunpack.c.l.b16 %v6304
    %v6824 = vunpack.c.l.b16 %v6305
    %v6825 = vunpack.c.l.b16 %v6306
    %v6826 = vunpack.c.l.b16 %v6307
    %v6827 = vunpack.c.l.b16 %v6308
    %v6828 = vunpack.c.l.b16 %v6309
    %v6829 = vunpack.c.l.b16 %v6310
    %v6830 = vunpack.c.l.b16 %v6311
    %v6831 = vunpack.c.l.b16 %v6312
    %v6832 = vunpack.c.l.b16 %v6313
    %v6833 = vunpack.c.l.b16 %v6314
    %v6834 = vunpack.c.l.b16 %v6315
    %v6835 = vunpack.c.l.b16 %v6316
    %v6836 = vunpack.c.l.b16 %v6317
    %v6837 = vunpack.c.l.b16 %v6318
    %v6838 = vunpack.c.l.b16 %v6319
    %v6839 = vunpack.c.l.b16 %v6320
    %v6840 = vunpack.c.l.b16 %v6321
    %v6841 = vunpack.c.l.b16 %v6322
    %v6842 = vunpack.c.l.b16 %v6323
    %v6843 = vunpack.c.l.b16 %v6324
    %v6844 = vunpack.c.l.b16 %v6325
    %v6845 = vunpack.c.l.b16 %v6326
    %v6846 = vunpack.c.l.b16 %v6327
    %v6847 = vunpack.c.l.b16 %v6328
    %v6848 = vunpack.c.l.b16 %v6329
    %v6849 = vunpack.c.l.b16 %v6330
    %v6850 = vunpack.c.l.b16 %v6331
    %v6851 = vunpack.c.l.b16 %v6332
    %v6852 = vunpack.c.l.b16 %v6333
    %v6853 = vunpack.c.l.b16 %v6334
    %v6854 = vunpack.c.l.b16 %v6335
    %v6855 = vunpack.c.l.b16 %v6336
    %v6856 = vunpack.c.l.b16 %v6337
    %v6857 = vunpack.c.l.b16 %v6338
    %v6858 = vunpack.c.l.b16 %v6339
    %v6859 = vunpack.c.l.b16 %v6340
    %v6860 = vunpack.c.l.b16 %v6341
    %v6861 = vunpack.c.l.b16 %v6342
    %v6862 = vunpack.c.l.b16 %v6343
    %v6863 = vunpack.c.l.b16 %v6344
    %v6864 = vunpack.c.l.b16 %v6345
    %v6865 = vunpack.c.l.b16 %v6346
    %v6866 = vunpack.c.l.b16 %v6347
    %v6867 = vunpack.c.l.b16 %v6348
    %v6868 = vunpack.c.l.b16 %v6349
    %v6869 = vunpack.c.l.b16 %v6350
    %v6870 = vunpack.c.l.b16 %v6351
    %v6871 = vunpack.c.l.b16 %v6352
    %v6872 = vunpack.c.l.b16 %v6353
    %v6873 = vunpack.c.l.b16 %v6354
    %v6874 = vunpack.c.l.b16 %v6355
    %v6875 = vunpack.c.l.b16 %v6356
    %v6876 = vunpack.c.l.b16 %v6357
    %v6877 = vunpack.c.l.b16 %v6358
    %v6878 = vunpack.c.l.b16 %v6359
    %v6879 = vunpack.c.l.b16 %v6360
    %v6880 = vunpack.c.l.b16 %v6361
    %v6881 = vunpack.c.l.b16 %v6362
    %v6882 = vunpack.c.l.b16 %v6363
    %v6883 = vunpack.c.l.b16 %v6364
    %v6884 = vunpack.c.l.b16 %v6365
    %v6885 = vunpack.c.l.b16 %v6366
    %v6886 = vunpack.c.l.b16 %v6367
    %v6887 = vunpack.c.l.b16 %v6368
    %v6888 = vunpack.c.l.b16 %v6369
    %v6889 = vunpack.c.l.b16 %v6370
    %v6890 = vunpack.c.l.b16 %v6371
    %v6891 = vunpack.c.l.b16 %v6372
    %v6892 = vunpack.c.l.b16 %v6373
    %v6893 = vunpack.c.l.b16 %v6374
    %v6894 = vunpack.c.l.b16 %v6375
    %v6895 = vunpack.c.l.b16 %v6376
    %v6896 = vunpack.c.l.b16 %v6377
    %v6897 = vunpack.c.l.b16 %v6378
    %v6898 = vunpack.c.l.b16 %v6379
    %v6899 = vunpack.c.l.b16 %v6380
    %v6900 = vunpack.c.l.b16 %v6381
    %v6901 = vunpack.c.l.b16 %v6382
    %v6902 = vunpack.c.l.b16 %v6383
    %v6903 = vunpack.c.l.b16 %v6384
    %v6904 = vunpack.c.l.b16 %v6385
    %v6905 = vunpack.c.l.b16 %v6386
    %v6906 = vunpack.c.l.b16 %v6387
    %v6907 = vunpack.c.l.b16 %v6388
    %v6908 = vunpack.c.l.b16 %v6389
    %v6909 = vunpack.c.l.b16 %v6390
    %v6910 = vunpack.c.l.b16 %v6391
    %v6911 = vunpack.c.l.b16 %v6392
    %v6912 = vunpack.c.l.b16 %v6393
    %v6913 = vunpack.c.l.b16 %v6394
    %v6914 = vunpack.c.l.b16 %v6395
    %v6915 = vunpack.c.l.b16 %v6396
    %v6916 = vunpack.c.l.b16 %v6397
    %v6917 = vunpack.c.l.b16 %v6398
    %v6918 = vunpack.c.l.b16 %v6399
    %v6919 = vunpack.c.l.b16 %v6400
    %v6920 = vunpack.c.l.b16 %v6401
    %v6921 = vunpack.c.l.b16 %v6402
    %v6922 = vunpack.c.l.b16 %v6403
    %v6923 = vunpack.c.l.b16 %v6404
    %v6924 = vunpack.c.l.b16 %v6405
    %v6925 = vunpack.c.l.b16 %v6406
    %v6926 = vunpack.c.l.b16 %v6407
    %v6927 = vunpack.c.l.b16 %v6408
    %v6928 = vunpack.c.l.b16 %v6409
    %v6929 = vpack.c.b16 %v6674, %v6673
    %v6930 = vpack.c.b16 %v6676, %v6675
    %v6931 = vpack.c.b16 %v6678, %v6677
    %v6932 = vpack.c.b16 %v6680, %v6679
    %v6933 = vpack.c.b16 %v6682, %v6681
    %v6934 = vpack.c.b16 %v6684, %v6683
    %v6935 = vpack.c.b16 %v6686, %v6685
    %v6936 = vpack.c.b16 %v6688, %v6687
    %v6937 = vpack.c.b16 %v6690, %v6689
    %v6938 = vpack.c.b16 %v6692, %v6691
    %v6939 = vpack.c.b16 %v6694, %v6693
    %v6940 = vpack.c.b16 %v6696, %v6695
    %v6941 = vpack.c.b16 %v6698, %v6697
    %v6942 = vpack.c.b16 %v6700, %v6699
    %v6943 = vpack.c.b16 %v6702, %v6701
    %v6944 = vpack.c.b16 %v6704, %v6703
    %v6945 = vpack.c.b16 %v6706, %v6705
    %v6946 = vpack.c.b16 %v6708, %v6707
    %v6947 = vpack.c.b16 %v6710, %v6709
    %v6948 = vpack.c.b16 %v6712, %v6711
    %v6949 = vpack.c.b16 %v6714, %v6713
    %v6950 = vpack.c.b16 %v6716, %v6715
    %v6951 = vpack.c.b16 %v6718, %v6717
    %v6952 = vpack.c.b16 %v6720, %v6719
    %v6953 = vpack.c.b16 %v6722, %v6721
    %v6954 = vpack.c.b16 %v6724, %v6723
    %v6955 = vpack.c.b16 %v6726, %v6725
    %v6956 = vpack.c.b16 %v6728, %v6727
    %v6957 = vpack.c.b16 %v6730, %v6729
    %v6958 = vpack.c.b16 %v6732, %v6731
    %v6959 = vpack.c.b16 %v6734, %v6733
    %v6960 = vpack.c.b16 %v6736, %v6735
    %v6961 = vpack.c.b16 %v6738, %v6737
    %v6962 = vpack.c.b16 %v6740, %v6739
    %v6963 = vpack.c.b16 %v6742, %v6741
    %v6964 = vpack.c.b16 %v6744, %v6743
    %v6965 = vpack.c.b16 %v6746, %v6745
    %v6966 = vpack.c.b16 %v6748, %v6747
    %v6967 = vpack.c.b16 %v6750, %v6749
    %v6968 = vpack.c.b16 %v6752, %v6751
    %v6969 = vpack.c.b16 %v6754, %v6753
    %v6970 = vpack.c.b16 %v6756, %v6755
    %v6971 = vpack.c.b16 %v6758, %v6757
    %v6972 = vpack.c.b16 %v6760, %v6759
    %v6973 = vpack.c.b16 %v6762, %v6761
    %v6974 = vpack.c.b16 %v6764, %v6763
    %v6975 = vpack.c.b16 %v6766, %v6765
    %v6976 = vpack.c.b16 %v6768, %v6767
    %v6977 = vpack.c.b16 %v6770, %v6769
    %v6978 = vpack.c.b16 %v6772, %v6771
    %v6979 = vpack.c.b16 %v6774, %v6773
    %v6980 = vpack.c.b16 %v6776, %v6775
    %v6981 = vpack.c.b16 %v6778, %v6777
    %v6982 = vpack.c.b16 %v6780, %v6779
    %v6983 = vpack.c.b16 %v6782, %v6781
    %v6984 = vpack.c.b16 %v6784, %v6783
    %v6985 = vpack.c.b16 %v6786, %v6785
    %v6986 = vpack.c.b16 %v6788, %v6787
    %v6987 = vpack.c.b16 %v6790, %v6789
    %v6988 = vpack.c.b16 %v6792, %v6791
    %v6989 = vpack.c.b16 %v6794, %v6793
    %v6990 = vpack.c.b16 %v6796, %v6795
    %v6991 = vpack.c.b16 %v6798, %v6797
    %v6992 = vpack.c.b16 %v6800, %v6799
    %v6993 = vpack.c.b16 %v6802, %v6801
    %v6994 = vpack.c.b16 %v6804, %v6803
    %v6995 = vpack.c.b16 %v6806, %v6805
    %v6996 = vpack.c.b16 %v6808, %v6807
    %v6997 = vpack.c.b16 %v6810, %v6809
    %v6998 = vpack.c.b16 %v6812, %v6811
    %v6999 = vpack.c.b16 %v6814, %v6813
    %v7000 = vpack.c.b16 %v6816, %v6815
    %v7001 = vpack.c.b16 %v6818, %v6817
    %v7002 = vpack.c.b16 %v6820, %v6819
    %v7003 = vpack.c.b16 %v6822, %v6821
    %v7004 = vpack.c.b16 %v6824, %v6823
    %v7005 = vpack.c.b16 %v6826, %v6825
    %v7006 = vpack.c.b16 %v6828, %v6827
    %v7007 = vpack.c.b16 %v6830, %v6829
    %v7008 = vpack.c.b16 %v6832, %v6831
    %v7009 = vpack.c.b16 %v6834, %v6833
    %v7010 = vpack.c.b16 %v6836, %v6835
    %v7011 = vpack.c.b16 %v6838, %v6837
    %v7012 = vpack.c.b16 %v6840, %v6839
    %v7013 = vpack.c.b16 %v6842, %v6841
    %v7014 = vpack.c.b16 %v6844, %v6843
    %v7015 = vpack.c.b16 %v6846, %v6845
    %v7016 = vpack.c.b16 %v6848, %v6847
    %v7017 = vpack.c.b16 %v6850, %v6849
    %v7018 = vpack.c.b16 %v6852, %v6851
    %v7019 = vpack.c.b16 %v6854, %v6853
    %v7020 = vpack.c.b16 %v6856, %v6855
    %v7021 = vpack.c.b16 %v6858, %v6857
    %v7022 = vpack.c.b16 %v6860, %v6859
    %v7023 = vpack.c.b16 %v6862, %v6861
    %v7024 = vpack.c.b16 %v6864, %v6863
    %v7025 = vpack.c.b16 %v6866, %v6865
    %v7026 = vpack.c.b16 %v6868, %v6867
    %v7027 = vpack.c.b16 %v6870, %v6869
    %v7028 = vpack.c.b16 %v6872, %v6871
    %v7029 = vpack.c.b16 %v6874, %v6873
    %v7030 = vpack.c.b16 %v6876, %v6875
    %v7031 = vpack.c.b16 %v6878, %v6877
    %v7032 = vpack.c.b16 %v6880, %v6879
    %v7033 = vpack.c.b16 %v6882, %v6881
    %v7034 = vpack.c.b16 %v6884, %v6883
    %v7035 = vpack.c.b16 %v6886, %v6885
    %v7036 = vpack.c.b16 %v6888, %v6887
    %v7037 = vpack.c.b16 %v6890, %v6889
    %v7038 = vpack.c.b16 %v6892, %v6891
    %v7039 = vpack.c.b16 %v6894, %v6893
    %v7040 = vpack.c.b16 %v6896, %v6895
    %v7041 = vpack.c.b16 %v6898, %v6897
    %v7042 = vpack.c.b16 %v6900, %v6899
    %v7043 = vpack.c.b16 %v6902, %v6901
    %v7044 = vpack.c.b16 %v6904, %v6903
    %v7045 = vpack.c.b16 %v6906, %v6905
    %v7046 = vpack.c.b16 %v6908, %v6907
    %v7047 = vpack.c.b16 %v6910, %v6909
    %v7048 = vpack.c.b16 %v6912, %v6911
    %v7049 = vpack.c.b16 %v6914, %v6913
    %v7050 = vpack.c.b16 %v6916, %v6915
    %v7051 = vpack.c.b16 %v6918, %v6917
    %v7052 = vpack.c.b16 %v6920, %v6919
    %v7053 = vpack.c.b16 %v6922, %v6921
    %v7054 = vpack.c.b16 %v6924, %v6923
    %v7055 = vpack.c.b16 %v6926, %v6925
    %v7056 = vpack.c.b16 %v6928, %v6927
    %7185 = vmatprep.subr.bf16.mxu0 0
    %7186 = vmatpush1.bf16.msra.mxu0 %v6929
    %7187 = vmatprep.subr.bf16.mxu0 0
    %7188 = vmatpush1.bf16.msra.mxu0 %v6930
    %7189 = vmatprep.subr.bf16.mxu0 0
    %7190 = vmatpush1.bf16.msra.mxu0 %v6931
    %7191 = vmatprep.subr.bf16.mxu0 0
    %7192 = vmatpush1.bf16.msra.mxu0 %v6932
    %7193 = vmatprep.subr.bf16.mxu0 0
    %7194 = vmatpush1.bf16.msra.mxu0 %v6933
    %7195 = vmatprep.subr.bf16.mxu0 0
    %7196 = vmatpush1.bf16.msra.mxu0 %v6934
    %7197 = vmatprep.subr.bf16.mxu0 0
    %7198 = vmatpush1.bf16.msra.mxu0 %v6935
    %7199 = vmatprep.subr.bf16.mxu0 0
    %7200 = vmatpush1.bf16.msra.mxu0 %v6936
    %7201 = vmatprep.subr.bf16.mxu0 0
    %7202 = vmatpush1.bf16.msra.mxu0 %v6937
    %7203 = vmatprep.subr.bf16.mxu0 0
    %7204 = vmatpush1.bf16.msra.mxu0 %v6938
    %7205 = vmatprep.subr.bf16.mxu0 0
    %7206 = vmatpush1.bf16.msra.mxu0 %v6939
    %7207 = vmatprep.subr.bf16.mxu0 0
    %7208 = vmatpush1.bf16.msra.mxu0 %v6940
    %7209 = vmatprep.subr.bf16.mxu0 0
    %7210 = vmatpush1.bf16.msra.mxu0 %v6941
    %7211 = vmatprep.subr.bf16.mxu0 0
    %7212 = vmatpush1.bf16.msra.mxu0 %v6942
    %7213 = vmatprep.subr.bf16.mxu0 0
    %7214 = vmatpush1.bf16.msra.mxu0 %v6943
    %7215 = vmatprep.subr.bf16.mxu0 0
    %7216 = vmatpush1.bf16.msra.mxu0 %v6944
    %7217 = vmatprep.mubr.bf16.mxu0 %v6075
    %7218 = vmatmul.mubr.bf16.gmra.mrb[0].mxu0 %v6074
    %v7219 = vpop.f32.mrb[0].mxu0
    %v7220 = vadd.f32 %v6415, %v7219
    %v7221 = vpop.f32.mrb[0].mxu0
    %v7222 = vpop.f32.mrb[0].mxu0
    %v7223 = vadd.f32 %v6415, %v7222
    %v7224 = vpop.f32.mrb[0].mxu0
    %7225 = vmatprep.mubr.bf16.mxu0 %v6091
    %7226 = vmatmul.mubr.bf16.gmra.mrb[0].mxu0 %v6090
    %v7227 = vpop.f32.mrb[0].mxu0
    %v7228 = vadd.f32 %v6415, %v7227
    %v7229 = vpop.f32.mrb[0].mxu0
    %v7230 = vpop.f32.mrb[0].mxu0
    %v7231 = vadd.f32 %v6415, %v7230
    %v7232 = vpop.f32.mrb[0].mxu0
    %7233 = vmatprep.mubr.bf16.mxu0 %v6107
    %7234 = vmatmul.mubr.bf16.gmra.mrb[0].mxu0 %v6106
    %v7235 = vpop.f32.mrb[0].mxu0
    %v7236 = vadd.f32 %v6415, %v7235
    %v7237 = vpop.f32.mrb[0].mxu0
    %v7238 = vpop.f32.mrb[0].mxu0
    %v7239 = vadd.f32 %v6415, %v7238
    %v7240 = vpop.f32.mrb[0].mxu0
    %7241 = vmatprep.mubr.bf16.mxu0 %v6123
    %7242 = vmatmul.mubr.bf16.gmra.mrb[0].mxu0 %v6122
    %v7243 = vpop.f32.mrb[0].mxu0
    %v7244 = vadd.f32 %v6415, %v7243
    %v7245 = vpop.f32.mrb[0].mxu0
    %v7246 = vpop.f32.mrb[0].mxu0
    %v7247 = vadd.f32 %v6415, %v7246
    %v7248 = vpop.f32.mrb[0].mxu0
    %7249 = vmatprep.mubr.bf16.mxu0 %v6139
    %7250 = vmatmul.mubr.bf16.gmra.mrb[0].mxu0 %v6138
    %v7251 = vpop.f32.mrb[0].mxu0
    %v7252 = vadd.f32 %v6415, %v7251
    %v7253 = vpop.f32.mrb[0].mxu0
    %v7254 = vpop.f32.mrb[0].mxu0
    %v7255 = vadd.f32 %v6415, %v7254
    %v7256 = vpop.f32.mrb[0].mxu0
    %7257 = vdwg.mxu0
    %7258 = vmatprep.subr.bf16.mxu0 0
    %7259 = vmatpush1.bf16.msra.mxu0 %v6945
    %7260 = vmatprep.subr.bf16.mxu0 0
    %7261 = vmatpush1.bf16.msra.mxu0 %v6946
    %7262 = vmatprep.subr.bf16.mxu0 0
    %7263 = vmatpush1.bf16.msra.mxu0 %v6947
    %7264 = vmatprep.subr.bf16.mxu0 0
    %7265 = vmatpush1.bf16.msra.mxu0 %v6948
    %7266 = vmatprep.subr.bf16.mxu0 0
    %7267 = vmatpush1.bf16.msra.mxu0 %v6949
    %7268 = vmatprep.subr.bf16.mxu0 0
    %7269 = vmatpush1.bf16.msra.mxu0 %v6950
    %7270 = vmatprep.subr.bf16.mxu0 0
    %7271 = vmatpush1.bf16.msra.mxu0 %v6951
    %7272 = vmatprep.subr.bf16.mxu0 0
    %7273 = vmatpush1.bf16.msra.mxu0 %v6952
    %7274 = vmatprep.subr.bf16.mxu0 0
    %7275 = vmatpush1.bf16.msra.mxu0 %v6953
    %7276 = vmatprep.subr.bf16.mxu0 0
    %7277 = vmatpush1.bf16.msra.mxu0 %v6954
    %7278 = vmatprep.subr.bf16.mxu0 0
    %7279 = vmatpush1.bf16.msra.mxu0 %v6955
    %7280 = vmatprep.subr.bf16.mxu0 0
    %7281 = vmatpush1.bf16.msra.mxu0 %v6956
    %7282 = vmatprep.subr.bf16.mxu0 0
    %7283 = vmatpush1.bf16.msra.mxu0 %v6957
    %7284 = vmatprep.subr.bf16.mxu0 0
    %7285 = vmatpush1.bf16.msra.mxu0 %v6958
    %7286 = vmatprep.subr.bf16.mxu0 0
    %7287 = vmatpush1.bf16.msra.mxu0 %v6959
    %7288 = vmatprep.subr.bf16.mxu0 0
    %7289 = vmatpush1.bf16.msra.mxu0 %v6960
    %7290 = vmatprep.mubr.bf16.mxu0 %v6077
    %7291 = vmatmul.mubr.bf16.gmra.mrb[0].mxu0 %v6076
    %v7292 = vpop.f32.mrb[0].mxu0
    %v7293 = vadd.f32 %v7220, %v7292
    %v7294 = vpop.f32.mrb[0].mxu0
    %v7295 = vpop.f32.mrb[0].mxu0
    %v7296 = vadd.f32 %v7223, %v7295
    %v7297 = vpop.f32.mrb[0].mxu0
    %7298 = vmatprep.mubr.bf16.mxu0 %v6093
    %7299 = vmatmul.mubr.bf16.gmra.mrb[0].mxu0 %v6092
    %v7300 = vpop.f32.mrb[0].mxu0
    %v7301 = vadd.f32 %v7228, %v7300
    %v7302 = vpop.f32.mrb[0].mxu0
    %v7303 = vpop.f32.mrb[0].mxu0
    %v7304 = vadd.f32 %v7231, %v7303
    %v7305 = vpop.f32.mrb[0].mxu0
    %7306 = vmatprep.mubr.bf16.mxu0 %v6109
    %7307 = vmatmul.mubr.bf16.gmra.mrb[0].mxu0 %v6108
    %v7308 = vpop.f32.mrb[0].mxu0
    %v7309 = vadd.f32 %v7236, %v7308
    %v7310 = vpop.f32.mrb[0].mxu0
    %v7311 = vpop.f32.mrb[0].mxu0
    %v7312 = vadd.f32 %v7239, %v7311
    %v7313 = vpop.f32.mrb[0].mxu0
    %7314 = vmatprep.mubr.bf16.mxu0 %v6125
    %7315 = vmatmul.mubr.bf16.gmra.mrb[0].mxu0 %v6124
    %v7316 = vpop.f32.mrb[0].mxu0
    %v7317 = vadd.f32 %v7244, %v7316
    %v7318 = vpop.f32.mrb[0].mxu0
    %v7319 = vpop.f32.mrb[0].mxu0
    %v7320 = vadd.f32 %v7247, %v7319
    %v7321 = vpop.f32.mrb[0].mxu0
    %7322 = vmatprep.mubr.bf16.mxu0 %v6141
    %7323 = vmatmul.mubr.bf16.gmra.mrb[0].mxu0 %v6140
    %v7324 = vpop.f32.mrb[0].mxu0
    %v7325 = vadd.f32 %v7252, %v7324
    %v7326 = vpop.f32.mrb[0].mxu0
    %v7327 = vpop.f32.mrb[0].mxu0
    %v7328 = vadd.f32 %v7255, %v7327
    %v7329 = vpop.f32.mrb[0].mxu0
    %7330 = vdwg.mxu0
    %7331 = vmatprep.subr.bf16.mxu0 0
    %7332 = vmatpush1.bf16.msra.mxu0 %v6961
    %7333 = vmatprep.subr.bf16.mxu0 0
    %7334 = vmatpush1.bf16.msra.mxu0 %v6962
    %7335 = vmatprep.subr.bf16.mxu0 0
    %7336 = vmatpush1.bf16.msra.mxu0 %v6963
    %7337 = vmatprep.subr.bf16.mxu0 0
    %7338 = vmatpush1.bf16.msra.mxu0 %v6964
    %7339 = vmatprep.subr.bf16.mxu0 0
    %7340 = vmatpush1.bf16.msra.mxu0 %v6965
    %7341 = vmatprep.subr.bf16.mxu0 0
    %7342 = vmatpush1.bf16.msra.mxu0 %v6966
    %7343 = vmatprep.subr.bf16.mxu0 0
    %7344 = vmatpush1.bf16.msra.mxu0 %v6967
    %7345 = vmatprep.subr.bf16.mxu0 0
    %7346 = vmatpush1.bf16.msra.mxu0 %v6968
    %7347 = vmatprep.subr.bf16.mxu0 0
    %7348 = vmatpush1.bf16.msra.mxu0 %v6969
    %7349 = vmatprep.subr.bf16.mxu0 0
    %7350 = vmatpush1.bf16.msra.mxu0 %v6970
    %7351 = vmatprep.subr.bf16.mxu0 0
    %7352 = vmatpush1.bf16.msra.mxu0 %v6971
    %7353 = vmatprep.subr.bf16.mxu0 0
    %7354 = vmatpush1.bf16.msra.mxu0 %v6972
    %7355 = vmatprep.subr.bf16.mxu0 0
    %7356 = vmatpush1.bf16.msra.mxu0 %v6973
    %7357 = vmatprep.subr.bf16.mxu0 0
    %7358 = vmatpush1.bf16.msra.mxu0 %v6974
    %7359 = vmatprep.subr.bf16.mxu0 0
    %7360 = vmatpush1.bf16.msra.mxu0 %v6975
    %7361 = vmatprep.subr.bf16.mxu0 0
    %7362 = vmatpush1.bf16.msra.mxu0 %v6976
    %7363 = vmatprep.mubr.bf16.mxu0 %v6079
    %7364 = vmatmul.mubr.bf16.gmra.mrb[0].mxu0 %v6078
    %v7365 = vpop.f32.mrb[0].mxu0
    %v7366 = vadd.f32 %v7293, %v7365
    %v7367 = vpop.f32.mrb[0].mxu0
    %v7368 = vpop.f32.mrb[0].mxu0
    %v7369 = vadd.f32 %v7296, %v7368
    %v7370 = vpop.f32.mrb[0].mxu0
    %7371 = vmatprep.mubr.bf16.mxu0 %v6095
    %7372 = vmatmul.mubr.bf16.gmra.mrb[0].mxu0 %v6094
    %v7373 = vpop.f32.mrb[0].mxu0
    %v7374 = vadd.f32 %v7301, %v7373
    %v7375 = vpop.f32.mrb[0].mxu0
    %v7376 = vpop.f32.mrb[0].mxu0
    %v7377 = vadd.f32 %v7304, %v7376
    %v7378 = vpop.f32.mrb[0].mxu0
    %7379 = vmatprep.mubr.bf16.mxu0 %v6111
    %7380 = vmatmul.mubr.bf16.gmra.mrb[0].mxu0 %v6110
    %v7381 = vpop.f32.mrb[0].mxu0
    %v7382 = vadd.f32 %v7309, %v7381
    %v7383 = vpop.f32.mrb[0].mxu0
    %v7384 = vpop.f32.mrb[0].mxu0
    %v7385 = vadd.f32 %v7312, %v7384
    %v7386 = vpop.f32.mrb[0].mxu0
    %7387 = vmatprep.mubr.bf16.mxu0 %v6127
    %7388 = vmatmul.mubr.bf16.gmra.mrb[0].mxu0 %v6126
    %v7389 = vpop.f32.mrb[0].mxu0
    %v7390 = vadd.f32 %v7317, %v7389
    %v7391 = vpop.f32.mrb[0].mxu0
    %v7392 = vpop.f32.mrb[0].mxu0
    %v7393 = vadd.f32 %v7320, %v7392
    %v7394 = vpop.f32.mrb[0].mxu0
    %7395 = vmatprep.mubr.bf16.mxu0 %v6143
    %7396 = vmatmul.mubr.bf16.gmra.mrb[0].mxu0 %v6142
    %v7397 = vpop.f32.mrb[0].mxu0
    %v7398 = vadd.f32 %v7325, %v7397
    %v7399 = vpop.f32.mrb[0].mxu0
    %v7400 = vpop.f32.mrb[0].mxu0
    %v7401 = vadd.f32 %v7328, %v7400
    %v7402 = vpop.f32.mrb[0].mxu0
    %7403 = vdwg.mxu0
    %7404 = vmatprep.subr.bf16.mxu0 0
    %7405 = vmatpush1.bf16.msra.mxu0 %v6977
    %7406 = vmatprep.subr.bf16.mxu0 0
    %7407 = vmatpush1.bf16.msra.mxu0 %v6978
    %7408 = vmatprep.subr.bf16.mxu0 0
    %7409 = vmatpush1.bf16.msra.mxu0 %v6979
    %7410 = vmatprep.subr.bf16.mxu0 0
    %7411 = vmatpush1.bf16.msra.mxu0 %v6980
    %7412 = vmatprep.subr.bf16.mxu0 0
    %7413 = vmatpush1.bf16.msra.mxu0 %v6981
    %7414 = vmatprep.subr.bf16.mxu0 0
    %7415 = vmatpush1.bf16.msra.mxu0 %v6982
    %7416 = vmatprep.subr.bf16.mxu0 0
    %7417 = vmatpush1.bf16.msra.mxu0 %v6983
    %7418 = vmatprep.subr.bf16.mxu0 0
    %7419 = vmatpush1.bf16.msra.mxu0 %v6984
    %7420 = vmatprep.subr.bf16.mxu0 0
    %7421 = vmatpush1.bf16.msra.mxu0 %v6985
    %7422 = vmatprep.subr.bf16.mxu0 0
    %7423 = vmatpush1.bf16.msra.mxu0 %v6986
    %7424 = vmatprep.subr.bf16.mxu0 0
    %7425 = vmatpush1.bf16.msra.mxu0 %v6987
    %7426 = vmatprep.subr.bf16.mxu0 0
    %7427 = vmatpush1.bf16.msra.mxu0 %v6988
    %7428 = vmatprep.subr.bf16.mxu0 0
    %7429 = vmatpush1.bf16.msra.mxu0 %v6989
    %7430 = vmatprep.subr.bf16.mxu0 0
    %7431 = vmatpush1.bf16.msra.mxu0 %v6990
    %7432 = vmatprep.subr.bf16.mxu0 0
    %7433 = vmatpush1.bf16.msra.mxu0 %v6991
    %7434 = vmatprep.subr.bf16.mxu0 0
    %7435 = vmatpush1.bf16.msra.mxu0 %v6992
    %7436 = vmatprep.mubr.bf16.mxu0 %v6081
    %7437 = vmatmul.mubr.bf16.gmra.mrb[0].mxu0 %v6080
    %v7438 = vpop.f32.mrb[0].mxu0
    %v7439 = vadd.f32 %v7366, %v7438
    %v7440 = vpop.f32.mrb[0].mxu0
    %v7441 = vpop.f32.mrb[0].mxu0
    %v7442 = vadd.f32 %v7369, %v7441
    %v7443 = vpop.f32.mrb[0].mxu0
    %7444 = vmatprep.mubr.bf16.mxu0 %v6097
    %7445 = vmatmul.mubr.bf16.gmra.mrb[0].mxu0 %v6096
    %v7446 = vpop.f32.mrb[0].mxu0
    %v7447 = vadd.f32 %v7374, %v7446
    %v7448 = vpop.f32.mrb[0].mxu0
    %v7449 = vpop.f32.mrb[0].mxu0
    %v7450 = vadd.f32 %v7377, %v7449
    %v7451 = vpop.f32.mrb[0].mxu0
    %7452 = vmatprep.mubr.bf16.mxu0 %v6113
    %7453 = vmatmul.mubr.bf16.gmra.mrb[0].mxu0 %v6112
    %v7454 = vpop.f32.mrb[0].mxu0
    %v7455 = vadd.f32 %v7382, %v7454
    %v7456 = vpop.f32.mrb[0].mxu0
    %v7457 = vpop.f32.mrb[0].mxu0
    %v7458 = vadd.f32 %v7385, %v7457
    %v7459 = vpop.f32.mrb[0].mxu0
    %7460 = vmatprep.mubr.bf16.mxu0 %v6129
    %7461 = vmatmul.mubr.bf16.gmra.mrb[0].mxu0 %v6128
    %v7462 = vpop.f32.mrb[0].mxu0
    %v7463 = vadd.f32 %v7390, %v7462
    %v7464 = vpop.f32.mrb[0].mxu0
    %v7465 = vpop.f32.mrb[0].mxu0
    %v7466 = vadd.f32 %v7393, %v7465
    %v7467 = vpop.f32.mrb[0].mxu0
    %7468 = vmatprep.mubr.bf16.mxu0 %v6145
    %7469 = vmatmul.mubr.bf16.gmra.mrb[0].mxu0 %v6144
    %v7470 = vpop.f32.mrb[0].mxu0
    %v7471 = vadd.f32 %v7398, %v7470
    %v7472 = vpop.f32.mrb[0].mxu0
    %v7473 = vpop.f32.mrb[0].mxu0
    %v7474 = vadd.f32 %v7401, %v7473
    %v7475 = vpop.f32.mrb[0].mxu0
    %7476 = vdwg.mxu0
    %7477 = vmatprep.subr.bf16.mxu0 0
    %7478 = vmatpush1.bf16.msra.mxu0 %v6993
    %7479 = vmatprep.subr.bf16.mxu0 0
    %7480 = vmatpush1.bf16.msra.mxu0 %v6994
    %7481 = vmatprep.subr.bf16.mxu0 0
    %7482 = vmatpush1.bf16.msra.mxu0 %v6995
    %7483 = vmatprep.subr.bf16.mxu0 0
    %7484 = vmatpush1.bf16.msra.mxu0 %v6996
    %7485 = vmatprep.subr.bf16.mxu0 0
    %7486 = vmatpush1.bf16.msra.mxu0 %v6997
    %7487 = vmatprep.subr.bf16.mxu0 0
    %7488 = vmatpush1.bf16.msra.mxu0 %v6998
    %7489 = vmatprep.subr.bf16.mxu0 0
    %7490 = vmatpush1.bf16.msra.mxu0 %v6999
    %7491 = vmatprep.subr.bf16.mxu0 0
    %7492 = vmatpush1.bf16.msra.mxu0 %v7000
    %7493 = vmatprep.subr.bf16.mxu0 0
    %7494 = vmatpush1.bf16.msra.mxu0 %v7001
    %7495 = vmatprep.subr.bf16.mxu0 0
    %7496 = vmatpush1.bf16.msra.mxu0 %v7002
    %7497 = vmatprep.subr.bf16.mxu0 0
    %7498 = vmatpush1.bf16.msra.mxu0 %v7003
    %7499 = vmatprep.subr.bf16.mxu0 0
    %7500 = vmatpush1.bf16.msra.mxu0 %v7004
    %7501 = vmatprep.subr.bf16.mxu0 0
    %7502 = vmatpush1.bf16.msra.mxu0 %v7005
    %7503 = vmatprep.subr.bf16.mxu0 0
    %7504 = vmatpush1.bf16.msra.mxu0 %v7006
    %7505 = vmatprep.subr.bf16.mxu0 0
    %7506 = vmatpush1.bf16.msra.mxu0 %v7007
    %7507 = vmatprep.subr.bf16.mxu0 0
    %7508 = vmatpush1.bf16.msra.mxu0 %v7008
    %7509 = vmatprep.mubr.bf16.mxu0 %v6083
    %7510 = vmatmul.mubr.bf16.gmra.mrb[0].mxu0 %v6082
    %v7511 = vpop.f32.mrb[0].mxu0
    %v7512 = vadd.f32 %v7439, %v7511
    %v7513 = vpop.f32.mrb[0].mxu0
    %v7514 = vpop.f32.mrb[0].mxu0
    %v7515 = vadd.f32 %v7442, %v7514
    %v7516 = vpop.f32.mrb[0].mxu0
    %7517 = vmatprep.mubr.bf16.mxu0 %v6099
    %7518 = vmatmul.mubr.bf16.gmra.mrb[0].mxu0 %v6098
    %v7519 = vpop.f32.mrb[0].mxu0
    %v7520 = vadd.f32 %v7447, %v7519
    %v7521 = vpop.f32.mrb[0].mxu0
    %v7522 = vpop.f32.mrb[0].mxu0
    %v7523 = vadd.f32 %v7450, %v7522
    %v7524 = vpop.f32.mrb[0].mxu0
    %7525 = vmatprep.mubr.bf16.mxu0 %v6115
    %7526 = vmatmul.mubr.bf16.gmra.mrb[0].mxu0 %v6114
    %v7527 = vpop.f32.mrb[0].mxu0
    %v7528 = vadd.f32 %v7455, %v7527
    %v7529 = vpop.f32.mrb[0].mxu0
    %v7530 = vpop.f32.mrb[0].mxu0
    %v7531 = vadd.f32 %v7458, %v7530
    %v7532 = vpop.f32.mrb[0].mxu0
    %7533 = vmatprep.mubr.bf16.mxu0 %v6131
    %7534 = vmatmul.mubr.bf16.gmra.mrb[0].mxu0 %v6130
    %v7535 = vpop.f32.mrb[0].mxu0
    %v7536 = vadd.f32 %v7463, %v7535
    %v7537 = vpop.f32.mrb[0].mxu0
    %v7538 = vpop.f32.mrb[0].mxu0
    %v7539 = vadd.f32 %v7466, %v7538
    %v7540 = vpop.f32.mrb[0].mxu0
    %7541 = vmatprep.mubr.bf16.mxu0 %v6147
    %7542 = vmatmul.mubr.bf16.gmra.mrb[0].mxu0 %v6146
    %v7543 = vpop.f32.mrb[0].mxu0
    %v7544 = vadd.f32 %v7471, %v7543
    %v7545 = vpop.f32.mrb[0].mxu0
    %v7546 = vpop.f32.mrb[0].mxu0
    %v7547 = vadd.f32 %v7474, %v7546
    %v7548 = vpop.f32.mrb[0].mxu0
    %7549 = vdwg.mxu0
    %7550 = vmatprep.subr.bf16.mxu0 0
    %7551 = vmatpush1.bf16.msra.mxu0 %v7009
    %7552 = vmatprep.subr.bf16.mxu0 0
    %7553 = vmatpush1.bf16.msra.mxu0 %v7010
    %7554 = vmatprep.subr.bf16.mxu0 0
    %7555 = vmatpush1.bf16.msra.mxu0 %v7011
    %7556 = vmatprep.subr.bf16.mxu0 0
    %7557 = vmatpush1.bf16.msra.mxu0 %v7012
    %7558 = vmatprep.subr.bf16.mxu0 0
    %7559 = vmatpush1.bf16.msra.mxu0 %v7013
    %7560 = vmatprep.subr.bf16.mxu0 0
    %7561 = vmatpush1.bf16.msra.mxu0 %v7014
    %7562 = vmatprep.subr.bf16.mxu0 0
    %7563 = vmatpush1.bf16.msra.mxu0 %v7015
    %7564 = vmatprep.subr.bf16.mxu0 0
    %7565 = vmatpush1.bf16.msra.mxu0 %v7016
    %7566 = vmatprep.subr.bf16.mxu0 0
    %7567 = vmatpush1.bf16.msra.mxu0 %v7017
    %7568 = vmatprep.subr.bf16.mxu0 0
    %7569 = vmatpush1.bf16.msra.mxu0 %v7018
    %7570 = vmatprep.subr.bf16.mxu0 0
    %7571 = vmatpush1.bf16.msra.mxu0 %v7019
    %7572 = vmatprep.subr.bf16.mxu0 0
    %7573 = vmatpush1.bf16.msra.mxu0 %v7020
    %7574 = vmatprep.subr.bf16.mxu0 0
    %7575 = vmatpush1.bf16.msra.mxu0 %v7021
    %7576 = vmatprep.subr.bf16.mxu0 0
    %7577 = vmatpush1.bf16.msra.mxu0 %v7022
    %7578 = vmatprep.subr.bf16.mxu0 0
    %7579 = vmatpush1.bf16.msra.mxu0 %v7023
    %7580 = vmatprep.subr.bf16.mxu0 0
    %7581 = vmatpush1.bf16.msra.mxu0 %v7024
    %7582 = vmatprep.mubr.bf16.mxu0 %v6085
    %7583 = vmatmul.mubr.bf16.gmra.mrb[0].mxu0 %v6084
    %v7584 = vpop.f32.mrb[0].mxu0
    %v7585 = vadd.f32 %v7512, %v7584
    %v7586 = vpop.f32.mrb[0].mxu0
    %v7587 = vpop.f32.mrb[0].mxu0
    %v7588 = vadd.f32 %v7515, %v7587
    %v7589 = vpop.f32.mrb[0].mxu0
    %7590 = vmatprep.mubr.bf16.mxu0 %v6101
    %7591 = vmatmul.mubr.bf16.gmra.mrb[0].mxu0 %v6100
    %v7592 = vpop.f32.mrb[0].mxu0
    %v7593 = vadd.f32 %v7520, %v7592
    %v7594 = vpop.f32.mrb[0].mxu0
    %v7595 = vpop.f32.mrb[0].mxu0
    %v7596 = vadd.f32 %v7523, %v7595
    %v7597 = vpop.f32.mrb[0].mxu0
    %7598 = vmatprep.mubr.bf16.mxu0 %v6117
    %7599 = vmatmul.mubr.bf16.gmra.mrb[0].mxu0 %v6116
    %v7600 = vpop.f32.mrb[0].mxu0
    %v7601 = vadd.f32 %v7528, %v7600
    %v7602 = vpop.f32.mrb[0].mxu0
    %v7603 = vpop.f32.mrb[0].mxu0
    %v7604 = vadd.f32 %v7531, %v7603
    %v7605 = vpop.f32.mrb[0].mxu0
    %7606 = vmatprep.mubr.bf16.mxu0 %v6133
    %7607 = vmatmul.mubr.bf16.gmra.mrb[0].mxu0 %v6132
    %v7608 = vpop.f32.mrb[0].mxu0
    %v7609 = vadd.f32 %v7536, %v7608
    %v7610 = vpop.f32.mrb[0].mxu0
    %v7611 = vpop.f32.mrb[0].mxu0
    %v7612 = vadd.f32 %v7539, %v7611
    %v7613 = vpop.f32.mrb[0].mxu0
    %7614 = vmatprep.mubr.bf16.mxu0 %v6149
    %7615 = vmatmul.mubr.bf16.gmra.mrb[0].mxu0 %v6148
    %v7616 = vpop.f32.mrb[0].mxu0
    %v7617 = vadd.f32 %v7544, %v7616
    %v7618 = vpop.f32.mrb[0].mxu0
    %v7619 = vpop.f32.mrb[0].mxu0
    %v7620 = vadd.f32 %v7547, %v7619
    %v7621 = vpop.f32.mrb[0].mxu0
    %7622 = vdwg.mxu0
    %7623 = vmatprep.subr.bf16.mxu0 0
    %7624 = vmatpush1.bf16.msra.mxu0 %v7025
    %7625 = vmatprep.subr.bf16.mxu0 0
    %7626 = vmatpush1.bf16.msra.mxu0 %v7026
    %7627 = vmatprep.subr.bf16.mxu0 0
    %7628 = vmatpush1.bf16.msra.mxu0 %v7027
    %7629 = vmatprep.subr.bf16.mxu0 0
    %7630 = vmatpush1.bf16.msra.mxu0 %v7028
    %7631 = vmatprep.subr.bf16.mxu0 0
    %7632 = vmatpush1.bf16.msra.mxu0 %v7029
    %7633 = vmatprep.subr.bf16.mxu0 0
    %7634 = vmatpush1.bf16.msra.mxu0 %v7030
    %7635 = vmatprep.subr.bf16.mxu0 0
    %7636 = vmatpush1.bf16.msra.mxu0 %v7031
    %7637 = vmatprep.subr.bf16.mxu0 0
    %7638 = vmatpush1.bf16.msra.mxu0 %v7032
    %7639 = vmatprep.subr.bf16.mxu0 0
    %7640 = vmatpush1.bf16.msra.mxu0 %v7033
    %7641 = vmatprep.subr.bf16.mxu0 0
    %7642 = vmatpush1.bf16.msra.mxu0 %v7034
    %7643 = vmatprep.subr.bf16.mxu0 0
    %7644 = vmatpush1.bf16.msra.mxu0 %v7035
    %7645 = vmatprep.subr.bf16.mxu0 0
    %7646 = vmatpush1.bf16.msra.mxu0 %v7036
    %7647 = vmatprep.subr.bf16.mxu0 0
    %7648 = vmatpush1.bf16.msra.mxu0 %v7037
    %7649 = vmatprep.subr.bf16.mxu0 0
    %7650 = vmatpush1.bf16.msra.mxu0 %v7038
    %7651 = vmatprep.subr.bf16.mxu0 0
    %7652 = vmatpush1.bf16.msra.mxu0 %v7039
    %7653 = vmatprep.subr.bf16.mxu0 0
    %7654 = vmatpush1.bf16.msra.mxu0 %v7040
    %7655 = vmatprep.mubr.bf16.mxu0 %v6087
    %7656 = vmatmul.mubr.bf16.gmra.mrb[0].mxu0 %v6086
    %v7657 = vpop.f32.mrb[0].mxu0
    %v7658 = vadd.f32 %v7585, %v7657
    %v7659 = vpop.f32.mrb[0].mxu0
    %v7660 = vpop.f32.mrb[0].mxu0
    %v7661 = vadd.f32 %v7588, %v7660
    %v7662 = vpop.f32.mrb[0].mxu0
    %7663 = vmatprep.mubr.bf16.mxu0 %v6103
    %7664 = vmatmul.mubr.bf16.gmra.mrb[0].mxu0 %v6102
    %v7665 = vpop.f32.mrb[0].mxu0
    %v7666 = vadd.f32 %v7593, %v7665
    %v7667 = vpop.f32.mrb[0].mxu0
    %v7668 = vpop.f32.mrb[0].mxu0
    %v7669 = vadd.f32 %v7596, %v7668
    %v7670 = vpop.f32.mrb[0].mxu0
    %7671 = vmatprep.mubr.bf16.mxu0 %v6119
    %7672 = vmatmul.mubr.bf16.gmra.mrb[0].mxu0 %v6118
    %v7673 = vpop.f32.mrb[0].mxu0
    %v7674 = vadd.f32 %v7601, %v7673
    %v7675 = vpop.f32.mrb[0].mxu0
    %v7676 = vpop.f32.mrb[0].mxu0
    %v7677 = vadd.f32 %v7604, %v7676
    %v7678 = vpop.f32.mrb[0].mxu0
    %7679 = vmatprep.mubr.bf16.mxu0 %v6135
    %7680 = vmatmul.mubr.bf16.gmra.mrb[0].mxu0 %v6134
    %v7681 = vpop.f32.mrb[0].mxu0
    %v7682 = vadd.f32 %v7609, %v7681
    %v7683 = vpop.f32.mrb[0].mxu0
    %v7684 = vpop.f32.mrb[0].mxu0
    %v7685 = vadd.f32 %v7612, %v7684
    %v7686 = vpop.f32.mrb[0].mxu0
    %7687 = vmatprep.mubr.bf16.mxu0 %v6151
    %7688 = vmatmul.mubr.bf16.gmra.mrb[0].mxu0 %v6150
    %v7689 = vpop.f32.mrb[0].mxu0
    %v7690 = vadd.f32 %v7617, %v7689
    %v7691 = vpop.f32.mrb[0].mxu0
    %v7692 = vpop.f32.mrb[0].mxu0
    %v7693 = vadd.f32 %v7620, %v7692
    %v7694 = vpop.f32.mrb[0].mxu0
    %7695 = vdwg.mxu0
    %7696 = vmatprep.subr.bf16.mxu0 0
    %7697 = vmatpush1.bf16.msra.mxu0 %v7041
    %7698 = vmatprep.subr.bf16.mxu0 0
    %7699 = vmatpush1.bf16.msra.mxu0 %v7042
    %7700 = vmatprep.subr.bf16.mxu0 0
    %7701 = vmatpush1.bf16.msra.mxu0 %v7043
    %7702 = vmatprep.subr.bf16.mxu0 0
    %7703 = vmatpush1.bf16.msra.mxu0 %v7044
    %7704 = vmatprep.subr.bf16.mxu0 0
    %7705 = vmatpush1.bf16.msra.mxu0 %v7045
    %7706 = vmatprep.subr.bf16.mxu0 0
    %7707 = vmatpush1.bf16.msra.mxu0 %v7046
    %7708 = vmatprep.subr.bf16.mxu0 0
    %7709 = vmatpush1.bf16.msra.mxu0 %v7047
    %7710 = vmatprep.subr.bf16.mxu0 0
    %7711 = vmatpush1.bf16.msra.mxu0 %v7048
    %7712 = vmatprep.subr.bf16.mxu0 0
    %7713 = vmatpush1.bf16.msra.mxu0 %v7049
    %7714 = vmatprep.subr.bf16.mxu0 0
    %7715 = vmatpush1.bf16.msra.mxu0 %v7050
    %7716 = vmatprep.subr.bf16.mxu0 0
    %7717 = vmatpush1.bf16.msra.mxu0 %v7051
    %7718 = vmatprep.subr.bf16.mxu0 0
    %7719 = vmatpush1.bf16.msra.mxu0 %v7052
    %7720 = vmatprep.subr.bf16.mxu0 0
    %7721 = vmatpush1.bf16.msra.mxu0 %v7053
    %7722 = vmatprep.subr.bf16.mxu0 0
    %7723 = vmatpush1.bf16.msra.mxu0 %v7054
    %7724 = vmatprep.subr.bf16.mxu0 0
    %7725 = vmatpush1.bf16.msra.mxu0 %v7055
    %7726 = vmatprep.subr.bf16.mxu0 0
    %7727 = vmatpush1.bf16.msra.mxu0 %v7056
    %7728 = vmatprep.mubr.bf16.mxu0 %v6089
    %7729 = vmatmul.mubr.bf16.gmra.mrb[0].mxu0 %v6088
    %v7730 = vpop.f32.mrb[0].mxu0
    %v7731 = vadd.f32 %v7658, %v7730
    %v7732 = vpop.f32.mrb[0].mxu0
    %v7733 = vpop.f32.mrb[0].mxu0
    %v7734 = vadd.f32 %v7661, %v7733
    %v7735 = vpop.f32.mrb[0].mxu0
    %7736 = vmatprep.mubr.bf16.mxu0 %v6105
    %7737 = vmatmul.mubr.bf16.gmra.mrb[0].mxu0 %v6104
    %v7738 = vpop.f32.mrb[0].mxu0
    %v7739 = vadd.f32 %v7666, %v7738
    %v7740 = vpop.f32.mrb[0].mxu0
    %v7741 = vpop.f32.mrb[0].mxu0
    %v7742 = vadd.f32 %v7669, %v7741
    %v7743 = vpop.f32.mrb[0].mxu0
    %7744 = vmatprep.mubr.bf16.mxu0 %v6121
    %7745 = vmatmul.mubr.bf16.gmra.mrb[0].mxu0 %v6120
    %v7746 = vpop.f32.mrb[0].mxu0
    %v7747 = vadd.f32 %v7674, %v7746
    %v7748 = vpop.f32.mrb[0].mxu0
    %v7749 = vpop.f32.mrb[0].mxu0
    %v7750 = vadd.f32 %v7677, %v7749
    %v7751 = vpop.f32.mrb[0].mxu0
    %7752 = vmatprep.mubr.bf16.mxu0 %v6137
    %7753 = vmatmul.mubr.bf16.gmra.mrb[0].mxu0 %v6136
    %v7754 = vpop.f32.mrb[0].mxu0
    %v7755 = vadd.f32 %v7682, %v7754
    %v7756 = vpop.f32.mrb[0].mxu0
    %v7757 = vpop.f32.mrb[0].mxu0
    %v7758 = vadd.f32 %v7685, %v7757
    %v7759 = vpop.f32.mrb[0].mxu0
    %7760 = vmatprep.mubr.bf16.mxu0 %v6153
    %7761 = vmatmul.mubr.bf16.gmra.mrb[0].mxu0 %v6152
    %v7762 = vpop.f32.mrb[0].mxu0
    %v7763 = vadd.f32 %v7690, %v7762
    %v7764 = vpop.f32.mrb[0].mxu0
    %v7765 = vpop.f32.mrb[0].mxu0
    %v7766 = vadd.f32 %v7693, %v7765
    %v7767 = vpop.f32.mrb[0].mxu0
    %7768 = vdwg.mxu0
    %v7769 = vadd.f32 %v4944, %v7731
    %v7770 = vadd.f32 %v4945, %v7734
    %v7771 = vadd.f32 %v4946, %v7739
    %v7772 = vadd.f32 %v4947, %v7742
    %v7773 = vadd.f32 %v4948, %v7747
    %v7774 = vadd.f32 %v4949, %v7750
    %v7775 = vadd.f32 %v4950, %v7755
    %v7776 = vadd.f32 %v4951, %v7758
    %v7777 = vadd.f32 %v4952, %v7763
    %v7778 = vadd.f32 %v4953, %v7766
    %v7779 = vld [vmem:[%s79] sm:$0x1]
    %v7780 = vld [vmem:[%s81] sm:$0x1]
    %v7781 = vsel %vm278, %v7769, 0.0
    %7782 = vadd.xlane.f32.xlu0 %v7781
    %v7783 = vpop.xlane.xlu0 %7782
    %v7784 = vsel %vm278, %v7770, 0.0
    %7785 = vadd.xlane.f32.xlu0 %v7784
    %v7786 = vpop.xlane.xlu0 %7785
    %v7787 = vsel %vm278, %v7771, 0.0
    %7788 = vadd.xlane.f32.xlu0 %v7787
    %v7789 = vpop.xlane.xlu0 %7788
    %v7790 = vsel %vm278, %v7772, 0.0
    %7791 = vadd.xlane.f32.xlu0 %v7790
    %v7792 = vpop.xlane.xlu0 %7791
    %v7793 = vsel %vm278, %v7773, 0.0
    %7794 = vadd.xlane.f32.xlu0 %v7793
    %v7795 = vpop.xlane.xlu0 %7794
    %v7796 = vsel %vm278, %v7774, 0.0
    %7797 = vadd.xlane.f32.xlu0 %v7796
    %v7798 = vpop.xlane.xlu0 %7797
    %v7799 = vsel %vm278, %v7775, 0.0
    %7800 = vadd.xlane.f32.xlu0 %v7799
    %v7801 = vpop.xlane.xlu0 %7800
    %v7802 = vsel %vm278, %v7776, 0.0
    %7803 = vadd.xlane.f32.xlu0 %v7802
    %v7804 = vpop.xlane.xlu0 %7803
    %v7805 = vsel %vm278, %v7777, 0.0
    %7806 = vadd.xlane.f32.xlu0 %v7805
    %v7807 = vpop.xlane.xlu0 %7806
    %v7808 = vsel %vm278, %v7778, 0.0
    %7809 = vadd.xlane.f32.xlu0 %v7808
    %v7810 = vpop.xlane.xlu0 %7809
    %v7811 = vmul.f32 %v7783, %v509
    %v7812 = vmul.f32 %v7786, %v509
    %v7813 = vmul.f32 %v7789, %v509
    %v7814 = vmul.f32 %v7792, %v509
    %v7815 = vmul.f32 %v7795, %v509
    %v7816 = vmul.f32 %v7798, %v509
    %v7817 = vmul.f32 %v7801, %v509
    %v7818 = vmul.f32 %v7804, %v509
    %v7819 = vmul.f32 %v7807, %v509
    %v7820 = vmul.f32 %v7810, %v509
    %v7821 = vsub.f32 %v7769, %v7811
    %v7822 = vsub.f32 %v7770, %v7812
    %v7823 = vsub.f32 %v7771, %v7813
    %v7824 = vsub.f32 %v7772, %v7814
    %v7825 = vsub.f32 %v7773, %v7815
    %v7826 = vsub.f32 %v7774, %v7816
    %v7827 = vsub.f32 %v7775, %v7817
    %v7828 = vsub.f32 %v7776, %v7818
    %v7829 = vsub.f32 %v7777, %v7819
    %v7830 = vsub.f32 %v7778, %v7820
    %v7831 = vmul.f32 %v7821, %v7821
    %v7832 = vmul.f32 %v7822, %v7822
    %v7833 = vmul.f32 %v7823, %v7823
    %v7834 = vmul.f32 %v7824, %v7824
    %v7835 = vmul.f32 %v7825, %v7825
    %v7836 = vmul.f32 %v7826, %v7826
    %v7837 = vmul.f32 %v7827, %v7827
    %v7838 = vmul.f32 %v7828, %v7828
    %v7839 = vmul.f32 %v7829, %v7829
    %v7840 = vmul.f32 %v7830, %v7830
    %v7841 = vsel %vm278, %v7831, 0.0
    %7842 = vadd.xlane.f32.xlu0 %v7841
    %v7843 = vpop.xlane.xlu0 %7842
    %v7844 = vsel %vm278, %v7832, 0.0
    %7845 = vadd.xlane.f32.xlu0 %v7844
    %v7846 = vpop.xlane.xlu0 %7845
    %v7847 = vsel %vm278, %v7833, 0.0
    %7848 = vadd.xlane.f32.xlu0 %v7847
    %v7849 = vpop.xlane.xlu0 %7848
    %v7850 = vsel %vm278, %v7834, 0.0
    %7851 = vadd.xlane.f32.xlu0 %v7850
    %v7852 = vpop.xlane.xlu0 %7851
    %v7853 = vsel %vm278, %v7835, 0.0
    %7854 = vadd.xlane.f32.xlu0 %v7853
    %v7855 = vpop.xlane.xlu0 %7854
    %v7856 = vsel %vm278, %v7836, 0.0
    %7857 = vadd.xlane.f32.xlu0 %v7856
    %v7858 = vpop.xlane.xlu0 %7857
    %v7859 = vsel %vm278, %v7837, 0.0
    %7860 = vadd.xlane.f32.xlu0 %v7859
    %v7861 = vpop.xlane.xlu0 %7860
    %v7862 = vsel %vm278, %v7838, 0.0
    %7863 = vadd.xlane.f32.xlu0 %v7862
    %v7864 = vpop.xlane.xlu0 %7863
    %v7865 = vsel %vm278, %v7839, 0.0
    %7866 = vadd.xlane.f32.xlu0 %v7865
    %v7867 = vpop.xlane.xlu0 %7866
    %v7868 = vsel %vm278, %v7840, 0.0
    %7869 = vadd.xlane.f32.xlu0 %v7868
    %v7870 = vpop.xlane.xlu0 %7869
    %v7871 = vmul.f32 %v7843, %v509
    %v7872 = vmul.f32 %v7846, %v509
    %v7873 = vmul.f32 %v7849, %v509
    %v7874 = vmul.f32 %v7852, %v509
    %v7875 = vmul.f32 %v7855, %v509
    %v7876 = vmul.f32 %v7858, %v509
    %v7877 = vmul.f32 %v7861, %v509
    %v7878 = vmul.f32 %v7864, %v509
    %v7879 = vmul.f32 %v7867, %v509
    %v7880 = vmul.f32 %v7870, %v509
    %v7881 = vadd.f32 %v7871, 1e-05
    %v7882 = vadd.f32 %v7872, 1e-05
    %v7883 = vadd.f32 %v7873, 1e-05
    %v7884 = vadd.f32 %v7874, 1e-05
    %v7885 = vadd.f32 %v7875, 1e-05
    %v7886 = vadd.f32 %v7876, 1e-05
    %v7887 = vadd.f32 %v7877, 1e-05
    %v7888 = vadd.f32 %v7878, 1e-05
    %v7889 = vadd.f32 %v7879, 1e-05
    %v7890 = vadd.f32 %v7880, 1e-05
    %v7891 = vrsqrt.pop %v7881
    %v7892 = vrsqrt.pop %v7882
    %v7893 = vrsqrt.pop %v7883
    %v7894 = vrsqrt.pop %v7884
    %v7895 = vrsqrt.pop %v7885
    %v7896 = vrsqrt.pop %v7886
    %v7897 = vrsqrt.pop %v7887
    %v7898 = vrsqrt.pop %v7888
    %v7899 = vrsqrt.pop %v7889
    %v7900 = vrsqrt.pop %v7890
    %v7901 = vmul.f32 %v7821, %v7891
    %v7902 = vmul.f32 %v7822, %v7892
    %v7903 = vmul.f32 %v7823, %v7893
    %v7904 = vmul.f32 %v7824, %v7894
    %v7905 = vmul.f32 %v7825, %v7895
    %v7906 = vmul.f32 %v7826, %v7896
    %v7907 = vmul.f32 %v7827, %v7897
    %v7908 = vmul.f32 %v7828, %v7898
    %v7909 = vmul.f32 %v7829, %v7899
    %v7910 = vmul.f32 %v7830, %v7900
    %v7912 = vlaneseq
    %v7913 = vshrl.u32 %v7912, 7
    %v7914 = vsub.s32 0, %v7913
    %v7915 = vrot.slane %v7779, %v7914
    %v7917 = vmul.f32 %v7901, %v7915
    %v7918 = vmul.f32 %v7902, %v7915
    %v7919 = vmul.f32 %v7903, %v7915
    %v7920 = vmul.f32 %v7904, %v7915
    %v7921 = vmul.f32 %v7905, %v7915
    %v7922 = vmul.f32 %v7906, %v7915
    %v7923 = vmul.f32 %v7907, %v7915
    %v7924 = vmul.f32 %v7908, %v7915
    %v7925 = vmul.f32 %v7909, %v7915
    %v7926 = vmul.f32 %v7910, %v7915
    %v7928 = vlaneseq
    %v7929 = vshrl.u32 %v7928, 7
    %v7930 = vsub.s32 0, %v7929
    %v7931 = vrot.slane %v7780, %v7930
    %v7933 = vadd.f32 %v7917, %v7931
    %v7934 = vadd.f32 %v7918, %v7931
    %v7935 = vadd.f32 %v7919, %v7931
    %v7936 = vadd.f32 %v7920, %v7931
    %v7937 = vadd.f32 %v7921, %v7931
    %v7938 = vadd.f32 %v7922, %v7931
    %v7939 = vadd.f32 %v7923, %v7931
    %v7940 = vadd.f32 %v7924, %v7931
    %v7941 = vadd.f32 %v7925, %v7931
    %v7942 = vadd.f32 %v7926, %v7931
    %v7943 = vld [vmem:[%s83] sm:$0xff]
    %v7944 = vld [vmem:[%s83 + $0x8] sm:$0xff]
    %v7945 = vld [vmem:[%s83 + $0x10] sm:$0xff]
    %v7946 = vld [vmem:[%s83 + $0x18] sm:$0xff]
    %v7947 = vld [vmem:[%s85] sm:$0x1]
    %v7949 = vlaneseq
    %v7950 = vshrl.u32 %v7949, 7
    %v7951 = vsub.s32 0, %v7950
    %v7952 = vrot.slane %v7947, %v7951
    %v7955 = vsel %vm278, %v7933, 0
    %v7958 = vsel %vm278, %v7934, 0
    %v7961 = vsel %vm278, %v7935, 0
    %v7964 = vsel %vm278, %v7936, 0
    %v7967 = vsel %vm278, %v7937, 0
    %v7970 = vsel %vm278, %v7938, 0
    %v7973 = vsel %vm278, %v7939, 0
    %v7976 = vsel %vm278, %v7940, 0
    %v7979 = vsel %vm278, %v7941, 0
    %v7982 = vsel %vm278, %v7942, 0
    %7984 = vmatprep.subr.mxu0 0.0
    %7985 = vmatpush1.msra.mxu0 %v7943
    %7986 = vmatprep.subr.mxu0 0.0
    %7987 = vmatpush1.msra.mxu0 %v7944
    %7988 = vmatprep.subr.mxu0 0.0
    %7989 = vmatpush1.msra.mxu0 %v7945
    %7990 = vmatprep.subr.mxu0 0.0
    %7991 = vmatpush1.msra.mxu0 %v7946
    %7992 = vmatprep.subr.mxu0 0.0
    %7993 = vmatpush1.msra.mxu0 0.0
    %7994 = vmatprep.subr.mxu0 0.0
    %7995 = vmatpush1.msra.mxu0 0.0
    %7996 = vmatprep.subr.mxu0 0.0
    %7997 = vmatpush1.msra.mxu0 0.0
    %7998 = vmatprep.subr.mxu0 0.0
    %7999 = vmatpush1.msra.mxu0 0.0
    %8000 = vmatprep.subr.mxu0 0.0
    %8001 = vmatpush1.msra.mxu0 0.0
    %8002 = vmatprep.subr.mxu0 0.0
    %8003 = vmatpush1.msra.mxu0 0.0
    %8004 = vmatprep.subr.mxu0 0.0
    %8005 = vmatpush1.msra.mxu0 0.0
    %8006 = vmatprep.subr.mxu0 0.0
    %8007 = vmatpush1.msra.mxu0 0.0
    %8008 = vmatprep.subr.mxu0 0.0
    %8009 = vmatpush1.msra.mxu0 0.0
    %8010 = vmatprep.subr.mxu0 0.0
    %8011 = vmatpush1.msra.mxu0 0.0
    %8012 = vmatprep.subr.mxu0 0.0
    %8013 = vmatpush1.msra.mxu0 0.0
    %8014 = vmatprep.subr.mxu0 0.0
    %8015 = vmatpush1.msra.mxu0 0.0
    %8016 = vmatprep.subr.mxu0 0.0
    %8017 = vmatpush1.msra.mxu0 0.0
    %8018 = vmatprep.subr.mxu0 0.0
    %8019 = vmatpush1.msra.mxu0 0.0
    %8020 = vmatprep.subr.mxu0 0.0
    %8021 = vmatpush1.msra.mxu0 0.0
    %8022 = vmatprep.subr.mxu0 0.0
    %8023 = vmatpush1.msra.mxu0 0.0
    %8024 = vmatprep.subr.mxu0 0.0
    %8025 = vmatpush1.msra.mxu0 0.0
    %8026 = vmatprep.subr.mxu0 0.0
    %8027 = vmatpush1.msra.mxu0 0.0
    %8028 = vmatprep.subr.mxu0 0.0
    %8029 = vmatpush1.msra.mxu0 0.0
    %8030 = vmatprep.subr.mxu0 0.0
    %8031 = vmatpush1.msra.mxu0 0.0
    %8032 = vmatprep.subr.mxu0 0.0
    %8033 = vmatpush1.msra.mxu0 0.0
    %8034 = vmatprep.subr.mxu0 0.0
    %8035 = vmatpush1.msra.mxu0 0.0
    %8036 = vmatprep.subr.mxu0 0.0
    %8037 = vmatpush1.msra.mxu0 0.0
    %8038 = vmatprep.subr.mxu0 0.0
    %8039 = vmatpush1.msra.mxu0 0.0
    %8040 = vmatprep.subr.mxu0 0.0
    %8041 = vmatpush1.msra.mxu0 0.0
    %8042 = vmatprep.subr.mxu0 0.0
    %8043 = vmatpush1.msra.mxu0 0.0
    %8044 = vmatprep.subr.mxu0 0.0
    %8045 = vmatpush1.msra.mxu0 0.0
    %8046 = vmatprep.subr.mxu0 0.0
    %8047 = vmatpush1.msra.mxu0 0.0
    %8048 = vmatprep.mubr.f32.mxu0 0.0
    %8049 = vmatmul.mubr.f32.gmra.mrb[0].mxu0 %v7955
    %v8050 = vpop.f32.mrb[0].mxu0
    %v8051 = vadd.f32 %v7952, %v8050
    %v8052 = vpop.f32.mrb[0].mxu0
    %8053 = vmatprep.mubr.f32.mxu0 0.0
    %8054 = vmatmul.mubr.f32.gmra.mrb[0].mxu0 %v7958
    %v8055 = vpop.f32.mrb[0].mxu0
    %v8056 = vadd.f32 %v7952, %v8055
    %v8057 = vpop.f32.mrb[0].mxu0
    %8058 = vmatprep.mubr.f32.mxu0 0.0
    %8059 = vmatmul.mubr.f32.gmra.mrb[0].mxu0 %v7961
    %v8060 = vpop.f32.mrb[0].mxu0
    %v8061 = vadd.f32 %v7952, %v8060
    %v8062 = vpop.f32.mrb[0].mxu0
    %8063 = vmatprep.mubr.f32.mxu0 0.0
    %8064 = vmatmul.mubr.f32.gmra.mrb[0].mxu0 %v7964
    %v8065 = vpop.f32.mrb[0].mxu0
    %v8066 = vadd.f32 %v7952, %v8065
    %v8067 = vpop.f32.mrb[0].mxu0
    %8068 = vmatprep.mubr.f32.mxu0 0.0
    %8069 = vmatmul.mubr.f32.gmra.mrb[0].mxu0 %v7967
    %v8070 = vpop.f32.mrb[0].mxu0
    %v8071 = vadd.f32 %v7952, %v8070
    %v8072 = vpop.f32.mrb[0].mxu0
    %8073 = vmatprep.mubr.f32.mxu0 0.0
    %8074 = vmatmul.mubr.f32.gmra.mrb[0].mxu0 %v7970
    %v8075 = vpop.f32.mrb[0].mxu0
    %v8076 = vadd.f32 %v7952, %v8075
    %v8077 = vpop.f32.mrb[0].mxu0
    %8078 = vmatprep.mubr.f32.mxu0 0.0
    %8079 = vmatmul.mubr.f32.gmra.mrb[0].mxu0 %v7973
    %v8080 = vpop.f32.mrb[0].mxu0
    %v8081 = vadd.f32 %v7952, %v8080
    %v8082 = vpop.f32.mrb[0].mxu0
    %8083 = vmatprep.mubr.f32.mxu0 0.0
    %8084 = vmatmul.mubr.f32.gmra.mrb[0].mxu0 %v7976
    %v8085 = vpop.f32.mrb[0].mxu0
    %v8086 = vadd.f32 %v7952, %v8085
    %v8087 = vpop.f32.mrb[0].mxu0
    %8088 = vmatprep.mubr.f32.mxu0 0.0
    %8089 = vmatmul.mubr.f32.gmra.mrb[0].mxu0 %v7979
    %v8090 = vpop.f32.mrb[0].mxu0
    %v8091 = vadd.f32 %v7952, %v8090
    %v8092 = vpop.f32.mrb[0].mxu0
    %8093 = vmatprep.mubr.f32.mxu0 0.0
    %8094 = vmatmul.mubr.f32.gmra.mrb[0].mxu0 %v7982
    %v8095 = vpop.f32.mrb[0].mxu0
    %v8096 = vadd.f32 %v7952, %v8095
    %v8097 = vpop.f32.mrb[0].mxu0
    %8098 = vdwg.mxu0
    %8099 = vst.msk [vmem:[%s87] sm:$0xff] %vm192, %v8051
    %8100 = vst.msk [vmem:[%s87 + $0x8] sm:$0xff] %vm192, %v8056
    %8101 = vst.msk [vmem:[%s87 + $0x10] sm:$0xff] %vm192, %v8061
    %8102 = vst.msk [vmem:[%s87 + $0x18] sm:$0xff] %vm192, %v8066
    %8103 = vst.msk [vmem:[%s87 + $0x20] sm:$0xff] %vm192, %v8071
    %8104 = vst.msk [vmem:[%s87 + $0x28] sm:$0xff] %vm192, %v8076
    %8105 = vst.msk [vmem:[%s87 + $0x30] sm:$0xff] %vm192, %v8081
    %8106 = vst.msk [vmem:[%s87 + $0x38] sm:$0xff] %vm192, %v8086
    %8107 = vst.msk [vmem:[%s87 + $0x40] sm:$0xff] %vm192, %v8091
    %8108 = vst.msk [vmem:[%s87 + $0x48] sm:$0xff] %vm192, %v8096
    %v8109 = vld [vmem:[%s13] sm:$0xff]
    %v8110 = vld [vmem:[%s13 + $0x8] sm:$0xff]
    %v8111 = vld [vmem:[%s13 + $0x10] sm:$0xff]
    %v8112 = vld [vmem:[%s13 + $0x18] sm:$0xff]
    %v8113 = vld [vmem:[%s13 + $0x20] sm:$0xff]
    %v8114 = vld [vmem:[%s13 + $0x28] sm:$0xff]
    %v8115 = vld [vmem:[%s13 + $0x30] sm:$0xff]
    %v8116 = vld [vmem:[%s13 + $0x38] sm:$0xff]
    %v8117 = vld [vmem:[%s13 + $0x40] sm:$0xff]
    %v8118 = vld [vmem:[%s13 + $0x48] sm:$0xff]
    %v8119 = vsub.f32 %v8051, %v8109
    %v8120 = vsub.f32 %v8056, %v8110
    %v8121 = vsub.f32 %v8061, %v8111
    %v8122 = vsub.f32 %v8066, %v8112
    %v8123 = vsub.f32 %v8071, %v8113
    %v8124 = vsub.f32 %v8076, %v8114
    %v8125 = vsub.f32 %v8081, %v8115
    %v8126 = vsub.f32 %v8086, %v8116
    %v8127 = vsub.f32 %v8091, %v8117
    %v8128 = vsub.f32 %v8096, %v8118
    %v8129 = vmul.f32 %v8119, %v8119
    %v8130 = vmul.f32 %v8120, %v8120
    %v8131 = vmul.f32 %v8121, %v8121
    %v8132 = vmul.f32 %v8122, %v8122
    %v8133 = vmul.f32 %v8123, %v8123
    %v8134 = vmul.f32 %v8124, %v8124
    %v8135 = vmul.f32 %v8125, %v8125
    %v8136 = vmul.f32 %v8126, %v8126
    %v8137 = vmul.f32 %v8127, %v8127
    %v8138 = vmul.f32 %v8128, %v8128
    %v8139 = vadd.f32 %v8129, %v8134
    %v8140 = vadd.f32 %v8130, %v8135
    %v8141 = vadd.f32 %v8131, %v8136
    %v8142 = vadd.f32 %v8132, %v8137
    %v8143 = vadd.f32 %v8133, %v8138
    %v8144 = vrsqrt.pop %v8139
    %v8145 = vmul.f32 %v8139, %v8144
    %vm8146 = vcmp.eq.f32.partialorder %v8139, inf
    %v8147 = vsel %vm8146, %v8139, %v8145
    %vm8148 = vcmp.eq.f32.partialorder %v8139, 0.0
    %v8149 = vand.u32 %v8139, 2147483648
    %v8150 = vsel %vm8148, %v8149, %v8147
    %v8151 = vrsqrt.pop %v8140
    %v8152 = vmul.f32 %v8140, %v8151
    %vm8153 = vcmp.eq.f32.partialorder %v8140, inf
    %v8154 = vsel %vm8153, %v8140, %v8152
    %vm8155 = vcmp.eq.f32.partialorder %v8140, 0.0
    %v8156 = vand.u32 %v8140, 2147483648
    %v8157 = vsel %vm8155, %v8156, %v8154
    %v8158 = vrsqrt.pop %v8141
    %v8159 = vmul.f32 %v8141, %v8158
    %vm8160 = vcmp.eq.f32.partialorder %v8141, inf
    %v8161 = vsel %vm8160, %v8141, %v8159
    %vm8162 = vcmp.eq.f32.partialorder %v8141, 0.0
    %v8163 = vand.u32 %v8141, 2147483648
    %v8164 = vsel %vm8162, %v8163, %v8161
    %v8165 = vrsqrt.pop %v8142
    %v8166 = vmul.f32 %v8142, %v8165
    %vm8167 = vcmp.eq.f32.partialorder %v8142, inf
    %v8168 = vsel %vm8167, %v8142, %v8166
    %vm8169 = vcmp.eq.f32.partialorder %v8142, 0.0
    %v8170 = vand.u32 %v8142, 2147483648
    %v8171 = vsel %vm8169, %v8170, %v8168
    %v8172 = vrsqrt.pop %v8143
    %v8173 = vmul.f32 %v8143, %v8172
    %vm8174 = vcmp.eq.f32.partialorder %v8143, inf
    %v8175 = vsel %vm8174, %v8143, %v8173
    %vm8176 = vcmp.eq.f32.partialorder %v8143, 0.0
    %v8177 = vand.u32 %v8143, 2147483648
    %v8178 = vsel %vm8176, %v8177, %v8175
    %v8179 = vsel %vm192, %v8150, 0.0
    %8180 = vadd.xlane.f32.xlu0 %v8179
    %v8181 = vpop.xlane.xlu0 %8180
    %v8182 = vsel %vm192, %v8157, 0.0
    %8183 = vadd.xlane.f32.xlu0 %v8182
    %v8184 = vpop.xlane.xlu0 %8183
    %v8185 = vsel %vm192, %v8164, 0.0
    %8186 = vadd.xlane.f32.xlu0 %v8185
    %v8187 = vpop.xlane.xlu0 %8186
    %v8188 = vsel %vm192, %v8171, 0.0
    %8189 = vadd.xlane.f32.xlu0 %v8188
    %v8190 = vpop.xlane.xlu0 %8189
    %v8191 = vsel %vm192, %v8178, 0.0
    %8192 = vadd.xlane.f32.xlu0 %v8191
    %v8193 = vpop.xlane.xlu0 %8192
    %v8194 = vadd.f32 %v8181, %v8184
    %v8195 = vadd.f32 %v8194, %v8187
    %v8196 = vadd.f32 %v8195, %v8190
    %v8197 = vadd.f32 %v8196, %v8193
    %v8198 = vrot.slane %v8197, 4
    %v8199 = vadd.f32 %v8197, %v8198
    %v8200 = vrot.slane %v8199, 2
    %v8201 = vadd.f32 %v8199, %v8200
    %v8202 = vrot.slane %v8201, 1
    %v8203 = vadd.f32 %v8201, %v8202
    %v8204 = vrcp.pop 40.0
    %v8205 = vmul.f32 %v8203, %v8204
    %v8206 = vadd.f32 %v1214, 1.0
    %v8207 = vadd.f32 %v1219, 1.0
    %v8208 = vadd.f32 %v1224, 1.0
    %v8209 = vadd.f32 %v1229, 1.0
    %v8210 = vadd.f32 %v1234, 1.0
    %v8211 = vadd.f32 %v1239, 1.0
    %v8212 = vadd.f32 %v1244, 1.0
    %v8213 = vadd.f32 %v1249, 1.0
    %v8214 = vadd.f32 %v1254, 1.0
    %v8215 = vadd.f32 %v1259, 1.0
    %v8216 = vmul.f32 %v1088, %v1088
    %v8217 = vmul.f32 %v1093, %v1093
    %v8218 = vmul.f32 %v1098, %v1098
    %v8219 = vmul.f32 %v1103, %v1103
    %v8220 = vmul.f32 %v1108, %v1108
    %v8221 = vmul.f32 %v1113, %v1113
    %v8222 = vmul.f32 %v1118, %v1118
    %v8223 = vmul.f32 %v1123, %v1123
    %v8224 = vmul.f32 %v1128, %v1128
    %v8225 = vmul.f32 %v1133, %v1133
    %v8226 = vsub.f32 %v8206, %v8216
    %v8227 = vsub.f32 %v8207, %v8217
    %v8228 = vsub.f32 %v8208, %v8218
    %v8229 = vsub.f32 %v8209, %v8219
    %v8230 = vsub.f32 %v8210, %v8220
    %v8231 = vsub.f32 %v8211, %v8221
    %v8232 = vsub.f32 %v8212, %v8222
    %v8233 = vsub.f32 %v8213, %v8223
    %v8234 = vsub.f32 %v8214, %v8224
    %v8235 = vsub.f32 %v8215, %v8225
    %v8236 = vmul.f32 %v1214, 1.442695
    %v8237 = vpow.pop %v8236
    %v8238 = vmul.f32 %v1219, 1.442695
    %v8239 = vpow.pop %v8238
    %v8240 = vmul.f32 %v1224, 1.442695
    %v8241 = vpow.pop %v8240
    %v8242 = vmul.f32 %v1229, 1.442695
    %v8243 = vpow.pop %v8242
    %v8244 = vmul.f32 %v1234, 1.442695
    %v8245 = vpow.pop %v8244
    %v8246 = vmul.f32 %v1239, 1.442695
    %v8247 = vpow.pop %v8246
    %v8248 = vmul.f32 %v1244, 1.442695
    %v8249 = vpow.pop %v8248
    %v8250 = vmul.f32 %v1249, 1.442695
    %v8251 = vpow.pop %v8250
    %v8252 = vmul.f32 %v1254, 1.442695
    %v8253 = vpow.pop %v8252
    %v8254 = vmul.f32 %v1259, 1.442695
    %v8255 = vpow.pop %v8254
    %v8256 = vsub.f32 %v8226, %v8237
    %v8257 = vsub.f32 %v8227, %v8239
    %v8258 = vsub.f32 %v8228, %v8241
    %v8259 = vsub.f32 %v8229, %v8243
    %v8260 = vsub.f32 %v8230, %v8245
    %v8261 = vsub.f32 %v8231, %v8247
    %v8262 = vsub.f32 %v8232, %v8249
    %v8263 = vsub.f32 %v8233, %v8251
    %v8264 = vsub.f32 %v8234, %v8253
    %v8265 = vsub.f32 %v8235, %v8255
    %v8266 = vsel %vm278, %v8256, 0.0
    %8267 = vadd.xlane.f32.xlu0 %v8266
    %v8268 = vpop.xlane.xlu0 %8267
    %v8269 = vsel %vm278, %v8257, 0.0
    %8270 = vadd.xlane.f32.xlu0 %v8269
    %v8271 = vpop.xlane.xlu0 %8270
    %v8272 = vsel %vm278, %v8258, 0.0
    %8273 = vadd.xlane.f32.xlu0 %v8272
    %v8274 = vpop.xlane.xlu0 %8273
    %v8275 = vsel %vm278, %v8259, 0.0
    %8276 = vadd.xlane.f32.xlu0 %v8275
    %v8277 = vpop.xlane.xlu0 %8276
    %v8278 = vsel %vm278, %v8260, 0.0
    %8279 = vadd.xlane.f32.xlu0 %v8278
    %v8280 = vpop.xlane.xlu0 %8279
    %v8281 = vsel %vm278, %v8261, 0.0
    %8282 = vadd.xlane.f32.xlu0 %v8281
    %v8283 = vpop.xlane.xlu0 %8282
    %v8284 = vsel %vm278, %v8262, 0.0
    %8285 = vadd.xlane.f32.xlu0 %v8284
    %v8286 = vpop.xlane.xlu0 %8285
    %v8287 = vsel %vm278, %v8263, 0.0
    %8288 = vadd.xlane.f32.xlu0 %v8287
    %v8289 = vpop.xlane.xlu0 %8288
    %v8290 = vsel %vm278, %v8264, 0.0
    %8291 = vadd.xlane.f32.xlu0 %v8290
    %v8292 = vpop.xlane.xlu0 %8291
    %v8293 = vsel %vm278, %v8265, 0.0
    %8294 = vadd.xlane.f32.xlu0 %v8293
    %v8295 = vpop.xlane.xlu0 %8294
    %v8296 = vadd.f32 %v8268, %v8271
    %v8297 = vadd.f32 %v8296, %v8274
    %v8298 = vadd.f32 %v8297, %v8277
    %v8299 = vadd.f32 %v8298, %v8280
    %v8300 = vadd.f32 %v8299, %v8283
    %v8301 = vadd.f32 %v8300, %v8286
    %v8302 = vadd.f32 %v8301, %v8289
    %v8303 = vadd.f32 %v8302, %v8292
    %v8304 = vadd.f32 %v8303, %v8295
    %v8305 = vrot.slane %v8304, 4
    %v8306 = vadd.f32 %v8304, %v8305
    %v8307 = vrot.slane %v8306, 2
    %v8308 = vadd.f32 %v8306, %v8307
    %v8309 = vrot.slane %v8308, 1
    %v8310 = vadd.f32 %v8308, %v8309
    %v8311 = vmul.f32 %v8310, -0.5
    %v8312 = vrcp.pop 80.0
    %v8313 = vmul.f32 %v8311, %v8312
    %v8314 = vmul.u32 %v772, 10
    %v8315 = vsub.s32 %v783, %v8314
    %vm8316 = vcmp.ge.s32.totalorder %v8315, 0
    %vm8317 = vcmp.lt.s32.totalorder %v8315, 10
    %vm8318 = vmand %vm8316, %vm8317
    %v8319 = vsel %vm8318, 0.1, 0.0
    %v8321 = vsel %vm2048, %v8319, 0
    %8323 = vmatprep.subr.mxu0 0.0
    %8324 = vmatpush1.msra.mxu0 %v1312
    %8325 = vmatprep.subr.mxu0 0.0
    %8326 = vmatpush1.msra.mxu0 %v1313
    %8327 = vmatprep.subr.mxu0 0.0
    %8328 = vmatpush1.msra.mxu0 %v1314
    %8329 = vmatprep.subr.mxu0 0.0
    %8330 = vmatpush1.msra.mxu0 %v1315
    %8331 = vmatprep.subr.mxu0 0.0
    %8332 = vmatpush1.msra.mxu0 %v1316
    %8333 = vmatprep.subr.mxu0 0.0
    %8334 = vmatpush1.msra.mxu0 %v1317
    %8335 = vmatprep.subr.mxu0 0.0
    %8336 = vmatpush1.msra.mxu0 %v1318
    %8337 = vmatprep.subr.mxu0 0.0
    %8338 = vmatpush1.msra.mxu0 %v1319
    %8339 = vmatprep.subr.mxu0 0.0
    %8340 = vmatpush1.msra.mxu0 %v1320
    %8341 = vmatprep.subr.mxu0 0.0
    %8342 = vmatpush1.msra.mxu0 %v1321
    %8343 = vmatprep.subr.mxu0 0.0
    %8344 = vmatpush1.msra.mxu0 0.0
    %8345 = vmatprep.subr.mxu0 0.0
    %8346 = vmatpush1.msra.mxu0 0.0
    %8347 = vmatprep.subr.mxu0 0.0
    %8348 = vmatpush1.msra.mxu0 0.0
    %8349 = vmatprep.subr.mxu0 0.0
    %8350 = vmatpush1.msra.mxu0 0.0
    %8351 = vmatprep.subr.mxu0 0.0
    %8352 = vmatpush1.msra.mxu0 0.0
    %8353 = vmatprep.subr.mxu0 0.0
    %8354 = vmatpush1.msra.mxu0 0.0
    %8355 = vmatprep.subr.mxu0 0.0
    %8356 = vmatpush1.msra.mxu0 0.0
    %8357 = vmatprep.subr.mxu0 0.0
    %8358 = vmatpush1.msra.mxu0 0.0
    %8359 = vmatprep.subr.mxu0 0.0
    %8360 = vmatpush1.msra.mxu0 0.0
    %8361 = vmatprep.subr.mxu0 0.0
    %8362 = vmatpush1.msra.mxu0 0.0
    %8363 = vmatprep.subr.mxu0 0.0
    %8364 = vmatpush1.msra.mxu0 0.0
    %8365 = vmatprep.subr.mxu0 0.0
    %8366 = vmatpush1.msra.mxu0 0.0
    %8367 = vmatprep.subr.mxu0 0.0
    %8368 = vmatpush1.msra.mxu0 0.0
    %8369 = vmatprep.subr.mxu0 0.0
    %8370 = vmatpush1.msra.mxu0 0.0
    %8371 = vmatprep.subr.mxu0 0.0
    %8372 = vmatpush1.msra.mxu0 0.0
    %8373 = vmatprep.subr.mxu0 0.0
    %8374 = vmatpush1.msra.mxu0 0.0
    %8375 = vmatprep.subr.mxu0 0.0
    %8376 = vmatpush1.msra.mxu0 0.0
    %8377 = vmatprep.subr.mxu0 0.0
    %8378 = vmatpush1.msra.mxu0 0.0
    %8379 = vmatprep.subr.mxu0 0.0
    %8380 = vmatpush1.msra.mxu0 0.0
    %8381 = vmatprep.subr.mxu0 0.0
    %8382 = vmatpush1.msra.mxu0 0.0
    %8383 = vmatprep.subr.mxu0 0.0
    %8384 = vmatpush1.msra.mxu0 0.0
    %8385 = vmatprep.subr.mxu0 0.0
    %8386 = vmatpush1.msra.mxu0 0.0
    %8387 = vmatprep.mubr.f32.mxu0 0.0
    %8388 = vmatmul.mubr.f32.gmra.mrb[0].mxu0 %v8321
    %v8389 = vpop.f32.mrb[0].mxu0
    %v8390 = vadd.f32 0.0, %v8389
    %v8391 = vpop.f32.mrb[0].mxu0
    %8392 = vdwg.mxu0
    %v8394 = vsel %vm278, %v8390, 0
    %8396 = vmatprep.subr.mxu0 0.0
    %8397 = vmatpush1.xpose.msra.mxu0 %v8394
    %8398 = vmatprep.subr.mxu0 0.0
    %8399 = vmatpush1.xpose.msra.mxu0 0.0
    %8400 = vmatprep.subr.mxu0 0.0
    %8401 = vmatpush1.xpose.msra.mxu0 0.0
    %8402 = vmatprep.subr.mxu0 0.0
    %8403 = vmatpush1.xpose.msra.mxu0 0.0
    %8404 = vmatprep.subr.mxu0 0.0
    %8405 = vmatpush1.xpose.msra.mxu0 0.0
    %8406 = vmatprep.subr.mxu0 0.0
    %8407 = vmatpush1.xpose.msra.mxu0 0.0
    %8408 = vmatprep.subr.mxu0 0.0
    %8409 = vmatpush1.xpose.msra.mxu0 0.0
    %8410 = vmatprep.subr.mxu0 0.0
    %8411 = vmatpush1.xpose.msra.mxu0 0.0
    %8412 = vmatprep.subr.mxu0 0.0
    %8413 = vmatpush1.xpose.msra.mxu0 0.0
    %8414 = vmatprep.subr.mxu0 0.0
    %8415 = vmatpush1.xpose.msra.mxu0 0.0
    %8416 = vmatprep.subr.mxu0 0.0
    %8417 = vmatpush1.xpose.msra.mxu0 0.0
    %8418 = vmatprep.subr.mxu0 0.0
    %8419 = vmatpush1.xpose.msra.mxu0 0.0
    %8420 = vmatprep.subr.mxu0 0.0
    %8421 = vmatpush1.xpose.msra.mxu0 0.0
    %8422 = vmatprep.subr.mxu0 0.0
    %8423 = vmatpush1.xpose.msra.mxu0 0.0
    %8424 = vmatprep.subr.mxu0 0.0
    %8425 = vmatpush1.xpose.msra.mxu0 0.0
    %8426 = vmatprep.subr.mxu0 0.0
    %8427 = vmatpush1.xpose.msra.mxu0 0.0
    %8428 = vmatprep.subr.mxu0 0.0
    %8429 = vmatpush1.xpose.msra.mxu0 0.0
    %8430 = vmatprep.subr.mxu0 0.0
    %8431 = vmatpush1.xpose.msra.mxu0 0.0
    %8432 = vmatprep.subr.mxu0 0.0
    %8433 = vmatpush1.xpose.msra.mxu0 0.0
    %8434 = vmatprep.subr.mxu0 0.0
    %8435 = vmatpush1.xpose.msra.mxu0 0.0
    %8436 = vmatprep.subr.mxu0 0.0
    %8437 = vmatpush1.xpose.msra.mxu0 0.0
    %8438 = vmatprep.subr.mxu0 0.0
    %8439 = vmatpush1.xpose.msra.mxu0 0.0
    %8440 = vmatprep.subr.mxu0 0.0
    %8441 = vmatpush1.xpose.msra.mxu0 0.0
    %8442 = vmatprep.subr.mxu0 0.0
    %8443 = vmatpush1.xpose.msra.mxu0 0.0
    %8444 = vmatprep.subr.mxu0 0.0
    %8445 = vmatpush1.xpose.msra.mxu0 0.0
    %8446 = vmatprep.subr.mxu0 0.0
    %8447 = vmatpush1.xpose.msra.mxu0 0.0
    %8448 = vmatprep.subr.mxu0 0.0
    %8449 = vmatpush1.xpose.msra.mxu0 0.0
    %8450 = vmatprep.subr.mxu0 0.0
    %8451 = vmatpush1.xpose.msra.mxu0 0.0
    %8452 = vmatprep.subr.mxu0 0.0
    %8453 = vmatpush1.xpose.msra.mxu0 0.0
    %8454 = vmatprep.subr.mxu0 0.0
    %8455 = vmatpush1.xpose.msra.mxu0 0.0
    %8456 = vmatprep.subr.mxu0 0.0
    %8457 = vmatpush1.xpose.msra.mxu0 0.0
    %8458 = vmatprep.subr.mxu0 0.0
    %8459 = vmatpush1.xpose.msra.mxu0 0.0
    %8460 = vmatprep.mubr.f32.mxu0 0.0
    %8461 = vmatmul.mubr.f32.gmra.mrb[0].mxu0 %v8394
    %v8462 = vpop.f32.mrb[0].mxu0
    %v8463 = vadd.f32 0.0, %v8462
    %v8464 = vpop.f32.mrb[0].mxu0
    %8465 = vdwg.mxu0
    %v8466 = vld [vmem:[%s5] sm:$0xff]
    %v8467 = vmax.f32 %v8463, 0.0
    %v8468 = vmul.f32 %v8463, %v8466
    %v8469 = vsub.f32 %v8467, %v8468
    %v8470 = vand.u32 2147483647, %v8463
    %v8471 = vsub.f32 0.0, %v8470
    %v8472 = vmul.f32 %v8471, 1.442695
    %v8473 = vpow.pop %v8472
    %v8474 = vadd.f32 %v8473, 1.0
    %v8475 = vlog2.pop %v8474
    %v8476 = vmul.f32 %v8475, 0.6931472
    %v8477 = vadd.f32 %v8469, %v8476
    %v8478 = vsel %vm192, %v8477, 0.0
    %8479 = vadd.xlane.f32.xlu0 %v8478
    %v8480 = vpop.xlane.xlu0 %8479
    %v8481 = vrot.slane %v8480, 4
    %v8482 = vadd.f32 %v8480, %v8481
    %v8483 = vrot.slane %v8482, 2
    %v8484 = vadd.f32 %v8482, %v8483
    %v8485 = vrot.slane %v8484, 1
    %v8486 = vadd.f32 %v8484, %v8485
    %v8487 = vrcp.pop 64.0
    %v8488 = vmul.f32 %v8486, %v8487
    %v8489 = vadd.f32 %v8205, %v8313
    %v8490 = vadd.f32 %v8489, %v8488
    %vm8491 = vcmask 0
    %8492 = vst.msk [vmem:[#allocation2] sm:$0x1] %vm8491, %v8490
    // Predicated region
    $region174: #{_lambda_.1} parent=1 // pred_check
      _
    $region175: #{_lambda_.1} parent=1 // pred_check_branch
      %8494 = sbr.rel (0) target = $region177
    $region176: #{_lambda_.1} parent=1 // pred_region
      _
    $region177: #{_lambda_.1} parent=1 // pred_fallthru
      _
    // Predicated region
    $region178: #{_lambda_.1} parent=1 // pred_check
      _
    $region179: #{_lambda_.1} parent=1 // pred_check_branch
      %8496 = sbr.rel (0) target = $region181
    $region180: #{_lambda_.1} parent=1 // pred_region
      %s8498 = ssub.s32 16, 16
      %8499 = vsyncadd [#allocation3], %s8498
      %s8501 = sshll.u32 [#allocation2], 4
      %s8502 = int_to_ptr.vmem [resolvable:$true] %s8501
      %8504 = dma.vmem_to_hbm [thread:$0]  %s8502, 16, %s89, [#allocation3]
    $region181: #{_lambda_.1} parent=1 // pred_fallthru
      _
    // Predicated region
    $region182: #{_lambda_.1} parent=1 // pred_check
      _
    $region183: #{_lambda_.1} parent=1 // pred_check_branch
      %8506 = sbr.rel (0) target = $region185
    $region184: #{_lambda_.1} parent=1 // pred_region
      _
    $region185: #{_lambda_.1} parent=1 // pred_fallthru
      _
    // Predicated region
    $region186: #{_lambda_.1} parent=1 // pred_check
      _
    $region187: #{_lambda_.1} parent=1 // pred_check_branch
      %8508 = sbr.rel (0) target = $region189
    $region188: #{_lambda_.1} parent=1 // pred_region
      %8509 = dma.done [#allocation3], 16
    $region189: #{_lambda_.1} parent=1 // pred_fallthru
      _
    %8510 = vsyncpa [#allocation3], 1

</llo_original>
